<compile_context>
chip_gen: v6e
topology: v6e:2x2x1
jax: 0.10.0
libtpu: 0.0.40
codegen_flags: <defaults>
</compile_context>

<pallas_src>
import functools

import jax
import jax.numpy as jnp
from jax.experimental import pallas as pl
from jax.experimental.pallas import tpu as pltpu

HIDDEN_SIZE = 450
INPUT_SIZE = 46 * 2
ZONEOUT_PROB = 0.1

_LANE = 128
_SUBLANE = 8


def _round_up(n, m):
    return ((n + m - 1) // m) * m


HP = _round_up(HIDDEN_SIZE, _LANE)    # 512  (lane-aligned hidden size)
INP = _round_up(INPUT_SIZE, _LANE)    # 128  (lane-aligned input size)


def _zoneout_gru_seq_kernel(zoneout_prob, hp, tt,
                            gi_ref, h0_ref, whh_ref, bhn_ref,
                            y_ref, h_scr):
    """TT GRU+zoneout steps per grid iteration; h carried in VMEM scratch.

    gi_ref holds the PRE-COMPUTED input projection (x @ W_ih^T + fused biases)
    for this chunk of timesteps, so only the recurrent h @ W_hh matmul runs here.
    """
    c = pl.program_id(0)

    @pl.when(c == 0)
    def _():
        h_scr[...] = h0_ref[...].astype(jnp.float32)

    whh = whh_ref[...]        # (HP, 3*HP) bf16, VMEM-resident across all steps
    bhn = bhn_ref[...]        # (1, HP) f32 — hidden bias of the n gate

    def step(t, h):
        gi = gi_ref[t]        # (BP, 3*HP) f32 — precomputed [r | z | n] blocks
        gh = jnp.dot(h.astype(jnp.bfloat16), whh,
                     preferred_element_type=jnp.float32)
        r = jax.nn.sigmoid(gi[:, 0:hp] + gh[:, 0:hp])
        z = jax.nn.sigmoid(gi[:, hp:2 * hp] + gh[:, hp:2 * hp])
        n = jnp.tanh(gi[:, 2 * hp:3 * hp] + r * (gh[:, 2 * hp:3 * hp] + bhn))
        # new_h = (1-z)*n + z*h ; out = p*h + (1-p)*new_h   (strength-reduced)
        new_h = n + z * (h - n)
        out = h + (1.0 - zoneout_prob) * (new_h - h)
        # Eval-mode zoneout only (deterministic blend with previous state).
        # TODO(synk): training-mode Bernoulli-mask zoneout (pltpu.prng_seed +
        # pltpu.stateful_bernoulli) is not implemented; eval semantics only.
        y_ref[t] = out.astype(y_ref.dtype)
        return out

    h_scr[...] = jax.lax.fori_loop(0, tt, step, h_scr[...], unroll=True)


def prepare_zoneout_gru_params(weight_ih, weight_hh, bias_ih, bias_hh):
    """One-time parameter prep (hoisted out of the per-step path).

    PyTorch layouts: weight_ih (3H, IN), weight_hh (3H, H), biases (3H,),
    gate order [r|z|n].  Returns:
      wih_t : (INP, 3*HP) f32   — used by the hoisted XLA input projection
      whh_t : (HP, 3*HP)  bf16  — VMEM-resident recurrent weights for the kernel
      bgi   : (1, 3*HP)   f32   — fused r/z biases (bih+bhh) and i_n bias
      bhn   : (1, HP)     f32   — h_n bias (kept separate: n = tanh(i_n + r*(h_n+b_hn)))
    Padded rows/cols/biases are zero so padded lanes never leak into real outputs.
    """
    H, IN = HIDDEN_SIZE, INPUT_SIZE
    wih = jnp.asarray(weight_ih, jnp.float32).reshape(3, H, IN)
    whh = jnp.asarray(weight_hh, jnp.float32).reshape(3, H, H)
    bih = jnp.asarray(bias_ih, jnp.float32).reshape(3, H)
    bhh = jnp.asarray(bias_hh, jnp.float32).reshape(3, H)

    wih_p = jnp.zeros((3, HP, INP), jnp.float32).at[:, :H, :IN].set(wih)
    whh_p = jnp.zeros((3, HP, HP), jnp.float32).at[:, :H, :H].set(whh)
    wih_t = jnp.transpose(wih_p, (2, 0, 1)).reshape(INP, 3 * HP)                 # f32
    whh_t = jnp.transpose(whh_p, (2, 0, 1)).reshape(HP, 3 * HP).astype(jnp.bfloat16)

    bgi = jnp.zeros((3, HP), jnp.float32).at[:, :H].set(
        jnp.stack([bih[0] + bhh[0], bih[1] + bhh[1], bih[2]]))
    bgi = bgi.reshape(1, 3 * HP)
    bhn = jnp.zeros((1, HP), jnp.float32).at[0, :H].set(bhh[2])
    return wih_t, whh_t, bgi, bhn


def zoneout_gru_sequence(xs, h0, params, zoneout_prob=ZONEOUT_PROB, time_chunk=16):
    """xs: (T, B, INPUT_SIZE), h0: (B, HIDDEN_SIZE) -> (T, B, HIDDEN_SIZE)."""
    wih_t, whh_t, bgi, bhn = params
    T, B, IN = xs.shape
    H = h0.shape[1]
    BP = _round_up(max(B, 1), _SUBLANE)

    TT = max(1, min(int(time_chunk), T))
    T_pad = _round_up(T, TT)

    # --- Hoisted, time-independent input projection (one big batched matmul) ---
    xs_p = jnp.zeros((T_pad, BP, INP), jnp.float32).at[:T, :B, :IN].set(
        xs.astype(jnp.float32))
    gi = (jnp.dot(xs_p.reshape(T_pad * BP, INP), wih_t,
                  preferred_element_type=jnp.float32)
          .reshape(T_pad, BP, 3 * HP) + bgi)                       # (T_pad, BP, 3*HP)

    h0_p = jnp.zeros((BP, HP), jnp.float32).at[:B, :H].set(h0.astype(jnp.float32))

    kernel = functools.partial(_zoneout_gru_seq_kernel, float(zoneout_prob), HP, TT)

    ys = pl.pallas_call(
        kernel,
        grid=(T_pad // TT,),
        in_specs=[
            pl.BlockSpec((TT, BP, 3 * HP), lambda c: (c, 0, 0)),   # gi chunk streamed
            pl.BlockSpec((BP, HP), lambda c: (0, 0)),              # h0 (read at c == 0)
            pl.BlockSpec((HP, 3 * HP), lambda c: (0, 0)),          # W_hh^T, VMEM-resident
            pl.BlockSpec((1, HP), lambda c: (0, 0)),               # h_n bias
        ],
        out_specs=pl.BlockSpec((TT, BP, HP), lambda c: (c, 0, 0)),
        out_shape=jax.ShapeDtypeStruct((T_pad, BP, HP), jnp.float32),
        scratch_shapes=[pltpu.VMEM((BP, HP), jnp.float32)],        # carried hidden state
        compiler_params=pltpu.CompilerParams(
            dimension_semantics=("arbitrary",)),                   # time is sequential
    )(gi, h0_p, whh_t, bhn)

    return ys[:T, :B, :H]


def zoneout_gru_cell(x, h_prev, params, zoneout_prob=ZONEOUT_PROB):
    """Single-step forward matching ZoneoutGRUCell.forward (eval mode)."""
    return zoneout_gru_sequence(x[None], h_prev, params, zoneout_prob, time_chunk=1)[0]


def _reference_sequence(xs, h0, weight_ih, weight_hh, bias_ih, bias_hh, p):
    """Pure-JAX reference: torch.nn.GRUCell + eval zoneout, scanned over time.

    W_hh is bf16-rounded (matching the kernel's bf16 recurrent weights); the
    input projection and all other math stay f32 like the hoisted XLA path.
    """
    wih = weight_ih.astype(jnp.float32)
    whh = weight_hh.astype(jnp.bfloat16).astype(jnp.float32)
    H = h0.shape[1]

    def step(h, x):
        gi = x @ wih.T + bias_ih
        gh = h @ whh.T + bias_hh
        i_r, i_z, i_n = gi[:, :H], gi[:, H:2 * H], gi[:, 2 * H:]
        h_r, h_z, h_n = gh[:, :H], gh[:, H:2 * H], gh[:, 2 * H:]
        r = jax.nn.sigmoid(i_r + h_r)
        z = jax.nn.sigmoid(i_z + h_z)
        n = jnp.tanh(i_n + r * h_n)
        new_h = (1.0 - z) * n + z * h
        out = p * h + (1.0 - p) * new_h
        return out, out

    _, ys = jax.lax.scan(step, h0, xs)
    return ys


if __name__ == "__main__":
    key = jax.random.PRNGKey(0)
    k_x, k_h, k_wih, k_whh, k_bih, k_bhh = jax.random.split(key, 6)

    B, T = 4, 8
    IN, H = INPUT_SIZE, HIDDEN_SIZE
    bound = 1.0 / jnp.sqrt(jnp.float32(H))   # PyTorch GRUCell init range

    xs = jax.random.normal(k_x, (T, B, IN), dtype=jnp.float32)
    h0 = jax.random.normal(k_h, (B, H), dtype=jnp.float32)
    weight_ih = jax.random.uniform(k_wih, (3 * H, IN), minval=-bound, maxval=bound)
    weight_hh = jax.random.uniform(k_whh, (3 * H, H), minval=-bound, maxval=bound)
    bias_ih = jax.random.uniform(k_bih, (3 * H,), minval=-bound, maxval=bound)
    bias_hh = jax.random.uniform(k_bhh, (3 * H,), minval=-bound, maxval=bound)

    # One-time parameter prep (transpose / pad / bf16) — hoisted out of the step loop.
    params = prepare_zoneout_gru_params(weight_ih, weight_hh, bias_ih, bias_hh)

    ys = zoneout_gru_sequence(xs, h0, params, ZONEOUT_PROB, time_chunk=16)
    ys = jax.block_until_ready(ys)
    assert ys.shape == (T, B, H)

    ref = _reference_sequence(xs, h0, weight_ih, weight_hh, bias_ih, bias_hh,
                              ZONEOUT_PROB)
    max_err = float(jnp.max(jnp.abs(ys - ref)))
    assert jnp.allclose(ys, ref, atol=3e-2, rtol=3e-2), f"mismatch vs ref: {max_err}"

    # Single-step path (module's forward signature) matches step 0 of the sequence.
    y0 = zoneout_gru_cell(xs[0], h0, params, ZONEOUT_PROB)
    y0 = jax.block_until_ready(y0)
    assert jnp.allclose(y0, ys[0], atol=1e-4, rtol=1e-4)

    print("KERNEL_OK")
</pallas_src>

<mosaic_0001>
module attributes {stable_mosaic.version = 11 : i64} {
  func.func @_zoneout_gru_seq_kernel(%arg0: i32, %arg1: memref<8x8x1536xf32, #tpu.memory_space<vmem>>, %arg2: memref<8x512xf32, #tpu.memory_space<vmem>>, %arg3: memref<512x1536xbf16, #tpu.memory_space<vmem>>, %arg4: memref<1x512xf32, #tpu.memory_space<vmem>>, %arg5: memref<8x8x512xf32, #tpu.memory_space<vmem>>, %arg6: memref<8x512xf32, #tpu.memory_space<vmem>>) attributes {dimension_semantics = [#tpu.dimension_semantics<arbitrary>], iteration_bounds = array<i64: 1>, scalar_prefetch = 0 : i64, scratch_operands = 1 : i64, tpu.core_type = #tpu.core_type<tc>, window_params = [{transform_indices = @transform_0, window_bounds = array<i64: 8, 8, 1536>}, {pipeline_mode = #tpu.pipeline_mode<synchronous>, transform_indices = @transform_1, window_bounds = array<i64: 8, 512>}, {pipeline_mode = #tpu.pipeline_mode<synchronous>, transform_indices = @transform_2, window_bounds = array<i64: 512, 1536>}, {pipeline_mode = #tpu.pipeline_mode<synchronous>, transform_indices = @transform_3, window_bounds = array<i64: 1, 512>}, {transform_indices = @transform_4, window_bounds = array<i64: 8, 8, 512>}]} {
    %c0_i32 = arith.constant 0 : i32
    %0 = arith.cmpi eq, %arg0, %c0_i32 : i32
    %1 = arith.extui %0 : i1 to i32
    %c0_i32_0 = arith.constant 0 : i32
    %2 = arith.cmpi ne, %1, %c0_i32_0 : i32
    scf.if %2 {
      %c0_72 = arith.constant 0 : index
      %c0_73 = arith.constant 0 : index
      %319 = vector.load %arg2[%c0_72, %c0_73] : memref<8x512xf32, #tpu.memory_space<vmem>>, vector<8x512xf32>
      %c0_74 = arith.constant 0 : index
      %c0_75 = arith.constant 0 : index
      %320 = vector.load %arg6[%c0_74, %c0_75] : memref<8x512xf32, #tpu.memory_space<vmem>>, vector<8x512xf32>
      tpu.vector_store %arg6[%c0_74, %c0_75], %319 {strides = array<i32>} : memref<8x512xf32, #tpu.memory_space<vmem>>, vector<8x512xf32>,
    } else {
    }
    %c0 = arith.constant 0 : index
    %c0_1 = arith.constant 0 : index
    %3 = vector.load %arg3[%c0, %c0_1] : memref<512x1536xbf16, #tpu.memory_space<vmem>>, vector<512x1536xbf16>
    %c0_2 = arith.constant 0 : index
    %c0_3 = arith.constant 0 : index
    %4 = vector.load %arg4[%c0_2, %c0_3] : memref<1x512xf32, #tpu.memory_space<vmem>>, vector<1x512xf32>
    %c0_4 = arith.constant 0 : index
    %c0_5 = arith.constant 0 : index
    %5 = vector.load %arg6[%c0_4, %c0_5] : memref<8x512xf32, #tpu.memory_space<vmem>>, vector<8x512xf32>
    %c0_i32_6 = arith.constant 0 : i32
    %6 = arith.index_cast %c0_i32_6 : i32 to index
    %c0_7 = arith.constant 0 : index
    %c0_8 = arith.constant 0 : index
    %7 = vector.load %arg1[%6, %c0_7, %c0_8] : memref<8x8x1536xf32, #tpu.memory_space<vmem>>, vector<1x8x1536xf32>
    %8 = vector.shape_cast %7 : vector<1x8x1536xf32> to vector<8x1536xf32>
    %9 = arith.truncf %5 : vector<8x512xf32> to vector<8x512xbf16>
    %cst = arith.constant dense<0.000000e+00> : vector<8x1536xf32>
    %10 = tpu.matmul %9, %3, %cst {dimension_numbers = #tpu.dot_dimension_numbers<[1], [0], [0], [1], [0, 0, 1, 1], [], []>} : vector<8x512xbf16>, vector<512x1536xbf16>, vector<8x1536xf32> -> vector<8x1536xf32>
    %11 = vector.extract_strided_slice %8 {offsets = [0, 0], sizes = [8, 512], strides = [1, 1]} : vector<8x1536xf32> to vector<8x512xf32>
    %12 = vector.extract_strided_slice %10 {offsets = [0, 0], sizes = [8, 512], strides = [1, 1]} : vector<8x1536xf32> to vector<8x512xf32>
    %13 = arith.addf %11, %12 : vector<8x512xf32>
    %14 = arith.negf %13 : vector<8x512xf32>
    %15 = math.exp %14 : vector<8x512xf32>
    %cst_9 = arith.constant 1.000000e+00 : f32
    %16 = vector.broadcast %cst_9 : f32 to vector<8x512xf32>
    %17 = arith.addf %16, %15 : vector<8x512xf32>
    %18 = arith.divf %16, %17 : vector<8x512xf32>
    %19 = vector.extract_strided_slice %8 {offsets = [0, 512], sizes = [8, 512], strides = [1, 1]} : vector<8x1536xf32> to vector<8x512xf32>
    %20 = vector.extract_strided_slice %10 {offsets = [0, 512], sizes = [8, 512], strides = [1, 1]} : vector<8x1536xf32> to vector<8x512xf32>
    %21 = arith.addf %19, %20 : vector<8x512xf32>
    %22 = arith.negf %21 : vector<8x512xf32>
    %23 = math.exp %22 : vector<8x512xf32>
    %cst_10 = arith.constant 1.000000e+00 : f32
    %24 = vector.broadcast %cst_10 : f32 to vector<8x512xf32>
    %25 = arith.addf %24, %23 : vector<8x512xf32>
    %26 = arith.divf %24, %25 : vector<8x512xf32>
    %27 = vector.extract_strided_slice %8 {offsets = [0, 1024], sizes = [8, 512], strides = [1, 1]} : vector<8x1536xf32> to vector<8x512xf32>
    %28 = vector.extract_strided_slice %10 {offsets = [0, 1024], sizes = [8, 512], strides = [1, 1]} : vector<8x1536xf32> to vector<8x512xf32>
    %29 = vector.broadcast %4 : vector<1x512xf32> to vector<8x512xf32>
    %30 = arith.addf %28, %29 : vector<8x512xf32>
    %31 = arith.mulf %18, %30 : vector<8x512xf32>
    %32 = arith.addf %27, %31 : vector<8x512xf32>
    %33 = math.tanh %32 : vector<8x512xf32>
    %34 = arith.subf %5, %33 : vector<8x512xf32>
    %35 = arith.mulf %26, %34 : vector<8x512xf32>
    %36 = arith.addf %33, %35 : vector<8x512xf32>
    %37 = arith.subf %36, %5 : vector<8x512xf32>
    %cst_11 = arith.constant 0.899999976 : f32
    %38 = vector.broadcast %cst_11 : f32 to vector<8x512xf32>
    %39 = arith.mulf %38, %37 : vector<8x512xf32>
    %40 = arith.addf %5, %39 : vector<8x512xf32>
    %41 = arith.index_cast %c0_i32_6 : i32 to index
    %c0_12 = arith.constant 0 : index
    %c0_13 = arith.constant 0 : index
    %42 = vector.load %arg5[%41, %c0_12, %c0_13] : memref<8x8x512xf32, #tpu.memory_space<vmem>>, vector<1x8x512xf32>
    %43 = vector.shape_cast %42 : vector<1x8x512xf32> to vector<8x512xf32>
    %44 = vector.shape_cast %40 : vector<8x512xf32> to vector<1x8x512xf32>
    tpu.vector_store %arg5[%41, %c0_12, %c0_13], %44 {strides = array<i32>} : memref<8x8x512xf32, #tpu.memory_space<vmem>>, vector<1x8x512xf32>,
    %c1_i32 = arith.constant 1 : i32
    %45 = arith.index_cast %c1_i32 : i32 to index
    %c0_14 = arith.constant 0 : index
    %c0_15 = arith.constant 0 : index
    %46 = vector.load %arg1[%45, %c0_14, %c0_15] : memref<8x8x1536xf32, #tpu.memory_space<vmem>>, vector<1x8x1536xf32>
    %47 = vector.shape_cast %46 : vector<1x8x1536xf32> to vector<8x1536xf32>
    %48 = arith.truncf %40 : vector<8x512xf32> to vector<8x512xbf16>
    %cst_16 = arith.constant dense<0.000000e+00> : vector<8x1536xf32>
    %49 = tpu.matmul %48, %3, %cst_16 {dimension_numbers = #tpu.dot_dimension_numbers<[1], [0], [0], [1], [0, 0, 1, 1], [], []>} : vector<8x512xbf16>, vector<512x1536xbf16>, vector<8x1536xf32> -> vector<8x1536xf32>
    %50 = vector.extract_strided_slice %47 {offsets = [0, 0], sizes = [8, 512], strides = [1, 1]} : vector<8x1536xf32> to vector<8x512xf32>
    %51 = vector.extract_strided_slice %49 {offsets = [0, 0], sizes = [8, 512], strides = [1, 1]} : vector<8x1536xf32> to vector<8x512xf32>
    %52 = arith.addf %50, %51 : vector<8x512xf32>
    %53 = arith.negf %52 : vector<8x512xf32>
    %54 = math.exp %53 : vector<8x512xf32>
    %cst_17 = arith.constant 1.000000e+00 : f32
    %55 = vector.broadcast %cst_17 : f32 to vector<8x512xf32>
    %56 = arith.addf %55, %54 : vector<8x512xf32>
    %57 = arith.divf %55, %56 : vector<8x512xf32>
    %58 = vector.extract_strided_slice %47 {offsets = [0, 512], sizes = [8, 512], strides = [1, 1]} : vector<8x1536xf32> to vector<8x512xf32>
    %59 = vector.extract_strided_slice %49 {offsets = [0, 512], sizes = [8, 512], strides = [1, 1]} : vector<8x1536xf32> to vector<8x512xf32>
    %60 = arith.addf %58, %59 : vector<8x512xf32>
    %61 = arith.negf %60 : vector<8x512xf32>
    %62 = math.exp %61 : vector<8x512xf32>
    %cst_18 = arith.constant 1.000000e+00 : f32
    %63 = vector.broadcast %cst_18 : f32 to vector<8x512xf32>
    %64 = arith.addf %63, %62 : vector<8x512xf32>
    %65 = arith.divf %63, %64 : vector<8x512xf32>
    %66 = vector.extract_strided_slice %47 {offsets = [0, 1024], sizes = [8, 512], strides = [1, 1]} : vector<8x1536xf32> to vector<8x512xf32>
    %67 = vector.extract_strided_slice %49 {offsets = [0, 1024], sizes = [8, 512], strides = [1, 1]} : vector<8x1536xf32> to vector<8x512xf32>
    %68 = vector.broadcast %4 : vector<1x512xf32> to vector<8x512xf32>
    %69 = arith.addf %67, %68 : vector<8x512xf32>
    %70 = arith.mulf %57, %69 : vector<8x512xf32>
    %71 = arith.addf %66, %70 : vector<8x512xf32>
    %72 = math.tanh %71 : vector<8x512xf32>
    %73 = arith.subf %40, %72 : vector<8x512xf32>
    %74 = arith.mulf %65, %73 : vector<8x512xf32>
    %75 = arith.addf %72, %74 : vector<8x512xf32>
    %76 = arith.subf %75, %40 : vector<8x512xf32>
    %cst_19 = arith.constant 0.899999976 : f32
    %77 = vector.broadcast %cst_19 : f32 to vector<8x512xf32>
    %78 = arith.mulf %77, %76 : vector<8x512xf32>
    %79 = arith.addf %40, %78 : vector<8x512xf32>
    %80 = arith.index_cast %c1_i32 : i32 to index
    %c0_20 = arith.constant 0 : index
    %c0_21 = arith.constant 0 : index
    %81 = vector.load %arg5[%80, %c0_20, %c0_21] : memref<8x8x512xf32, #tpu.memory_space<vmem>>, vector<1x8x512xf32>
    %82 = vector.shape_cast %81 : vector<1x8x512xf32> to vector<8x512xf32>
    %83 = vector.shape_cast %79 : vector<8x512xf32> to vector<1x8x512xf32>
    tpu.vector_store %arg5[%80, %c0_20, %c0_21], %83 {strides = array<i32>} : memref<8x8x512xf32, #tpu.memory_space<vmem>>, vector<1x8x512xf32>,
    %c2_i32 = arith.constant 2 : i32
    %84 = arith.index_cast %c2_i32 : i32 to index
    %c0_22 = arith.constant 0 : index
    %c0_23 = arith.constant 0 : index
    %85 = vector.load %arg1[%84, %c0_22, %c0_23] : memref<8x8x1536xf32, #tpu.memory_space<vmem>>, vector<1x8x1536xf32>
    %86 = vector.shape_cast %85 : vector<1x8x1536xf32> to vector<8x1536xf32>
    %87 = arith.truncf %79 : vector<8x512xf32> to vector<8x512xbf16>
    %cst_24 = arith.constant dense<0.000000e+00> : vector<8x1536xf32>
    %88 = tpu.matmul %87, %3, %cst_24 {dimension_numbers = #tpu.dot_dimension_numbers<[1], [0], [0], [1], [0, 0, 1, 1], [], []>} : vector<8x512xbf16>, vector<512x1536xbf16>, vector<8x1536xf32> -> vector<8x1536xf32>
    %89 = vector.extract_strided_slice %86 {offsets = [0, 0], sizes = [8, 512], strides = [1, 1]} : vector<8x1536xf32> to vector<8x512xf32>
    %90 = vector.extract_strided_slice %88 {offsets = [0, 0], sizes = [8, 512], strides = [1, 1]} : vector<8x1536xf32> to vector<8x512xf32>
    %91 = arith.addf %89, %90 : vector<8x512xf32>
    %92 = arith.negf %91 : vector<8x512xf32>
    %93 = math.exp %92 : vector<8x512xf32>
    %cst_25 = arith.constant 1.000000e+00 : f32
    %94 = vector.broadcast %cst_25 : f32 to vector<8x512xf32>
    %95 = arith.addf %94, %93 : vector<8x512xf32>
    %96 = arith.divf %94, %95 : vector<8x512xf32>
    %97 = vector.extract_strided_slice %86 {offsets = [0, 512], sizes = [8, 512], strides = [1, 1]} : vector<8x1536xf32> to vector<8x512xf32>
    %98 = vector.extract_strided_slice %88 {offsets = [0, 512], sizes = [8, 512], strides = [1, 1]} : vector<8x1536xf32> to vector<8x512xf32>
    %99 = arith.addf %97, %98 : vector<8x512xf32>
    %100 = arith.negf %99 : vector<8x512xf32>
    %101 = math.exp %100 : vector<8x512xf32>
    %cst_26 = arith.constant 1.000000e+00 : f32
    %102 = vector.broadcast %cst_26 : f32 to vector<8x512xf32>
    %103 = arith.addf %102, %101 : vector<8x512xf32>
    %104 = arith.divf %102, %103 : vector<8x512xf32>
    %105 = vector.extract_strided_slice %86 {offsets = [0, 1024], sizes = [8, 512], strides = [1, 1]} : vector<8x1536xf32> to vector<8x512xf32>
    %106 = vector.extract_strided_slice %88 {offsets = [0, 1024], sizes = [8, 512], strides = [1, 1]} : vector<8x1536xf32> to vector<8x512xf32>
    %107 = vector.broadcast %4 : vector<1x512xf32> to vector<8x512xf32>
    %108 = arith.addf %106, %107 : vector<8x512xf32>
    %109 = arith.mulf %96, %108 : vector<8x512xf32>
    %110 = arith.addf %105, %109 : vector<8x512xf32>
    %111 = math.tanh %110 : vector<8x512xf32>
    %112 = arith.subf %79, %111 : vector<8x512xf32>
    %113 = arith.mulf %104, %112 : vector<8x512xf32>
    %114 = arith.addf %111, %113 : vector<8x512xf32>
    %115 = arith.subf %114, %79 : vector<8x512xf32>
    %cst_27 = arith.constant 0.899999976 : f32
    %116 = vector.broadcast %cst_27 : f32 to vector<8x512xf32>
    %117 = arith.mulf %116, %115 : vector<8x512xf32>
    %118 = arith.addf %79, %117 : vector<8x512xf32>
    %119 = arith.index_cast %c2_i32 : i32 to index
    %c0_28 = arith.constant 0 : index
    %c0_29 = arith.constant 0 : index
    %120 = vector.load %arg5[%119, %c0_28, %c0_29] : memref<8x8x512xf32, #tpu.memory_space<vmem>>, vector<1x8x512xf32>
    %121 = vector.shape_cast %120 : vector<1x8x512xf32> to vector<8x512xf32>
    %122 = vector.shape_cast %118 : vector<8x512xf32> to vector<1x8x512xf32>
    tpu.vector_store %arg5[%119, %c0_28, %c0_29], %122 {strides = array<i32>} : memref<8x8x512xf32, #tpu.memory_space<vmem>>, vector<1x8x512xf32>,
    %c3_i32 = arith.constant 3 : i32
    %123 = arith.index_cast %c3_i32 : i32 to index
    %c0_30 = arith.constant 0 : index
    %c0_31 = arith.constant 0 : index
    %124 = vector.load %arg1[%123, %c0_30, %c0_31] : memref<8x8x1536xf32, #tpu.memory_space<vmem>>, vector<1x8x1536xf32>
    %125 = vector.shape_cast %124 : vector<1x8x1536xf32> to vector<8x1536xf32>
    %126 = arith.truncf %118 : vector<8x512xf32> to vector<8x512xbf16>
    %cst_32 = arith.constant dense<0.000000e+00> : vector<8x1536xf32>
    %127 = tpu.matmul %126, %3, %cst_32 {dimension_numbers = #tpu.dot_dimension_numbers<[1], [0], [0], [1], [0, 0, 1, 1], [], []>} : vector<8x512xbf16>, vector<512x1536xbf16>, vector<8x1536xf32> -> vector<8x1536xf32>
    %128 = vector.extract_strided_slice %125 {offsets = [0, 0], sizes = [8, 512], strides = [1, 1]} : vector<8x1536xf32> to vector<8x512xf32>
    %129 = vector.extract_strided_slice %127 {offsets = [0, 0], sizes = [8, 512], strides = [1, 1]} : vector<8x1536xf32> to vector<8x512xf32>
    %130 = arith.addf %128, %129 : vector<8x512xf32>
    %131 = arith.negf %130 : vector<8x512xf32>
    %132 = math.exp %131 : vector<8x512xf32>
    %cst_33 = arith.constant 1.000000e+00 : f32
    %133 = vector.broadcast %cst_33 : f32 to vector<8x512xf32>
    %134 = arith.addf %133, %132 : vector<8x512xf32>
    %135 = arith.divf %133, %134 : vector<8x512xf32>
    %136 = vector.extract_strided_slice %125 {offsets = [0, 512], sizes = [8, 512], strides = [1, 1]} : vector<8x1536xf32> to vector<8x512xf32>
    %137 = vector.extract_strided_slice %127 {offsets = [0, 512], sizes = [8, 512], strides = [1, 1]} : vector<8x1536xf32> to vector<8x512xf32>
    %138 = arith.addf %136, %137 : vector<8x512xf32>
    %139 = arith.negf %138 : vector<8x512xf32>
    %140 = math.exp %139 : vector<8x512xf32>
    %cst_34 = arith.constant 1.000000e+00 : f32
    %141 = vector.broadcast %cst_34 : f32 to vector<8x512xf32>
    %142 = arith.addf %141, %140 : vector<8x512xf32>
    %143 = arith.divf %141, %142 : vector<8x512xf32>
    %144 = vector.extract_strided_slice %125 {offsets = [0, 1024], sizes = [8, 512], strides = [1, 1]} : vector<8x1536xf32> to vector<8x512xf32>
    %145 = vector.extract_strided_slice %127 {offsets = [0, 1024], sizes = [8, 512], strides = [1, 1]} : vector<8x1536xf32> to vector<8x512xf32>
    %146 = vector.broadcast %4 : vector<1x512xf32> to vector<8x512xf32>
    %147 = arith.addf %145, %146 : vector<8x512xf32>
    %148 = arith.mulf %135, %147 : vector<8x512xf32>
    %149 = arith.addf %144, %148 : vector<8x512xf32>
    %150 = math.tanh %149 : vector<8x512xf32>
    %151 = arith.subf %118, %150 : vector<8x512xf32>
    %152 = arith.mulf %143, %151 : vector<8x512xf32>
    %153 = arith.addf %150, %152 : vector<8x512xf32>
    %154 = arith.subf %153, %118 : vector<8x512xf32>
    %cst_35 = arith.constant 0.899999976 : f32
    %155 = vector.broadcast %cst_35 : f32 to vector<8x512xf32>
    %156 = arith.mulf %155, %154 : vector<8x512xf32>
    %157 = arith.addf %118, %156 : vector<8x512xf32>
    %158 = arith.index_cast %c3_i32 : i32 to index
    %c0_36 = arith.constant 0 : index
    %c0_37 = arith.constant 0 : index
    %159 = vector.load %arg5[%158, %c0_36, %c0_37] : memref<8x8x512xf32, #tpu.memory_space<vmem>>, vector<1x8x512xf32>
    %160 = vector.shape_cast %159 : vector<1x8x512xf32> to vector<8x512xf32>
    %161 = vector.shape_cast %157 : vector<8x512xf32> to vector<1x8x512xf32>
    tpu.vector_store %arg5[%158, %c0_36, %c0_37], %161 {strides = array<i32>} : memref<8x8x512xf32, #tpu.memory_space<vmem>>, vector<1x8x512xf32>,
    %c4_i32 = arith.constant 4 : i32
    %162 = arith.index_cast %c4_i32 : i32 to index
    %c0_38 = arith.constant 0 : index
    %c0_39 = arith.constant 0 : index
    %163 = vector.load %arg1[%162, %c0_38, %c0_39] : memref<8x8x1536xf32, #tpu.memory_space<vmem>>, vector<1x8x1536xf32>
    %164 = vector.shape_cast %163 : vector<1x8x1536xf32> to vector<8x1536xf32>
    %165 = arith.truncf %157 : vector<8x512xf32> to vector<8x512xbf16>
    %cst_40 = arith.constant dense<0.000000e+00> : vector<8x1536xf32>
    %166 = tpu.matmul %165, %3, %cst_40 {dimension_numbers = #tpu.dot_dimension_numbers<[1], [0], [0], [1], [0, 0, 1, 1], [], []>} : vector<8x512xbf16>, vector<512x1536xbf16>, vector<8x1536xf32> -> vector<8x1536xf32>
    %167 = vector.extract_strided_slice %164 {offsets = [0, 0], sizes = [8, 512], strides = [1, 1]} : vector<8x1536xf32> to vector<8x512xf32>
    %168 = vector.extract_strided_slice %166 {offsets = [0, 0], sizes = [8, 512], strides = [1, 1]} : vector<8x1536xf32> to vector<8x512xf32>
    %169 = arith.addf %167, %168 : vector<8x512xf32>
    %170 = arith.negf %169 : vector<8x512xf32>
    %171 = math.exp %170 : vector<8x512xf32>
    %cst_41 = arith.constant 1.000000e+00 : f32
    %172 = vector.broadcast %cst_41 : f32 to vector<8x512xf32>
    %173 = arith.addf %172, %171 : vector<8x512xf32>
    %174 = arith.divf %172, %173 : vector<8x512xf32>
    %175 = vector.extract_strided_slice %164 {offsets = [0, 512], sizes = [8, 512], strides = [1, 1]} : vector<8x1536xf32> to vector<8x512xf32>
    %176 = vector.extract_strided_slice %166 {offsets = [0, 512], sizes = [8, 512], strides = [1, 1]} : vector<8x1536xf32> to vector<8x512xf32>
    %177 = arith.addf %175, %176 : vector<8x512xf32>
    %178 = arith.negf %177 : vector<8x512xf32>
    %179 = math.exp %178 : vector<8x512xf32>
    %cst_42 = arith.constant 1.000000e+00 : f32
    %180 = vector.broadcast %cst_42 : f32 to vector<8x512xf32>
    %181 = arith.addf %180, %179 : vector<8x512xf32>
    %182 = arith.divf %180, %181 : vector<8x512xf32>
    %183 = vector.extract_strided_slice %164 {offsets = [0, 1024], sizes = [8, 512], strides = [1, 1]} : vector<8x1536xf32> to vector<8x512xf32>
    %184 = vector.extract_strided_slice %166 {offsets = [0, 1024], sizes = [8, 512], strides = [1, 1]} : vector<8x1536xf32> to vector<8x512xf32>
    %185 = vector.broadcast %4 : vector<1x512xf32> to vector<8x512xf32>
    %186 = arith.addf %184, %185 : vector<8x512xf32>
    %187 = arith.mulf %174, %186 : vector<8x512xf32>
    %188 = arith.addf %183, %187 : vector<8x512xf32>
    %189 = math.tanh %188 : vector<8x512xf32>
    %190 = arith.subf %157, %189 : vector<8x512xf32>
    %191 = arith.mulf %182, %190 : vector<8x512xf32>
    %192 = arith.addf %189, %191 : vector<8x512xf32>
    %193 = arith.subf %192, %157 : vector<8x512xf32>
    %cst_43 = arith.constant 0.899999976 : f32
    %194 = vector.broadcast %cst_43 : f32 to vector<8x512xf32>
    %195 = arith.mulf %194, %193 : vector<8x512xf32>
    %196 = arith.addf %157, %195 : vector<8x512xf32>
    %197 = arith.index_cast %c4_i32 : i32 to index
    %c0_44 = arith.constant 0 : index
    %c0_45 = arith.constant 0 : index
    %198 = vector.load %arg5[%197, %c0_44, %c0_45] : memref<8x8x512xf32, #tpu.memory_space<vmem>>, vector<1x8x512xf32>
    %199 = vector.shape_cast %198 : vector<1x8x512xf32> to vector<8x512xf32>
    %200 = vector.shape_cast %196 : vector<8x512xf32> to vector<1x8x512xf32>
    tpu.vector_store %arg5[%197, %c0_44, %c0_45], %200 {strides = array<i32>} : memref<8x8x512xf32, #tpu.memory_space<vmem>>, vector<1x8x512xf32>,
    %c5_i32 = arith.constant 5 : i32
    %201 = arith.index_cast %c5_i32 : i32 to index
    %c0_46 = arith.constant 0 : index
    %c0_47 = arith.constant 0 : index
    %202 = vector.load %arg1[%201, %c0_46, %c0_47] : memref<8x8x1536xf32, #tpu.memory_space<vmem>>, vector<1x8x1536xf32>
    %203 = vector.shape_cast %202 : vector<1x8x1536xf32> to vector<8x1536xf32>
    %204 = arith.truncf %196 : vector<8x512xf32> to vector<8x512xbf16>
    %cst_48 = arith.constant dense<0.000000e+00> : vector<8x1536xf32>
    %205 = tpu.matmul %204, %3, %cst_48 {dimension_numbers = #tpu.dot_dimension_numbers<[1], [0], [0], [1], [0, 0, 1, 1], [], []>} : vector<8x512xbf16>, vector<512x1536xbf16>, vector<8x1536xf32> -> vector<8x1536xf32>
    %206 = vector.extract_strided_slice %203 {offsets = [0, 0], sizes = [8, 512], strides = [1, 1]} : vector<8x1536xf32> to vector<8x512xf32>
    %207 = vector.extract_strided_slice %205 {offsets = [0, 0], sizes = [8, 512], strides = [1, 1]} : vector<8x1536xf32> to vector<8x512xf32>
    %208 = arith.addf %206, %207 : vector<8x512xf32>
    %209 = arith.negf %208 : vector<8x512xf32>
    %210 = math.exp %209 : vector<8x512xf32>
    %cst_49 = arith.constant 1.000000e+00 : f32
    %211 = vector.broadcast %cst_49 : f32 to vector<8x512xf32>
    %212 = arith.addf %211, %210 : vector<8x512xf32>
    %213 = arith.divf %211, %212 : vector<8x512xf32>
    %214 = vector.extract_strided_slice %203 {offsets = [0, 512], sizes = [8, 512], strides = [1, 1]} : vector<8x1536xf32> to vector<8x512xf32>
    %215 = vector.extract_strided_slice %205 {offsets = [0, 512], sizes = [8, 512], strides = [1, 1]} : vector<8x1536xf32> to vector<8x512xf32>
    %216 = arith.addf %214, %215 : vector<8x512xf32>
    %217 = arith.negf %216 : vector<8x512xf32>
    %218 = math.exp %217 : vector<8x512xf32>
    %cst_50 = arith.constant 1.000000e+00 : f32
    %219 = vector.broadcast %cst_50 : f32 to vector<8x512xf32>
    %220 = arith.addf %219, %218 : vector<8x512xf32>
    %221 = arith.divf %219, %220 : vector<8x512xf32>
    %222 = vector.extract_strided_slice %203 {offsets = [0, 1024], sizes = [8, 512], strides = [1, 1]} : vector<8x1536xf32> to vector<8x512xf32>
    %223 = vector.extract_strided_slice %205 {offsets = [0, 1024], sizes = [8, 512], strides = [1, 1]} : vector<8x1536xf32> to vector<8x512xf32>
    %224 = vector.broadcast %4 : vector<1x512xf32> to vector<8x512xf32>
    %225 = arith.addf %223, %224 : vector<8x512xf32>
    %226 = arith.mulf %213, %225 : vector<8x512xf32>
    %227 = arith.addf %222, %226 : vector<8x512xf32>
    %228 = math.tanh %227 : vector<8x512xf32>
    %229 = arith.subf %196, %228 : vector<8x512xf32>
    %230 = arith.mulf %221, %229 : vector<8x512xf32>
    %231 = arith.addf %228, %230 : vector<8x512xf32>
    %232 = arith.subf %231, %196 : vector<8x512xf32>
    %cst_51 = arith.constant 0.899999976 : f32
    %233 = vector.broadcast %cst_51 : f32 to vector<8x512xf32>
    %234 = arith.mulf %233, %232 : vector<8x512xf32>
    %235 = arith.addf %196, %234 : vector<8x512xf32>
    %236 = arith.index_cast %c5_i32 : i32 to index
    %c0_52 = arith.constant 0 : index
    %c0_53 = arith.constant 0 : index
    %237 = vector.load %arg5[%236, %c0_52, %c0_53] : memref<8x8x512xf32, #tpu.memory_space<vmem>>, vector<1x8x512xf32>
    %238 = vector.shape_cast %237 : vector<1x8x512xf32> to vector<8x512xf32>
    %239 = vector.shape_cast %235 : vector<8x512xf32> to vector<1x8x512xf32>
    tpu.vector_store %arg5[%236, %c0_52, %c0_53], %239 {strides = array<i32>} : memref<8x8x512xf32, #tpu.memory_space<vmem>>, vector<1x8x512xf32>,
    %c6_i32 = arith.constant 6 : i32
    %240 = arith.index_cast %c6_i32 : i32 to index
    %c0_54 = arith.constant 0 : index
    %c0_55 = arith.constant 0 : index
    %241 = vector.load %arg1[%240, %c0_54, %c0_55] : memref<8x8x1536xf32, #tpu.memory_space<vmem>>, vector<1x8x1536xf32>
    %242 = vector.shape_cast %241 : vector<1x8x1536xf32> to vector<8x1536xf32>
    %243 = arith.truncf %235 : vector<8x512xf32> to vector<8x512xbf16>
    %cst_56 = arith.constant dense<0.000000e+00> : vector<8x1536xf32>
    %244 = tpu.matmul %243, %3, %cst_56 {dimension_numbers = #tpu.dot_dimension_numbers<[1], [0], [0], [1], [0, 0, 1, 1], [], []>} : vector<8x512xbf16>, vector<512x1536xbf16>, vector<8x1536xf32> -> vector<8x1536xf32>
    %245 = vector.extract_strided_slice %242 {offsets = [0, 0], sizes = [8, 512], strides = [1, 1]} : vector<8x1536xf32> to vector<8x512xf32>
    %246 = vector.extract_strided_slice %244 {offsets = [0, 0], sizes = [8, 512], strides = [1, 1]} : vector<8x1536xf32> to vector<8x512xf32>
    %247 = arith.addf %245, %246 : vector<8x512xf32>
    %248 = arith.negf %247 : vector<8x512xf32>
    %249 = math.exp %248 : vector<8x512xf32>
    %cst_57 = arith.constant 1.000000e+00 : f32
    %250 = vector.broadcast %cst_57 : f32 to vector<8x512xf32>
    %251 = arith.addf %250, %249 : vector<8x512xf32>
    %252 = arith.divf %250, %251 : vector<8x512xf32>
    %253 = vector.extract_strided_slice %242 {offsets = [0, 512], sizes = [8, 512], strides = [1, 1]} : vector<8x1536xf32> to vector<8x512xf32>
    %254 = vector.extract_strided_slice %244 {offsets = [0, 512], sizes = [8, 512], strides = [1, 1]} : vector<8x1536xf32> to vector<8x512xf32>
    %255 = arith.addf %253, %254 : vector<8x512xf32>
    %256 = arith.negf %255 : vector<8x512xf32>
    %257 = math.exp %256 : vector<8x512xf32>
    %cst_58 = arith.constant 1.000000e+00 : f32
    %258 = vector.broadcast %cst_58 : f32 to vector<8x512xf32>
    %259 = arith.addf %258, %257 : vector<8x512xf32>
    %260 = arith.divf %258, %259 : vector<8x512xf32>
    %261 = vector.extract_strided_slice %242 {offsets = [0, 1024], sizes = [8, 512], strides = [1, 1]} : vector<8x1536xf32> to vector<8x512xf32>
    %262 = vector.extract_strided_slice %244 {offsets = [0, 1024], sizes = [8, 512], strides = [1, 1]} : vector<8x1536xf32> to vector<8x512xf32>
    %263 = vector.broadcast %4 : vector<1x512xf32> to vector<8x512xf32>
    %264 = arith.addf %262, %263 : vector<8x512xf32>
    %265 = arith.mulf %252, %264 : vector<8x512xf32>
    %266 = arith.addf %261, %265 : vector<8x512xf32>
    %267 = math.tanh %266 : vector<8x512xf32>
    %268 = arith.subf %235, %267 : vector<8x512xf32>
    %269 = arith.mulf %260, %268 : vector<8x512xf32>
    %270 = arith.addf %267, %269 : vector<8x512xf32>
    %271 = arith.subf %270, %235 : vector<8x512xf32>
    %cst_59 = arith.constant 0.899999976 : f32
    %272 = vector.broadcast %cst_59 : f32 to vector<8x512xf32>
    %273 = arith.mulf %272, %271 : vector<8x512xf32>
    %274 = arith.addf %235, %273 : vector<8x512xf32>
    %275 = arith.index_cast %c6_i32 : i32 to index
    %c0_60 = arith.constant 0 : index
    %c0_61 = arith.constant 0 : index
    %276 = vector.load %arg5[%275, %c0_60, %c0_61] : memref<8x8x512xf32, #tpu.memory_space<vmem>>, vector<1x8x512xf32>
    %277 = vector.shape_cast %276 : vector<1x8x512xf32> to vector<8x512xf32>
    %278 = vector.shape_cast %274 : vector<8x512xf32> to vector<1x8x512xf32>
    tpu.vector_store %arg5[%275, %c0_60, %c0_61], %278 {strides = array<i32>} : memref<8x8x512xf32, #tpu.memory_space<vmem>>, vector<1x8x512xf32>,
    %c7_i32 = arith.constant 7 : i32
    %279 = arith.index_cast %c7_i32 : i32 to index
    %c0_62 = arith.constant 0 : index
    %c0_63 = arith.constant 0 : index
    %280 = vector.load %arg1[%279, %c0_62, %c0_63] : memref<8x8x1536xf32, #tpu.memory_space<vmem>>, vector<1x8x1536xf32>
    %281 = vector.shape_cast %280 : vector<1x8x1536xf32> to vector<8x1536xf32>
    %282 = arith.truncf %274 : vector<8x512xf32> to vector<8x512xbf16>
    %cst_64 = arith.constant dense<0.000000e+00> : vector<8x1536xf32>
    %283 = tpu.matmul %282, %3, %cst_64 {dimension_numbers = #tpu.dot_dimension_numbers<[1], [0], [0], [1], [0, 0, 1, 1], [], []>} : vector<8x512xbf16>, vector<512x1536xbf16>, vector<8x1536xf32> -> vector<8x1536xf32>
    %284 = vector.extract_strided_slice %281 {offsets = [0, 0], sizes = [8, 512], strides = [1, 1]} : vector<8x1536xf32> to vector<8x512xf32>
    %285 = vector.extract_strided_slice %283 {offsets = [0, 0], sizes = [8, 512], strides = [1, 1]} : vector<8x1536xf32> to vector<8x512xf32>
    %286 = arith.addf %284, %285 : vector<8x512xf32>
    %287 = arith.negf %286 : vector<8x512xf32>
    %288 = math.exp %287 : vector<8x512xf32>
    %cst_65 = arith.constant 1.000000e+00 : f32
    %289 = vector.broadcast %cst_65 : f32 to vector<8x512xf32>
    %290 = arith.addf %289, %288 : vector<8x512xf32>
    %291 = arith.divf %289, %290 : vector<8x512xf32>
    %292 = vector.extract_strided_slice %281 {offsets = [0, 512], sizes = [8, 512], strides = [1, 1]} : vector<8x1536xf32> to vector<8x512xf32>
    %293 = vector.extract_strided_slice %283 {offsets = [0, 512], sizes = [8, 512], strides = [1, 1]} : vector<8x1536xf32> to vector<8x512xf32>
    %294 = arith.addf %292, %293 : vector<8x512xf32>
    %295 = arith.negf %294 : vector<8x512xf32>
    %296 = math.exp %295 : vector<8x512xf32>
    %cst_66 = arith.constant 1.000000e+00 : f32
    %297 = vector.broadcast %cst_66 : f32 to vector<8x512xf32>
    %298 = arith.addf %297, %296 : vector<8x512xf32>
    %299 = arith.divf %297, %298 : vector<8x512xf32>
    %300 = vector.extract_strided_slice %281 {offsets = [0, 1024], sizes = [8, 512], strides = [1, 1]} : vector<8x1536xf32> to vector<8x512xf32>
    %301 = vector.extract_strided_slice %283 {offsets = [0, 1024], sizes = [8, 512], strides = [1, 1]} : vector<8x1536xf32> to vector<8x512xf32>
    %302 = vector.broadcast %4 : vector<1x512xf32> to vector<8x512xf32>
    %303 = arith.addf %301, %302 : vector<8x512xf32>
    %304 = arith.mulf %291, %303 : vector<8x512xf32>
    %305 = arith.addf %300, %304 : vector<8x512xf32>
    %306 = math.tanh %305 : vector<8x512xf32>
    %307 = arith.subf %274, %306 : vector<8x512xf32>
    %308 = arith.mulf %299, %307 : vector<8x512xf32>
    %309 = arith.addf %306, %308 : vector<8x512xf32>
    %310 = arith.subf %309, %274 : vector<8x512xf32>
    %cst_67 = arith.constant 0.899999976 : f32
    %311 = vector.broadcast %cst_67 : f32 to vector<8x512xf32>
    %312 = arith.mulf %311, %310 : vector<8x512xf32>
    %313 = arith.addf %274, %312 : vector<8x512xf32>
    %314 = arith.index_cast %c7_i32 : i32 to index
    %c0_68 = arith.constant 0 : index
    %c0_69 = arith.constant 0 : index
    %315 = vector.load %arg5[%314, %c0_68, %c0_69] : memref<8x8x512xf32, #tpu.memory_space<vmem>>, vector<1x8x512xf32>
    %316 = vector.shape_cast %315 : vector<1x8x512xf32> to vector<8x512xf32>
    %317 = vector.shape_cast %313 : vector<8x512xf32> to vector<1x8x512xf32>
    tpu.vector_store %arg5[%314, %c0_68, %c0_69], %317 {strides = array<i32>} : memref<8x8x512xf32, #tpu.memory_space<vmem>>, vector<1x8x512xf32>,
    %c8_i32 = arith.constant 8 : i32
    %c0_70 = arith.constant 0 : index
    %c0_71 = arith.constant 0 : index
    %318 = vector.load %arg6[%c0_70, %c0_71] : memref<8x512xf32, #tpu.memory_space<vmem>>, vector<8x512xf32>
    tpu.vector_store %arg6[%c0_70, %c0_71], %313 {strides = array<i32>} : memref<8x512xf32, #tpu.memory_space<vmem>>, vector<8x512xf32>,
    return
  }
  func.func @transform_0(%arg0: i32) -> (i32, i32, i32) {
    %c0_i32 = arith.constant 0 : i32
    %c0_i32_0 = arith.constant 0 : i32
    %c0_i32_1 = arith.constant 0 : i32
    return %arg0, %c0_i32, %c0_i32_0 : i32, i32, i32
  }
  func.func @transform_1(%arg0: i32) -> (i32, i32) {
    %c0_i32 = arith.constant 0 : i32
    %c0_i32_0 = arith.constant 0 : i32
    %c0_i32_1 = arith.constant 0 : i32
    return %c0_i32, %c0_i32_0 : i32, i32
  }
  func.func @transform_2(%arg0: i32) -> (i32, i32) {
    %c0_i32 = arith.constant 0 : i32
    %c0_i32_0 = arith.constant 0 : i32
    %c0_i32_1 = arith.constant 0 : i32
    return %c0_i32, %c0_i32_0 : i32, i32
  }
  func.func @transform_3(%arg0: i32) -> (i32, i32) {
    %c0_i32 = arith.constant 0 : i32
    %c0_i32_0 = arith.constant 0 : i32
    %c0_i32_1 = arith.constant 0 : i32
    return %c0_i32, %c0_i32_0 : i32, i32
  }
  func.func @transform_4(%arg0: i32) -> (i32, i32, i32) {
    %c0_i32 = arith.constant 0 : i32
    %c0_i32_0 = arith.constant 0 : i32
    %c0_i32_1 = arith.constant 0 : i32
    return %arg0, %c0_i32, %c0_i32_0 : i32, i32, i32
  }
}

</mosaic_0001>

<llo_original>
// kernel: tpu_custom_call.1
$region0: #{tpu_custom_call.1}
  #allocation0 [shape = 'u32[]', space=smem, size = 0x4, offset = 0x4, fixed_abs, tag = 'smem constant byte address 0x4 - core index']
  #allocation1 [shape = 'u32[144,128]{1,0:T(1,128)}', space=vmem, size = 0x12000, scoped, tag = 'internal scratch']
  #allocation2 [shape = 'f32[8,512]{1,0:T(8,128)}', space=vmem, size = 0x4000, scoped, tag = 'scratch operand']
  %s0 = inlined_call_operand.hbm [shape: f32[8,8,1536], index: 0, kind: input, shape index: {}]
  %s1 = inlined_call_operand.hbm [shape: f32[8,512], index: 1, kind: input, shape index: {}]
  %s2 = inlined_call_operand.hbm [shape: bf16[512,1536], index: 2, kind: input, shape index: {}]
  %s3 = inlined_call_operand.hbm [shape: f32[1,512], index: 3, kind: input, shape index: {}]
  %s4 = inlined_call_operand.hbm [shape: f32[8,8,512], index: 4, kind: output, shape index: {}]
  %s5 = sld [smem:[#allocation0]]
  $region46: #{tpu_custom_call.1} parent=0
    _
  %s7 = ssub.s32 1, %s5
  %s8 = scalar_select 0, %s7, %s5
  $region1: #{tpu_custom_call.1} parent=0
    #allocation3 [shape = 'u8[393216]{0}', space=vmem, size = 0x60000, scoped, tag = 'input window, operand 0, single buffered']
    #allocation4 [shape = 's32[1]{0}', space=sflag, size = 0x4, scoped, tag = 'scoped memory for tpu_custom_call.1']
    #allocation5 [shape = 's32[1]{0}', space=sflag, size = 0x4, scoped, tag = 'scoped memory for tpu_custom_call.1']
    #allocation6 [shape = 'u8[16384]{0}', space=vmem, size = 0x4000, scoped, tag = 'input window, operand 1, single buffered']
    #allocation7 [shape = 's32[1]{0}', space=sflag, size = 0x4, scoped, tag = 'scoped memory for tpu_custom_call.1']
    #allocation8 [shape = 'u8[1572864]{0}', space=vmem, size = 0x180000, scoped, tag = 'input window, operand 2, single buffered']
    #allocation9 [shape = 'u8[2048]{0}', space=vmem, size = 0x800, scoped, tag = 'input window, operand 3, single buffered']
    #allocation10 [shape = 's32[1]{0}', space=sflag, size = 0x4, scoped, tag = 'scoped memory for tpu_custom_call.1']
    #allocation11 [shape = 'u8[131072]{0}', space=vmem, size = 0x20000, scoped, tag = 'output window, operand 0, single buffered']
    %9 = vsyncpa [#allocation4], 0
    %10 = vsyncpa [#allocation7], 0
    %11 = vsyncpa [#allocation10], 0
    %12 = vsyncpa [#allocation5], 0
    // Predicated region
    $region2: #{tpu_custom_call.1} parent=1 // pred_check
      _
    $region3: #{tpu_custom_call.1} parent=1 // pred_check_branch
      %14 = sbr.rel (0) target = $region5
    $region4: #{tpu_custom_call.1} parent=1 // pred_region
      %s16 = ssub.s32 12288, 12288
      %17 = vsyncadd [#allocation4], %s16
      %s18 = sshll.u32 [#allocation3], 4
      %s19 = int_to_ptr.vmem [resolvable:$true] %s18
      %24 = dma.hbm_to_vmem [thread:$0]  %s0, 12288, %s19, [#allocation4], 1536, 1536, 96
    $region5: #{tpu_custom_call.1} parent=1 // pred_fallthru
      _
    // Predicated region
    $region6: #{tpu_custom_call.1} parent=1 // pred_check
      _
    $region7: #{tpu_custom_call.1} parent=1 // pred_check_branch
      %26 = sbr.rel (0) target = $region9
    $region8: #{tpu_custom_call.1} parent=1 // pred_region
      %s28 = ssub.s32 512, 512
      %29 = vsyncadd [#allocation7], %s28
      %s31 = sshll.u32 [#allocation6], 4
      %s32 = int_to_ptr.vmem [resolvable:$true] %s31
      %34 = dma.hbm_to_vmem [thread:$0]  %s1, 512, %s32, [#allocation7]
    $region9: #{tpu_custom_call.1} parent=1 // pred_fallthru
      _
    // Predicated region
    $region10: #{tpu_custom_call.1} parent=1 // pred_check
      _
    $region11: #{tpu_custom_call.1} parent=1 // pred_check_branch
      %36 = sbr.rel (0) target = $region13
    $region12: #{tpu_custom_call.1} parent=1 // pred_region
      %s38 = ssub.s32 49152, 49152
      %39 = vsyncadd [#allocation7], %s38
      %s40 = sshll.u32 [#allocation8], 4
      %s41 = int_to_ptr.vmem [resolvable:$true] %s40
      %46 = dma.hbm_to_vmem [thread:$0]  %s2, 49152, %s41, [#allocation7], 768, 768, 48
    $region13: #{tpu_custom_call.1} parent=1 // pred_fallthru
      _
    // Predicated region
    $region14: #{tpu_custom_call.1} parent=1 // pred_check
      _
    $region15: #{tpu_custom_call.1} parent=1 // pred_check_branch
      %48 = sbr.rel (0) target = $region17
    $region16: #{tpu_custom_call.1} parent=1 // pred_region
      %s50 = ssub.s32 64, 64
      %51 = vsyncadd [#allocation10], %s50
      %s53 = sshll.u32 [#allocation9], 4
      %s54 = int_to_ptr.vmem [resolvable:$true] %s53
      %56 = dma.hbm_to_vmem [thread:$0]  %s3, 64, %s54, [#allocation10]
    $region17: #{tpu_custom_call.1} parent=1 // pred_fallthru
      _
    // Predicated region
    $region18: #{tpu_custom_call.1} parent=1 // pred_check
      _
    $region19: #{tpu_custom_call.1} parent=1 // pred_check_branch
      %58 = sbr.rel (0) target = $region21
    $region20: #{tpu_custom_call.1} parent=1 // pred_region
      %59 = dma.done [#allocation4], 12288
    $region21: #{tpu_custom_call.1} parent=1 // pred_fallthru
      _
    // Predicated region
    $region22: #{tpu_custom_call.1} parent=1 // pred_check
      _
    $region23: #{tpu_custom_call.1} parent=1 // pred_check_branch
      %61 = sbr.rel (0) target = $region25
    $region24: #{tpu_custom_call.1} parent=1 // pred_region
      %62 = dma.done [#allocation7], 512
    $region25: #{tpu_custom_call.1} parent=1 // pred_fallthru
      _
    // Predicated region
    $region26: #{tpu_custom_call.1} parent=1 // pred_check
      _
    $region27: #{tpu_custom_call.1} parent=1 // pred_check_branch
      %64 = sbr.rel (0) target = $region29
    $region28: #{tpu_custom_call.1} parent=1 // pred_region
      %65 = dma.done [#allocation7], 49152
    $region29: #{tpu_custom_call.1} parent=1 // pred_fallthru
      _
    // Predicated region
    $region30: #{tpu_custom_call.1} parent=1 // pred_check
      _
    $region31: #{tpu_custom_call.1} parent=1 // pred_check_branch
      %67 = sbr.rel (0) target = $region33
    $region32: #{tpu_custom_call.1} parent=1 // pred_region
      %68 = dma.done [#allocation10], 64
    $region33: #{tpu_custom_call.1} parent=1 // pred_fallthru
      _
    %p69 = scmp.eq.s32.totalorder 0, 0
    // Predicated region
    $region34: #{tpu_custom_call.1} parent=1 // pred_check
      %p70 = pneg %p69
    $region35: #{tpu_custom_call.1} parent=1 // pred_check_branch
      %72 = sbr.rel (%p70) target = $region37
    $region36: #{tpu_custom_call.1} parent=1 // pred_region
      %v73 = vld [vmem:[#allocation6] sm:$0xff]
      %v74 = vld [vmem:[#allocation6 + $0x8] sm:$0xff]
      %v75 = vld [vmem:[#allocation6 + $0x10] sm:$0xff]
      %v76 = vld [vmem:[#allocation6 + $0x18] sm:$0xff]
      %77 = vst [vmem:[#allocation2] sm:$0xff] %v73
      %78 = vst [vmem:[#allocation2 + $0x8] sm:$0xff] %v74
      %79 = vst [vmem:[#allocation2 + $0x10] sm:$0xff] %v75
      %80 = vst [vmem:[#allocation2 + $0x18] sm:$0xff] %v76
    $region37: #{tpu_custom_call.1} parent=1 // pred_fallthru
      _
    %v81 = vld [vmem:[#allocation8] sm:$0xff]
    %v82 = vld [vmem:[#allocation8 + $0x8] sm:$0xff]
    %v83 = vld [vmem:[#allocation8 + $0x10] sm:$0xff]
    %v84 = vld [vmem:[#allocation8 + $0x18] sm:$0xff]
    %v85 = vld [vmem:[#allocation8 + $0x20] sm:$0xff]
    %v86 = vld [vmem:[#allocation8 + $0x28] sm:$0xff]
    %v87 = vld [vmem:[#allocation8 + $0x30] sm:$0xff]
    %v88 = vld [vmem:[#allocation8 + $0x38] sm:$0xff]
    %v89 = vld [vmem:[#allocation8 + $0x40] sm:$0xff]
    %v90 = vld [vmem:[#allocation8 + $0x48] sm:$0xff]
    %v91 = vld [vmem:[#allocation8 + $0x50] sm:$0xff]
    %v92 = vld [vmem:[#allocation8 + $0x58] sm:$0xff]
    %v93 = vld [vmem:[#allocation8 + $0x60] sm:$0xff]
    %v94 = vld [vmem:[#allocation8 + $0x68] sm:$0xff]
    %v95 = vld [vmem:[#allocation8 + $0x70] sm:$0xff]
    %v96 = vld [vmem:[#allocation8 + $0x78] sm:$0xff]
    %v97 = vld [vmem:[#allocation8 + $0x80] sm:$0xff]
    %v98 = vld [vmem:[#allocation8 + $0x88] sm:$0xff]
    %v99 = vld [vmem:[#allocation8 + $0x90] sm:$0xff]
    %v100 = vld [vmem:[#allocation8 + $0x98] sm:$0xff]
    %v101 = vld [vmem:[#allocation8 + $0xa0] sm:$0xff]
    %v102 = vld [vmem:[#allocation8 + $0xa8] sm:$0xff]
    %v103 = vld [vmem:[#allocation8 + $0xb0] sm:$0xff]
    %v104 = vld [vmem:[#allocation8 + $0xb8] sm:$0xff]
    %v105 = vld [vmem:[#allocation8 + $0xc0] sm:$0xff]
    %v106 = vld [vmem:[#allocation8 + $0xc8] sm:$0xff]
    %v107 = vld [vmem:[#allocation8 + $0xd0] sm:$0xff]
    %v108 = vld [vmem:[#allocation8 + $0xd8] sm:$0xff]
    %v109 = vld [vmem:[#allocation8 + $0xe0] sm:$0xff]
    %v110 = vld [vmem:[#allocation8 + $0xe8] sm:$0xff]
    %v111 = vld [vmem:[#allocation8 + $0xf0] sm:$0xff]
    %v112 = vld [vmem:[#allocation8 + $0xf8] sm:$0xff]
    %v113 = vld [vmem:[#allocation8 + $0x100] sm:$0xff]
    %v114 = vld [vmem:[#allocation8 + $0x108] sm:$0xff]
    %v115 = vld [vmem:[#allocation8 + $0x110] sm:$0xff]
    %v116 = vld [vmem:[#allocation8 + $0x118] sm:$0xff]
    %v117 = vld [vmem:[#allocation8 + $0x120] sm:$0xff]
    %v118 = vld [vmem:[#allocation8 + $0x128] sm:$0xff]
    %v119 = vld [vmem:[#allocation8 + $0x130] sm:$0xff]
    %v120 = vld [vmem:[#allocation8 + $0x138] sm:$0xff]
    %v121 = vld [vmem:[#allocation8 + $0x140] sm:$0xff]
    %v122 = vld [vmem:[#allocation8 + $0x148] sm:$0xff]
    %v123 = vld [vmem:[#allocation8 + $0x150] sm:$0xff]
    %v124 = vld [vmem:[#allocation8 + $0x158] sm:$0xff]
    %v125 = vld [vmem:[#allocation8 + $0x160] sm:$0xff]
    %v126 = vld [vmem:[#allocation8 + $0x168] sm:$0xff]
    %v127 = vld [vmem:[#allocation8 + $0x170] sm:$0xff]
    %v128 = vld [vmem:[#allocation8 + $0x178] sm:$0xff]
    %v129 = vld [vmem:[#allocation8 + $0x180] sm:$0xff]
    %v130 = vld [vmem:[#allocation8 + $0x188] sm:$0xff]
    %v131 = vld [vmem:[#allocation8 + $0x190] sm:$0xff]
    %v132 = vld [vmem:[#allocation8 + $0x198] sm:$0xff]
    %v133 = vld [vmem:[#allocation8 + $0x1a0] sm:$0xff]
    %v134 = vld [vmem:[#allocation8 + $0x1a8] sm:$0xff]
    %v135 = vld [vmem:[#allocation8 + $0x1b0] sm:$0xff]
    %v136 = vld [vmem:[#allocation8 + $0x1b8] sm:$0xff]
    %v137 = vld [vmem:[#allocation8 + $0x1c0] sm:$0xff]
    %v138 = vld [vmem:[#allocation8 + $0x1c8] sm:$0xff]
    %v139 = vld [vmem:[#allocation8 + $0x1d0] sm:$0xff]
    %v140 = vld [vmem:[#allocation8 + $0x1d8] sm:$0xff]
    %v141 = vld [vmem:[#allocation8 + $0x1e0] sm:$0xff]
    %v142 = vld [vmem:[#allocation8 + $0x1e8] sm:$0xff]
    %v143 = vld [vmem:[#allocation8 + $0x1f0] sm:$0xff]
    %v144 = vld [vmem:[#allocation8 + $0x1f8] sm:$0xff]
    %v145 = vld [vmem:[#allocation8 + $0x200] sm:$0xff]
    %v146 = vld [vmem:[#allocation8 + $0x208] sm:$0xff]
    %v147 = vld [vmem:[#allocation8 + $0x210] sm:$0xff]
    %v148 = vld [vmem:[#allocation8 + $0x218] sm:$0xff]
    %v149 = vld [vmem:[#allocation8 + $0x220] sm:$0xff]
    %v150 = vld [vmem:[#allocation8 + $0x228] sm:$0xff]
    %v151 = vld [vmem:[#allocation8 + $0x230] sm:$0xff]
    %v152 = vld [vmem:[#allocation8 + $0x238] sm:$0xff]
    %v153 = vld [vmem:[#allocation8 + $0x240] sm:$0xff]
    %v154 = vld [vmem:[#allocation8 + $0x248] sm:$0xff]
    %v155 = vld [vmem:[#allocation8 + $0x250] sm:$0xff]
    %v156 = vld [vmem:[#allocation8 + $0x258] sm:$0xff]
    %v157 = vld [vmem:[#allocation8 + $0x260] sm:$0xff]
    %v158 = vld [vmem:[#allocation8 + $0x268] sm:$0xff]
    %v159 = vld [vmem:[#allocation8 + $0x270] sm:$0xff]
    %v160 = vld [vmem:[#allocation8 + $0x278] sm:$0xff]
    %v161 = vld [vmem:[#allocation8 + $0x280] sm:$0xff]
    %v162 = vld [vmem:[#allocation8 + $0x288] sm:$0xff]
    %v163 = vld [vmem:[#allocation8 + $0x290] sm:$0xff]
    %v164 = vld [vmem:[#allocation8 + $0x298] sm:$0xff]
    %v165 = vld [vmem:[#allocation8 + $0x2a0] sm:$0xff]
    %v166 = vld [vmem:[#allocation8 + $0x2a8] sm:$0xff]
    %v167 = vld [vmem:[#allocation8 + $0x2b0] sm:$0xff]
    %v168 = vld [vmem:[#allocation8 + $0x2b8] sm:$0xff]
    %v169 = vld [vmem:[#allocation8 + $0x2c0] sm:$0xff]
    %v170 = vld [vmem:[#allocation8 + $0x2c8] sm:$0xff]
    %v171 = vld [vmem:[#allocation8 + $0x2d0] sm:$0xff]
    %v172 = vld [vmem:[#allocation8 + $0x2d8] sm:$0xff]
    %v173 = vld [vmem:[#allocation8 + $0x2e0] sm:$0xff]
    %v174 = vld [vmem:[#allocation8 + $0x2e8] sm:$0xff]
    %v175 = vld [vmem:[#allocation8 + $0x2f0] sm:$0xff]
    %v176 = vld [vmem:[#allocation8 + $0x2f8] sm:$0xff]
    %v177 = vld [vmem:[#allocation8 + $0x300] sm:$0xff]
    %v178 = vld [vmem:[#allocation8 + $0x308] sm:$0xff]
    %v179 = vld [vmem:[#allocation8 + $0x310] sm:$0xff]
    %v180 = vld [vmem:[#allocation8 + $0x318] sm:$0xff]
    %v181 = vld [vmem:[#allocation8 + $0x320] sm:$0xff]
    %v182 = vld [vmem:[#allocation8 + $0x328] sm:$0xff]
    %v183 = vld [vmem:[#allocation8 + $0x330] sm:$0xff]
    %v184 = vld [vmem:[#allocation8 + $0x338] sm:$0xff]
    %v185 = vld [vmem:[#allocation8 + $0x340] sm:$0xff]
    %v186 = vld [vmem:[#allocation8 + $0x348] sm:$0xff]
    %v187 = vld [vmem:[#allocation8 + $0x350] sm:$0xff]
    %v188 = vld [vmem:[#allocation8 + $0x358] sm:$0xff]
    %v189 = vld [vmem:[#allocation8 + $0x360] sm:$0xff]
    %v190 = vld [vmem:[#allocation8 + $0x368] sm:$0xff]
    %v191 = vld [vmem:[#allocation8 + $0x370] sm:$0xff]
    %v192 = vld [vmem:[#allocation8 + $0x378] sm:$0xff]
    %v193 = vld [vmem:[#allocation8 + $0x380] sm:$0xff]
    %v194 = vld [vmem:[#allocation8 + $0x388] sm:$0xff]
    %v195 = vld [vmem:[#allocation8 + $0x390] sm:$0xff]
    %v196 = vld [vmem:[#allocation8 + $0x398] sm:$0xff]
    %v197 = vld [vmem:[#allocation8 + $0x3a0] sm:$0xff]
    %v198 = vld [vmem:[#allocation8 + $0x3a8] sm:$0xff]
    %v199 = vld [vmem:[#allocation8 + $0x3b0] sm:$0xff]
    %v200 = vld [vmem:[#allocation8 + $0x3b8] sm:$0xff]
    %v201 = vld [vmem:[#allocation8 + $0x3c0] sm:$0xff]
    %v202 = vld [vmem:[#allocation8 + $0x3c8] sm:$0xff]
    %v203 = vld [vmem:[#allocation8 + $0x3d0] sm:$0xff]
    %v204 = vld [vmem:[#allocation8 + $0x3d8] sm:$0xff]
    %v205 = vld [vmem:[#allocation8 + $0x3e0] sm:$0xff]
    %v206 = vld [vmem:[#allocation8 + $0x3e8] sm:$0xff]
    %v207 = vld [vmem:[#allocation8 + $0x3f0] sm:$0xff]
    %v208 = vld [vmem:[#allocation8 + $0x3f8] sm:$0xff]
    %v209 = vld [vmem:[#allocation8 + $0x400] sm:$0xff]
    %v210 = vld [vmem:[#allocation8 + $0x408] sm:$0xff]
    %v211 = vld [vmem:[#allocation8 + $0x410] sm:$0xff]
    %v212 = vld [vmem:[#allocation8 + $0x418] sm:$0xff]
    %v213 = vld [vmem:[#allocation8 + $0x420] sm:$0xff]
    %v214 = vld [vmem:[#allocation8 + $0x428] sm:$0xff]
    %v215 = vld [vmem:[#allocation8 + $0x430] sm:$0xff]
    %v216 = vld [vmem:[#allocation8 + $0x438] sm:$0xff]
    %v217 = vld [vmem:[#allocation8 + $0x440] sm:$0xff]
    %v218 = vld [vmem:[#allocation8 + $0x448] sm:$0xff]
    %v219 = vld [vmem:[#allocation8 + $0x450] sm:$0xff]
    %v220 = vld [vmem:[#allocation8 + $0x458] sm:$0xff]
    %v221 = vld [vmem:[#allocation8 + $0x460] sm:$0xff]
    %v222 = vld [vmem:[#allocation8 + $0x468] sm:$0xff]
    %v223 = vld [vmem:[#allocation8 + $0x470] sm:$0xff]
    %v224 = vld [vmem:[#allocation8 + $0x478] sm:$0xff]
    %v225 = vld [vmem:[#allocation8 + $0x480] sm:$0xff]
    %v226 = vld [vmem:[#allocation8 + $0x488] sm:$0xff]
    %v227 = vld [vmem:[#allocation8 + $0x490] sm:$0xff]
    %v228 = vld [vmem:[#allocation8 + $0x498] sm:$0xff]
    %v229 = vld [vmem:[#allocation8 + $0x4a0] sm:$0xff]
    %v230 = vld [vmem:[#allocation8 + $0x4a8] sm:$0xff]
    %v231 = vld [vmem:[#allocation8 + $0x4b0] sm:$0xff]
    %v232 = vld [vmem:[#allocation8 + $0x4b8] sm:$0xff]
    %v233 = vld [vmem:[#allocation8 + $0x4c0] sm:$0xff]
    %v234 = vld [vmem:[#allocation8 + $0x4c8] sm:$0xff]
    %v235 = vld [vmem:[#allocation8 + $0x4d0] sm:$0xff]
    %v236 = vld [vmem:[#allocation8 + $0x4d8] sm:$0xff]
    %v237 = vld [vmem:[#allocation8 + $0x4e0] sm:$0xff]
    %v238 = vld [vmem:[#allocation8 + $0x4e8] sm:$0xff]
    %v239 = vld [vmem:[#allocation8 + $0x4f0] sm:$0xff]
    %v240 = vld [vmem:[#allocation8 + $0x4f8] sm:$0xff]
    %v241 = vld [vmem:[#allocation8 + $0x500] sm:$0xff]
    %v242 = vld [vmem:[#allocation8 + $0x508] sm:$0xff]
    %v243 = vld [vmem:[#allocation8 + $0x510] sm:$0xff]
    %v244 = vld [vmem:[#allocation8 + $0x518] sm:$0xff]
    %v245 = vld [vmem:[#allocation8 + $0x520] sm:$0xff]
    %v246 = vld [vmem:[#allocation8 + $0x528] sm:$0xff]
    %v247 = vld [vmem:[#allocation8 + $0x530] sm:$0xff]
    %v248 = vld [vmem:[#allocation8 + $0x538] sm:$0xff]
    %v249 = vld [vmem:[#allocation8 + $0x540] sm:$0xff]
    %v250 = vld [vmem:[#allocation8 + $0x548] sm:$0xff]
    %v251 = vld [vmem:[#allocation8 + $0x550] sm:$0xff]
    %v252 = vld [vmem:[#allocation8 + $0x558] sm:$0xff]
    %v253 = vld [vmem:[#allocation8 + $0x560] sm:$0xff]
    %v254 = vld [vmem:[#allocation8 + $0x568] sm:$0xff]
    %v255 = vld [vmem:[#allocation8 + $0x570] sm:$0xff]
    %v256 = vld [vmem:[#allocation8 + $0x578] sm:$0xff]
    %v257 = vld [vmem:[#allocation8 + $0x580] sm:$0xff]
    %v258 = vld [vmem:[#allocation8 + $0x588] sm:$0xff]
    %v259 = vld [vmem:[#allocation8 + $0x590] sm:$0xff]
    %v260 = vld [vmem:[#allocation8 + $0x598] sm:$0xff]
    %v261 = vld [vmem:[#allocation8 + $0x5a0] sm:$0xff]
    %v262 = vld [vmem:[#allocation8 + $0x5a8] sm:$0xff]
    %v263 = vld [vmem:[#allocation8 + $0x5b0] sm:$0xff]
    %v264 = vld [vmem:[#allocation8 + $0x5b8] sm:$0xff]
    %v265 = vld [vmem:[#allocation8 + $0x5c0] sm:$0xff]
    %v266 = vld [vmem:[#allocation8 + $0x5c8] sm:$0xff]
    %v267 = vld [vmem:[#allocation8 + $0x5d0] sm:$0xff]
    %v268 = vld [vmem:[#allocation8 + $0x5d8] sm:$0xff]
    %v269 = vld [vmem:[#allocation8 + $0x5e0] sm:$0xff]
    %v270 = vld [vmem:[#allocation8 + $0x5e8] sm:$0xff]
    %v271 = vld [vmem:[#allocation8 + $0x5f0] sm:$0xff]
    %v272 = vld [vmem:[#allocation8 + $0x5f8] sm:$0xff]
    %v273 = vld [vmem:[#allocation8 + $0x600] sm:$0xff]
    %v274 = vld [vmem:[#allocation8 + $0x608] sm:$0xff]
    %v275 = vld [vmem:[#allocation8 + $0x610] sm:$0xff]
    %v276 = vld [vmem:[#allocation8 + $0x618] sm:$0xff]
    %v277 = vld [vmem:[#allocation8 + $0x620] sm:$0xff]
    %v278 = vld [vmem:[#allocation8 + $0x628] sm:$0xff]
    %v279 = vld [vmem:[#allocation8 + $0x630] sm:$0xff]
    %v280 = vld [vmem:[#allocation8 + $0x638] sm:$0xff]
    %v281 = vld [vmem:[#allocation8 + $0x640] sm:$0xff]
    %v282 = vld [vmem:[#allocation8 + $0x648] sm:$0xff]
    %v283 = vld [vmem:[#allocation8 + $0x650] sm:$0xff]
    %v284 = vld [vmem:[#allocation8 + $0x658] sm:$0xff]
    %v285 = vld [vmem:[#allocation8 + $0x660] sm:$0xff]
    %v286 = vld [vmem:[#allocation8 + $0x668] sm:$0xff]
    %v287 = vld [vmem:[#allocation8 + $0x670] sm:$0xff]
    %v288 = vld [vmem:[#allocation8 + $0x678] sm:$0xff]
    %v289 = vld [vmem:[#allocation8 + $0x680] sm:$0xff]
    %v290 = vld [vmem:[#allocation8 + $0x688] sm:$0xff]
    %v291 = vld [vmem:[#allocation8 + $0x690] sm:$0xff]
    %v292 = vld [vmem:[#allocation8 + $0x698] sm:$0xff]
    %v293 = vld [vmem:[#allocation8 + $0x6a0] sm:$0xff]
    %v294 = vld [vmem:[#allocation8 + $0x6a8] sm:$0xff]
    %v295 = vld [vmem:[#allocation8 + $0x6b0] sm:$0xff]
    %v296 = vld [vmem:[#allocation8 + $0x6b8] sm:$0xff]
    %v297 = vld [vmem:[#allocation8 + $0x6c0] sm:$0xff]
    %v298 = vld [vmem:[#allocation8 + $0x6c8] sm:$0xff]
    %v299 = vld [vmem:[#allocation8 + $0x6d0] sm:$0xff]
    %v300 = vld [vmem:[#allocation8 + $0x6d8] sm:$0xff]
    %v301 = vld [vmem:[#allocation8 + $0x6e0] sm:$0xff]
    %v302 = vld [vmem:[#allocation8 + $0x6e8] sm:$0xff]
    %v303 = vld [vmem:[#allocation8 + $0x6f0] sm:$0xff]
    %v304 = vld [vmem:[#allocation8 + $0x6f8] sm:$0xff]
    %v305 = vld [vmem:[#allocation8 + $0x700] sm:$0xff]
    %v306 = vld [vmem:[#allocation8 + $0x708] sm:$0xff]
    %v307 = vld [vmem:[#allocation8 + $0x710] sm:$0xff]
    %v308 = vld [vmem:[#allocation8 + $0x718] sm:$0xff]
    %v309 = vld [vmem:[#allocation8 + $0x720] sm:$0xff]
    %v310 = vld [vmem:[#allocation8 + $0x728] sm:$0xff]
    %v311 = vld [vmem:[#allocation8 + $0x730] sm:$0xff]
    %v312 = vld [vmem:[#allocation8 + $0x738] sm:$0xff]
    %v313 = vld [vmem:[#allocation8 + $0x740] sm:$0xff]
    %v314 = vld [vmem:[#allocation8 + $0x748] sm:$0xff]
    %v315 = vld [vmem:[#allocation8 + $0x750] sm:$0xff]
    %v316 = vld [vmem:[#allocation8 + $0x758] sm:$0xff]
    %v317 = vld [vmem:[#allocation8 + $0x760] sm:$0xff]
    %v318 = vld [vmem:[#allocation8 + $0x768] sm:$0xff]
    %v319 = vld [vmem:[#allocation8 + $0x770] sm:$0xff]
    %v320 = vld [vmem:[#allocation8 + $0x778] sm:$0xff]
    %v321 = vld [vmem:[#allocation8 + $0x780] sm:$0xff]
    %v322 = vld [vmem:[#allocation8 + $0x788] sm:$0xff]
    %v323 = vld [vmem:[#allocation8 + $0x790] sm:$0xff]
    %v324 = vld [vmem:[#allocation8 + $0x798] sm:$0xff]
    %v325 = vld [vmem:[#allocation8 + $0x7a0] sm:$0xff]
    %v326 = vld [vmem:[#allocation8 + $0x7a8] sm:$0xff]
    %v327 = vld [vmem:[#allocation8 + $0x7b0] sm:$0xff]
    %v328 = vld [vmem:[#allocation8 + $0x7b8] sm:$0xff]
    %v329 = vld [vmem:[#allocation8 + $0x7c0] sm:$0xff]
    %v330 = vld [vmem:[#allocation8 + $0x7c8] sm:$0xff]
    %v331 = vld [vmem:[#allocation8 + $0x7d0] sm:$0xff]
    %v332 = vld [vmem:[#allocation8 + $0x7d8] sm:$0xff]
    %v333 = vld [vmem:[#allocation8 + $0x7e0] sm:$0xff]
    %v334 = vld [vmem:[#allocation8 + $0x7e8] sm:$0xff]
    %v335 = vld [vmem:[#allocation8 + $0x7f0] sm:$0xff]
    %v336 = vld [vmem:[#allocation8 + $0x7f8] sm:$0xff]
    %v337 = vld [vmem:[#allocation8 + $0x800] sm:$0xff]
    %v338 = vld [vmem:[#allocation8 + $0x808] sm:$0xff]
    %v339 = vld [vmem:[#allocation8 + $0x810] sm:$0xff]
    %v340 = vld [vmem:[#allocation8 + $0x818] sm:$0xff]
    %v341 = vld [vmem:[#allocation8 + $0x820] sm:$0xff]
    %v342 = vld [vmem:[#allocation8 + $0x828] sm:$0xff]
    %v343 = vld [vmem:[#allocation8 + $0x830] sm:$0xff]
    %v344 = vld [vmem:[#allocation8 + $0x838] sm:$0xff]
    %v345 = vld [vmem:[#allocation8 + $0x840] sm:$0xff]
    %v346 = vld [vmem:[#allocation8 + $0x848] sm:$0xff]
    %v347 = vld [vmem:[#allocation8 + $0x850] sm:$0xff]
    %v348 = vld [vmem:[#allocation8 + $0x858] sm:$0xff]
    %v349 = vld [vmem:[#allocation8 + $0x860] sm:$0xff]
    %v350 = vld [vmem:[#allocation8 + $0x868] sm:$0xff]
    %v351 = vld [vmem:[#allocation8 + $0x870] sm:$0xff]
    %v352 = vld [vmem:[#allocation8 + $0x878] sm:$0xff]
    %v353 = vld [vmem:[#allocation8 + $0x880] sm:$0xff]
    %v354 = vld [vmem:[#allocation8 + $0x888] sm:$0xff]
    %v355 = vld [vmem:[#allocation8 + $0x890] sm:$0xff]
    %v356 = vld [vmem:[#allocation8 + $0x898] sm:$0xff]
    %v357 = vld [vmem:[#allocation8 + $0x8a0] sm:$0xff]
    %v358 = vld [vmem:[#allocation8 + $0x8a8] sm:$0xff]
    %v359 = vld [vmem:[#allocation8 + $0x8b0] sm:$0xff]
    %v360 = vld [vmem:[#allocation8 + $0x8b8] sm:$0xff]
    %v361 = vld [vmem:[#allocation8 + $0x8c0] sm:$0xff]
    %v362 = vld [vmem:[#allocation8 + $0x8c8] sm:$0xff]
    %v363 = vld [vmem:[#allocation8 + $0x8d0] sm:$0xff]
    %v364 = vld [vmem:[#allocation8 + $0x8d8] sm:$0xff]
    %v365 = vld [vmem:[#allocation8 + $0x8e0] sm:$0xff]
    %v366 = vld [vmem:[#allocation8 + $0x8e8] sm:$0xff]
    %v367 = vld [vmem:[#allocation8 + $0x8f0] sm:$0xff]
    %v368 = vld [vmem:[#allocation8 + $0x8f8] sm:$0xff]
    %v369 = vld [vmem:[#allocation8 + $0x900] sm:$0xff]
    %v370 = vld [vmem:[#allocation8 + $0x908] sm:$0xff]
    %v371 = vld [vmem:[#allocation8 + $0x910] sm:$0xff]
    %v372 = vld [vmem:[#allocation8 + $0x918] sm:$0xff]
    %v373 = vld [vmem:[#allocation8 + $0x920] sm:$0xff]
    %v374 = vld [vmem:[#allocation8 + $0x928] sm:$0xff]
    %v375 = vld [vmem:[#allocation8 + $0x930] sm:$0xff]
    %v376 = vld [vmem:[#allocation8 + $0x938] sm:$0xff]
    %v377 = vld [vmem:[#allocation8 + $0x940] sm:$0xff]
    %v378 = vld [vmem:[#allocation8 + $0x948] sm:$0xff]
    %v379 = vld [vmem:[#allocation8 + $0x950] sm:$0xff]
    %v380 = vld [vmem:[#allocation8 + $0x958] sm:$0xff]
    %v381 = vld [vmem:[#allocation8 + $0x960] sm:$0xff]
    %v382 = vld [vmem:[#allocation8 + $0x968] sm:$0xff]
    %v383 = vld [vmem:[#allocation8 + $0x970] sm:$0xff]
    %v384 = vld [vmem:[#allocation8 + $0x978] sm:$0xff]
    %v385 = vld [vmem:[#allocation8 + $0x980] sm:$0xff]
    %v386 = vld [vmem:[#allocation8 + $0x988] sm:$0xff]
    %v387 = vld [vmem:[#allocation8 + $0x990] sm:$0xff]
    %v388 = vld [vmem:[#allocation8 + $0x998] sm:$0xff]
    %v389 = vld [vmem:[#allocation8 + $0x9a0] sm:$0xff]
    %v390 = vld [vmem:[#allocation8 + $0x9a8] sm:$0xff]
    %v391 = vld [vmem:[#allocation8 + $0x9b0] sm:$0xff]
    %v392 = vld [vmem:[#allocation8 + $0x9b8] sm:$0xff]
    %v393 = vld [vmem:[#allocation8 + $0x9c0] sm:$0xff]
    %v394 = vld [vmem:[#allocation8 + $0x9c8] sm:$0xff]
    %v395 = vld [vmem:[#allocation8 + $0x9d0] sm:$0xff]
    %v396 = vld [vmem:[#allocation8 + $0x9d8] sm:$0xff]
    %v397 = vld [vmem:[#allocation8 + $0x9e0] sm:$0xff]
    %v398 = vld [vmem:[#allocation8 + $0x9e8] sm:$0xff]
    %v399 = vld [vmem:[#allocation8 + $0x9f0] sm:$0xff]
    %v400 = vld [vmem:[#allocation8 + $0x9f8] sm:$0xff]
    %v401 = vld [vmem:[#allocation8 + $0xa00] sm:$0xff]
    %v402 = vld [vmem:[#allocation8 + $0xa08] sm:$0xff]
    %v403 = vld [vmem:[#allocation8 + $0xa10] sm:$0xff]
    %v404 = vld [vmem:[#allocation8 + $0xa18] sm:$0xff]
    %v405 = vld [vmem:[#allocation8 + $0xa20] sm:$0xff]
    %v406 = vld [vmem:[#allocation8 + $0xa28] sm:$0xff]
    %v407 = vld [vmem:[#allocation8 + $0xa30] sm:$0xff]
    %v408 = vld [vmem:[#allocation8 + $0xa38] sm:$0xff]
    %v409 = vld [vmem:[#allocation8 + $0xa40] sm:$0xff]
    %v410 = vld [vmem:[#allocation8 + $0xa48] sm:$0xff]
    %v411 = vld [vmem:[#allocation8 + $0xa50] sm:$0xff]
    %v412 = vld [vmem:[#allocation8 + $0xa58] sm:$0xff]
    %v413 = vld [vmem:[#allocation8 + $0xa60] sm:$0xff]
    %v414 = vld [vmem:[#allocation8 + $0xa68] sm:$0xff]
    %v415 = vld [vmem:[#allocation8 + $0xa70] sm:$0xff]
    %v416 = vld [vmem:[#allocation8 + $0xa78] sm:$0xff]
    %v417 = vld [vmem:[#allocation8 + $0xa80] sm:$0xff]
    %v418 = vld [vmem:[#allocation8 + $0xa88] sm:$0xff]
    %v419 = vld [vmem:[#allocation8 + $0xa90] sm:$0xff]
    %v420 = vld [vmem:[#allocation8 + $0xa98] sm:$0xff]
    %v421 = vld [vmem:[#allocation8 + $0xaa0] sm:$0xff]
    %v422 = vld [vmem:[#allocation8 + $0xaa8] sm:$0xff]
    %v423 = vld [vmem:[#allocation8 + $0xab0] sm:$0xff]
    %v424 = vld [vmem:[#allocation8 + $0xab8] sm:$0xff]
    %v425 = vld [vmem:[#allocation8 + $0xac0] sm:$0xff]
    %v426 = vld [vmem:[#allocation8 + $0xac8] sm:$0xff]
    %v427 = vld [vmem:[#allocation8 + $0xad0] sm:$0xff]
    %v428 = vld [vmem:[#allocation8 + $0xad8] sm:$0xff]
    %v429 = vld [vmem:[#allocation8 + $0xae0] sm:$0xff]
    %v430 = vld [vmem:[#allocation8 + $0xae8] sm:$0xff]
    %v431 = vld [vmem:[#allocation8 + $0xaf0] sm:$0xff]
    %v432 = vld [vmem:[#allocation8 + $0xaf8] sm:$0xff]
    %v433 = vld [vmem:[#allocation8 + $0xb00] sm:$0xff]
    %v434 = vld [vmem:[#allocation8 + $0xb08] sm:$0xff]
    %v435 = vld [vmem:[#allocation8 + $0xb10] sm:$0xff]
    %v436 = vld [vmem:[#allocation8 + $0xb18] sm:$0xff]
    %v437 = vld [vmem:[#allocation8 + $0xb20] sm:$0xff]
    %v438 = vld [vmem:[#allocation8 + $0xb28] sm:$0xff]
    %v439 = vld [vmem:[#allocation8 + $0xb30] sm:$0xff]
    %v440 = vld [vmem:[#allocation8 + $0xb38] sm:$0xff]
    %v441 = vld [vmem:[#allocation8 + $0xb40] sm:$0xff]
    %v442 = vld [vmem:[#allocation8 + $0xb48] sm:$0xff]
    %v443 = vld [vmem:[#allocation8 + $0xb50] sm:$0xff]
    %v444 = vld [vmem:[#allocation8 + $0xb58] sm:$0xff]
    %v445 = vld [vmem:[#allocation8 + $0xb60] sm:$0xff]
    %v446 = vld [vmem:[#allocation8 + $0xb68] sm:$0xff]
    %v447 = vld [vmem:[#allocation8 + $0xb70] sm:$0xff]
    %v448 = vld [vmem:[#allocation8 + $0xb78] sm:$0xff]
    %v449 = vld [vmem:[#allocation8 + $0xb80] sm:$0xff]
    %v450 = vld [vmem:[#allocation8 + $0xb88] sm:$0xff]
    %v451 = vld [vmem:[#allocation8 + $0xb90] sm:$0xff]
    %v452 = vld [vmem:[#allocation8 + $0xb98] sm:$0xff]
    %v453 = vld [vmem:[#allocation8 + $0xba0] sm:$0xff]
    %v454 = vld [vmem:[#allocation8 + $0xba8] sm:$0xff]
    %v455 = vld [vmem:[#allocation8 + $0xbb0] sm:$0xff]
    %v456 = vld [vmem:[#allocation8 + $0xbb8] sm:$0xff]
    %v457 = vld [vmem:[#allocation8 + $0xbc0] sm:$0xff]
    %v458 = vld [vmem:[#allocation8 + $0xbc8] sm:$0xff]
    %v459 = vld [vmem:[#allocation8 + $0xbd0] sm:$0xff]
    %v460 = vld [vmem:[#allocation8 + $0xbd8] sm:$0xff]
    %v461 = vld [vmem:[#allocation8 + $0xbe0] sm:$0xff]
    %v462 = vld [vmem:[#allocation8 + $0xbe8] sm:$0xff]
    %v463 = vld [vmem:[#allocation8 + $0xbf0] sm:$0xff]
    %v464 = vld [vmem:[#allocation8 + $0xbf8] sm:$0xff]
    %v465 = vld [vmem:[#allocation9] sm:$0xf]
    %v466 = vld [vmem:[#allocation2] sm:$0xff]
    %v467 = vld [vmem:[#allocation2 + $0x8] sm:$0xff]
    %v468 = vld [vmem:[#allocation2 + $0x10] sm:$0xff]
    %v469 = vld [vmem:[#allocation2 + $0x18] sm:$0xff]
    %v470 = vld [vmem:[#allocation3] sm:$0xff]
    %v471 = vld [vmem:[#allocation3 + $0x8] sm:$0xff]
    %v472 = vld [vmem:[#allocation3 + $0x10] sm:$0xff]
    %v473 = vld [vmem:[#allocation3 + $0x18] sm:$0xff]
    %v474 = vld [vmem:[#allocation3 + $0x20] sm:$0xff]
    %v475 = vld [vmem:[#allocation3 + $0x28] sm:$0xff]
    %v476 = vld [vmem:[#allocation3 + $0x30] sm:$0xff]
    %v477 = vld [vmem:[#allocation3 + $0x38] sm:$0xff]
    %v478 = vld [vmem:[#allocation3 + $0x40] sm:$0xff]
    %v479 = vld [vmem:[#allocation3 + $0x48] sm:$0xff]
    %v480 = vld [vmem:[#allocation3 + $0x50] sm:$0xff]
    %v481 = vld [vmem:[#allocation3 + $0x58] sm:$0xff]
    %v482 = vpack.c.bf16 %v466, %v466
    %v483 = vpack.c.bf16 %v467, %v467
    %v484 = vpack.c.bf16 %v468, %v468
    %v485 = vpack.c.bf16 %v469, %v469
    %v870 = vunpack.c.l.b16 %v81
    %v871 = vunpack.c.h.b16 %v81
    %v872 = vunpack.c.l.b16 %v82
    %v873 = vunpack.c.h.b16 %v82
    %v874 = vunpack.c.l.b16 %v83
    %v875 = vunpack.c.h.b16 %v83
    %v876 = vunpack.c.l.b16 %v84
    %v877 = vunpack.c.h.b16 %v84
    %v878 = vunpack.c.l.b16 %v85
    %v879 = vunpack.c.h.b16 %v85
    %v880 = vunpack.c.l.b16 %v86
    %v881 = vunpack.c.h.b16 %v86
    %v882 = vunpack.c.l.b16 %v87
    %v883 = vunpack.c.h.b16 %v87
    %v884 = vunpack.c.l.b16 %v88
    %v885 = vunpack.c.h.b16 %v88
    %v886 = vunpack.c.l.b16 %v89
    %v887 = vunpack.c.h.b16 %v89
    %v888 = vunpack.c.l.b16 %v90
    %v889 = vunpack.c.h.b16 %v90
    %v890 = vunpack.c.l.b16 %v91
    %v891 = vunpack.c.h.b16 %v91
    %v892 = vunpack.c.l.b16 %v92
    %v893 = vunpack.c.h.b16 %v92
    %v894 = vunpack.c.l.b16 %v93
    %v895 = vunpack.c.h.b16 %v93
    %v896 = vunpack.c.l.b16 %v94
    %v897 = vunpack.c.h.b16 %v94
    %v898 = vunpack.c.l.b16 %v95
    %v899 = vunpack.c.h.b16 %v95
    %v900 = vunpack.c.l.b16 %v96
    %v901 = vunpack.c.h.b16 %v96
    %v902 = vunpack.c.l.b16 %v97
    %v903 = vunpack.c.h.b16 %v97
    %v904 = vunpack.c.l.b16 %v98
    %v905 = vunpack.c.h.b16 %v98
    %v906 = vunpack.c.l.b16 %v99
    %v907 = vunpack.c.h.b16 %v99
    %v908 = vunpack.c.l.b16 %v100
    %v909 = vunpack.c.h.b16 %v100
    %v910 = vunpack.c.l.b16 %v101
    %v911 = vunpack.c.h.b16 %v101
    %v912 = vunpack.c.l.b16 %v102
    %v913 = vunpack.c.h.b16 %v102
    %v914 = vunpack.c.l.b16 %v103
    %v915 = vunpack.c.h.b16 %v103
    %v916 = vunpack.c.l.b16 %v104
    %v917 = vunpack.c.h.b16 %v104
    %v918 = vunpack.c.l.b16 %v105
    %v919 = vunpack.c.h.b16 %v105
    %v920 = vunpack.c.l.b16 %v106
    %v921 = vunpack.c.h.b16 %v106
    %v922 = vunpack.c.l.b16 %v107
    %v923 = vunpack.c.h.b16 %v107
    %v924 = vunpack.c.l.b16 %v108
    %v925 = vunpack.c.h.b16 %v108
    %v926 = vunpack.c.l.b16 %v109
    %v927 = vunpack.c.h.b16 %v109
    %v928 = vunpack.c.l.b16 %v110
    %v929 = vunpack.c.h.b16 %v110
    %v930 = vunpack.c.l.b16 %v111
    %v931 = vunpack.c.h.b16 %v111
    %v932 = vunpack.c.l.b16 %v112
    %v933 = vunpack.c.h.b16 %v112
    %v934 = vunpack.c.l.b16 %v113
    %v935 = vunpack.c.h.b16 %v113
    %v936 = vunpack.c.l.b16 %v114
    %v937 = vunpack.c.h.b16 %v114
    %v938 = vunpack.c.l.b16 %v115
    %v939 = vunpack.c.h.b16 %v115
    %v940 = vunpack.c.l.b16 %v116
    %v941 = vunpack.c.h.b16 %v116
    %v942 = vunpack.c.l.b16 %v117
    %v943 = vunpack.c.h.b16 %v117
    %v944 = vunpack.c.l.b16 %v118
    %v945 = vunpack.c.h.b16 %v118
    %v946 = vunpack.c.l.b16 %v119
    %v947 = vunpack.c.h.b16 %v119
    %v948 = vunpack.c.l.b16 %v120
    %v949 = vunpack.c.h.b16 %v120
    %v950 = vunpack.c.l.b16 %v121
    %v951 = vunpack.c.h.b16 %v121
    %v952 = vunpack.c.l.b16 %v122
    %v953 = vunpack.c.h.b16 %v122
    %v954 = vunpack.c.l.b16 %v123
    %v955 = vunpack.c.h.b16 %v123
    %v956 = vunpack.c.l.b16 %v124
    %v957 = vunpack.c.h.b16 %v124
    %v958 = vunpack.c.l.b16 %v125
    %v959 = vunpack.c.h.b16 %v125
    %v960 = vunpack.c.l.b16 %v126
    %v961 = vunpack.c.h.b16 %v126
    %v962 = vunpack.c.l.b16 %v127
    %v963 = vunpack.c.h.b16 %v127
    %v964 = vunpack.c.l.b16 %v128
    %v965 = vunpack.c.h.b16 %v128
    %v966 = vunpack.c.l.b16 %v129
    %v967 = vunpack.c.h.b16 %v129
    %v968 = vunpack.c.l.b16 %v130
    %v969 = vunpack.c.h.b16 %v130
    %v970 = vunpack.c.l.b16 %v131
    %v971 = vunpack.c.h.b16 %v131
    %v972 = vunpack.c.l.b16 %v132
    %v973 = vunpack.c.h.b16 %v132
    %v974 = vunpack.c.l.b16 %v133
    %v975 = vunpack.c.h.b16 %v133
    %v976 = vunpack.c.l.b16 %v134
    %v977 = vunpack.c.h.b16 %v134
    %v978 = vunpack.c.l.b16 %v135
    %v979 = vunpack.c.h.b16 %v135
    %v980 = vunpack.c.l.b16 %v136
    %v981 = vunpack.c.h.b16 %v136
    %v982 = vunpack.c.l.b16 %v137
    %v983 = vunpack.c.h.b16 %v137
    %v984 = vunpack.c.l.b16 %v138
    %v985 = vunpack.c.h.b16 %v138
    %v986 = vunpack.c.l.b16 %v139
    %v987 = vunpack.c.h.b16 %v139
    %v988 = vunpack.c.l.b16 %v140
    %v989 = vunpack.c.h.b16 %v140
    %v990 = vunpack.c.l.b16 %v141
    %v991 = vunpack.c.h.b16 %v141
    %v992 = vunpack.c.l.b16 %v142
    %v993 = vunpack.c.h.b16 %v142
    %v994 = vunpack.c.l.b16 %v143
    %v995 = vunpack.c.h.b16 %v143
    %v996 = vunpack.c.l.b16 %v144
    %v997 = vunpack.c.h.b16 %v144
    %v998 = vunpack.c.l.b16 %v145
    %v999 = vunpack.c.h.b16 %v145
    %v1000 = vunpack.c.l.b16 %v146
    %v1001 = vunpack.c.h.b16 %v146
    %v1002 = vunpack.c.l.b16 %v147
    %v1003 = vunpack.c.h.b16 %v147
    %v1004 = vunpack.c.l.b16 %v148
    %v1005 = vunpack.c.h.b16 %v148
    %v1006 = vunpack.c.l.b16 %v149
    %v1007 = vunpack.c.h.b16 %v149
    %v1008 = vunpack.c.l.b16 %v150
    %v1009 = vunpack.c.h.b16 %v150
    %v1010 = vunpack.c.l.b16 %v151
    %v1011 = vunpack.c.h.b16 %v151
    %v1012 = vunpack.c.l.b16 %v152
    %v1013 = vunpack.c.h.b16 %v152
    %v1014 = vunpack.c.l.b16 %v153
    %v1015 = vunpack.c.h.b16 %v153
    %v1016 = vunpack.c.l.b16 %v154
    %v1017 = vunpack.c.h.b16 %v154
    %v1018 = vunpack.c.l.b16 %v155
    %v1019 = vunpack.c.h.b16 %v155
    %v1020 = vunpack.c.l.b16 %v156
    %v1021 = vunpack.c.h.b16 %v156
    %v1022 = vunpack.c.l.b16 %v157
    %v1023 = vunpack.c.h.b16 %v157
    %v1024 = vunpack.c.l.b16 %v158
    %v1025 = vunpack.c.h.b16 %v158
    %v1026 = vunpack.c.l.b16 %v159
    %v1027 = vunpack.c.h.b16 %v159
    %v1028 = vunpack.c.l.b16 %v160
    %v1029 = vunpack.c.h.b16 %v160
    %v1030 = vunpack.c.l.b16 %v161
    %v1031 = vunpack.c.h.b16 %v161
    %v1032 = vunpack.c.l.b16 %v162
    %v1033 = vunpack.c.h.b16 %v162
    %v1034 = vunpack.c.l.b16 %v163
    %v1035 = vunpack.c.h.b16 %v163
    %v1036 = vunpack.c.l.b16 %v164
    %v1037 = vunpack.c.h.b16 %v164
    %v1038 = vunpack.c.l.b16 %v165
    %v1039 = vunpack.c.h.b16 %v165
    %v1040 = vunpack.c.l.b16 %v166
    %v1041 = vunpack.c.h.b16 %v166
    %v1042 = vunpack.c.l.b16 %v167
    %v1043 = vunpack.c.h.b16 %v167
    %v1044 = vunpack.c.l.b16 %v168
    %v1045 = vunpack.c.h.b16 %v168
    %v1046 = vunpack.c.l.b16 %v169
    %v1047 = vunpack.c.h.b16 %v169
    %v1048 = vunpack.c.l.b16 %v170
    %v1049 = vunpack.c.h.b16 %v170
    %v1050 = vunpack.c.l.b16 %v171
    %v1051 = vunpack.c.h.b16 %v171
    %v1052 = vunpack.c.l.b16 %v172
    %v1053 = vunpack.c.h.b16 %v172
    %v1054 = vunpack.c.l.b16 %v173
    %v1055 = vunpack.c.h.b16 %v173
    %v1056 = vunpack.c.l.b16 %v174
    %v1057 = vunpack.c.h.b16 %v174
    %v1058 = vunpack.c.l.b16 %v175
    %v1059 = vunpack.c.h.b16 %v175
    %v1060 = vunpack.c.l.b16 %v176
    %v1061 = vunpack.c.h.b16 %v176
    %v1062 = vunpack.c.l.b16 %v177
    %v1063 = vunpack.c.h.b16 %v177
    %v1064 = vunpack.c.l.b16 %v178
    %v1065 = vunpack.c.h.b16 %v178
    %v1066 = vunpack.c.l.b16 %v179
    %v1067 = vunpack.c.h.b16 %v179
    %v1068 = vunpack.c.l.b16 %v180
    %v1069 = vunpack.c.h.b16 %v180
    %v1070 = vunpack.c.l.b16 %v181
    %v1071 = vunpack.c.h.b16 %v181
    %v1072 = vunpack.c.l.b16 %v182
    %v1073 = vunpack.c.h.b16 %v182
    %v1074 = vunpack.c.l.b16 %v183
    %v1075 = vunpack.c.h.b16 %v183
    %v1076 = vunpack.c.l.b16 %v184
    %v1077 = vunpack.c.h.b16 %v184
    %v1078 = vunpack.c.l.b16 %v185
    %v1079 = vunpack.c.h.b16 %v185
    %v1080 = vunpack.c.l.b16 %v186
    %v1081 = vunpack.c.h.b16 %v186
    %v1082 = vunpack.c.l.b16 %v187
    %v1083 = vunpack.c.h.b16 %v187
    %v1084 = vunpack.c.l.b16 %v188
    %v1085 = vunpack.c.h.b16 %v188
    %v1086 = vunpack.c.l.b16 %v189
    %v1087 = vunpack.c.h.b16 %v189
    %v1088 = vunpack.c.l.b16 %v190
    %v1089 = vunpack.c.h.b16 %v190
    %v1090 = vunpack.c.l.b16 %v191
    %v1091 = vunpack.c.h.b16 %v191
    %v1092 = vunpack.c.l.b16 %v192
    %v1093 = vunpack.c.h.b16 %v192
    %v1094 = vunpack.c.l.b16 %v193
    %v1095 = vunpack.c.h.b16 %v193
    %v1096 = vunpack.c.l.b16 %v194
    %v1097 = vunpack.c.h.b16 %v194
    %v1098 = vunpack.c.l.b16 %v195
    %v1099 = vunpack.c.h.b16 %v195
    %v1100 = vunpack.c.l.b16 %v196
    %v1101 = vunpack.c.h.b16 %v196
    %v1102 = vunpack.c.l.b16 %v197
    %v1103 = vunpack.c.h.b16 %v197
    %v1104 = vunpack.c.l.b16 %v198
    %v1105 = vunpack.c.h.b16 %v198
    %v1106 = vunpack.c.l.b16 %v199
    %v1107 = vunpack.c.h.b16 %v199
    %v1108 = vunpack.c.l.b16 %v200
    %v1109 = vunpack.c.h.b16 %v200
    %v1110 = vunpack.c.l.b16 %v201
    %v1111 = vunpack.c.h.b16 %v201
    %v1112 = vunpack.c.l.b16 %v202
    %v1113 = vunpack.c.h.b16 %v202
    %v1114 = vunpack.c.l.b16 %v203
    %v1115 = vunpack.c.h.b16 %v203
    %v1116 = vunpack.c.l.b16 %v204
    %v1117 = vunpack.c.h.b16 %v204
    %v1118 = vunpack.c.l.b16 %v205
    %v1119 = vunpack.c.h.b16 %v205
    %v1120 = vunpack.c.l.b16 %v206
    %v1121 = vunpack.c.h.b16 %v206
    %v1122 = vunpack.c.l.b16 %v207
    %v1123 = vunpack.c.h.b16 %v207
    %v1124 = vunpack.c.l.b16 %v208
    %v1125 = vunpack.c.h.b16 %v208
    %v1126 = vunpack.c.l.b16 %v209
    %v1127 = vunpack.c.h.b16 %v209
    %v1128 = vunpack.c.l.b16 %v210
    %v1129 = vunpack.c.h.b16 %v210
    %v1130 = vunpack.c.l.b16 %v211
    %v1131 = vunpack.c.h.b16 %v211
    %v1132 = vunpack.c.l.b16 %v212
    %v1133 = vunpack.c.h.b16 %v212
    %v1134 = vunpack.c.l.b16 %v213
    %v1135 = vunpack.c.h.b16 %v213
    %v1136 = vunpack.c.l.b16 %v214
    %v1137 = vunpack.c.h.b16 %v214
    %v1138 = vunpack.c.l.b16 %v215
    %v1139 = vunpack.c.h.b16 %v215
    %v1140 = vunpack.c.l.b16 %v216
    %v1141 = vunpack.c.h.b16 %v216
    %v1142 = vunpack.c.l.b16 %v217
    %v1143 = vunpack.c.h.b16 %v217
    %v1144 = vunpack.c.l.b16 %v218
    %v1145 = vunpack.c.h.b16 %v218
    %v1146 = vunpack.c.l.b16 %v219
    %v1147 = vunpack.c.h.b16 %v219
    %v1148 = vunpack.c.l.b16 %v220
    %v1149 = vunpack.c.h.b16 %v220
    %v1150 = vunpack.c.l.b16 %v221
    %v1151 = vunpack.c.h.b16 %v221
    %v1152 = vunpack.c.l.b16 %v222
    %v1153 = vunpack.c.h.b16 %v222
    %v1154 = vunpack.c.l.b16 %v223
    %v1155 = vunpack.c.h.b16 %v223
    %v1156 = vunpack.c.l.b16 %v224
    %v1157 = vunpack.c.h.b16 %v224
    %v1158 = vunpack.c.l.b16 %v225
    %v1159 = vunpack.c.h.b16 %v225
    %v1160 = vunpack.c.l.b16 %v226
    %v1161 = vunpack.c.h.b16 %v226
    %v1162 = vunpack.c.l.b16 %v227
    %v1163 = vunpack.c.h.b16 %v227
    %v1164 = vunpack.c.l.b16 %v228
    %v1165 = vunpack.c.h.b16 %v228
    %v1166 = vunpack.c.l.b16 %v229
    %v1167 = vunpack.c.h.b16 %v229
    %v1168 = vunpack.c.l.b16 %v230
    %v1169 = vunpack.c.h.b16 %v230
    %v1170 = vunpack.c.l.b16 %v231
    %v1171 = vunpack.c.h.b16 %v231
    %v1172 = vunpack.c.l.b16 %v232
    %v1173 = vunpack.c.h.b16 %v232
    %v1174 = vunpack.c.l.b16 %v233
    %v1175 = vunpack.c.h.b16 %v233
    %v1176 = vunpack.c.l.b16 %v234
    %v1177 = vunpack.c.h.b16 %v234
    %v1178 = vunpack.c.l.b16 %v235
    %v1179 = vunpack.c.h.b16 %v235
    %v1180 = vunpack.c.l.b16 %v236
    %v1181 = vunpack.c.h.b16 %v236
    %v1182 = vunpack.c.l.b16 %v237
    %v1183 = vunpack.c.h.b16 %v237
    %v1184 = vunpack.c.l.b16 %v238
    %v1185 = vunpack.c.h.b16 %v238
    %v1186 = vunpack.c.l.b16 %v239
    %v1187 = vunpack.c.h.b16 %v239
    %v1188 = vunpack.c.l.b16 %v240
    %v1189 = vunpack.c.h.b16 %v240
    %v1190 = vunpack.c.l.b16 %v241
    %v1191 = vunpack.c.h.b16 %v241
    %v1192 = vunpack.c.l.b16 %v242
    %v1193 = vunpack.c.h.b16 %v242
    %v1194 = vunpack.c.l.b16 %v243
    %v1195 = vunpack.c.h.b16 %v243
    %v1196 = vunpack.c.l.b16 %v244
    %v1197 = vunpack.c.h.b16 %v244
    %v1198 = vunpack.c.l.b16 %v245
    %v1199 = vunpack.c.h.b16 %v245
    %v1200 = vunpack.c.l.b16 %v246
    %v1201 = vunpack.c.h.b16 %v246
    %v1202 = vunpack.c.l.b16 %v247
    %v1203 = vunpack.c.h.b16 %v247
    %v1204 = vunpack.c.l.b16 %v248
    %v1205 = vunpack.c.h.b16 %v248
    %v1206 = vunpack.c.l.b16 %v249
    %v1207 = vunpack.c.h.b16 %v249
    %v1208 = vunpack.c.l.b16 %v250
    %v1209 = vunpack.c.h.b16 %v250
    %v1210 = vunpack.c.l.b16 %v251
    %v1211 = vunpack.c.h.b16 %v251
    %v1212 = vunpack.c.l.b16 %v252
    %v1213 = vunpack.c.h.b16 %v252
    %v1214 = vunpack.c.l.b16 %v253
    %v1215 = vunpack.c.h.b16 %v253
    %v1216 = vunpack.c.l.b16 %v254
    %v1217 = vunpack.c.h.b16 %v254
    %v1218 = vunpack.c.l.b16 %v255
    %v1219 = vunpack.c.h.b16 %v255
    %v1220 = vunpack.c.l.b16 %v256
    %v1221 = vunpack.c.h.b16 %v256
    %v1222 = vunpack.c.l.b16 %v257
    %v1223 = vunpack.c.h.b16 %v257
    %v1224 = vunpack.c.l.b16 %v258
    %v1225 = vunpack.c.h.b16 %v258
    %v1226 = vunpack.c.l.b16 %v259
    %v1227 = vunpack.c.h.b16 %v259
    %v1228 = vunpack.c.l.b16 %v260
    %v1229 = vunpack.c.h.b16 %v260
    %v1230 = vunpack.c.l.b16 %v261
    %v1231 = vunpack.c.h.b16 %v261
    %v1232 = vunpack.c.l.b16 %v262
    %v1233 = vunpack.c.h.b16 %v262
    %v1234 = vunpack.c.l.b16 %v263
    %v1235 = vunpack.c.h.b16 %v263
    %v1236 = vunpack.c.l.b16 %v264
    %v1237 = vunpack.c.h.b16 %v264
    %v1238 = vunpack.c.l.b16 %v265
    %v1239 = vunpack.c.h.b16 %v265
    %v1240 = vunpack.c.l.b16 %v266
    %v1241 = vunpack.c.h.b16 %v266
    %v1242 = vunpack.c.l.b16 %v267
    %v1243 = vunpack.c.h.b16 %v267
    %v1244 = vunpack.c.l.b16 %v268
    %v1245 = vunpack.c.h.b16 %v268
    %v1246 = vunpack.c.l.b16 %v269
    %v1247 = vunpack.c.h.b16 %v269
    %v1248 = vunpack.c.l.b16 %v270
    %v1249 = vunpack.c.h.b16 %v270
    %v1250 = vunpack.c.l.b16 %v271
    %v1251 = vunpack.c.h.b16 %v271
    %v1252 = vunpack.c.l.b16 %v272
    %v1253 = vunpack.c.h.b16 %v272
    %v1254 = vunpack.c.l.b16 %v273
    %v1255 = vunpack.c.h.b16 %v273
    %v1256 = vunpack.c.l.b16 %v274
    %v1257 = vunpack.c.h.b16 %v274
    %v1258 = vunpack.c.l.b16 %v275
    %v1259 = vunpack.c.h.b16 %v275
    %v1260 = vunpack.c.l.b16 %v276
    %v1261 = vunpack.c.h.b16 %v276
    %v1262 = vunpack.c.l.b16 %v277
    %v1263 = vunpack.c.h.b16 %v277
    %v1264 = vunpack.c.l.b16 %v278
    %v1265 = vunpack.c.h.b16 %v278
    %v1266 = vunpack.c.l.b16 %v279
    %v1267 = vunpack.c.h.b16 %v279
    %v1268 = vunpack.c.l.b16 %v280
    %v1269 = vunpack.c.h.b16 %v280
    %v1270 = vunpack.c.l.b16 %v281
    %v1271 = vunpack.c.h.b16 %v281
    %v1272 = vunpack.c.l.b16 %v282
    %v1273 = vunpack.c.h.b16 %v282
    %v1274 = vunpack.c.l.b16 %v283
    %v1275 = vunpack.c.h.b16 %v283
    %v1276 = vunpack.c.l.b16 %v284
    %v1277 = vunpack.c.h.b16 %v284
    %v1278 = vunpack.c.l.b16 %v285
    %v1279 = vunpack.c.h.b16 %v285
    %v1280 = vunpack.c.l.b16 %v286
    %v1281 = vunpack.c.h.b16 %v286
    %v1282 = vunpack.c.l.b16 %v287
    %v1283 = vunpack.c.h.b16 %v287
    %v1284 = vunpack.c.l.b16 %v288
    %v1285 = vunpack.c.h.b16 %v288
    %v1286 = vunpack.c.l.b16 %v289
    %v1287 = vunpack.c.h.b16 %v289
    %v1288 = vunpack.c.l.b16 %v290
    %v1289 = vunpack.c.h.b16 %v290
    %v1290 = vunpack.c.l.b16 %v291
    %v1291 = vunpack.c.h.b16 %v291
    %v1292 = vunpack.c.l.b16 %v292
    %v1293 = vunpack.c.h.b16 %v292
    %v1294 = vunpack.c.l.b16 %v293
    %v1295 = vunpack.c.h.b16 %v293
    %v1296 = vunpack.c.l.b16 %v294
    %v1297 = vunpack.c.h.b16 %v294
    %v1298 = vunpack.c.l.b16 %v295
    %v1299 = vunpack.c.h.b16 %v295
    %v1300 = vunpack.c.l.b16 %v296
    %v1301 = vunpack.c.h.b16 %v296
    %v1302 = vunpack.c.l.b16 %v297
    %v1303 = vunpack.c.h.b16 %v297
    %v1304 = vunpack.c.l.b16 %v298
    %v1305 = vunpack.c.h.b16 %v298
    %v1306 = vunpack.c.l.b16 %v299
    %v1307 = vunpack.c.h.b16 %v299
    %v1308 = vunpack.c.l.b16 %v300
    %v1309 = vunpack.c.h.b16 %v300
    %v1310 = vunpack.c.l.b16 %v301
    %v1311 = vunpack.c.h.b16 %v301
    %v1312 = vunpack.c.l.b16 %v302
    %v1313 = vunpack.c.h.b16 %v302
    %v1314 = vunpack.c.l.b16 %v303
    %v1315 = vunpack.c.h.b16 %v303
    %v1316 = vunpack.c.l.b16 %v304
    %v1317 = vunpack.c.h.b16 %v304
    %v1318 = vunpack.c.l.b16 %v305
    %v1319 = vunpack.c.h.b16 %v305
    %v1320 = vunpack.c.l.b16 %v306
    %v1321 = vunpack.c.h.b16 %v306
    %v1322 = vunpack.c.l.b16 %v307
    %v1323 = vunpack.c.h.b16 %v307
    %v1324 = vunpack.c.l.b16 %v308
    %v1325 = vunpack.c.h.b16 %v308
    %v1326 = vunpack.c.l.b16 %v309
    %v1327 = vunpack.c.h.b16 %v309
    %v1328 = vunpack.c.l.b16 %v310
    %v1329 = vunpack.c.h.b16 %v310
    %v1330 = vunpack.c.l.b16 %v311
    %v1331 = vunpack.c.h.b16 %v311
    %v1332 = vunpack.c.l.b16 %v312
    %v1333 = vunpack.c.h.b16 %v312
    %v1334 = vunpack.c.l.b16 %v313
    %v1335 = vunpack.c.h.b16 %v313
    %v1336 = vunpack.c.l.b16 %v314
    %v1337 = vunpack.c.h.b16 %v314
    %v1338 = vunpack.c.l.b16 %v315
    %v1339 = vunpack.c.h.b16 %v315
    %v1340 = vunpack.c.l.b16 %v316
    %v1341 = vunpack.c.h.b16 %v316
    %v1342 = vunpack.c.l.b16 %v317
    %v1343 = vunpack.c.h.b16 %v317
    %v1344 = vunpack.c.l.b16 %v318
    %v1345 = vunpack.c.h.b16 %v318
    %v1346 = vunpack.c.l.b16 %v319
    %v1347 = vunpack.c.h.b16 %v319
    %v1348 = vunpack.c.l.b16 %v320
    %v1349 = vunpack.c.h.b16 %v320
    %v1350 = vunpack.c.l.b16 %v321
    %v1351 = vunpack.c.h.b16 %v321
    %v1352 = vunpack.c.l.b16 %v322
    %v1353 = vunpack.c.h.b16 %v322
    %v1354 = vunpack.c.l.b16 %v323
    %v1355 = vunpack.c.h.b16 %v323
    %v1356 = vunpack.c.l.b16 %v324
    %v1357 = vunpack.c.h.b16 %v324
    %v1358 = vunpack.c.l.b16 %v325
    %v1359 = vunpack.c.h.b16 %v325
    %v1360 = vunpack.c.l.b16 %v326
    %v1361 = vunpack.c.h.b16 %v326
    %v1362 = vunpack.c.l.b16 %v327
    %v1363 = vunpack.c.h.b16 %v327
    %v1364 = vunpack.c.l.b16 %v328
    %v1365 = vunpack.c.h.b16 %v328
    %v1366 = vunpack.c.l.b16 %v329
    %v1367 = vunpack.c.h.b16 %v329
    %v1368 = vunpack.c.l.b16 %v330
    %v1369 = vunpack.c.h.b16 %v330
    %v1370 = vunpack.c.l.b16 %v331
    %v1371 = vunpack.c.h.b16 %v331
    %v1372 = vunpack.c.l.b16 %v332
    %v1373 = vunpack.c.h.b16 %v332
    %v1374 = vunpack.c.l.b16 %v333
    %v1375 = vunpack.c.h.b16 %v333
    %v1376 = vunpack.c.l.b16 %v334
    %v1377 = vunpack.c.h.b16 %v334
    %v1378 = vunpack.c.l.b16 %v335
    %v1379 = vunpack.c.h.b16 %v335
    %v1380 = vunpack.c.l.b16 %v336
    %v1381 = vunpack.c.h.b16 %v336
    %v1382 = vunpack.c.l.b16 %v337
    %v1383 = vunpack.c.h.b16 %v337
    %v1384 = vunpack.c.l.b16 %v338
    %v1385 = vunpack.c.h.b16 %v338
    %v1386 = vunpack.c.l.b16 %v339
    %v1387 = vunpack.c.h.b16 %v339
    %v1388 = vunpack.c.l.b16 %v340
    %v1389 = vunpack.c.h.b16 %v340
    %v1390 = vunpack.c.l.b16 %v341
    %v1391 = vunpack.c.h.b16 %v341
    %v1392 = vunpack.c.l.b16 %v342
    %v1393 = vunpack.c.h.b16 %v342
    %v1394 = vunpack.c.l.b16 %v343
    %v1395 = vunpack.c.h.b16 %v343
    %v1396 = vunpack.c.l.b16 %v344
    %v1397 = vunpack.c.h.b16 %v344
    %v1398 = vunpack.c.l.b16 %v345
    %v1399 = vunpack.c.h.b16 %v345
    %v1400 = vunpack.c.l.b16 %v346
    %v1401 = vunpack.c.h.b16 %v346
    %v1402 = vunpack.c.l.b16 %v347
    %v1403 = vunpack.c.h.b16 %v347
    %v1404 = vunpack.c.l.b16 %v348
    %v1405 = vunpack.c.h.b16 %v348
    %v1406 = vunpack.c.l.b16 %v349
    %v1407 = vunpack.c.h.b16 %v349
    %v1408 = vunpack.c.l.b16 %v350
    %v1409 = vunpack.c.h.b16 %v350
    %v1410 = vunpack.c.l.b16 %v351
    %v1411 = vunpack.c.h.b16 %v351
    %v1412 = vunpack.c.l.b16 %v352
    %v1413 = vunpack.c.h.b16 %v352
    %v1414 = vunpack.c.l.b16 %v353
    %v1415 = vunpack.c.h.b16 %v353
    %v1416 = vunpack.c.l.b16 %v354
    %v1417 = vunpack.c.h.b16 %v354
    %v1418 = vunpack.c.l.b16 %v355
    %v1419 = vunpack.c.h.b16 %v355
    %v1420 = vunpack.c.l.b16 %v356
    %v1421 = vunpack.c.h.b16 %v356
    %v1422 = vunpack.c.l.b16 %v357
    %v1423 = vunpack.c.h.b16 %v357
    %v1424 = vunpack.c.l.b16 %v358
    %v1425 = vunpack.c.h.b16 %v358
    %v1426 = vunpack.c.l.b16 %v359
    %v1427 = vunpack.c.h.b16 %v359
    %v1428 = vunpack.c.l.b16 %v360
    %v1429 = vunpack.c.h.b16 %v360
    %v1430 = vunpack.c.l.b16 %v361
    %v1431 = vunpack.c.h.b16 %v361
    %v1432 = vunpack.c.l.b16 %v362
    %v1433 = vunpack.c.h.b16 %v362
    %v1434 = vunpack.c.l.b16 %v363
    %v1435 = vunpack.c.h.b16 %v363
    %v1436 = vunpack.c.l.b16 %v364
    %v1437 = vunpack.c.h.b16 %v364
    %v1438 = vunpack.c.l.b16 %v365
    %v1439 = vunpack.c.h.b16 %v365
    %v1440 = vunpack.c.l.b16 %v366
    %v1441 = vunpack.c.h.b16 %v366
    %v1442 = vunpack.c.l.b16 %v367
    %v1443 = vunpack.c.h.b16 %v367
    %v1444 = vunpack.c.l.b16 %v368
    %v1445 = vunpack.c.h.b16 %v368
    %v1446 = vunpack.c.l.b16 %v369
    %v1447 = vunpack.c.h.b16 %v369
    %v1448 = vunpack.c.l.b16 %v370
    %v1449 = vunpack.c.h.b16 %v370
    %v1450 = vunpack.c.l.b16 %v371
    %v1451 = vunpack.c.h.b16 %v371
    %v1452 = vunpack.c.l.b16 %v372
    %v1453 = vunpack.c.h.b16 %v372
    %v1454 = vunpack.c.l.b16 %v373
    %v1455 = vunpack.c.h.b16 %v373
    %v1456 = vunpack.c.l.b16 %v374
    %v1457 = vunpack.c.h.b16 %v374
    %v1458 = vunpack.c.l.b16 %v375
    %v1459 = vunpack.c.h.b16 %v375
    %v1460 = vunpack.c.l.b16 %v376
    %v1461 = vunpack.c.h.b16 %v376
    %v1462 = vunpack.c.l.b16 %v377
    %v1463 = vunpack.c.h.b16 %v377
    %v1464 = vunpack.c.l.b16 %v378
    %v1465 = vunpack.c.h.b16 %v378
    %v1466 = vunpack.c.l.b16 %v379
    %v1467 = vunpack.c.h.b16 %v379
    %v1468 = vunpack.c.l.b16 %v380
    %v1469 = vunpack.c.h.b16 %v380
    %v1470 = vunpack.c.l.b16 %v381
    %v1471 = vunpack.c.h.b16 %v381
    %v1472 = vunpack.c.l.b16 %v382
    %v1473 = vunpack.c.h.b16 %v382
    %v1474 = vunpack.c.l.b16 %v383
    %v1475 = vunpack.c.h.b16 %v383
    %v1476 = vunpack.c.l.b16 %v384
    %v1477 = vunpack.c.h.b16 %v384
    %v1478 = vunpack.c.l.b16 %v385
    %v1479 = vunpack.c.h.b16 %v385
    %v1480 = vunpack.c.l.b16 %v386
    %v1481 = vunpack.c.h.b16 %v386
    %v1482 = vunpack.c.l.b16 %v387
    %v1483 = vunpack.c.h.b16 %v387
    %v1484 = vunpack.c.l.b16 %v388
    %v1485 = vunpack.c.h.b16 %v388
    %v1486 = vunpack.c.l.b16 %v389
    %v1487 = vunpack.c.h.b16 %v389
    %v1488 = vunpack.c.l.b16 %v390
    %v1489 = vunpack.c.h.b16 %v390
    %v1490 = vunpack.c.l.b16 %v391
    %v1491 = vunpack.c.h.b16 %v391
    %v1492 = vunpack.c.l.b16 %v392
    %v1493 = vunpack.c.h.b16 %v392
    %v1494 = vunpack.c.l.b16 %v393
    %v1495 = vunpack.c.h.b16 %v393
    %v1496 = vunpack.c.l.b16 %v394
    %v1497 = vunpack.c.h.b16 %v394
    %v1498 = vunpack.c.l.b16 %v395
    %v1499 = vunpack.c.h.b16 %v395
    %v1500 = vunpack.c.l.b16 %v396
    %v1501 = vunpack.c.h.b16 %v396
    %v1502 = vunpack.c.l.b16 %v397
    %v1503 = vunpack.c.h.b16 %v397
    %v1504 = vunpack.c.l.b16 %v398
    %v1505 = vunpack.c.h.b16 %v398
    %v1506 = vunpack.c.l.b16 %v399
    %v1507 = vunpack.c.h.b16 %v399
    %v1508 = vunpack.c.l.b16 %v400
    %v1509 = vunpack.c.h.b16 %v400
    %v1510 = vunpack.c.l.b16 %v401
    %v1511 = vunpack.c.h.b16 %v401
    %v1512 = vunpack.c.l.b16 %v402
    %v1513 = vunpack.c.h.b16 %v402
    %v1514 = vunpack.c.l.b16 %v403
    %v1515 = vunpack.c.h.b16 %v403
    %v1516 = vunpack.c.l.b16 %v404
    %v1517 = vunpack.c.h.b16 %v404
    %v1518 = vunpack.c.l.b16 %v405
    %v1519 = vunpack.c.h.b16 %v405
    %v1520 = vunpack.c.l.b16 %v406
    %v1521 = vunpack.c.h.b16 %v406
    %v1522 = vunpack.c.l.b16 %v407
    %v1523 = vunpack.c.h.b16 %v407
    %v1524 = vunpack.c.l.b16 %v408
    %v1525 = vunpack.c.h.b16 %v408
    %v1526 = vunpack.c.l.b16 %v409
    %v1527 = vunpack.c.h.b16 %v409
    %v1528 = vunpack.c.l.b16 %v410
    %v1529 = vunpack.c.h.b16 %v410
    %v1530 = vunpack.c.l.b16 %v411
    %v1531 = vunpack.c.h.b16 %v411
    %v1532 = vunpack.c.l.b16 %v412
    %v1533 = vunpack.c.h.b16 %v412
    %v1534 = vunpack.c.l.b16 %v413
    %v1535 = vunpack.c.h.b16 %v413
    %v1536 = vunpack.c.l.b16 %v414
    %v1537 = vunpack.c.h.b16 %v414
    %v1538 = vunpack.c.l.b16 %v415
    %v1539 = vunpack.c.h.b16 %v415
    %v1540 = vunpack.c.l.b16 %v416
    %v1541 = vunpack.c.h.b16 %v416
    %v1542 = vunpack.c.l.b16 %v417
    %v1543 = vunpack.c.h.b16 %v417
    %v1544 = vunpack.c.l.b16 %v418
    %v1545 = vunpack.c.h.b16 %v418
    %v1546 = vunpack.c.l.b16 %v419
    %v1547 = vunpack.c.h.b16 %v419
    %v1548 = vunpack.c.l.b16 %v420
    %v1549 = vunpack.c.h.b16 %v420
    %v1550 = vunpack.c.l.b16 %v421
    %v1551 = vunpack.c.h.b16 %v421
    %v1552 = vunpack.c.l.b16 %v422
    %v1553 = vunpack.c.h.b16 %v422
    %v1554 = vunpack.c.l.b16 %v423
    %v1555 = vunpack.c.h.b16 %v423
    %v1556 = vunpack.c.l.b16 %v424
    %v1557 = vunpack.c.h.b16 %v424
    %v1558 = vunpack.c.l.b16 %v425
    %v1559 = vunpack.c.h.b16 %v425
    %v1560 = vunpack.c.l.b16 %v426
    %v1561 = vunpack.c.h.b16 %v426
    %v1562 = vunpack.c.l.b16 %v427
    %v1563 = vunpack.c.h.b16 %v427
    %v1564 = vunpack.c.l.b16 %v428
    %v1565 = vunpack.c.h.b16 %v428
    %v1566 = vunpack.c.l.b16 %v429
    %v1567 = vunpack.c.h.b16 %v429
    %v1568 = vunpack.c.l.b16 %v430
    %v1569 = vunpack.c.h.b16 %v430
    %v1570 = vunpack.c.l.b16 %v431
    %v1571 = vunpack.c.h.b16 %v431
    %v1572 = vunpack.c.l.b16 %v432
    %v1573 = vunpack.c.h.b16 %v432
    %v1574 = vunpack.c.l.b16 %v433
    %v1575 = vunpack.c.h.b16 %v433
    %v1576 = vunpack.c.l.b16 %v434
    %v1577 = vunpack.c.h.b16 %v434
    %v1578 = vunpack.c.l.b16 %v435
    %v1579 = vunpack.c.h.b16 %v435
    %v1580 = vunpack.c.l.b16 %v436
    %v1581 = vunpack.c.h.b16 %v436
    %v1582 = vunpack.c.l.b16 %v437
    %v1583 = vunpack.c.h.b16 %v437
    %v1584 = vunpack.c.l.b16 %v438
    %v1585 = vunpack.c.h.b16 %v438
    %v1586 = vunpack.c.l.b16 %v439
    %v1587 = vunpack.c.h.b16 %v439
    %v1588 = vunpack.c.l.b16 %v440
    %v1589 = vunpack.c.h.b16 %v440
    %v1590 = vunpack.c.l.b16 %v441
    %v1591 = vunpack.c.h.b16 %v441
    %v1592 = vunpack.c.l.b16 %v442
    %v1593 = vunpack.c.h.b16 %v442
    %v1594 = vunpack.c.l.b16 %v443
    %v1595 = vunpack.c.h.b16 %v443
    %v1596 = vunpack.c.l.b16 %v444
    %v1597 = vunpack.c.h.b16 %v444
    %v1598 = vunpack.c.l.b16 %v445
    %v1599 = vunpack.c.h.b16 %v445
    %v1600 = vunpack.c.l.b16 %v446
    %v1601 = vunpack.c.h.b16 %v446
    %v1602 = vunpack.c.l.b16 %v447
    %v1603 = vunpack.c.h.b16 %v447
    %v1604 = vunpack.c.l.b16 %v448
    %v1605 = vunpack.c.h.b16 %v448
    %v1606 = vunpack.c.l.b16 %v449
    %v1607 = vunpack.c.h.b16 %v449
    %v1608 = vunpack.c.l.b16 %v450
    %v1609 = vunpack.c.h.b16 %v450
    %v1610 = vunpack.c.l.b16 %v451
    %v1611 = vunpack.c.h.b16 %v451
    %v1612 = vunpack.c.l.b16 %v452
    %v1613 = vunpack.c.h.b16 %v452
    %v1614 = vunpack.c.l.b16 %v453
    %v1615 = vunpack.c.h.b16 %v453
    %v1616 = vunpack.c.l.b16 %v454
    %v1617 = vunpack.c.h.b16 %v454
    %v1618 = vunpack.c.l.b16 %v455
    %v1619 = vunpack.c.h.b16 %v455
    %v1620 = vunpack.c.l.b16 %v456
    %v1621 = vunpack.c.h.b16 %v456
    %v1622 = vunpack.c.l.b16 %v457
    %v1623 = vunpack.c.h.b16 %v457
    %v1624 = vunpack.c.l.b16 %v458
    %v1625 = vunpack.c.h.b16 %v458
    %v1626 = vunpack.c.l.b16 %v459
    %v1627 = vunpack.c.h.b16 %v459
    %v1628 = vunpack.c.l.b16 %v460
    %v1629 = vunpack.c.h.b16 %v460
    %v1630 = vunpack.c.l.b16 %v461
    %v1631 = vunpack.c.h.b16 %v461
    %v1632 = vunpack.c.l.b16 %v462
    %v1633 = vunpack.c.h.b16 %v462
    %v1634 = vunpack.c.l.b16 %v463
    %v1635 = vunpack.c.h.b16 %v463
    %v1636 = vunpack.c.l.b16 %v464
    %v1637 = vunpack.c.h.b16 %v464
    %v1638 = vpack.c.b16 %v882, %v870
    %v1639 = vpack.c.b16 %v883, %v871
    %v1640 = vpack.c.b16 %v884, %v872
    %v1641 = vpack.c.b16 %v885, %v873
    %v1642 = vpack.c.b16 %v886, %v874
    %v1643 = vpack.c.b16 %v887, %v875
    %v1644 = vpack.c.b16 %v888, %v876
    %v1645 = vpack.c.b16 %v889, %v877
    %v1646 = vpack.c.b16 %v890, %v878
    %v1647 = vpack.c.b16 %v891, %v879
    %v1648 = vpack.c.b16 %v892, %v880
    %v1649 = vpack.c.b16 %v893, %v881
    %v1650 = vpack.c.b16 %v906, %v894
    %v1651 = vpack.c.b16 %v907, %v895
    %v1652 = vpack.c.b16 %v908, %v896
    %v1653 = vpack.c.b16 %v909, %v897
    %v1654 = vpack.c.b16 %v910, %v898
    %v1655 = vpack.c.b16 %v911, %v899
    %v1656 = vpack.c.b16 %v912, %v900
    %v1657 = vpack.c.b16 %v913, %v901
    %v1658 = vpack.c.b16 %v914, %v902
    %v1659 = vpack.c.b16 %v915, %v903
    %v1660 = vpack.c.b16 %v916, %v904
    %v1661 = vpack.c.b16 %v917, %v905
    %v1662 = vpack.c.b16 %v930, %v918
    %v1663 = vpack.c.b16 %v931, %v919
    %v1664 = vpack.c.b16 %v932, %v920
    %v1665 = vpack.c.b16 %v933, %v921
    %v1666 = vpack.c.b16 %v934, %v922
    %v1667 = vpack.c.b16 %v935, %v923
    %v1668 = vpack.c.b16 %v936, %v924
    %v1669 = vpack.c.b16 %v937, %v925
    %v1670 = vpack.c.b16 %v938, %v926
    %v1671 = vpack.c.b16 %v939, %v927
    %v1672 = vpack.c.b16 %v940, %v928
    %v1673 = vpack.c.b16 %v941, %v929
    %v1674 = vpack.c.b16 %v954, %v942
    %v1675 = vpack.c.b16 %v955, %v943
    %v1676 = vpack.c.b16 %v956, %v944
    %v1677 = vpack.c.b16 %v957, %v945
    %v1678 = vpack.c.b16 %v958, %v946
    %v1679 = vpack.c.b16 %v959, %v947
    %v1680 = vpack.c.b16 %v960, %v948
    %v1681 = vpack.c.b16 %v961, %v949
    %v1682 = vpack.c.b16 %v962, %v950
    %v1683 = vpack.c.b16 %v963, %v951
    %v1684 = vpack.c.b16 %v964, %v952
    %v1685 = vpack.c.b16 %v965, %v953
    %v1686 = vpack.c.b16 %v978, %v966
    %v1687 = vpack.c.b16 %v979, %v967
    %v1688 = vpack.c.b16 %v980, %v968
    %v1689 = vpack.c.b16 %v981, %v969
    %v1690 = vpack.c.b16 %v982, %v970
    %v1691 = vpack.c.b16 %v983, %v971
    %v1692 = vpack.c.b16 %v984, %v972
    %v1693 = vpack.c.b16 %v985, %v973
    %v1694 = vpack.c.b16 %v986, %v974
    %v1695 = vpack.c.b16 %v987, %v975
    %v1696 = vpack.c.b16 %v988, %v976
    %v1697 = vpack.c.b16 %v989, %v977
    %v1698 = vpack.c.b16 %v1002, %v990
    %v1699 = vpack.c.b16 %v1003, %v991
    %v1700 = vpack.c.b16 %v1004, %v992
    %v1701 = vpack.c.b16 %v1005, %v993
    %v1702 = vpack.c.b16 %v1006, %v994
    %v1703 = vpack.c.b16 %v1007, %v995
    %v1704 = vpack.c.b16 %v1008, %v996
    %v1705 = vpack.c.b16 %v1009, %v997
    %v1706 = vpack.c.b16 %v1010, %v998
    %v1707 = vpack.c.b16 %v1011, %v999
    %v1708 = vpack.c.b16 %v1012, %v1000
    %v1709 = vpack.c.b16 %v1013, %v1001
    %v1710 = vpack.c.b16 %v1026, %v1014
    %v1711 = vpack.c.b16 %v1027, %v1015
    %v1712 = vpack.c.b16 %v1028, %v1016
    %v1713 = vpack.c.b16 %v1029, %v1017
    %v1714 = vpack.c.b16 %v1030, %v1018
    %v1715 = vpack.c.b16 %v1031, %v1019
    %v1716 = vpack.c.b16 %v1032, %v1020
    %v1717 = vpack.c.b16 %v1033, %v1021
    %v1718 = vpack.c.b16 %v1034, %v1022
    %v1719 = vpack.c.b16 %v1035, %v1023
    %v1720 = vpack.c.b16 %v1036, %v1024
    %v1721 = vpack.c.b16 %v1037, %v1025
    %v1722 = vpack.c.b16 %v1050, %v1038
    %v1723 = vpack.c.b16 %v1051, %v1039
    %v1724 = vpack.c.b16 %v1052, %v1040
    %v1725 = vpack.c.b16 %v1053, %v1041
    %v1726 = vpack.c.b16 %v1054, %v1042
    %v1727 = vpack.c.b16 %v1055, %v1043
    %v1728 = vpack.c.b16 %v1056, %v1044
    %v1729 = vpack.c.b16 %v1057, %v1045
    %v1730 = vpack.c.b16 %v1058, %v1046
    %v1731 = vpack.c.b16 %v1059, %v1047
    %v1732 = vpack.c.b16 %v1060, %v1048
    %v1733 = vpack.c.b16 %v1061, %v1049
    %v1734 = vpack.c.b16 %v1074, %v1062
    %v1735 = vpack.c.b16 %v1075, %v1063
    %v1736 = vpack.c.b16 %v1076, %v1064
    %v1737 = vpack.c.b16 %v1077, %v1065
    %v1738 = vpack.c.b16 %v1078, %v1066
    %v1739 = vpack.c.b16 %v1079, %v1067
    %v1740 = vpack.c.b16 %v1080, %v1068
    %v1741 = vpack.c.b16 %v1081, %v1069
    %v1742 = vpack.c.b16 %v1082, %v1070
    %v1743 = vpack.c.b16 %v1083, %v1071
    %v1744 = vpack.c.b16 %v1084, %v1072
    %v1745 = vpack.c.b16 %v1085, %v1073
    %v1746 = vpack.c.b16 %v1098, %v1086
    %v1747 = vpack.c.b16 %v1099, %v1087
    %v1748 = vpack.c.b16 %v1100, %v1088
    %v1749 = vpack.c.b16 %v1101, %v1089
    %v1750 = vpack.c.b16 %v1102, %v1090
    %v1751 = vpack.c.b16 %v1103, %v1091
    %v1752 = vpack.c.b16 %v1104, %v1092
    %v1753 = vpack.c.b16 %v1105, %v1093
    %v1754 = vpack.c.b16 %v1106, %v1094
    %v1755 = vpack.c.b16 %v1107, %v1095
    %v1756 = vpack.c.b16 %v1108, %v1096
    %v1757 = vpack.c.b16 %v1109, %v1097
    %v1758 = vpack.c.b16 %v1122, %v1110
    %v1759 = vpack.c.b16 %v1123, %v1111
    %v1760 = vpack.c.b16 %v1124, %v1112
    %v1761 = vpack.c.b16 %v1125, %v1113
    %v1762 = vpack.c.b16 %v1126, %v1114
    %v1763 = vpack.c.b16 %v1127, %v1115
    %v1764 = vpack.c.b16 %v1128, %v1116
    %v1765 = vpack.c.b16 %v1129, %v1117
    %v1766 = vpack.c.b16 %v1130, %v1118
    %v1767 = vpack.c.b16 %v1131, %v1119
    %v1768 = vpack.c.b16 %v1132, %v1120
    %v1769 = vpack.c.b16 %v1133, %v1121
    %v1770 = vpack.c.b16 %v1146, %v1134
    %v1771 = vpack.c.b16 %v1147, %v1135
    %v1772 = vpack.c.b16 %v1148, %v1136
    %v1773 = vpack.c.b16 %v1149, %v1137
    %v1774 = vpack.c.b16 %v1150, %v1138
    %v1775 = vpack.c.b16 %v1151, %v1139
    %v1776 = vpack.c.b16 %v1152, %v1140
    %v1777 = vpack.c.b16 %v1153, %v1141
    %v1778 = vpack.c.b16 %v1154, %v1142
    %v1779 = vpack.c.b16 %v1155, %v1143
    %v1780 = vpack.c.b16 %v1156, %v1144
    %v1781 = vpack.c.b16 %v1157, %v1145
    %v1782 = vpack.c.b16 %v1170, %v1158
    %v1783 = vpack.c.b16 %v1171, %v1159
    %v1784 = vpack.c.b16 %v1172, %v1160
    %v1785 = vpack.c.b16 %v1173, %v1161
    %v1786 = vpack.c.b16 %v1174, %v1162
    %v1787 = vpack.c.b16 %v1175, %v1163
    %v1788 = vpack.c.b16 %v1176, %v1164
    %v1789 = vpack.c.b16 %v1177, %v1165
    %v1790 = vpack.c.b16 %v1178, %v1166
    %v1791 = vpack.c.b16 %v1179, %v1167
    %v1792 = vpack.c.b16 %v1180, %v1168
    %v1793 = vpack.c.b16 %v1181, %v1169
    %v1794 = vpack.c.b16 %v1194, %v1182
    %v1795 = vpack.c.b16 %v1195, %v1183
    %v1796 = vpack.c.b16 %v1196, %v1184
    %v1797 = vpack.c.b16 %v1197, %v1185
    %v1798 = vpack.c.b16 %v1198, %v1186
    %v1799 = vpack.c.b16 %v1199, %v1187
    %v1800 = vpack.c.b16 %v1200, %v1188
    %v1801 = vpack.c.b16 %v1201, %v1189
    %v1802 = vpack.c.b16 %v1202, %v1190
    %v1803 = vpack.c.b16 %v1203, %v1191
    %v1804 = vpack.c.b16 %v1204, %v1192
    %v1805 = vpack.c.b16 %v1205, %v1193
    %v1806 = vpack.c.b16 %v1218, %v1206
    %v1807 = vpack.c.b16 %v1219, %v1207
    %v1808 = vpack.c.b16 %v1220, %v1208
    %v1809 = vpack.c.b16 %v1221, %v1209
    %v1810 = vpack.c.b16 %v1222, %v1210
    %v1811 = vpack.c.b16 %v1223, %v1211
    %v1812 = vpack.c.b16 %v1224, %v1212
    %v1813 = vpack.c.b16 %v1225, %v1213
    %v1814 = vpack.c.b16 %v1226, %v1214
    %v1815 = vpack.c.b16 %v1227, %v1215
    %v1816 = vpack.c.b16 %v1228, %v1216
    %v1817 = vpack.c.b16 %v1229, %v1217
    %v1818 = vpack.c.b16 %v1242, %v1230
    %v1819 = vpack.c.b16 %v1243, %v1231
    %v1820 = vpack.c.b16 %v1244, %v1232
    %v1821 = vpack.c.b16 %v1245, %v1233
    %v1822 = vpack.c.b16 %v1246, %v1234
    %v1823 = vpack.c.b16 %v1247, %v1235
    %v1824 = vpack.c.b16 %v1248, %v1236
    %v1825 = vpack.c.b16 %v1249, %v1237
    %v1826 = vpack.c.b16 %v1250, %v1238
    %v1827 = vpack.c.b16 %v1251, %v1239
    %v1828 = vpack.c.b16 %v1252, %v1240
    %v1829 = vpack.c.b16 %v1253, %v1241
    %v1830 = vpack.c.b16 %v1266, %v1254
    %v1831 = vpack.c.b16 %v1267, %v1255
    %v1832 = vpack.c.b16 %v1268, %v1256
    %v1833 = vpack.c.b16 %v1269, %v1257
    %v1834 = vpack.c.b16 %v1270, %v1258
    %v1835 = vpack.c.b16 %v1271, %v1259
    %v1836 = vpack.c.b16 %v1272, %v1260
    %v1837 = vpack.c.b16 %v1273, %v1261
    %v1838 = vpack.c.b16 %v1274, %v1262
    %v1839 = vpack.c.b16 %v1275, %v1263
    %v1840 = vpack.c.b16 %v1276, %v1264
    %v1841 = vpack.c.b16 %v1277, %v1265
    %v1842 = vpack.c.b16 %v1290, %v1278
    %v1843 = vpack.c.b16 %v1291, %v1279
    %v1844 = vpack.c.b16 %v1292, %v1280
    %v1845 = vpack.c.b16 %v1293, %v1281
    %v1846 = vpack.c.b16 %v1294, %v1282
    %v1847 = vpack.c.b16 %v1295, %v1283
    %v1848 = vpack.c.b16 %v1296, %v1284
    %v1849 = vpack.c.b16 %v1297, %v1285
    %v1850 = vpack.c.b16 %v1298, %v1286
    %v1851 = vpack.c.b16 %v1299, %v1287
    %v1852 = vpack.c.b16 %v1300, %v1288
    %v1853 = vpack.c.b16 %v1301, %v1289
    %v1854 = vpack.c.b16 %v1314, %v1302
    %v1855 = vpack.c.b16 %v1315, %v1303
    %v1856 = vpack.c.b16 %v1316, %v1304
    %v1857 = vpack.c.b16 %v1317, %v1305
    %v1858 = vpack.c.b16 %v1318, %v1306
    %v1859 = vpack.c.b16 %v1319, %v1307
    %v1860 = vpack.c.b16 %v1320, %v1308
    %v1861 = vpack.c.b16 %v1321, %v1309
    %v1862 = vpack.c.b16 %v1322, %v1310
    %v1863 = vpack.c.b16 %v1323, %v1311
    %v1864 = vpack.c.b16 %v1324, %v1312
    %v1865 = vpack.c.b16 %v1325, %v1313
    %v1866 = vpack.c.b16 %v1338, %v1326
    %v1867 = vpack.c.b16 %v1339, %v1327
    %v1868 = vpack.c.b16 %v1340, %v1328
    %v1869 = vpack.c.b16 %v1341, %v1329
    %v1870 = vpack.c.b16 %v1342, %v1330
    %v1871 = vpack.c.b16 %v1343, %v1331
    %v1872 = vpack.c.b16 %v1344, %v1332
    %v1873 = vpack.c.b16 %v1345, %v1333
    %v1874 = vpack.c.b16 %v1346, %v1334
    %v1875 = vpack.c.b16 %v1347, %v1335
    %v1876 = vpack.c.b16 %v1348, %v1336
    %v1877 = vpack.c.b16 %v1349, %v1337
    %v1878 = vpack.c.b16 %v1362, %v1350
    %v1879 = vpack.c.b16 %v1363, %v1351
    %v1880 = vpack.c.b16 %v1364, %v1352
    %v1881 = vpack.c.b16 %v1365, %v1353
    %v1882 = vpack.c.b16 %v1366, %v1354
    %v1883 = vpack.c.b16 %v1367, %v1355
    %v1884 = vpack.c.b16 %v1368, %v1356
    %v1885 = vpack.c.b16 %v1369, %v1357
    %v1886 = vpack.c.b16 %v1370, %v1358
    %v1887 = vpack.c.b16 %v1371, %v1359
    %v1888 = vpack.c.b16 %v1372, %v1360
    %v1889 = vpack.c.b16 %v1373, %v1361
    %v1890 = vpack.c.b16 %v1386, %v1374
    %v1891 = vpack.c.b16 %v1387, %v1375
    %v1892 = vpack.c.b16 %v1388, %v1376
    %v1893 = vpack.c.b16 %v1389, %v1377
    %v1894 = vpack.c.b16 %v1390, %v1378
    %v1895 = vpack.c.b16 %v1391, %v1379
    %v1896 = vpack.c.b16 %v1392, %v1380
    %v1897 = vpack.c.b16 %v1393, %v1381
    %v1898 = vpack.c.b16 %v1394, %v1382
    %v1899 = vpack.c.b16 %v1395, %v1383
    %v1900 = vpack.c.b16 %v1396, %v1384
    %v1901 = vpack.c.b16 %v1397, %v1385
    %v1902 = vpack.c.b16 %v1410, %v1398
    %v1903 = vpack.c.b16 %v1411, %v1399
    %v1904 = vpack.c.b16 %v1412, %v1400
    %v1905 = vpack.c.b16 %v1413, %v1401
    %v1906 = vpack.c.b16 %v1414, %v1402
    %v1907 = vpack.c.b16 %v1415, %v1403
    %v1908 = vpack.c.b16 %v1416, %v1404
    %v1909 = vpack.c.b16 %v1417, %v1405
    %v1910 = vpack.c.b16 %v1418, %v1406
    %v1911 = vpack.c.b16 %v1419, %v1407
    %v1912 = vpack.c.b16 %v1420, %v1408
    %v1913 = vpack.c.b16 %v1421, %v1409
    %v1914 = vpack.c.b16 %v1434, %v1422
    %v1915 = vpack.c.b16 %v1435, %v1423
    %v1916 = vpack.c.b16 %v1436, %v1424
    %v1917 = vpack.c.b16 %v1437, %v1425
    %v1918 = vpack.c.b16 %v1438, %v1426
    %v1919 = vpack.c.b16 %v1439, %v1427
    %v1920 = vpack.c.b16 %v1440, %v1428
    %v1921 = vpack.c.b16 %v1441, %v1429
    %v1922 = vpack.c.b16 %v1442, %v1430
    %v1923 = vpack.c.b16 %v1443, %v1431
    %v1924 = vpack.c.b16 %v1444, %v1432
    %v1925 = vpack.c.b16 %v1445, %v1433
    %v1926 = vpack.c.b16 %v1458, %v1446
    %v1927 = vpack.c.b16 %v1459, %v1447
    %v1928 = vpack.c.b16 %v1460, %v1448
    %v1929 = vpack.c.b16 %v1461, %v1449
    %v1930 = vpack.c.b16 %v1462, %v1450
    %v1931 = vpack.c.b16 %v1463, %v1451
    %v1932 = vpack.c.b16 %v1464, %v1452
    %v1933 = vpack.c.b16 %v1465, %v1453
    %v1934 = vpack.c.b16 %v1466, %v1454
    %v1935 = vpack.c.b16 %v1467, %v1455
    %v1936 = vpack.c.b16 %v1468, %v1456
    %v1937 = vpack.c.b16 %v1469, %v1457
    %v1938 = vpack.c.b16 %v1482, %v1470
    %v1939 = vpack.c.b16 %v1483, %v1471
    %v1940 = vpack.c.b16 %v1484, %v1472
    %v1941 = vpack.c.b16 %v1485, %v1473
    %v1942 = vpack.c.b16 %v1486, %v1474
    %v1943 = vpack.c.b16 %v1487, %v1475
    %v1944 = vpack.c.b16 %v1488, %v1476
    %v1945 = vpack.c.b16 %v1489, %v1477
    %v1946 = vpack.c.b16 %v1490, %v1478
    %v1947 = vpack.c.b16 %v1491, %v1479
    %v1948 = vpack.c.b16 %v1492, %v1480
    %v1949 = vpack.c.b16 %v1493, %v1481
    %v1950 = vpack.c.b16 %v1506, %v1494
    %v1951 = vpack.c.b16 %v1507, %v1495
    %v1952 = vpack.c.b16 %v1508, %v1496
    %v1953 = vpack.c.b16 %v1509, %v1497
    %v1954 = vpack.c.b16 %v1510, %v1498
    %v1955 = vpack.c.b16 %v1511, %v1499
    %v1956 = vpack.c.b16 %v1512, %v1500
    %v1957 = vpack.c.b16 %v1513, %v1501
    %v1958 = vpack.c.b16 %v1514, %v1502
    %v1959 = vpack.c.b16 %v1515, %v1503
    %v1960 = vpack.c.b16 %v1516, %v1504
    %v1961 = vpack.c.b16 %v1517, %v1505
    %v1962 = vpack.c.b16 %v1530, %v1518
    %v1963 = vpack.c.b16 %v1531, %v1519
    %v1964 = vpack.c.b16 %v1532, %v1520
    %v1965 = vpack.c.b16 %v1533, %v1521
    %v1966 = vpack.c.b16 %v1534, %v1522
    %v1967 = vpack.c.b16 %v1535, %v1523
    %v1968 = vpack.c.b16 %v1536, %v1524
    %v1969 = vpack.c.b16 %v1537, %v1525
    %v1970 = vpack.c.b16 %v1538, %v1526
    %v1971 = vpack.c.b16 %v1539, %v1527
    %v1972 = vpack.c.b16 %v1540, %v1528
    %v1973 = vpack.c.b16 %v1541, %v1529
    %v1974 = vpack.c.b16 %v1554, %v1542
    %v1975 = vpack.c.b16 %v1555, %v1543
    %v1976 = vpack.c.b16 %v1556, %v1544
    %v1977 = vpack.c.b16 %v1557, %v1545
    %v1978 = vpack.c.b16 %v1558, %v1546
    %v1979 = vpack.c.b16 %v1559, %v1547
    %v1980 = vpack.c.b16 %v1560, %v1548
    %v1981 = vpack.c.b16 %v1561, %v1549
    %v1982 = vpack.c.b16 %v1562, %v1550
    %v1983 = vpack.c.b16 %v1563, %v1551
    %v1984 = vpack.c.b16 %v1564, %v1552
    %v1985 = vpack.c.b16 %v1565, %v1553
    %v1986 = vpack.c.b16 %v1578, %v1566
    %v1987 = vpack.c.b16 %v1579, %v1567
    %v1988 = vpack.c.b16 %v1580, %v1568
    %v1989 = vpack.c.b16 %v1581, %v1569
    %v1990 = vpack.c.b16 %v1582, %v1570
    %v1991 = vpack.c.b16 %v1583, %v1571
    %v1992 = vpack.c.b16 %v1584, %v1572
    %v1993 = vpack.c.b16 %v1585, %v1573
    %v1994 = vpack.c.b16 %v1586, %v1574
    %v1995 = vpack.c.b16 %v1587, %v1575
    %v1996 = vpack.c.b16 %v1588, %v1576
    %v1997 = vpack.c.b16 %v1589, %v1577
    %v1998 = vpack.c.b16 %v1602, %v1590
    %v1999 = vpack.c.b16 %v1603, %v1591
    %v2000 = vpack.c.b16 %v1604, %v1592
    %v2001 = vpack.c.b16 %v1605, %v1593
    %v2002 = vpack.c.b16 %v1606, %v1594
    %v2003 = vpack.c.b16 %v1607, %v1595
    %v2004 = vpack.c.b16 %v1608, %v1596
    %v2005 = vpack.c.b16 %v1609, %v1597
    %v2006 = vpack.c.b16 %v1610, %v1598
    %v2007 = vpack.c.b16 %v1611, %v1599
    %v2008 = vpack.c.b16 %v1612, %v1600
    %v2009 = vpack.c.b16 %v1613, %v1601
    %v2010 = vpack.c.b16 %v1626, %v1614
    %v2011 = vpack.c.b16 %v1627, %v1615
    %v2012 = vpack.c.b16 %v1628, %v1616
    %v2013 = vpack.c.b16 %v1629, %v1617
    %v2014 = vpack.c.b16 %v1630, %v1618
    %v2015 = vpack.c.b16 %v1631, %v1619
    %v2016 = vpack.c.b16 %v1632, %v1620
    %v2017 = vpack.c.b16 %v1633, %v1621
    %v2018 = vpack.c.b16 %v1634, %v1622
    %v2019 = vpack.c.b16 %v1635, %v1623
    %v2020 = vpack.c.b16 %v1636, %v1624
    %v2021 = vpack.c.b16 %v1637, %v1625
    %2406 = vmatprep.subr.bf16.mxu0 %v1723
    %2407 = vmatpush1.bf16.msra.mxu0 %v1722
    %2408 = vmatprep.subr.bf16.mxu0 %v1711
    %2409 = vmatpush1.bf16.msra.mxu0 %v1710
    %2410 = vmatprep.subr.bf16.mxu0 %v1699
    %2411 = vmatpush1.bf16.msra.mxu0 %v1698
    %2412 = vmatprep.subr.bf16.mxu0 %v1687
    %2413 = vmatpush1.bf16.msra.mxu0 %v1686
    %2414 = vmatprep.subr.bf16.mxu0 %v1675
    %2415 = vmatpush1.bf16.msra.mxu0 %v1674
    %2416 = vmatprep.subr.bf16.mxu0 %v1663
    %2417 = vmatpush1.bf16.msra.mxu0 %v1662
    %2418 = vmatprep.subr.bf16.mxu0 %v1651
    %2419 = vmatpush1.bf16.msra.mxu0 %v1650
    %2420 = vmatprep.subr.bf16.mxu0 %v1639
    %2421 = vmatpush1.bf16.msra.mxu0 %v1638
    %2422 = vmatprep.subr.bf16.mxu0 %v1819
    %2423 = vmatpush2.bf16.msra.mxu0 %v1818
    %2424 = vmatprep.subr.bf16.mxu0 %v1807
    %2425 = vmatpush2.bf16.msra.mxu0 %v1806
    %2426 = vmatprep.subr.bf16.mxu0 %v1795
    %2427 = vmatpush2.bf16.msra.mxu0 %v1794
    %2428 = vmatprep.subr.bf16.mxu0 %v1783
    %2429 = vmatpush2.bf16.msra.mxu0 %v1782
    %2430 = vmatprep.subr.bf16.mxu0 %v1771
    %2431 = vmatpush2.bf16.msra.mxu0 %v1770
    %2432 = vmatprep.subr.bf16.mxu0 %v1759
    %2433 = vmatpush2.bf16.msra.mxu0 %v1758
    %2434 = vmatprep.subr.bf16.mxu0 %v1747
    %2435 = vmatpush2.bf16.msra.mxu0 %v1746
    %2436 = vmatprep.subr.bf16.mxu0 %v1735
    %2437 = vmatpush2.bf16.msra.mxu0 %v1734
    %2438 = vmatprep.mubr.bf16.mxu0 %v483
    %2439 = vmatmul.mubr.bf16.gmra.mxu0 %v482
    %v2440 = vpop.f32.mrf.mxu0
    %v2441 = vadd.f32 0.0, %v2440
    %v2442 = vpop.f32.mrf.mxu0
    %v2443 = vadd.f32 0.0, %v2442
    %v2444 = vpop.f32.mrf.mxu0
    %v2445 = vpop.f32.mrf.mxu0
    %2446 = vdwg.mxu0
    %2447 = vmatprep.subr.bf16.mxu0 %v1915
    %2448 = vmatpush1.bf16.msra.mxu0 %v1914
    %2449 = vmatprep.subr.bf16.mxu0 %v1903
    %2450 = vmatpush1.bf16.msra.mxu0 %v1902
    %2451 = vmatprep.subr.bf16.mxu0 %v1891
    %2452 = vmatpush1.bf16.msra.mxu0 %v1890
    %2453 = vmatprep.subr.bf16.mxu0 %v1879
    %2454 = vmatpush1.bf16.msra.mxu0 %v1878
    %2455 = vmatprep.subr.bf16.mxu0 %v1867
    %2456 = vmatpush1.bf16.msra.mxu0 %v1866
    %2457 = vmatprep.subr.bf16.mxu0 %v1855
    %2458 = vmatpush1.bf16.msra.mxu0 %v1854
    %2459 = vmatprep.subr.bf16.mxu0 %v1843
    %2460 = vmatpush1.bf16.msra.mxu0 %v1842
    %2461 = vmatprep.subr.bf16.mxu0 %v1831
    %2462 = vmatpush1.bf16.msra.mxu0 %v1830
    %2463 = vmatprep.subr.bf16.mxu0 %v2011
    %2464 = vmatpush2.bf16.msra.mxu0 %v2010
    %2465 = vmatprep.subr.bf16.mxu0 %v1999
    %2466 = vmatpush2.bf16.msra.mxu0 %v1998
    %2467 = vmatprep.subr.bf16.mxu0 %v1987
    %2468 = vmatpush2.bf16.msra.mxu0 %v1986
    %2469 = vmatprep.subr.bf16.mxu0 %v1975
    %2470 = vmatpush2.bf16.msra.mxu0 %v1974
    %2471 = vmatprep.subr.bf16.mxu0 %v1963
    %2472 = vmatpush2.bf16.msra.mxu0 %v1962
    %2473 = vmatprep.subr.bf16.mxu0 %v1951
    %2474 = vmatpush2.bf16.msra.mxu0 %v1950
    %2475 = vmatprep.subr.bf16.mxu0 %v1939
    %2476 = vmatpush2.bf16.msra.mxu0 %v1938
    %2477 = vmatprep.subr.bf16.mxu0 %v1927
    %2478 = vmatpush2.bf16.msra.mxu0 %v1926
    %2479 = vmatprep.mubr.bf16.mxu0 %v485
    %2480 = vmatmul.mubr.bf16.gmra.mxu0 %v484
    %v2481 = vpop.f32.mrf.mxu0
    %v2482 = vadd.f32 %v2441, %v2481
    %v2483 = vpop.f32.mrf.mxu0
    %v2484 = vadd.f32 %v2443, %v2483
    %v2485 = vpop.f32.mrf.mxu0
    %v2486 = vpop.f32.mrf.mxu0
    %2487 = vdwg.mxu0
    %2488 = vmatprep.subr.bf16.mxu0 %v1725
    %2489 = vmatpush1.bf16.msra.mxu0 %v1724
    %2490 = vmatprep.subr.bf16.mxu0 %v1713
    %2491 = vmatpush1.bf16.msra.mxu0 %v1712
    %2492 = vmatprep.subr.bf16.mxu0 %v1701
    %2493 = vmatpush1.bf16.msra.mxu0 %v1700
    %2494 = vmatprep.subr.bf16.mxu0 %v1689
    %2495 = vmatpush1.bf16.msra.mxu0 %v1688
    %2496 = vmatprep.subr.bf16.mxu0 %v1677
    %2497 = vmatpush1.bf16.msra.mxu0 %v1676
    %2498 = vmatprep.subr.bf16.mxu0 %v1665
    %2499 = vmatpush1.bf16.msra.mxu0 %v1664
    %2500 = vmatprep.subr.bf16.mxu0 %v1653
    %2501 = vmatpush1.bf16.msra.mxu0 %v1652
    %2502 = vmatprep.subr.bf16.mxu0 %v1641
    %2503 = vmatpush1.bf16.msra.mxu0 %v1640
    %2504 = vmatprep.subr.bf16.mxu0 %v1821
    %2505 = vmatpush2.bf16.msra.mxu0 %v1820
    %2506 = vmatprep.subr.bf16.mxu0 %v1809
    %2507 = vmatpush2.bf16.msra.mxu0 %v1808
    %2508 = vmatprep.subr.bf16.mxu0 %v1797
    %2509 = vmatpush2.bf16.msra.mxu0 %v1796
    %2510 = vmatprep.subr.bf16.mxu0 %v1785
    %2511 = vmatpush2.bf16.msra.mxu0 %v1784
    %2512 = vmatprep.subr.bf16.mxu0 %v1773
    %2513 = vmatpush2.bf16.msra.mxu0 %v1772
    %2514 = vmatprep.subr.bf16.mxu0 %v1761
    %2515 = vmatpush2.bf16.msra.mxu0 %v1760
    %2516 = vmatprep.subr.bf16.mxu0 %v1749
    %2517 = vmatpush2.bf16.msra.mxu0 %v1748
    %2518 = vmatprep.subr.bf16.mxu0 %v1737
    %2519 = vmatpush2.bf16.msra.mxu0 %v1736
    %2520 = vmatprep.mubr.bf16.mxu0 %v483
    %2521 = vmatmul.mubr.bf16.gmra.mxu0 %v482
    %v2522 = vpop.f32.mrf.mxu0
    %v2523 = vadd.f32 0.0, %v2522
    %v2524 = vpop.f32.mrf.mxu0
    %v2525 = vadd.f32 0.0, %v2524
    %v2526 = vpop.f32.mrf.mxu0
    %v2527 = vpop.f32.mrf.mxu0
    %2528 = vdwg.mxu0
    %2529 = vmatprep.subr.bf16.mxu0 %v1917
    %2530 = vmatpush1.bf16.msra.mxu0 %v1916
    %2531 = vmatprep.subr.bf16.mxu0 %v1905
    %2532 = vmatpush1.bf16.msra.mxu0 %v1904
    %2533 = vmatprep.subr.bf16.mxu0 %v1893
    %2534 = vmatpush1.bf16.msra.mxu0 %v1892
    %2535 = vmatprep.subr.bf16.mxu0 %v1881
    %2536 = vmatpush1.bf16.msra.mxu0 %v1880
    %2537 = vmatprep.subr.bf16.mxu0 %v1869
    %2538 = vmatpush1.bf16.msra.mxu0 %v1868
    %2539 = vmatprep.subr.bf16.mxu0 %v1857
    %2540 = vmatpush1.bf16.msra.mxu0 %v1856
    %2541 = vmatprep.subr.bf16.mxu0 %v1845
    %2542 = vmatpush1.bf16.msra.mxu0 %v1844
    %2543 = vmatprep.subr.bf16.mxu0 %v1833
    %2544 = vmatpush1.bf16.msra.mxu0 %v1832
    %2545 = vmatprep.subr.bf16.mxu0 %v2013
    %2546 = vmatpush2.bf16.msra.mxu0 %v2012
    %2547 = vmatprep.subr.bf16.mxu0 %v2001
    %2548 = vmatpush2.bf16.msra.mxu0 %v2000
    %2549 = vmatprep.subr.bf16.mxu0 %v1989
    %2550 = vmatpush2.bf16.msra.mxu0 %v1988
    %2551 = vmatprep.subr.bf16.mxu0 %v1977
    %2552 = vmatpush2.bf16.msra.mxu0 %v1976
    %2553 = vmatprep.subr.bf16.mxu0 %v1965
    %2554 = vmatpush2.bf16.msra.mxu0 %v1964
    %2555 = vmatprep.subr.bf16.mxu0 %v1953
    %2556 = vmatpush2.bf16.msra.mxu0 %v1952
    %2557 = vmatprep.subr.bf16.mxu0 %v1941
    %2558 = vmatpush2.bf16.msra.mxu0 %v1940
    %2559 = vmatprep.subr.bf16.mxu0 %v1929
    %2560 = vmatpush2.bf16.msra.mxu0 %v1928
    %2561 = vmatprep.mubr.bf16.mxu0 %v485
    %2562 = vmatmul.mubr.bf16.gmra.mxu0 %v484
    %v2563 = vpop.f32.mrf.mxu0
    %v2564 = vadd.f32 %v2523, %v2563
    %v2565 = vpop.f32.mrf.mxu0
    %v2566 = vadd.f32 %v2525, %v2565
    %v2567 = vpop.f32.mrf.mxu0
    %v2568 = vpop.f32.mrf.mxu0
    %2569 = vdwg.mxu0
    %2570 = vmatprep.subr.bf16.mxu0 %v1727
    %2571 = vmatpush1.bf16.msra.mxu0 %v1726
    %2572 = vmatprep.subr.bf16.mxu0 %v1715
    %2573 = vmatpush1.bf16.msra.mxu0 %v1714
    %2574 = vmatprep.subr.bf16.mxu0 %v1703
    %2575 = vmatpush1.bf16.msra.mxu0 %v1702
    %2576 = vmatprep.subr.bf16.mxu0 %v1691
    %2577 = vmatpush1.bf16.msra.mxu0 %v1690
    %2578 = vmatprep.subr.bf16.mxu0 %v1679
    %2579 = vmatpush1.bf16.msra.mxu0 %v1678
    %2580 = vmatprep.subr.bf16.mxu0 %v1667
    %2581 = vmatpush1.bf16.msra.mxu0 %v1666
    %2582 = vmatprep.subr.bf16.mxu0 %v1655
    %2583 = vmatpush1.bf16.msra.mxu0 %v1654
    %2584 = vmatprep.subr.bf16.mxu0 %v1643
    %2585 = vmatpush1.bf16.msra.mxu0 %v1642
    %2586 = vmatprep.subr.bf16.mxu0 %v1823
    %2587 = vmatpush2.bf16.msra.mxu0 %v1822
    %2588 = vmatprep.subr.bf16.mxu0 %v1811
    %2589 = vmatpush2.bf16.msra.mxu0 %v1810
    %2590 = vmatprep.subr.bf16.mxu0 %v1799
    %2591 = vmatpush2.bf16.msra.mxu0 %v1798
    %2592 = vmatprep.subr.bf16.mxu0 %v1787
    %2593 = vmatpush2.bf16.msra.mxu0 %v1786
    %2594 = vmatprep.subr.bf16.mxu0 %v1775
    %2595 = vmatpush2.bf16.msra.mxu0 %v1774
    %2596 = vmatprep.subr.bf16.mxu0 %v1763
    %2597 = vmatpush2.bf16.msra.mxu0 %v1762
    %2598 = vmatprep.subr.bf16.mxu0 %v1751
    %2599 = vmatpush2.bf16.msra.mxu0 %v1750
    %2600 = vmatprep.subr.bf16.mxu0 %v1739
    %2601 = vmatpush2.bf16.msra.mxu0 %v1738
    %2602 = vmatprep.mubr.bf16.mxu0 %v483
    %2603 = vmatmul.mubr.bf16.gmra.mxu0 %v482
    %v2604 = vpop.f32.mrf.mxu0
    %v2605 = vadd.f32 0.0, %v2604
    %v2606 = vpop.f32.mrf.mxu0
    %v2607 = vadd.f32 0.0, %v2606
    %v2608 = vpop.f32.mrf.mxu0
    %v2609 = vpop.f32.mrf.mxu0
    %2610 = vdwg.mxu0
    %2611 = vmatprep.subr.bf16.mxu0 %v1919
    %2612 = vmatpush1.bf16.msra.mxu0 %v1918
    %2613 = vmatprep.subr.bf16.mxu0 %v1907
    %2614 = vmatpush1.bf16.msra.mxu0 %v1906
    %2615 = vmatprep.subr.bf16.mxu0 %v1895
    %2616 = vmatpush1.bf16.msra.mxu0 %v1894
    %2617 = vmatprep.subr.bf16.mxu0 %v1883
    %2618 = vmatpush1.bf16.msra.mxu0 %v1882
    %2619 = vmatprep.subr.bf16.mxu0 %v1871
    %2620 = vmatpush1.bf16.msra.mxu0 %v1870
    %2621 = vmatprep.subr.bf16.mxu0 %v1859
    %2622 = vmatpush1.bf16.msra.mxu0 %v1858
    %2623 = vmatprep.subr.bf16.mxu0 %v1847
    %2624 = vmatpush1.bf16.msra.mxu0 %v1846
    %2625 = vmatprep.subr.bf16.mxu0 %v1835
    %2626 = vmatpush1.bf16.msra.mxu0 %v1834
    %2627 = vmatprep.subr.bf16.mxu0 %v2015
    %2628 = vmatpush2.bf16.msra.mxu0 %v2014
    %2629 = vmatprep.subr.bf16.mxu0 %v2003
    %2630 = vmatpush2.bf16.msra.mxu0 %v2002
    %2631 = vmatprep.subr.bf16.mxu0 %v1991
    %2632 = vmatpush2.bf16.msra.mxu0 %v1990
    %2633 = vmatprep.subr.bf16.mxu0 %v1979
    %2634 = vmatpush2.bf16.msra.mxu0 %v1978
    %2635 = vmatprep.subr.bf16.mxu0 %v1967
    %2636 = vmatpush2.bf16.msra.mxu0 %v1966
    %2637 = vmatprep.subr.bf16.mxu0 %v1955
    %2638 = vmatpush2.bf16.msra.mxu0 %v1954
    %2639 = vmatprep.subr.bf16.mxu0 %v1943
    %2640 = vmatpush2.bf16.msra.mxu0 %v1942
    %2641 = vmatprep.subr.bf16.mxu0 %v1931
    %2642 = vmatpush2.bf16.msra.mxu0 %v1930
    %2643 = vmatprep.mubr.bf16.mxu0 %v485
    %2644 = vmatmul.mubr.bf16.gmra.mxu0 %v484
    %v2645 = vpop.f32.mrf.mxu0
    %v2646 = vadd.f32 %v2605, %v2645
    %v2647 = vpop.f32.mrf.mxu0
    %v2648 = vadd.f32 %v2607, %v2647
    %v2649 = vpop.f32.mrf.mxu0
    %v2650 = vpop.f32.mrf.mxu0
    %2651 = vdwg.mxu0
    %2652 = vmatprep.subr.bf16.mxu0 %v1729
    %2653 = vmatpush1.bf16.msra.mxu0 %v1728
    %2654 = vmatprep.subr.bf16.mxu0 %v1717
    %2655 = vmatpush1.bf16.msra.mxu0 %v1716
    %2656 = vmatprep.subr.bf16.mxu0 %v1705
    %2657 = vmatpush1.bf16.msra.mxu0 %v1704
    %2658 = vmatprep.subr.bf16.mxu0 %v1693
    %2659 = vmatpush1.bf16.msra.mxu0 %v1692
    %2660 = vmatprep.subr.bf16.mxu0 %v1681
    %2661 = vmatpush1.bf16.msra.mxu0 %v1680
    %2662 = vmatprep.subr.bf16.mxu0 %v1669
    %2663 = vmatpush1.bf16.msra.mxu0 %v1668
    %2664 = vmatprep.subr.bf16.mxu0 %v1657
    %2665 = vmatpush1.bf16.msra.mxu0 %v1656
    %2666 = vmatprep.subr.bf16.mxu0 %v1645
    %2667 = vmatpush1.bf16.msra.mxu0 %v1644
    %2668 = vmatprep.subr.bf16.mxu0 %v1825
    %2669 = vmatpush2.bf16.msra.mxu0 %v1824
    %2670 = vmatprep.subr.bf16.mxu0 %v1813
    %2671 = vmatpush2.bf16.msra.mxu0 %v1812
    %2672 = vmatprep.subr.bf16.mxu0 %v1801
    %2673 = vmatpush2.bf16.msra.mxu0 %v1800
    %2674 = vmatprep.subr.bf16.mxu0 %v1789
    %2675 = vmatpush2.bf16.msra.mxu0 %v1788
    %2676 = vmatprep.subr.bf16.mxu0 %v1777
    %2677 = vmatpush2.bf16.msra.mxu0 %v1776
    %2678 = vmatprep.subr.bf16.mxu0 %v1765
    %2679 = vmatpush2.bf16.msra.mxu0 %v1764
    %2680 = vmatprep.subr.bf16.mxu0 %v1753
    %2681 = vmatpush2.bf16.msra.mxu0 %v1752
    %2682 = vmatprep.subr.bf16.mxu0 %v1741
    %2683 = vmatpush2.bf16.msra.mxu0 %v1740
    %2684 = vmatprep.mubr.bf16.mxu0 %v483
    %2685 = vmatmul.mubr.bf16.gmra.mxu0 %v482
    %v2686 = vpop.f32.mrf.mxu0
    %v2687 = vadd.f32 0.0, %v2686
    %v2688 = vpop.f32.mrf.mxu0
    %v2689 = vadd.f32 0.0, %v2688
    %v2690 = vpop.f32.mrf.mxu0
    %v2691 = vpop.f32.mrf.mxu0
    %2692 = vdwg.mxu0
    %2693 = vmatprep.subr.bf16.mxu0 %v1921
    %2694 = vmatpush1.bf16.msra.mxu0 %v1920
    %2695 = vmatprep.subr.bf16.mxu0 %v1909
    %2696 = vmatpush1.bf16.msra.mxu0 %v1908
    %2697 = vmatprep.subr.bf16.mxu0 %v1897
    %2698 = vmatpush1.bf16.msra.mxu0 %v1896
    %2699 = vmatprep.subr.bf16.mxu0 %v1885
    %2700 = vmatpush1.bf16.msra.mxu0 %v1884
    %2701 = vmatprep.subr.bf16.mxu0 %v1873
    %2702 = vmatpush1.bf16.msra.mxu0 %v1872
    %2703 = vmatprep.subr.bf16.mxu0 %v1861
    %2704 = vmatpush1.bf16.msra.mxu0 %v1860
    %2705 = vmatprep.subr.bf16.mxu0 %v1849
    %2706 = vmatpush1.bf16.msra.mxu0 %v1848
    %2707 = vmatprep.subr.bf16.mxu0 %v1837
    %2708 = vmatpush1.bf16.msra.mxu0 %v1836
    %2709 = vmatprep.subr.bf16.mxu0 %v2017
    %2710 = vmatpush2.bf16.msra.mxu0 %v2016
    %2711 = vmatprep.subr.bf16.mxu0 %v2005
    %2712 = vmatpush2.bf16.msra.mxu0 %v2004
    %2713 = vmatprep.subr.bf16.mxu0 %v1993
    %2714 = vmatpush2.bf16.msra.mxu0 %v1992
    %2715 = vmatprep.subr.bf16.mxu0 %v1981
    %2716 = vmatpush2.bf16.msra.mxu0 %v1980
    %2717 = vmatprep.subr.bf16.mxu0 %v1969
    %2718 = vmatpush2.bf16.msra.mxu0 %v1968
    %2719 = vmatprep.subr.bf16.mxu0 %v1957
    %2720 = vmatpush2.bf16.msra.mxu0 %v1956
    %2721 = vmatprep.subr.bf16.mxu0 %v1945
    %2722 = vmatpush2.bf16.msra.mxu0 %v1944
    %2723 = vmatprep.subr.bf16.mxu0 %v1933
    %2724 = vmatpush2.bf16.msra.mxu0 %v1932
    %2725 = vmatprep.mubr.bf16.mxu0 %v485
    %2726 = vmatmul.mubr.bf16.gmra.mxu0 %v484
    %v2727 = vpop.f32.mrf.mxu0
    %v2728 = vadd.f32 %v2687, %v2727
    %v2729 = vpop.f32.mrf.mxu0
    %v2730 = vadd.f32 %v2689, %v2729
    %v2731 = vpop.f32.mrf.mxu0
    %v2732 = vpop.f32.mrf.mxu0
    %2733 = vdwg.mxu0
    %2734 = vmatprep.subr.bf16.mxu0 %v1731
    %2735 = vmatpush1.bf16.msra.mxu0 %v1730
    %2736 = vmatprep.subr.bf16.mxu0 %v1719
    %2737 = vmatpush1.bf16.msra.mxu0 %v1718
    %2738 = vmatprep.subr.bf16.mxu0 %v1707
    %2739 = vmatpush1.bf16.msra.mxu0 %v1706
    %2740 = vmatprep.subr.bf16.mxu0 %v1695
    %2741 = vmatpush1.bf16.msra.mxu0 %v1694
    %2742 = vmatprep.subr.bf16.mxu0 %v1683
    %2743 = vmatpush1.bf16.msra.mxu0 %v1682
    %2744 = vmatprep.subr.bf16.mxu0 %v1671
    %2745 = vmatpush1.bf16.msra.mxu0 %v1670
    %2746 = vmatprep.subr.bf16.mxu0 %v1659
    %2747 = vmatpush1.bf16.msra.mxu0 %v1658
    %2748 = vmatprep.subr.bf16.mxu0 %v1647
    %2749 = vmatpush1.bf16.msra.mxu0 %v1646
    %2750 = vmatprep.subr.bf16.mxu0 %v1827
    %2751 = vmatpush2.bf16.msra.mxu0 %v1826
    %2752 = vmatprep.subr.bf16.mxu0 %v1815
    %2753 = vmatpush2.bf16.msra.mxu0 %v1814
    %2754 = vmatprep.subr.bf16.mxu0 %v1803
    %2755 = vmatpush2.bf16.msra.mxu0 %v1802
    %2756 = vmatprep.subr.bf16.mxu0 %v1791
    %2757 = vmatpush2.bf16.msra.mxu0 %v1790
    %2758 = vmatprep.subr.bf16.mxu0 %v1779
    %2759 = vmatpush2.bf16.msra.mxu0 %v1778
    %2760 = vmatprep.subr.bf16.mxu0 %v1767
    %2761 = vmatpush2.bf16.msra.mxu0 %v1766
    %2762 = vmatprep.subr.bf16.mxu0 %v1755
    %2763 = vmatpush2.bf16.msra.mxu0 %v1754
    %2764 = vmatprep.subr.bf16.mxu0 %v1743
    %2765 = vmatpush2.bf16.msra.mxu0 %v1742
    %2766 = vmatprep.mubr.bf16.mxu0 %v483
    %2767 = vmatmul.mubr.bf16.gmra.mxu0 %v482
    %v2768 = vpop.f32.mrf.mxu0
    %v2769 = vadd.f32 0.0, %v2768
    %v2770 = vpop.f32.mrf.mxu0
    %v2771 = vadd.f32 0.0, %v2770
    %v2772 = vpop.f32.mrf.mxu0
    %v2773 = vpop.f32.mrf.mxu0
    %2774 = vdwg.mxu0
    %2775 = vmatprep.subr.bf16.mxu0 %v1923
    %2776 = vmatpush1.bf16.msra.mxu0 %v1922
    %2777 = vmatprep.subr.bf16.mxu0 %v1911
    %2778 = vmatpush1.bf16.msra.mxu0 %v1910
    %2779 = vmatprep.subr.bf16.mxu0 %v1899
    %2780 = vmatpush1.bf16.msra.mxu0 %v1898
    %2781 = vmatprep.subr.bf16.mxu0 %v1887
    %2782 = vmatpush1.bf16.msra.mxu0 %v1886
    %2783 = vmatprep.subr.bf16.mxu0 %v1875
    %2784 = vmatpush1.bf16.msra.mxu0 %v1874
    %2785 = vmatprep.subr.bf16.mxu0 %v1863
    %2786 = vmatpush1.bf16.msra.mxu0 %v1862
    %2787 = vmatprep.subr.bf16.mxu0 %v1851
    %2788 = vmatpush1.bf16.msra.mxu0 %v1850
    %2789 = vmatprep.subr.bf16.mxu0 %v1839
    %2790 = vmatpush1.bf16.msra.mxu0 %v1838
    %2791 = vmatprep.subr.bf16.mxu0 %v2019
    %2792 = vmatpush2.bf16.msra.mxu0 %v2018
    %2793 = vmatprep.subr.bf16.mxu0 %v2007
    %2794 = vmatpush2.bf16.msra.mxu0 %v2006
    %2795 = vmatprep.subr.bf16.mxu0 %v1995
    %2796 = vmatpush2.bf16.msra.mxu0 %v1994
    %2797 = vmatprep.subr.bf16.mxu0 %v1983
    %2798 = vmatpush2.bf16.msra.mxu0 %v1982
    %2799 = vmatprep.subr.bf16.mxu0 %v1971
    %2800 = vmatpush2.bf16.msra.mxu0 %v1970
    %2801 = vmatprep.subr.bf16.mxu0 %v1959
    %2802 = vmatpush2.bf16.msra.mxu0 %v1958
    %2803 = vmatprep.subr.bf16.mxu0 %v1947
    %2804 = vmatpush2.bf16.msra.mxu0 %v1946
    %2805 = vmatprep.subr.bf16.mxu0 %v1935
    %2806 = vmatpush2.bf16.msra.mxu0 %v1934
    %2807 = vmatprep.mubr.bf16.mxu0 %v485
    %2808 = vmatmul.mubr.bf16.gmra.mxu0 %v484
    %v2809 = vpop.f32.mrf.mxu0
    %v2810 = vadd.f32 %v2769, %v2809
    %v2811 = vpop.f32.mrf.mxu0
    %v2812 = vadd.f32 %v2771, %v2811
    %v2813 = vpop.f32.mrf.mxu0
    %v2814 = vpop.f32.mrf.mxu0
    %2815 = vdwg.mxu0
    %2816 = vmatprep.subr.bf16.mxu0 %v1733
    %2817 = vmatpush1.bf16.msra.mxu0 %v1732
    %2818 = vmatprep.subr.bf16.mxu0 %v1721
    %2819 = vmatpush1.bf16.msra.mxu0 %v1720
    %2820 = vmatprep.subr.bf16.mxu0 %v1709
    %2821 = vmatpush1.bf16.msra.mxu0 %v1708
    %2822 = vmatprep.subr.bf16.mxu0 %v1697
    %2823 = vmatpush1.bf16.msra.mxu0 %v1696
    %2824 = vmatprep.subr.bf16.mxu0 %v1685
    %2825 = vmatpush1.bf16.msra.mxu0 %v1684
    %2826 = vmatprep.subr.bf16.mxu0 %v1673
    %2827 = vmatpush1.bf16.msra.mxu0 %v1672
    %2828 = vmatprep.subr.bf16.mxu0 %v1661
    %2829 = vmatpush1.bf16.msra.mxu0 %v1660
    %2830 = vmatprep.subr.bf16.mxu0 %v1649
    %2831 = vmatpush1.bf16.msra.mxu0 %v1648
    %2832 = vmatprep.subr.bf16.mxu0 %v1829
    %2833 = vmatpush2.bf16.msra.mxu0 %v1828
    %2834 = vmatprep.subr.bf16.mxu0 %v1817
    %2835 = vmatpush2.bf16.msra.mxu0 %v1816
    %2836 = vmatprep.subr.bf16.mxu0 %v1805
    %2837 = vmatpush2.bf16.msra.mxu0 %v1804
    %2838 = vmatprep.subr.bf16.mxu0 %v1793
    %2839 = vmatpush2.bf16.msra.mxu0 %v1792
    %2840 = vmatprep.subr.bf16.mxu0 %v1781
    %2841 = vmatpush2.bf16.msra.mxu0 %v1780
    %2842 = vmatprep.subr.bf16.mxu0 %v1769
    %2843 = vmatpush2.bf16.msra.mxu0 %v1768
    %2844 = vmatprep.subr.bf16.mxu0 %v1757
    %2845 = vmatpush2.bf16.msra.mxu0 %v1756
    %2846 = vmatprep.subr.bf16.mxu0 %v1745
    %2847 = vmatpush2.bf16.msra.mxu0 %v1744
    %2848 = vmatprep.mubr.bf16.mxu0 %v483
    %2849 = vmatmul.mubr.bf16.gmra.mxu0 %v482
    %v2850 = vpop.f32.mrf.mxu0
    %v2851 = vadd.f32 0.0, %v2850
    %v2852 = vpop.f32.mrf.mxu0
    %v2853 = vadd.f32 0.0, %v2852
    %v2854 = vpop.f32.mrf.mxu0
    %v2855 = vpop.f32.mrf.mxu0
    %2856 = vdwg.mxu0
    %2857 = vmatprep.subr.bf16.mxu0 %v1925
    %2858 = vmatpush1.bf16.msra.mxu0 %v1924
    %2859 = vmatprep.subr.bf16.mxu0 %v1913
    %2860 = vmatpush1.bf16.msra.mxu0 %v1912
    %2861 = vmatprep.subr.bf16.mxu0 %v1901
    %2862 = vmatpush1.bf16.msra.mxu0 %v1900
    %2863 = vmatprep.subr.bf16.mxu0 %v1889
    %2864 = vmatpush1.bf16.msra.mxu0 %v1888
    %2865 = vmatprep.subr.bf16.mxu0 %v1877
    %2866 = vmatpush1.bf16.msra.mxu0 %v1876
    %2867 = vmatprep.subr.bf16.mxu0 %v1865
    %2868 = vmatpush1.bf16.msra.mxu0 %v1864
    %2869 = vmatprep.subr.bf16.mxu0 %v1853
    %2870 = vmatpush1.bf16.msra.mxu0 %v1852
    %2871 = vmatprep.subr.bf16.mxu0 %v1841
    %2872 = vmatpush1.bf16.msra.mxu0 %v1840
    %2873 = vmatprep.subr.bf16.mxu0 %v2021
    %2874 = vmatpush2.bf16.msra.mxu0 %v2020
    %2875 = vmatprep.subr.bf16.mxu0 %v2009
    %2876 = vmatpush2.bf16.msra.mxu0 %v2008
    %2877 = vmatprep.subr.bf16.mxu0 %v1997
    %2878 = vmatpush2.bf16.msra.mxu0 %v1996
    %2879 = vmatprep.subr.bf16.mxu0 %v1985
    %2880 = vmatpush2.bf16.msra.mxu0 %v1984
    %2881 = vmatprep.subr.bf16.mxu0 %v1973
    %2882 = vmatpush2.bf16.msra.mxu0 %v1972
    %2883 = vmatprep.subr.bf16.mxu0 %v1961
    %2884 = vmatpush2.bf16.msra.mxu0 %v1960
    %2885 = vmatprep.subr.bf16.mxu0 %v1949
    %2886 = vmatpush2.bf16.msra.mxu0 %v1948
    %2887 = vmatprep.subr.bf16.mxu0 %v1937
    %2888 = vmatpush2.bf16.msra.mxu0 %v1936
    %2889 = vmatprep.mubr.bf16.mxu0 %v485
    %2890 = vmatmul.mubr.bf16.gmra.mxu0 %v484
    %v2891 = vpop.f32.mrf.mxu0
    %v2892 = vadd.f32 %v2851, %v2891
    %v2893 = vpop.f32.mrf.mxu0
    %v2894 = vadd.f32 %v2853, %v2893
    %v2895 = vpop.f32.mrf.mxu0
    %v2896 = vpop.f32.mrf.mxu0
    %2897 = vdwg.mxu0
    %v2898 = vadd.f32 %v470, %v2482
    %v2899 = vadd.f32 %v471, %v2484
    %v2900 = vadd.f32 %v472, %v2564
    %v2901 = vadd.f32 %v473, %v2566
    %v2902 = vxor.u32 %v2898, 2147483648
    %v2903 = vxor.u32 %v2899, 2147483648
    %v2904 = vxor.u32 %v2900, 2147483648
    %v2905 = vxor.u32 %v2901, 2147483648
    %v2906 = vmul.f32 %v2902, 1.442695
    %v2907 = vpow.pop %v2906
    %v2908 = vmul.f32 %v2903, 1.442695
    %v2909 = vpow.pop %v2908
    %v2910 = vmul.f32 %v2904, 1.442695
    %v2911 = vpow.pop %v2910
    %v2912 = vmul.f32 %v2905, 1.442695
    %v2913 = vpow.pop %v2912
    %v2914 = vadd.f32 %v2907, 1.0
    %v2915 = vadd.f32 %v2909, 1.0
    %v2916 = vadd.f32 %v2911, 1.0
    %v2917 = vadd.f32 %v2913, 1.0
    %v2918 = vrcp.pop %v2914
    %v2919 = vmul.f32 1.0, %v2918
    %v2920 = vrcp.pop %v2915
    %v2921 = vmul.f32 1.0, %v2920
    %v2922 = vrcp.pop %v2916
    %v2923 = vmul.f32 1.0, %v2922
    %v2924 = vrcp.pop %v2917
    %v2925 = vmul.f32 1.0, %v2924
    %v2926 = vadd.f32 %v474, %v2646
    %v2927 = vadd.f32 %v475, %v2648
    %v2928 = vadd.f32 %v476, %v2728
    %v2929 = vadd.f32 %v477, %v2730
    %v2930 = vxor.u32 %v2926, 2147483648
    %v2931 = vxor.u32 %v2927, 2147483648
    %v2932 = vxor.u32 %v2928, 2147483648
    %v2933 = vxor.u32 %v2929, 2147483648
    %v2934 = vmul.f32 %v2930, 1.442695
    %v2935 = vpow.pop %v2934
    %v2936 = vmul.f32 %v2931, 1.442695
    %v2937 = vpow.pop %v2936
    %v2938 = vmul.f32 %v2932, 1.442695
    %v2939 = vpow.pop %v2938
    %v2940 = vmul.f32 %v2933, 1.442695
    %v2941 = vpow.pop %v2940
    %v2942 = vadd.f32 %v2935, 1.0
    %v2943 = vadd.f32 %v2937, 1.0
    %v2944 = vadd.f32 %v2939, 1.0
    %v2945 = vadd.f32 %v2941, 1.0
    %v2946 = vrcp.pop %v2942
    %v2947 = vmul.f32 1.0, %v2946
    %v2948 = vrcp.pop %v2943
    %v2949 = vmul.f32 1.0, %v2948
    %v2950 = vrcp.pop %v2944
    %v2951 = vmul.f32 1.0, %v2950
    %v2952 = vrcp.pop %v2945
    %v2953 = vmul.f32 1.0, %v2952
    %v2955 = vlaneseq
    %v2956 = vshrl.u32 %v2955, 7
    %v2957 = vsub.s32 0, %v2956
    %v2958 = vrot.slane %v465, %v2957
    %v2959 = vlaneseq
    %v2960 = vshrl.u32 %v2959, 7
    %v2961 = vsub.s32 1, %v2960
    %v2962 = vrot.slane %v465, %v2961
    %v2963 = vlaneseq
    %v2964 = vshrl.u32 %v2963, 7
    %v2965 = vsub.s32 2, %v2964
    %v2966 = vrot.slane %v465, %v2965
    %v2967 = vlaneseq
    %v2968 = vshrl.u32 %v2967, 7
    %v2969 = vsub.s32 3, %v2968
    %v2970 = vrot.slane %v465, %v2969
    %v2975 = vadd.f32 %v2810, %v2958
    %v2976 = vadd.f32 %v2812, %v2962
    %v2977 = vadd.f32 %v2892, %v2966
    %v2978 = vadd.f32 %v2894, %v2970
    %v2979 = vmul.f32 %v2919, %v2975
    %v2980 = vmul.f32 %v2921, %v2976
    %v2981 = vmul.f32 %v2923, %v2977
    %v2982 = vmul.f32 %v2925, %v2978
    %v2983 = vadd.f32 %v478, %v2979
    %v2984 = vadd.f32 %v479, %v2980
    %v2985 = vadd.f32 %v480, %v2981
    %v2986 = vadd.f32 %v481, %v2982
    %v2987 = vtanh.pop %v2983
    %v2988 = vtanh.pop %v2984
    %v2989 = vtanh.pop %v2985
    %v2990 = vtanh.pop %v2986
    %v2991 = vsub.f32 %v466, %v2987
    %v2992 = vsub.f32 %v467, %v2988
    %v2993 = vsub.f32 %v468, %v2989
    %v2994 = vsub.f32 %v469, %v2990
    %v2995 = vmul.f32 %v2947, %v2991
    %v2996 = vmul.f32 %v2949, %v2992
    %v2997 = vmul.f32 %v2951, %v2993
    %v2998 = vmul.f32 %v2953, %v2994
    %v2999 = vadd.f32 %v2987, %v2995
    %v3000 = vadd.f32 %v2988, %v2996
    %v3001 = vadd.f32 %v2989, %v2997
    %v3002 = vadd.f32 %v2990, %v2998
    %v3003 = vsub.f32 %v2999, %v466
    %v3004 = vsub.f32 %v3000, %v467
    %v3005 = vsub.f32 %v3001, %v468
    %v3006 = vsub.f32 %v3002, %v469
    %v3007 = vmul.f32 %v3003, 0.9
    %v3008 = vmul.f32 %v3004, 0.9
    %v3009 = vmul.f32 %v3005, 0.9
    %v3010 = vmul.f32 %v3006, 0.9
    %v3011 = vadd.f32 %v466, %v3007
    %v3012 = vadd.f32 %v467, %v3008
    %v3013 = vadd.f32 %v468, %v3009
    %v3014 = vadd.f32 %v469, %v3010
    %3015 = vst [vmem:[#allocation11] sm:$0xff] %v3011
    %3016 = vst [vmem:[#allocation11 + $0x8] sm:$0xff] %v3012
    %3017 = vst [vmem:[#allocation11 + $0x10] sm:$0xff] %v3013
    %3018 = vst [vmem:[#allocation11 + $0x18] sm:$0xff] %v3014
    %s3019 = scalar_lea.vmem [#allocation3], 96
    %v3020 = vld [vmem:[%s3019] sm:$0xff]
    %v3021 = vld [vmem:[%s3019 + $0x8] sm:$0xff]
    %v3022 = vld [vmem:[%s3019 + $0x10] sm:$0xff]
    %v3023 = vld [vmem:[%s3019 + $0x18] sm:$0xff]
    %v3024 = vld [vmem:[%s3019 + $0x20] sm:$0xff]
    %v3025 = vld [vmem:[%s3019 + $0x28] sm:$0xff]
    %v3026 = vld [vmem:[%s3019 + $0x30] sm:$0xff]
    %v3027 = vld [vmem:[%s3019 + $0x38] sm:$0xff]
    %v3028 = vld [vmem:[%s3019 + $0x40] sm:$0xff]
    %v3029 = vld [vmem:[%s3019 + $0x48] sm:$0xff]
    %v3030 = vld [vmem:[%s3019 + $0x50] sm:$0xff]
    %v3031 = vld [vmem:[%s3019 + $0x58] sm:$0xff]
    %v3032 = vpack.c.bf16 %v3011, %v3011
    %v3033 = vpack.c.bf16 %v3012, %v3012
    %v3034 = vpack.c.bf16 %v3013, %v3013
    %v3035 = vpack.c.bf16 %v3014, %v3014
    %3036 = vmatprep.subr.bf16.mxu0 %v1723
    %3037 = vmatpush1.bf16.msra.mxu0 %v1722
    %3038 = vmatprep.subr.bf16.mxu0 %v1711
    %3039 = vmatpush1.bf16.msra.mxu0 %v1710
    %3040 = vmatprep.subr.bf16.mxu0 %v1699
    %3041 = vmatpush1.bf16.msra.mxu0 %v1698
    %3042 = vmatprep.subr.bf16.mxu0 %v1687
    %3043 = vmatpush1.bf16.msra.mxu0 %v1686
    %3044 = vmatprep.subr.bf16.mxu0 %v1675
    %3045 = vmatpush1.bf16.msra.mxu0 %v1674
    %3046 = vmatprep.subr.bf16.mxu0 %v1663
    %3047 = vmatpush1.bf16.msra.mxu0 %v1662
    %3048 = vmatprep.subr.bf16.mxu0 %v1651
    %3049 = vmatpush1.bf16.msra.mxu0 %v1650
    %3050 = vmatprep.subr.bf16.mxu0 %v1639
    %3051 = vmatpush1.bf16.msra.mxu0 %v1638
    %3052 = vmatprep.subr.bf16.mxu0 %v1819
    %3053 = vmatpush2.bf16.msra.mxu0 %v1818
    %3054 = vmatprep.subr.bf16.mxu0 %v1807
    %3055 = vmatpush2.bf16.msra.mxu0 %v1806
    %3056 = vmatprep.subr.bf16.mxu0 %v1795
    %3057 = vmatpush2.bf16.msra.mxu0 %v1794
    %3058 = vmatprep.subr.bf16.mxu0 %v1783
    %3059 = vmatpush2.bf16.msra.mxu0 %v1782
    %3060 = vmatprep.subr.bf16.mxu0 %v1771
    %3061 = vmatpush2.bf16.msra.mxu0 %v1770
    %3062 = vmatprep.subr.bf16.mxu0 %v1759
    %3063 = vmatpush2.bf16.msra.mxu0 %v1758
    %3064 = vmatprep.subr.bf16.mxu0 %v1747
    %3065 = vmatpush2.bf16.msra.mxu0 %v1746
    %3066 = vmatprep.subr.bf16.mxu0 %v1735
    %3067 = vmatpush2.bf16.msra.mxu0 %v1734
    %3068 = vmatprep.mubr.bf16.mxu0 %v3033
    %3069 = vmatmul.mubr.bf16.gmra.mxu0 %v3032
    %v3070 = vpop.f32.mrf.mxu0
    %v3071 = vadd.f32 0.0, %v3070
    %v3072 = vpop.f32.mrf.mxu0
    %v3073 = vadd.f32 0.0, %v3072
    %v3074 = vpop.f32.mrf.mxu0
    %v3075 = vpop.f32.mrf.mxu0
    %3076 = vdwg.mxu0
    %3077 = vmatprep.subr.bf16.mxu0 %v1915
    %3078 = vmatpush1.bf16.msra.mxu0 %v1914
    %3079 = vmatprep.subr.bf16.mxu0 %v1903
    %3080 = vmatpush1.bf16.msra.mxu0 %v1902
    %3081 = vmatprep.subr.bf16.mxu0 %v1891
    %3082 = vmatpush1.bf16.msra.mxu0 %v1890
    %3083 = vmatprep.subr.bf16.mxu0 %v1879
    %3084 = vmatpush1.bf16.msra.mxu0 %v1878
    %3085 = vmatprep.subr.bf16.mxu0 %v1867
    %3086 = vmatpush1.bf16.msra.mxu0 %v1866
    %3087 = vmatprep.subr.bf16.mxu0 %v1855
    %3088 = vmatpush1.bf16.msra.mxu0 %v1854
    %3089 = vmatprep.subr.bf16.mxu0 %v1843
    %3090 = vmatpush1.bf16.msra.mxu0 %v1842
    %3091 = vmatprep.subr.bf16.mxu0 %v1831
    %3092 = vmatpush1.bf16.msra.mxu0 %v1830
    %3093 = vmatprep.subr.bf16.mxu0 %v2011
    %3094 = vmatpush2.bf16.msra.mxu0 %v2010
    %3095 = vmatprep.subr.bf16.mxu0 %v1999
    %3096 = vmatpush2.bf16.msra.mxu0 %v1998
    %3097 = vmatprep.subr.bf16.mxu0 %v1987
    %3098 = vmatpush2.bf16.msra.mxu0 %v1986
    %3099 = vmatprep.subr.bf16.mxu0 %v1975
    %3100 = vmatpush2.bf16.msra.mxu0 %v1974
    %3101 = vmatprep.subr.bf16.mxu0 %v1963
    %3102 = vmatpush2.bf16.msra.mxu0 %v1962
    %3103 = vmatprep.subr.bf16.mxu0 %v1951
    %3104 = vmatpush2.bf16.msra.mxu0 %v1950
    %3105 = vmatprep.subr.bf16.mxu0 %v1939
    %3106 = vmatpush2.bf16.msra.mxu0 %v1938
    %3107 = vmatprep.subr.bf16.mxu0 %v1927
    %3108 = vmatpush2.bf16.msra.mxu0 %v1926
    %3109 = vmatprep.mubr.bf16.mxu0 %v3035
    %3110 = vmatmul.mubr.bf16.gmra.mxu0 %v3034
    %v3111 = vpop.f32.mrf.mxu0
    %v3112 = vadd.f32 %v3071, %v3111
    %v3113 = vpop.f32.mrf.mxu0
    %v3114 = vadd.f32 %v3073, %v3113
    %v3115 = vpop.f32.mrf.mxu0
    %v3116 = vpop.f32.mrf.mxu0
    %3117 = vdwg.mxu0
    %3118 = vmatprep.subr.bf16.mxu0 %v1725
    %3119 = vmatpush1.bf16.msra.mxu0 %v1724
    %3120 = vmatprep.subr.bf16.mxu0 %v1713
    %3121 = vmatpush1.bf16.msra.mxu0 %v1712
    %3122 = vmatprep.subr.bf16.mxu0 %v1701
    %3123 = vmatpush1.bf16.msra.mxu0 %v1700
    %3124 = vmatprep.subr.bf16.mxu0 %v1689
    %3125 = vmatpush1.bf16.msra.mxu0 %v1688
    %3126 = vmatprep.subr.bf16.mxu0 %v1677
    %3127 = vmatpush1.bf16.msra.mxu0 %v1676
    %3128 = vmatprep.subr.bf16.mxu0 %v1665
    %3129 = vmatpush1.bf16.msra.mxu0 %v1664
    %3130 = vmatprep.subr.bf16.mxu0 %v1653
    %3131 = vmatpush1.bf16.msra.mxu0 %v1652
    %3132 = vmatprep.subr.bf16.mxu0 %v1641
    %3133 = vmatpush1.bf16.msra.mxu0 %v1640
    %3134 = vmatprep.subr.bf16.mxu0 %v1821
    %3135 = vmatpush2.bf16.msra.mxu0 %v1820
    %3136 = vmatprep.subr.bf16.mxu0 %v1809
    %3137 = vmatpush2.bf16.msra.mxu0 %v1808
    %3138 = vmatprep.subr.bf16.mxu0 %v1797
    %3139 = vmatpush2.bf16.msra.mxu0 %v1796
    %3140 = vmatprep.subr.bf16.mxu0 %v1785
    %3141 = vmatpush2.bf16.msra.mxu0 %v1784
    %3142 = vmatprep.subr.bf16.mxu0 %v1773
    %3143 = vmatpush2.bf16.msra.mxu0 %v1772
    %3144 = vmatprep.subr.bf16.mxu0 %v1761
    %3145 = vmatpush2.bf16.msra.mxu0 %v1760
    %3146 = vmatprep.subr.bf16.mxu0 %v1749
    %3147 = vmatpush2.bf16.msra.mxu0 %v1748
    %3148 = vmatprep.subr.bf16.mxu0 %v1737
    %3149 = vmatpush2.bf16.msra.mxu0 %v1736
    %3150 = vmatprep.mubr.bf16.mxu0 %v3033
    %3151 = vmatmul.mubr.bf16.gmra.mxu0 %v3032
    %v3152 = vpop.f32.mrf.mxu0
    %v3153 = vadd.f32 0.0, %v3152
    %v3154 = vpop.f32.mrf.mxu0
    %v3155 = vadd.f32 0.0, %v3154
    %v3156 = vpop.f32.mrf.mxu0
    %v3157 = vpop.f32.mrf.mxu0
    %3158 = vdwg.mxu0
    %3159 = vmatprep.subr.bf16.mxu0 %v1917
    %3160 = vmatpush1.bf16.msra.mxu0 %v1916
    %3161 = vmatprep.subr.bf16.mxu0 %v1905
    %3162 = vmatpush1.bf16.msra.mxu0 %v1904
    %3163 = vmatprep.subr.bf16.mxu0 %v1893
    %3164 = vmatpush1.bf16.msra.mxu0 %v1892
    %3165 = vmatprep.subr.bf16.mxu0 %v1881
    %3166 = vmatpush1.bf16.msra.mxu0 %v1880
    %3167 = vmatprep.subr.bf16.mxu0 %v1869
    %3168 = vmatpush1.bf16.msra.mxu0 %v1868
    %3169 = vmatprep.subr.bf16.mxu0 %v1857
    %3170 = vmatpush1.bf16.msra.mxu0 %v1856
    %3171 = vmatprep.subr.bf16.mxu0 %v1845
    %3172 = vmatpush1.bf16.msra.mxu0 %v1844
    %3173 = vmatprep.subr.bf16.mxu0 %v1833
    %3174 = vmatpush1.bf16.msra.mxu0 %v1832
    %3175 = vmatprep.subr.bf16.mxu0 %v2013
    %3176 = vmatpush2.bf16.msra.mxu0 %v2012
    %3177 = vmatprep.subr.bf16.mxu0 %v2001
    %3178 = vmatpush2.bf16.msra.mxu0 %v2000
    %3179 = vmatprep.subr.bf16.mxu0 %v1989
    %3180 = vmatpush2.bf16.msra.mxu0 %v1988
    %3181 = vmatprep.subr.bf16.mxu0 %v1977
    %3182 = vmatpush2.bf16.msra.mxu0 %v1976
    %3183 = vmatprep.subr.bf16.mxu0 %v1965
    %3184 = vmatpush2.bf16.msra.mxu0 %v1964
    %3185 = vmatprep.subr.bf16.mxu0 %v1953
    %3186 = vmatpush2.bf16.msra.mxu0 %v1952
    %3187 = vmatprep.subr.bf16.mxu0 %v1941
    %3188 = vmatpush2.bf16.msra.mxu0 %v1940
    %3189 = vmatprep.subr.bf16.mxu0 %v1929
    %3190 = vmatpush2.bf16.msra.mxu0 %v1928
    %3191 = vmatprep.mubr.bf16.mxu0 %v3035
    %3192 = vmatmul.mubr.bf16.gmra.mxu0 %v3034
    %v3193 = vpop.f32.mrf.mxu0
    %v3194 = vadd.f32 %v3153, %v3193
    %v3195 = vpop.f32.mrf.mxu0
    %v3196 = vadd.f32 %v3155, %v3195
    %v3197 = vpop.f32.mrf.mxu0
    %v3198 = vpop.f32.mrf.mxu0
    %3199 = vdwg.mxu0
    %3200 = vmatprep.subr.bf16.mxu0 %v1727
    %3201 = vmatpush1.bf16.msra.mxu0 %v1726
    %3202 = vmatprep.subr.bf16.mxu0 %v1715
    %3203 = vmatpush1.bf16.msra.mxu0 %v1714
    %3204 = vmatprep.subr.bf16.mxu0 %v1703
    %3205 = vmatpush1.bf16.msra.mxu0 %v1702
    %3206 = vmatprep.subr.bf16.mxu0 %v1691
    %3207 = vmatpush1.bf16.msra.mxu0 %v1690
    %3208 = vmatprep.subr.bf16.mxu0 %v1679
    %3209 = vmatpush1.bf16.msra.mxu0 %v1678
    %3210 = vmatprep.subr.bf16.mxu0 %v1667
    %3211 = vmatpush1.bf16.msra.mxu0 %v1666
    %3212 = vmatprep.subr.bf16.mxu0 %v1655
    %3213 = vmatpush1.bf16.msra.mxu0 %v1654
    %3214 = vmatprep.subr.bf16.mxu0 %v1643
    %3215 = vmatpush1.bf16.msra.mxu0 %v1642
    %3216 = vmatprep.subr.bf16.mxu0 %v1823
    %3217 = vmatpush2.bf16.msra.mxu0 %v1822
    %3218 = vmatprep.subr.bf16.mxu0 %v1811
    %3219 = vmatpush2.bf16.msra.mxu0 %v1810
    %3220 = vmatprep.subr.bf16.mxu0 %v1799
    %3221 = vmatpush2.bf16.msra.mxu0 %v1798
    %3222 = vmatprep.subr.bf16.mxu0 %v1787
    %3223 = vmatpush2.bf16.msra.mxu0 %v1786
    %3224 = vmatprep.subr.bf16.mxu0 %v1775
    %3225 = vmatpush2.bf16.msra.mxu0 %v1774
    %3226 = vmatprep.subr.bf16.mxu0 %v1763
    %3227 = vmatpush2.bf16.msra.mxu0 %v1762
    %3228 = vmatprep.subr.bf16.mxu0 %v1751
    %3229 = vmatpush2.bf16.msra.mxu0 %v1750
    %3230 = vmatprep.subr.bf16.mxu0 %v1739
    %3231 = vmatpush2.bf16.msra.mxu0 %v1738
    %3232 = vmatprep.mubr.bf16.mxu0 %v3033
    %3233 = vmatmul.mubr.bf16.gmra.mxu0 %v3032
    %v3234 = vpop.f32.mrf.mxu0
    %v3235 = vadd.f32 0.0, %v3234
    %v3236 = vpop.f32.mrf.mxu0
    %v3237 = vadd.f32 0.0, %v3236
    %v3238 = vpop.f32.mrf.mxu0
    %v3239 = vpop.f32.mrf.mxu0
    %3240 = vdwg.mxu0
    %3241 = vmatprep.subr.bf16.mxu0 %v1919
    %3242 = vmatpush1.bf16.msra.mxu0 %v1918
    %3243 = vmatprep.subr.bf16.mxu0 %v1907
    %3244 = vmatpush1.bf16.msra.mxu0 %v1906
    %3245 = vmatprep.subr.bf16.mxu0 %v1895
    %3246 = vmatpush1.bf16.msra.mxu0 %v1894
    %3247 = vmatprep.subr.bf16.mxu0 %v1883
    %3248 = vmatpush1.bf16.msra.mxu0 %v1882
    %3249 = vmatprep.subr.bf16.mxu0 %v1871
    %3250 = vmatpush1.bf16.msra.mxu0 %v1870
    %3251 = vmatprep.subr.bf16.mxu0 %v1859
    %3252 = vmatpush1.bf16.msra.mxu0 %v1858
    %3253 = vmatprep.subr.bf16.mxu0 %v1847
    %3254 = vmatpush1.bf16.msra.mxu0 %v1846
    %3255 = vmatprep.subr.bf16.mxu0 %v1835
    %3256 = vmatpush1.bf16.msra.mxu0 %v1834
    %3257 = vmatprep.subr.bf16.mxu0 %v2015
    %3258 = vmatpush2.bf16.msra.mxu0 %v2014
    %3259 = vmatprep.subr.bf16.mxu0 %v2003
    %3260 = vmatpush2.bf16.msra.mxu0 %v2002
    %3261 = vmatprep.subr.bf16.mxu0 %v1991
    %3262 = vmatpush2.bf16.msra.mxu0 %v1990
    %3263 = vmatprep.subr.bf16.mxu0 %v1979
    %3264 = vmatpush2.bf16.msra.mxu0 %v1978
    %3265 = vmatprep.subr.bf16.mxu0 %v1967
    %3266 = vmatpush2.bf16.msra.mxu0 %v1966
    %3267 = vmatprep.subr.bf16.mxu0 %v1955
    %3268 = vmatpush2.bf16.msra.mxu0 %v1954
    %3269 = vmatprep.subr.bf16.mxu0 %v1943
    %3270 = vmatpush2.bf16.msra.mxu0 %v1942
    %3271 = vmatprep.subr.bf16.mxu0 %v1931
    %3272 = vmatpush2.bf16.msra.mxu0 %v1930
    %3273 = vmatprep.mubr.bf16.mxu0 %v3035
    %3274 = vmatmul.mubr.bf16.gmra.mxu0 %v3034
    %v3275 = vpop.f32.mrf.mxu0
    %v3276 = vadd.f32 %v3235, %v3275
    %v3277 = vpop.f32.mrf.mxu0
    %v3278 = vadd.f32 %v3237, %v3277
    %v3279 = vpop.f32.mrf.mxu0
    %v3280 = vpop.f32.mrf.mxu0
    %3281 = vdwg.mxu0
    %3282 = vmatprep.subr.bf16.mxu0 %v1729
    %3283 = vmatpush1.bf16.msra.mxu0 %v1728
    %3284 = vmatprep.subr.bf16.mxu0 %v1717
    %3285 = vmatpush1.bf16.msra.mxu0 %v1716
    %3286 = vmatprep.subr.bf16.mxu0 %v1705
    %3287 = vmatpush1.bf16.msra.mxu0 %v1704
    %3288 = vmatprep.subr.bf16.mxu0 %v1693
    %3289 = vmatpush1.bf16.msra.mxu0 %v1692
    %3290 = vmatprep.subr.bf16.mxu0 %v1681
    %3291 = vmatpush1.bf16.msra.mxu0 %v1680
    %3292 = vmatprep.subr.bf16.mxu0 %v1669
    %3293 = vmatpush1.bf16.msra.mxu0 %v1668
    %3294 = vmatprep.subr.bf16.mxu0 %v1657
    %3295 = vmatpush1.bf16.msra.mxu0 %v1656
    %3296 = vmatprep.subr.bf16.mxu0 %v1645
    %3297 = vmatpush1.bf16.msra.mxu0 %v1644
    %3298 = vmatprep.subr.bf16.mxu0 %v1825
    %3299 = vmatpush2.bf16.msra.mxu0 %v1824
    %3300 = vmatprep.subr.bf16.mxu0 %v1813
    %3301 = vmatpush2.bf16.msra.mxu0 %v1812
    %3302 = vmatprep.subr.bf16.mxu0 %v1801
    %3303 = vmatpush2.bf16.msra.mxu0 %v1800
    %3304 = vmatprep.subr.bf16.mxu0 %v1789
    %3305 = vmatpush2.bf16.msra.mxu0 %v1788
    %3306 = vmatprep.subr.bf16.mxu0 %v1777
    %3307 = vmatpush2.bf16.msra.mxu0 %v1776
    %3308 = vmatprep.subr.bf16.mxu0 %v1765
    %3309 = vmatpush2.bf16.msra.mxu0 %v1764
    %3310 = vmatprep.subr.bf16.mxu0 %v1753
    %3311 = vmatpush2.bf16.msra.mxu0 %v1752
    %3312 = vmatprep.subr.bf16.mxu0 %v1741
    %3313 = vmatpush2.bf16.msra.mxu0 %v1740
    %3314 = vmatprep.mubr.bf16.mxu0 %v3033
    %3315 = vmatmul.mubr.bf16.gmra.mxu0 %v3032
    %v3316 = vpop.f32.mrf.mxu0
    %v3317 = vadd.f32 0.0, %v3316
    %v3318 = vpop.f32.mrf.mxu0
    %v3319 = vadd.f32 0.0, %v3318
    %v3320 = vpop.f32.mrf.mxu0
    %v3321 = vpop.f32.mrf.mxu0
    %3322 = vdwg.mxu0
    %3323 = vmatprep.subr.bf16.mxu0 %v1921
    %3324 = vmatpush1.bf16.msra.mxu0 %v1920
    %3325 = vmatprep.subr.bf16.mxu0 %v1909
    %3326 = vmatpush1.bf16.msra.mxu0 %v1908
    %3327 = vmatprep.subr.bf16.mxu0 %v1897
    %3328 = vmatpush1.bf16.msra.mxu0 %v1896
    %3329 = vmatprep.subr.bf16.mxu0 %v1885
    %3330 = vmatpush1.bf16.msra.mxu0 %v1884
    %3331 = vmatprep.subr.bf16.mxu0 %v1873
    %3332 = vmatpush1.bf16.msra.mxu0 %v1872
    %3333 = vmatprep.subr.bf16.mxu0 %v1861
    %3334 = vmatpush1.bf16.msra.mxu0 %v1860
    %3335 = vmatprep.subr.bf16.mxu0 %v1849
    %3336 = vmatpush1.bf16.msra.mxu0 %v1848
    %3337 = vmatprep.subr.bf16.mxu0 %v1837
    %3338 = vmatpush1.bf16.msra.mxu0 %v1836
    %3339 = vmatprep.subr.bf16.mxu0 %v2017
    %3340 = vmatpush2.bf16.msra.mxu0 %v2016
    %3341 = vmatprep.subr.bf16.mxu0 %v2005
    %3342 = vmatpush2.bf16.msra.mxu0 %v2004
    %3343 = vmatprep.subr.bf16.mxu0 %v1993
    %3344 = vmatpush2.bf16.msra.mxu0 %v1992
    %3345 = vmatprep.subr.bf16.mxu0 %v1981
    %3346 = vmatpush2.bf16.msra.mxu0 %v1980
    %3347 = vmatprep.subr.bf16.mxu0 %v1969
    %3348 = vmatpush2.bf16.msra.mxu0 %v1968
    %3349 = vmatprep.subr.bf16.mxu0 %v1957
    %3350 = vmatpush2.bf16.msra.mxu0 %v1956
    %3351 = vmatprep.subr.bf16.mxu0 %v1945
    %3352 = vmatpush2.bf16.msra.mxu0 %v1944
    %3353 = vmatprep.subr.bf16.mxu0 %v1933
    %3354 = vmatpush2.bf16.msra.mxu0 %v1932
    %3355 = vmatprep.mubr.bf16.mxu0 %v3035
    %3356 = vmatmul.mubr.bf16.gmra.mxu0 %v3034
    %v3357 = vpop.f32.mrf.mxu0
    %v3358 = vadd.f32 %v3317, %v3357
    %v3359 = vpop.f32.mrf.mxu0
    %v3360 = vadd.f32 %v3319, %v3359
    %v3361 = vpop.f32.mrf.mxu0
    %v3362 = vpop.f32.mrf.mxu0
    %3363 = vdwg.mxu0
    %3364 = vmatprep.subr.bf16.mxu0 %v1731
    %3365 = vmatpush1.bf16.msra.mxu0 %v1730
    %3366 = vmatprep.subr.bf16.mxu0 %v1719
    %3367 = vmatpush1.bf16.msra.mxu0 %v1718
    %3368 = vmatprep.subr.bf16.mxu0 %v1707
    %3369 = vmatpush1.bf16.msra.mxu0 %v1706
    %3370 = vmatprep.subr.bf16.mxu0 %v1695
    %3371 = vmatpush1.bf16.msra.mxu0 %v1694
    %3372 = vmatprep.subr.bf16.mxu0 %v1683
    %3373 = vmatpush1.bf16.msra.mxu0 %v1682
    %3374 = vmatprep.subr.bf16.mxu0 %v1671
    %3375 = vmatpush1.bf16.msra.mxu0 %v1670
    %3376 = vmatprep.subr.bf16.mxu0 %v1659
    %3377 = vmatpush1.bf16.msra.mxu0 %v1658
    %3378 = vmatprep.subr.bf16.mxu0 %v1647
    %3379 = vmatpush1.bf16.msra.mxu0 %v1646
    %3380 = vmatprep.subr.bf16.mxu0 %v1827
    %3381 = vmatpush2.bf16.msra.mxu0 %v1826
    %3382 = vmatprep.subr.bf16.mxu0 %v1815
    %3383 = vmatpush2.bf16.msra.mxu0 %v1814
    %3384 = vmatprep.subr.bf16.mxu0 %v1803
    %3385 = vmatpush2.bf16.msra.mxu0 %v1802
    %3386 = vmatprep.subr.bf16.mxu0 %v1791
    %3387 = vmatpush2.bf16.msra.mxu0 %v1790
    %3388 = vmatprep.subr.bf16.mxu0 %v1779
    %3389 = vmatpush2.bf16.msra.mxu0 %v1778
    %3390 = vmatprep.subr.bf16.mxu0 %v1767
    %3391 = vmatpush2.bf16.msra.mxu0 %v1766
    %3392 = vmatprep.subr.bf16.mxu0 %v1755
    %3393 = vmatpush2.bf16.msra.mxu0 %v1754
    %3394 = vmatprep.subr.bf16.mxu0 %v1743
    %3395 = vmatpush2.bf16.msra.mxu0 %v1742
    %3396 = vmatprep.mubr.bf16.mxu0 %v3033
    %3397 = vmatmul.mubr.bf16.gmra.mxu0 %v3032
    %v3398 = vpop.f32.mrf.mxu0
    %v3399 = vadd.f32 0.0, %v3398
    %v3400 = vpop.f32.mrf.mxu0
    %v3401 = vadd.f32 0.0, %v3400
    %v3402 = vpop.f32.mrf.mxu0
    %v3403 = vpop.f32.mrf.mxu0
    %3404 = vdwg.mxu0
    %3405 = vmatprep.subr.bf16.mxu0 %v1923
    %3406 = vmatpush1.bf16.msra.mxu0 %v1922
    %3407 = vmatprep.subr.bf16.mxu0 %v1911
    %3408 = vmatpush1.bf16.msra.mxu0 %v1910
    %3409 = vmatprep.subr.bf16.mxu0 %v1899
    %3410 = vmatpush1.bf16.msra.mxu0 %v1898
    %3411 = vmatprep.subr.bf16.mxu0 %v1887
    %3412 = vmatpush1.bf16.msra.mxu0 %v1886
    %3413 = vmatprep.subr.bf16.mxu0 %v1875
    %3414 = vmatpush1.bf16.msra.mxu0 %v1874
    %3415 = vmatprep.subr.bf16.mxu0 %v1863
    %3416 = vmatpush1.bf16.msra.mxu0 %v1862
    %3417 = vmatprep.subr.bf16.mxu0 %v1851
    %3418 = vmatpush1.bf16.msra.mxu0 %v1850
    %3419 = vmatprep.subr.bf16.mxu0 %v1839
    %3420 = vmatpush1.bf16.msra.mxu0 %v1838
    %3421 = vmatprep.subr.bf16.mxu0 %v2019
    %3422 = vmatpush2.bf16.msra.mxu0 %v2018
    %3423 = vmatprep.subr.bf16.mxu0 %v2007
    %3424 = vmatpush2.bf16.msra.mxu0 %v2006
    %3425 = vmatprep.subr.bf16.mxu0 %v1995
    %3426 = vmatpush2.bf16.msra.mxu0 %v1994
    %3427 = vmatprep.subr.bf16.mxu0 %v1983
    %3428 = vmatpush2.bf16.msra.mxu0 %v1982
    %3429 = vmatprep.subr.bf16.mxu0 %v1971
    %3430 = vmatpush2.bf16.msra.mxu0 %v1970
    %3431 = vmatprep.subr.bf16.mxu0 %v1959
    %3432 = vmatpush2.bf16.msra.mxu0 %v1958
    %3433 = vmatprep.subr.bf16.mxu0 %v1947
    %3434 = vmatpush2.bf16.msra.mxu0 %v1946
    %3435 = vmatprep.subr.bf16.mxu0 %v1935
    %3436 = vmatpush2.bf16.msra.mxu0 %v1934
    %3437 = vmatprep.mubr.bf16.mxu0 %v3035
    %3438 = vmatmul.mubr.bf16.gmra.mxu0 %v3034
    %v3439 = vpop.f32.mrf.mxu0
    %v3440 = vadd.f32 %v3399, %v3439
    %v3441 = vpop.f32.mrf.mxu0
    %v3442 = vadd.f32 %v3401, %v3441
    %v3443 = vpop.f32.mrf.mxu0
    %v3444 = vpop.f32.mrf.mxu0
    %3445 = vdwg.mxu0
    %3446 = vmatprep.subr.bf16.mxu0 %v1733
    %3447 = vmatpush1.bf16.msra.mxu0 %v1732
    %3448 = vmatprep.subr.bf16.mxu0 %v1721
    %3449 = vmatpush1.bf16.msra.mxu0 %v1720
    %3450 = vmatprep.subr.bf16.mxu0 %v1709
    %3451 = vmatpush1.bf16.msra.mxu0 %v1708
    %3452 = vmatprep.subr.bf16.mxu0 %v1697
    %3453 = vmatpush1.bf16.msra.mxu0 %v1696
    %3454 = vmatprep.subr.bf16.mxu0 %v1685
    %3455 = vmatpush1.bf16.msra.mxu0 %v1684
    %3456 = vmatprep.subr.bf16.mxu0 %v1673
    %3457 = vmatpush1.bf16.msra.mxu0 %v1672
    %3458 = vmatprep.subr.bf16.mxu0 %v1661
    %3459 = vmatpush1.bf16.msra.mxu0 %v1660
    %3460 = vmatprep.subr.bf16.mxu0 %v1649
    %3461 = vmatpush1.bf16.msra.mxu0 %v1648
    %3462 = vmatprep.subr.bf16.mxu0 %v1829
    %3463 = vmatpush2.bf16.msra.mxu0 %v1828
    %3464 = vmatprep.subr.bf16.mxu0 %v1817
    %3465 = vmatpush2.bf16.msra.mxu0 %v1816
    %3466 = vmatprep.subr.bf16.mxu0 %v1805
    %3467 = vmatpush2.bf16.msra.mxu0 %v1804
    %3468 = vmatprep.subr.bf16.mxu0 %v1793
    %3469 = vmatpush2.bf16.msra.mxu0 %v1792
    %3470 = vmatprep.subr.bf16.mxu0 %v1781
    %3471 = vmatpush2.bf16.msra.mxu0 %v1780
    %3472 = vmatprep.subr.bf16.mxu0 %v1769
    %3473 = vmatpush2.bf16.msra.mxu0 %v1768
    %3474 = vmatprep.subr.bf16.mxu0 %v1757
    %3475 = vmatpush2.bf16.msra.mxu0 %v1756
    %3476 = vmatprep.subr.bf16.mxu0 %v1745
    %3477 = vmatpush2.bf16.msra.mxu0 %v1744
    %3478 = vmatprep.mubr.bf16.mxu0 %v3033
    %3479 = vmatmul.mubr.bf16.gmra.mxu0 %v3032
    %v3480 = vpop.f32.mrf.mxu0
    %v3481 = vadd.f32 0.0, %v3480
    %v3482 = vpop.f32.mrf.mxu0
    %v3483 = vadd.f32 0.0, %v3482
    %v3484 = vpop.f32.mrf.mxu0
    %v3485 = vpop.f32.mrf.mxu0
    %3486 = vdwg.mxu0
    %3487 = vmatprep.subr.bf16.mxu0 %v1925
    %3488 = vmatpush1.bf16.msra.mxu0 %v1924
    %3489 = vmatprep.subr.bf16.mxu0 %v1913
    %3490 = vmatpush1.bf16.msra.mxu0 %v1912
    %3491 = vmatprep.subr.bf16.mxu0 %v1901
    %3492 = vmatpush1.bf16.msra.mxu0 %v1900
    %3493 = vmatprep.subr.bf16.mxu0 %v1889
    %3494 = vmatpush1.bf16.msra.mxu0 %v1888
    %3495 = vmatprep.subr.bf16.mxu0 %v1877
    %3496 = vmatpush1.bf16.msra.mxu0 %v1876
    %3497 = vmatprep.subr.bf16.mxu0 %v1865
    %3498 = vmatpush1.bf16.msra.mxu0 %v1864
    %3499 = vmatprep.subr.bf16.mxu0 %v1853
    %3500 = vmatpush1.bf16.msra.mxu0 %v1852
    %3501 = vmatprep.subr.bf16.mxu0 %v1841
    %3502 = vmatpush1.bf16.msra.mxu0 %v1840
    %3503 = vmatprep.subr.bf16.mxu0 %v2021
    %3504 = vmatpush2.bf16.msra.mxu0 %v2020
    %3505 = vmatprep.subr.bf16.mxu0 %v2009
    %3506 = vmatpush2.bf16.msra.mxu0 %v2008
    %3507 = vmatprep.subr.bf16.mxu0 %v1997
    %3508 = vmatpush2.bf16.msra.mxu0 %v1996
    %3509 = vmatprep.subr.bf16.mxu0 %v1985
    %3510 = vmatpush2.bf16.msra.mxu0 %v1984
    %3511 = vmatprep.subr.bf16.mxu0 %v1973
    %3512 = vmatpush2.bf16.msra.mxu0 %v1972
    %3513 = vmatprep.subr.bf16.mxu0 %v1961
    %3514 = vmatpush2.bf16.msra.mxu0 %v1960
    %3515 = vmatprep.subr.bf16.mxu0 %v1949
    %3516 = vmatpush2.bf16.msra.mxu0 %v1948
    %3517 = vmatprep.subr.bf16.mxu0 %v1937
    %3518 = vmatpush2.bf16.msra.mxu0 %v1936
    %3519 = vmatprep.mubr.bf16.mxu0 %v3035
    %3520 = vmatmul.mubr.bf16.gmra.mxu0 %v3034
    %v3521 = vpop.f32.mrf.mxu0
    %v3522 = vadd.f32 %v3481, %v3521
    %v3523 = vpop.f32.mrf.mxu0
    %v3524 = vadd.f32 %v3483, %v3523
    %v3525 = vpop.f32.mrf.mxu0
    %v3526 = vpop.f32.mrf.mxu0
    %3527 = vdwg.mxu0
    %v3528 = vadd.f32 %v3020, %v3112
    %v3529 = vadd.f32 %v3021, %v3114
    %v3530 = vadd.f32 %v3022, %v3194
    %v3531 = vadd.f32 %v3023, %v3196
    %v3532 = vxor.u32 %v3528, 2147483648
    %v3533 = vxor.u32 %v3529, 2147483648
    %v3534 = vxor.u32 %v3530, 2147483648
    %v3535 = vxor.u32 %v3531, 2147483648
    %v3536 = vmul.f32 %v3532, 1.442695
    %v3537 = vpow.pop %v3536
    %v3538 = vmul.f32 %v3533, 1.442695
    %v3539 = vpow.pop %v3538
    %v3540 = vmul.f32 %v3534, 1.442695
    %v3541 = vpow.pop %v3540
    %v3542 = vmul.f32 %v3535, 1.442695
    %v3543 = vpow.pop %v3542
    %v3544 = vadd.f32 %v3537, 1.0
    %v3545 = vadd.f32 %v3539, 1.0
    %v3546 = vadd.f32 %v3541, 1.0
    %v3547 = vadd.f32 %v3543, 1.0
    %v3548 = vrcp.pop %v3544
    %v3549 = vmul.f32 1.0, %v3548
    %v3550 = vrcp.pop %v3545
    %v3551 = vmul.f32 1.0, %v3550
    %v3552 = vrcp.pop %v3546
    %v3553 = vmul.f32 1.0, %v3552
    %v3554 = vrcp.pop %v3547
    %v3555 = vmul.f32 1.0, %v3554
    %v3556 = vadd.f32 %v3024, %v3276
    %v3557 = vadd.f32 %v3025, %v3278
    %v3558 = vadd.f32 %v3026, %v3358
    %v3559 = vadd.f32 %v3027, %v3360
    %v3560 = vxor.u32 %v3556, 2147483648
    %v3561 = vxor.u32 %v3557, 2147483648
    %v3562 = vxor.u32 %v3558, 2147483648
    %v3563 = vxor.u32 %v3559, 2147483648
    %v3564 = vmul.f32 %v3560, 1.442695
    %v3565 = vpow.pop %v3564
    %v3566 = vmul.f32 %v3561, 1.442695
    %v3567 = vpow.pop %v3566
    %v3568 = vmul.f32 %v3562, 1.442695
    %v3569 = vpow.pop %v3568
    %v3570 = vmul.f32 %v3563, 1.442695
    %v3571 = vpow.pop %v3570
    %v3572 = vadd.f32 %v3565, 1.0
    %v3573 = vadd.f32 %v3567, 1.0
    %v3574 = vadd.f32 %v3569, 1.0
    %v3575 = vadd.f32 %v3571, 1.0
    %v3576 = vrcp.pop %v3572
    %v3577 = vmul.f32 1.0, %v3576
    %v3578 = vrcp.pop %v3573
    %v3579 = vmul.f32 1.0, %v3578
    %v3580 = vrcp.pop %v3574
    %v3581 = vmul.f32 1.0, %v3580
    %v3582 = vrcp.pop %v3575
    %v3583 = vmul.f32 1.0, %v3582
    %v3584 = vadd.f32 %v3440, %v2958
    %v3585 = vadd.f32 %v3442, %v2962
    %v3586 = vadd.f32 %v3522, %v2966
    %v3587 = vadd.f32 %v3524, %v2970
    %v3588 = vmul.f32 %v3549, %v3584
    %v3589 = vmul.f32 %v3551, %v3585
    %v3590 = vmul.f32 %v3553, %v3586
    %v3591 = vmul.f32 %v3555, %v3587
    %v3592 = vadd.f32 %v3028, %v3588
    %v3593 = vadd.f32 %v3029, %v3589
    %v3594 = vadd.f32 %v3030, %v3590
    %v3595 = vadd.f32 %v3031, %v3591
    %v3596 = vtanh.pop %v3592
    %v3597 = vtanh.pop %v3593
    %v3598 = vtanh.pop %v3594
    %v3599 = vtanh.pop %v3595
    %v3600 = vsub.f32 %v3011, %v3596
    %v3601 = vsub.f32 %v3012, %v3597
    %v3602 = vsub.f32 %v3013, %v3598
    %v3603 = vsub.f32 %v3014, %v3599
    %v3604 = vmul.f32 %v3577, %v3600
    %v3605 = vmul.f32 %v3579, %v3601
    %v3606 = vmul.f32 %v3581, %v3602
    %v3607 = vmul.f32 %v3583, %v3603
    %v3608 = vadd.f32 %v3596, %v3604
    %v3609 = vadd.f32 %v3597, %v3605
    %v3610 = vadd.f32 %v3598, %v3606
    %v3611 = vadd.f32 %v3599, %v3607
    %v3612 = vsub.f32 %v3608, %v3011
    %v3613 = vsub.f32 %v3609, %v3012
    %v3614 = vsub.f32 %v3610, %v3013
    %v3615 = vsub.f32 %v3611, %v3014
    %v3616 = vmul.f32 %v3612, 0.9
    %v3617 = vmul.f32 %v3613, 0.9
    %v3618 = vmul.f32 %v3614, 0.9
    %v3619 = vmul.f32 %v3615, 0.9
    %v3620 = vadd.f32 %v3011, %v3616
    %v3621 = vadd.f32 %v3012, %v3617
    %v3622 = vadd.f32 %v3013, %v3618
    %v3623 = vadd.f32 %v3014, %v3619
    %s3624 = scalar_lea.vmem [#allocation11], 32
    %3625 = vst [vmem:[%s3624] sm:$0xff] %v3620
    %3626 = vst [vmem:[%s3624 + $0x8] sm:$0xff] %v3621
    %3627 = vst [vmem:[%s3624 + $0x10] sm:$0xff] %v3622
    %3628 = vst [vmem:[%s3624 + $0x18] sm:$0xff] %v3623
    %s3629 = scalar_lea.vmem [#allocation3], 192
    %v3630 = vld [vmem:[%s3629] sm:$0xff]
    %v3631 = vld [vmem:[%s3629 + $0x8] sm:$0xff]
    %v3632 = vld [vmem:[%s3629 + $0x10] sm:$0xff]
    %v3633 = vld [vmem:[%s3629 + $0x18] sm:$0xff]
    %v3634 = vld [vmem:[%s3629 + $0x20] sm:$0xff]
    %v3635 = vld [vmem:[%s3629 + $0x28] sm:$0xff]
    %v3636 = vld [vmem:[%s3629 + $0x30] sm:$0xff]
    %v3637 = vld [vmem:[%s3629 + $0x38] sm:$0xff]
    %v3638 = vld [vmem:[%s3629 + $0x40] sm:$0xff]
    %v3639 = vld [vmem:[%s3629 + $0x48] sm:$0xff]
    %v3640 = vld [vmem:[%s3629 + $0x50] sm:$0xff]
    %v3641 = vld [vmem:[%s3629 + $0x58] sm:$0xff]
    %v3642 = vpack.c.bf16 %v3620, %v3620
    %v3643 = vpack.c.bf16 %v3621, %v3621
    %v3644 = vpack.c.bf16 %v3622, %v3622
    %v3645 = vpack.c.bf16 %v3623, %v3623
    %3646 = vmatprep.subr.bf16.mxu0 %v1723
    %3647 = vmatpush1.bf16.msra.mxu0 %v1722
    %3648 = vmatprep.subr.bf16.mxu0 %v1711
    %3649 = vmatpush1.bf16.msra.mxu0 %v1710
    %3650 = vmatprep.subr.bf16.mxu0 %v1699
    %3651 = vmatpush1.bf16.msra.mxu0 %v1698
    %3652 = vmatprep.subr.bf16.mxu0 %v1687
    %3653 = vmatpush1.bf16.msra.mxu0 %v1686
    %3654 = vmatprep.subr.bf16.mxu0 %v1675
    %3655 = vmatpush1.bf16.msra.mxu0 %v1674
    %3656 = vmatprep.subr.bf16.mxu0 %v1663
    %3657 = vmatpush1.bf16.msra.mxu0 %v1662
    %3658 = vmatprep.subr.bf16.mxu0 %v1651
    %3659 = vmatpush1.bf16.msra.mxu0 %v1650
    %3660 = vmatprep.subr.bf16.mxu0 %v1639
    %3661 = vmatpush1.bf16.msra.mxu0 %v1638
    %3662 = vmatprep.subr.bf16.mxu0 %v1819
    %3663 = vmatpush2.bf16.msra.mxu0 %v1818
    %3664 = vmatprep.subr.bf16.mxu0 %v1807
    %3665 = vmatpush2.bf16.msra.mxu0 %v1806
    %3666 = vmatprep.subr.bf16.mxu0 %v1795
    %3667 = vmatpush2.bf16.msra.mxu0 %v1794
    %3668 = vmatprep.subr.bf16.mxu0 %v1783
    %3669 = vmatpush2.bf16.msra.mxu0 %v1782
    %3670 = vmatprep.subr.bf16.mxu0 %v1771
    %3671 = vmatpush2.bf16.msra.mxu0 %v1770
    %3672 = vmatprep.subr.bf16.mxu0 %v1759
    %3673 = vmatpush2.bf16.msra.mxu0 %v1758
    %3674 = vmatprep.subr.bf16.mxu0 %v1747
    %3675 = vmatpush2.bf16.msra.mxu0 %v1746
    %3676 = vmatprep.subr.bf16.mxu0 %v1735
    %3677 = vmatpush2.bf16.msra.mxu0 %v1734
    %3678 = vmatprep.mubr.bf16.mxu0 %v3643
    %3679 = vmatmul.mubr.bf16.gmra.mxu0 %v3642
    %v3680 = vpop.f32.mrf.mxu0
    %v3681 = vadd.f32 0.0, %v3680
    %v3682 = vpop.f32.mrf.mxu0
    %v3683 = vadd.f32 0.0, %v3682
    %v3684 = vpop.f32.mrf.mxu0
    %v3685 = vpop.f32.mrf.mxu0
    %3686 = vdwg.mxu0
    %3687 = vmatprep.subr.bf16.mxu0 %v1915
    %3688 = vmatpush1.bf16.msra.mxu0 %v1914
    %3689 = vmatprep.subr.bf16.mxu0 %v1903
    %3690 = vmatpush1.bf16.msra.mxu0 %v1902
    %3691 = vmatprep.subr.bf16.mxu0 %v1891
    %3692 = vmatpush1.bf16.msra.mxu0 %v1890
    %3693 = vmatprep.subr.bf16.mxu0 %v1879
    %3694 = vmatpush1.bf16.msra.mxu0 %v1878
    %3695 = vmatprep.subr.bf16.mxu0 %v1867
    %3696 = vmatpush1.bf16.msra.mxu0 %v1866
    %3697 = vmatprep.subr.bf16.mxu0 %v1855
    %3698 = vmatpush1.bf16.msra.mxu0 %v1854
    %3699 = vmatprep.subr.bf16.mxu0 %v1843
    %3700 = vmatpush1.bf16.msra.mxu0 %v1842
    %3701 = vmatprep.subr.bf16.mxu0 %v1831
    %3702 = vmatpush1.bf16.msra.mxu0 %v1830
    %3703 = vmatprep.subr.bf16.mxu0 %v2011
    %3704 = vmatpush2.bf16.msra.mxu0 %v2010
    %3705 = vmatprep.subr.bf16.mxu0 %v1999
    %3706 = vmatpush2.bf16.msra.mxu0 %v1998
    %3707 = vmatprep.subr.bf16.mxu0 %v1987
    %3708 = vmatpush2.bf16.msra.mxu0 %v1986
    %3709 = vmatprep.subr.bf16.mxu0 %v1975
    %3710 = vmatpush2.bf16.msra.mxu0 %v1974
    %3711 = vmatprep.subr.bf16.mxu0 %v1963
    %3712 = vmatpush2.bf16.msra.mxu0 %v1962
    %3713 = vmatprep.subr.bf16.mxu0 %v1951
    %3714 = vmatpush2.bf16.msra.mxu0 %v1950
    %3715 = vmatprep.subr.bf16.mxu0 %v1939
    %3716 = vmatpush2.bf16.msra.mxu0 %v1938
    %3717 = vmatprep.subr.bf16.mxu0 %v1927
    %3718 = vmatpush2.bf16.msra.mxu0 %v1926
    %3719 = vmatprep.mubr.bf16.mxu0 %v3645
    %3720 = vmatmul.mubr.bf16.gmra.mxu0 %v3644
    %v3721 = vpop.f32.mrf.mxu0
    %v3722 = vadd.f32 %v3681, %v3721
    %v3723 = vpop.f32.mrf.mxu0
    %v3724 = vadd.f32 %v3683, %v3723
    %v3725 = vpop.f32.mrf.mxu0
    %v3726 = vpop.f32.mrf.mxu0
    %3727 = vdwg.mxu0
    %3728 = vmatprep.subr.bf16.mxu0 %v1725
    %3729 = vmatpush1.bf16.msra.mxu0 %v1724
    %3730 = vmatprep.subr.bf16.mxu0 %v1713
    %3731 = vmatpush1.bf16.msra.mxu0 %v1712
    %3732 = vmatprep.subr.bf16.mxu0 %v1701
    %3733 = vmatpush1.bf16.msra.mxu0 %v1700
    %3734 = vmatprep.subr.bf16.mxu0 %v1689
    %3735 = vmatpush1.bf16.msra.mxu0 %v1688
    %3736 = vmatprep.subr.bf16.mxu0 %v1677
    %3737 = vmatpush1.bf16.msra.mxu0 %v1676
    %3738 = vmatprep.subr.bf16.mxu0 %v1665
    %3739 = vmatpush1.bf16.msra.mxu0 %v1664
    %3740 = vmatprep.subr.bf16.mxu0 %v1653
    %3741 = vmatpush1.bf16.msra.mxu0 %v1652
    %3742 = vmatprep.subr.bf16.mxu0 %v1641
    %3743 = vmatpush1.bf16.msra.mxu0 %v1640
    %3744 = vmatprep.subr.bf16.mxu0 %v1821
    %3745 = vmatpush2.bf16.msra.mxu0 %v1820
    %3746 = vmatprep.subr.bf16.mxu0 %v1809
    %3747 = vmatpush2.bf16.msra.mxu0 %v1808
    %3748 = vmatprep.subr.bf16.mxu0 %v1797
    %3749 = vmatpush2.bf16.msra.mxu0 %v1796
    %3750 = vmatprep.subr.bf16.mxu0 %v1785
    %3751 = vmatpush2.bf16.msra.mxu0 %v1784
    %3752 = vmatprep.subr.bf16.mxu0 %v1773
    %3753 = vmatpush2.bf16.msra.mxu0 %v1772
    %3754 = vmatprep.subr.bf16.mxu0 %v1761
    %3755 = vmatpush2.bf16.msra.mxu0 %v1760
    %3756 = vmatprep.subr.bf16.mxu0 %v1749
    %3757 = vmatpush2.bf16.msra.mxu0 %v1748
    %3758 = vmatprep.subr.bf16.mxu0 %v1737
    %3759 = vmatpush2.bf16.msra.mxu0 %v1736
    %3760 = vmatprep.mubr.bf16.mxu0 %v3643
    %3761 = vmatmul.mubr.bf16.gmra.mxu0 %v3642
    %v3762 = vpop.f32.mrf.mxu0
    %v3763 = vadd.f32 0.0, %v3762
    %v3764 = vpop.f32.mrf.mxu0
    %v3765 = vadd.f32 0.0, %v3764
    %v3766 = vpop.f32.mrf.mxu0
    %v3767 = vpop.f32.mrf.mxu0
    %3768 = vdwg.mxu0
    %3769 = vmatprep.subr.bf16.mxu0 %v1917
    %3770 = vmatpush1.bf16.msra.mxu0 %v1916
    %3771 = vmatprep.subr.bf16.mxu0 %v1905
    %3772 = vmatpush1.bf16.msra.mxu0 %v1904
    %3773 = vmatprep.subr.bf16.mxu0 %v1893
    %3774 = vmatpush1.bf16.msra.mxu0 %v1892
    %3775 = vmatprep.subr.bf16.mxu0 %v1881
    %3776 = vmatpush1.bf16.msra.mxu0 %v1880
    %3777 = vmatprep.subr.bf16.mxu0 %v1869
    %3778 = vmatpush1.bf16.msra.mxu0 %v1868
    %3779 = vmatprep.subr.bf16.mxu0 %v1857
    %3780 = vmatpush1.bf16.msra.mxu0 %v1856
    %3781 = vmatprep.subr.bf16.mxu0 %v1845
    %3782 = vmatpush1.bf16.msra.mxu0 %v1844
    %3783 = vmatprep.subr.bf16.mxu0 %v1833
    %3784 = vmatpush1.bf16.msra.mxu0 %v1832
    %3785 = vmatprep.subr.bf16.mxu0 %v2013
    %3786 = vmatpush2.bf16.msra.mxu0 %v2012
    %3787 = vmatprep.subr.bf16.mxu0 %v2001
    %3788 = vmatpush2.bf16.msra.mxu0 %v2000
    %3789 = vmatprep.subr.bf16.mxu0 %v1989
    %3790 = vmatpush2.bf16.msra.mxu0 %v1988
    %3791 = vmatprep.subr.bf16.mxu0 %v1977
    %3792 = vmatpush2.bf16.msra.mxu0 %v1976
    %3793 = vmatprep.subr.bf16.mxu0 %v1965
    %3794 = vmatpush2.bf16.msra.mxu0 %v1964
    %3795 = vmatprep.subr.bf16.mxu0 %v1953
    %3796 = vmatpush2.bf16.msra.mxu0 %v1952
    %3797 = vmatprep.subr.bf16.mxu0 %v1941
    %3798 = vmatpush2.bf16.msra.mxu0 %v1940
    %3799 = vmatprep.subr.bf16.mxu0 %v1929
    %3800 = vmatpush2.bf16.msra.mxu0 %v1928
    %3801 = vmatprep.mubr.bf16.mxu0 %v3645
    %3802 = vmatmul.mubr.bf16.gmra.mxu0 %v3644
    %v3803 = vpop.f32.mrf.mxu0
    %v3804 = vadd.f32 %v3763, %v3803
    %v3805 = vpop.f32.mrf.mxu0
    %v3806 = vadd.f32 %v3765, %v3805
    %v3807 = vpop.f32.mrf.mxu0
    %v3808 = vpop.f32.mrf.mxu0
    %3809 = vdwg.mxu0
    %3810 = vmatprep.subr.bf16.mxu0 %v1727
    %3811 = vmatpush1.bf16.msra.mxu0 %v1726
    %3812 = vmatprep.subr.bf16.mxu0 %v1715
    %3813 = vmatpush1.bf16.msra.mxu0 %v1714
    %3814 = vmatprep.subr.bf16.mxu0 %v1703
    %3815 = vmatpush1.bf16.msra.mxu0 %v1702
    %3816 = vmatprep.subr.bf16.mxu0 %v1691
    %3817 = vmatpush1.bf16.msra.mxu0 %v1690
    %3818 = vmatprep.subr.bf16.mxu0 %v1679
    %3819 = vmatpush1.bf16.msra.mxu0 %v1678
    %3820 = vmatprep.subr.bf16.mxu0 %v1667
    %3821 = vmatpush1.bf16.msra.mxu0 %v1666
    %3822 = vmatprep.subr.bf16.mxu0 %v1655
    %3823 = vmatpush1.bf16.msra.mxu0 %v1654
    %3824 = vmatprep.subr.bf16.mxu0 %v1643
    %3825 = vmatpush1.bf16.msra.mxu0 %v1642
    %3826 = vmatprep.subr.bf16.mxu0 %v1823
    %3827 = vmatpush2.bf16.msra.mxu0 %v1822
    %3828 = vmatprep.subr.bf16.mxu0 %v1811
    %3829 = vmatpush2.bf16.msra.mxu0 %v1810
    %3830 = vmatprep.subr.bf16.mxu0 %v1799
    %3831 = vmatpush2.bf16.msra.mxu0 %v1798
    %3832 = vmatprep.subr.bf16.mxu0 %v1787
    %3833 = vmatpush2.bf16.msra.mxu0 %v1786
    %3834 = vmatprep.subr.bf16.mxu0 %v1775
    %3835 = vmatpush2.bf16.msra.mxu0 %v1774
    %3836 = vmatprep.subr.bf16.mxu0 %v1763
    %3837 = vmatpush2.bf16.msra.mxu0 %v1762
    %3838 = vmatprep.subr.bf16.mxu0 %v1751
    %3839 = vmatpush2.bf16.msra.mxu0 %v1750
    %3840 = vmatprep.subr.bf16.mxu0 %v1739
    %3841 = vmatpush2.bf16.msra.mxu0 %v1738
    %3842 = vmatprep.mubr.bf16.mxu0 %v3643
    %3843 = vmatmul.mubr.bf16.gmra.mxu0 %v3642
    %v3844 = vpop.f32.mrf.mxu0
    %v3845 = vadd.f32 0.0, %v3844
    %v3846 = vpop.f32.mrf.mxu0
    %v3847 = vadd.f32 0.0, %v3846
    %v3848 = vpop.f32.mrf.mxu0
    %v3849 = vpop.f32.mrf.mxu0
    %3850 = vdwg.mxu0
    %3851 = vmatprep.subr.bf16.mxu0 %v1919
    %3852 = vmatpush1.bf16.msra.mxu0 %v1918
    %3853 = vmatprep.subr.bf16.mxu0 %v1907
    %3854 = vmatpush1.bf16.msra.mxu0 %v1906
    %3855 = vmatprep.subr.bf16.mxu0 %v1895
    %3856 = vmatpush1.bf16.msra.mxu0 %v1894
    %3857 = vmatprep.subr.bf16.mxu0 %v1883
    %3858 = vmatpush1.bf16.msra.mxu0 %v1882
    %3859 = vmatprep.subr.bf16.mxu0 %v1871
    %3860 = vmatpush1.bf16.msra.mxu0 %v1870
    %3861 = vmatprep.subr.bf16.mxu0 %v1859
    %3862 = vmatpush1.bf16.msra.mxu0 %v1858
    %3863 = vmatprep.subr.bf16.mxu0 %v1847
    %3864 = vmatpush1.bf16.msra.mxu0 %v1846
    %3865 = vmatprep.subr.bf16.mxu0 %v1835
    %3866 = vmatpush1.bf16.msra.mxu0 %v1834
    %3867 = vmatprep.subr.bf16.mxu0 %v2015
    %3868 = vmatpush2.bf16.msra.mxu0 %v2014
    %3869 = vmatprep.subr.bf16.mxu0 %v2003
    %3870 = vmatpush2.bf16.msra.mxu0 %v2002
    %3871 = vmatprep.subr.bf16.mxu0 %v1991
    %3872 = vmatpush2.bf16.msra.mxu0 %v1990
    %3873 = vmatprep.subr.bf16.mxu0 %v1979
    %3874 = vmatpush2.bf16.msra.mxu0 %v1978
    %3875 = vmatprep.subr.bf16.mxu0 %v1967
    %3876 = vmatpush2.bf16.msra.mxu0 %v1966
    %3877 = vmatprep.subr.bf16.mxu0 %v1955
    %3878 = vmatpush2.bf16.msra.mxu0 %v1954
    %3879 = vmatprep.subr.bf16.mxu0 %v1943
    %3880 = vmatpush2.bf16.msra.mxu0 %v1942
    %3881 = vmatprep.subr.bf16.mxu0 %v1931
    %3882 = vmatpush2.bf16.msra.mxu0 %v1930
    %3883 = vmatprep.mubr.bf16.mxu0 %v3645
    %3884 = vmatmul.mubr.bf16.gmra.mxu0 %v3644
    %v3885 = vpop.f32.mrf.mxu0
    %v3886 = vadd.f32 %v3845, %v3885
    %v3887 = vpop.f32.mrf.mxu0
    %v3888 = vadd.f32 %v3847, %v3887
    %v3889 = vpop.f32.mrf.mxu0
    %v3890 = vpop.f32.mrf.mxu0
    %3891 = vdwg.mxu0
    %3892 = vmatprep.subr.bf16.mxu0 %v1729
    %3893 = vmatpush1.bf16.msra.mxu0 %v1728
    %3894 = vmatprep.subr.bf16.mxu0 %v1717
    %3895 = vmatpush1.bf16.msra.mxu0 %v1716
    %3896 = vmatprep.subr.bf16.mxu0 %v1705
    %3897 = vmatpush1.bf16.msra.mxu0 %v1704
    %3898 = vmatprep.subr.bf16.mxu0 %v1693
    %3899 = vmatpush1.bf16.msra.mxu0 %v1692
    %3900 = vmatprep.subr.bf16.mxu0 %v1681
    %3901 = vmatpush1.bf16.msra.mxu0 %v1680
    %3902 = vmatprep.subr.bf16.mxu0 %v1669
    %3903 = vmatpush1.bf16.msra.mxu0 %v1668
    %3904 = vmatprep.subr.bf16.mxu0 %v1657
    %3905 = vmatpush1.bf16.msra.mxu0 %v1656
    %3906 = vmatprep.subr.bf16.mxu0 %v1645
    %3907 = vmatpush1.bf16.msra.mxu0 %v1644
    %3908 = vmatprep.subr.bf16.mxu0 %v1825
    %3909 = vmatpush2.bf16.msra.mxu0 %v1824
    %3910 = vmatprep.subr.bf16.mxu0 %v1813
    %3911 = vmatpush2.bf16.msra.mxu0 %v1812
    %3912 = vmatprep.subr.bf16.mxu0 %v1801
    %3913 = vmatpush2.bf16.msra.mxu0 %v1800
    %3914 = vmatprep.subr.bf16.mxu0 %v1789
    %3915 = vmatpush2.bf16.msra.mxu0 %v1788
    %3916 = vmatprep.subr.bf16.mxu0 %v1777
    %3917 = vmatpush2.bf16.msra.mxu0 %v1776
    %3918 = vmatprep.subr.bf16.mxu0 %v1765
    %3919 = vmatpush2.bf16.msra.mxu0 %v1764
    %3920 = vmatprep.subr.bf16.mxu0 %v1753
    %3921 = vmatpush2.bf16.msra.mxu0 %v1752
    %3922 = vmatprep.subr.bf16.mxu0 %v1741
    %3923 = vmatpush2.bf16.msra.mxu0 %v1740
    %3924 = vmatprep.mubr.bf16.mxu0 %v3643
    %3925 = vmatmul.mubr.bf16.gmra.mxu0 %v3642
    %v3926 = vpop.f32.mrf.mxu0
    %v3927 = vadd.f32 0.0, %v3926
    %v3928 = vpop.f32.mrf.mxu0
    %v3929 = vadd.f32 0.0, %v3928
    %v3930 = vpop.f32.mrf.mxu0
    %v3931 = vpop.f32.mrf.mxu0
    %3932 = vdwg.mxu0
    %3933 = vmatprep.subr.bf16.mxu0 %v1921
    %3934 = vmatpush1.bf16.msra.mxu0 %v1920
    %3935 = vmatprep.subr.bf16.mxu0 %v1909
    %3936 = vmatpush1.bf16.msra.mxu0 %v1908
    %3937 = vmatprep.subr.bf16.mxu0 %v1897
    %3938 = vmatpush1.bf16.msra.mxu0 %v1896
    %3939 = vmatprep.subr.bf16.mxu0 %v1885
    %3940 = vmatpush1.bf16.msra.mxu0 %v1884
    %3941 = vmatprep.subr.bf16.mxu0 %v1873
    %3942 = vmatpush1.bf16.msra.mxu0 %v1872
    %3943 = vmatprep.subr.bf16.mxu0 %v1861
    %3944 = vmatpush1.bf16.msra.mxu0 %v1860
    %3945 = vmatprep.subr.bf16.mxu0 %v1849
    %3946 = vmatpush1.bf16.msra.mxu0 %v1848
    %3947 = vmatprep.subr.bf16.mxu0 %v1837
    %3948 = vmatpush1.bf16.msra.mxu0 %v1836
    %3949 = vmatprep.subr.bf16.mxu0 %v2017
    %3950 = vmatpush2.bf16.msra.mxu0 %v2016
    %3951 = vmatprep.subr.bf16.mxu0 %v2005
    %3952 = vmatpush2.bf16.msra.mxu0 %v2004
    %3953 = vmatprep.subr.bf16.mxu0 %v1993
    %3954 = vmatpush2.bf16.msra.mxu0 %v1992
    %3955 = vmatprep.subr.bf16.mxu0 %v1981
    %3956 = vmatpush2.bf16.msra.mxu0 %v1980
    %3957 = vmatprep.subr.bf16.mxu0 %v1969
    %3958 = vmatpush2.bf16.msra.mxu0 %v1968
    %3959 = vmatprep.subr.bf16.mxu0 %v1957
    %3960 = vmatpush2.bf16.msra.mxu0 %v1956
    %3961 = vmatprep.subr.bf16.mxu0 %v1945
    %3962 = vmatpush2.bf16.msra.mxu0 %v1944
    %3963 = vmatprep.subr.bf16.mxu0 %v1933
    %3964 = vmatpush2.bf16.msra.mxu0 %v1932
    %3965 = vmatprep.mubr.bf16.mxu0 %v3645
    %3966 = vmatmul.mubr.bf16.gmra.mxu0 %v3644
    %v3967 = vpop.f32.mrf.mxu0
    %v3968 = vadd.f32 %v3927, %v3967
    %v3969 = vpop.f32.mrf.mxu0
    %v3970 = vadd.f32 %v3929, %v3969
    %v3971 = vpop.f32.mrf.mxu0
    %v3972 = vpop.f32.mrf.mxu0
    %3973 = vdwg.mxu0
    %3974 = vmatprep.subr.bf16.mxu0 %v1731
    %3975 = vmatpush1.bf16.msra.mxu0 %v1730
    %3976 = vmatprep.subr.bf16.mxu0 %v1719
    %3977 = vmatpush1.bf16.msra.mxu0 %v1718
    %3978 = vmatprep.subr.bf16.mxu0 %v1707
    %3979 = vmatpush1.bf16.msra.mxu0 %v1706
    %3980 = vmatprep.subr.bf16.mxu0 %v1695
    %3981 = vmatpush1.bf16.msra.mxu0 %v1694
    %3982 = vmatprep.subr.bf16.mxu0 %v1683
    %3983 = vmatpush1.bf16.msra.mxu0 %v1682
    %3984 = vmatprep.subr.bf16.mxu0 %v1671
    %3985 = vmatpush1.bf16.msra.mxu0 %v1670
    %3986 = vmatprep.subr.bf16.mxu0 %v1659
    %3987 = vmatpush1.bf16.msra.mxu0 %v1658
    %3988 = vmatprep.subr.bf16.mxu0 %v1647
    %3989 = vmatpush1.bf16.msra.mxu0 %v1646
    %3990 = vmatprep.subr.bf16.mxu0 %v1827
    %3991 = vmatpush2.bf16.msra.mxu0 %v1826
    %3992 = vmatprep.subr.bf16.mxu0 %v1815
    %3993 = vmatpush2.bf16.msra.mxu0 %v1814
    %3994 = vmatprep.subr.bf16.mxu0 %v1803
    %3995 = vmatpush2.bf16.msra.mxu0 %v1802
    %3996 = vmatprep.subr.bf16.mxu0 %v1791
    %3997 = vmatpush2.bf16.msra.mxu0 %v1790
    %3998 = vmatprep.subr.bf16.mxu0 %v1779
    %3999 = vmatpush2.bf16.msra.mxu0 %v1778
    %4000 = vmatprep.subr.bf16.mxu0 %v1767
    %4001 = vmatpush2.bf16.msra.mxu0 %v1766
    %4002 = vmatprep.subr.bf16.mxu0 %v1755
    %4003 = vmatpush2.bf16.msra.mxu0 %v1754
    %4004 = vmatprep.subr.bf16.mxu0 %v1743
    %4005 = vmatpush2.bf16.msra.mxu0 %v1742
    %4006 = vmatprep.mubr.bf16.mxu0 %v3643
    %4007 = vmatmul.mubr.bf16.gmra.mxu0 %v3642
    %v4008 = vpop.f32.mrf.mxu0
    %v4009 = vadd.f32 0.0, %v4008
    %v4010 = vpop.f32.mrf.mxu0
    %v4011 = vadd.f32 0.0, %v4010
    %v4012 = vpop.f32.mrf.mxu0
    %v4013 = vpop.f32.mrf.mxu0
    %4014 = vdwg.mxu0
    %4015 = vmatprep.subr.bf16.mxu0 %v1923
    %4016 = vmatpush1.bf16.msra.mxu0 %v1922
    %4017 = vmatprep.subr.bf16.mxu0 %v1911
    %4018 = vmatpush1.bf16.msra.mxu0 %v1910
    %4019 = vmatprep.subr.bf16.mxu0 %v1899
    %4020 = vmatpush1.bf16.msra.mxu0 %v1898
    %4021 = vmatprep.subr.bf16.mxu0 %v1887
    %4022 = vmatpush1.bf16.msra.mxu0 %v1886
    %4023 = vmatprep.subr.bf16.mxu0 %v1875
    %4024 = vmatpush1.bf16.msra.mxu0 %v1874
    %4025 = vmatprep.subr.bf16.mxu0 %v1863
    %4026 = vmatpush1.bf16.msra.mxu0 %v1862
    %4027 = vmatprep.subr.bf16.mxu0 %v1851
    %4028 = vmatpush1.bf16.msra.mxu0 %v1850
    %4029 = vmatprep.subr.bf16.mxu0 %v1839
    %4030 = vmatpush1.bf16.msra.mxu0 %v1838
    %4031 = vmatprep.subr.bf16.mxu0 %v2019
    %4032 = vmatpush2.bf16.msra.mxu0 %v2018
    %4033 = vmatprep.subr.bf16.mxu0 %v2007
    %4034 = vmatpush2.bf16.msra.mxu0 %v2006
    %4035 = vmatprep.subr.bf16.mxu0 %v1995
    %4036 = vmatpush2.bf16.msra.mxu0 %v1994
    %4037 = vmatprep.subr.bf16.mxu0 %v1983
    %4038 = vmatpush2.bf16.msra.mxu0 %v1982
    %4039 = vmatprep.subr.bf16.mxu0 %v1971
    %4040 = vmatpush2.bf16.msra.mxu0 %v1970
    %4041 = vmatprep.subr.bf16.mxu0 %v1959
    %4042 = vmatpush2.bf16.msra.mxu0 %v1958
    %4043 = vmatprep.subr.bf16.mxu0 %v1947
    %4044 = vmatpush2.bf16.msra.mxu0 %v1946
    %4045 = vmatprep.subr.bf16.mxu0 %v1935
    %4046 = vmatpush2.bf16.msra.mxu0 %v1934
    %4047 = vmatprep.mubr.bf16.mxu0 %v3645
    %4048 = vmatmul.mubr.bf16.gmra.mxu0 %v3644
    %v4049 = vpop.f32.mrf.mxu0
    %v4050 = vadd.f32 %v4009, %v4049
    %v4051 = vpop.f32.mrf.mxu0
    %v4052 = vadd.f32 %v4011, %v4051
    %v4053 = vpop.f32.mrf.mxu0
    %v4054 = vpop.f32.mrf.mxu0
    %4055 = vdwg.mxu0
    %4056 = vmatprep.subr.bf16.mxu0 %v1733
    %4057 = vmatpush1.bf16.msra.mxu0 %v1732
    %4058 = vmatprep.subr.bf16.mxu0 %v1721
    %4059 = vmatpush1.bf16.msra.mxu0 %v1720
    %4060 = vmatprep.subr.bf16.mxu0 %v1709
    %4061 = vmatpush1.bf16.msra.mxu0 %v1708
    %4062 = vmatprep.subr.bf16.mxu0 %v1697
    %4063 = vmatpush1.bf16.msra.mxu0 %v1696
    %4064 = vmatprep.subr.bf16.mxu0 %v1685
    %4065 = vmatpush1.bf16.msra.mxu0 %v1684
    %4066 = vmatprep.subr.bf16.mxu0 %v1673
    %4067 = vmatpush1.bf16.msra.mxu0 %v1672
    %4068 = vmatprep.subr.bf16.mxu0 %v1661
    %4069 = vmatpush1.bf16.msra.mxu0 %v1660
    %4070 = vmatprep.subr.bf16.mxu0 %v1649
    %4071 = vmatpush1.bf16.msra.mxu0 %v1648
    %4072 = vmatprep.subr.bf16.mxu0 %v1829
    %4073 = vmatpush2.bf16.msra.mxu0 %v1828
    %4074 = vmatprep.subr.bf16.mxu0 %v1817
    %4075 = vmatpush2.bf16.msra.mxu0 %v1816
    %4076 = vmatprep.subr.bf16.mxu0 %v1805
    %4077 = vmatpush2.bf16.msra.mxu0 %v1804
    %4078 = vmatprep.subr.bf16.mxu0 %v1793
    %4079 = vmatpush2.bf16.msra.mxu0 %v1792
    %4080 = vmatprep.subr.bf16.mxu0 %v1781
    %4081 = vmatpush2.bf16.msra.mxu0 %v1780
    %4082 = vmatprep.subr.bf16.mxu0 %v1769
    %4083 = vmatpush2.bf16.msra.mxu0 %v1768
    %4084 = vmatprep.subr.bf16.mxu0 %v1757
    %4085 = vmatpush2.bf16.msra.mxu0 %v1756
    %4086 = vmatprep.subr.bf16.mxu0 %v1745
    %4087 = vmatpush2.bf16.msra.mxu0 %v1744
    %4088 = vmatprep.mubr.bf16.mxu0 %v3643
    %4089 = vmatmul.mubr.bf16.gmra.mxu0 %v3642
    %v4090 = vpop.f32.mrf.mxu0
    %v4091 = vadd.f32 0.0, %v4090
    %v4092 = vpop.f32.mrf.mxu0
    %v4093 = vadd.f32 0.0, %v4092
    %v4094 = vpop.f32.mrf.mxu0
    %v4095 = vpop.f32.mrf.mxu0
    %4096 = vdwg.mxu0
    %4097 = vmatprep.subr.bf16.mxu0 %v1925
    %4098 = vmatpush1.bf16.msra.mxu0 %v1924
    %4099 = vmatprep.subr.bf16.mxu0 %v1913
    %4100 = vmatpush1.bf16.msra.mxu0 %v1912
    %4101 = vmatprep.subr.bf16.mxu0 %v1901
    %4102 = vmatpush1.bf16.msra.mxu0 %v1900
    %4103 = vmatprep.subr.bf16.mxu0 %v1889
    %4104 = vmatpush1.bf16.msra.mxu0 %v1888
    %4105 = vmatprep.subr.bf16.mxu0 %v1877
    %4106 = vmatpush1.bf16.msra.mxu0 %v1876
    %4107 = vmatprep.subr.bf16.mxu0 %v1865
    %4108 = vmatpush1.bf16.msra.mxu0 %v1864
    %4109 = vmatprep.subr.bf16.mxu0 %v1853
    %4110 = vmatpush1.bf16.msra.mxu0 %v1852
    %4111 = vmatprep.subr.bf16.mxu0 %v1841
    %4112 = vmatpush1.bf16.msra.mxu0 %v1840
    %4113 = vmatprep.subr.bf16.mxu0 %v2021
    %4114 = vmatpush2.bf16.msra.mxu0 %v2020
    %4115 = vmatprep.subr.bf16.mxu0 %v2009
    %4116 = vmatpush2.bf16.msra.mxu0 %v2008
    %4117 = vmatprep.subr.bf16.mxu0 %v1997
    %4118 = vmatpush2.bf16.msra.mxu0 %v1996
    %4119 = vmatprep.subr.bf16.mxu0 %v1985
    %4120 = vmatpush2.bf16.msra.mxu0 %v1984
    %4121 = vmatprep.subr.bf16.mxu0 %v1973
    %4122 = vmatpush2.bf16.msra.mxu0 %v1972
    %4123 = vmatprep.subr.bf16.mxu0 %v1961
    %4124 = vmatpush2.bf16.msra.mxu0 %v1960
    %4125 = vmatprep.subr.bf16.mxu0 %v1949
    %4126 = vmatpush2.bf16.msra.mxu0 %v1948
    %4127 = vmatprep.subr.bf16.mxu0 %v1937
    %4128 = vmatpush2.bf16.msra.mxu0 %v1936
    %4129 = vmatprep.mubr.bf16.mxu0 %v3645
    %4130 = vmatmul.mubr.bf16.gmra.mxu0 %v3644
    %v4131 = vpop.f32.mrf.mxu0
    %v4132 = vadd.f32 %v4091, %v4131
    %v4133 = vpop.f32.mrf.mxu0
    %v4134 = vadd.f32 %v4093, %v4133
    %v4135 = vpop.f32.mrf.mxu0
    %v4136 = vpop.f32.mrf.mxu0
    %4137 = vdwg.mxu0
    %v4138 = vadd.f32 %v3630, %v3722
    %v4139 = vadd.f32 %v3631, %v3724
    %v4140 = vadd.f32 %v3632, %v3804
    %v4141 = vadd.f32 %v3633, %v3806
    %v4142 = vxor.u32 %v4138, 2147483648
    %v4143 = vxor.u32 %v4139, 2147483648
    %v4144 = vxor.u32 %v4140, 2147483648
    %v4145 = vxor.u32 %v4141, 2147483648
    %v4146 = vmul.f32 %v4142, 1.442695
    %v4147 = vpow.pop %v4146
    %v4148 = vmul.f32 %v4143, 1.442695
    %v4149 = vpow.pop %v4148
    %v4150 = vmul.f32 %v4144, 1.442695
    %v4151 = vpow.pop %v4150
    %v4152 = vmul.f32 %v4145, 1.442695
    %v4153 = vpow.pop %v4152
    %v4154 = vadd.f32 %v4147, 1.0
    %v4155 = vadd.f32 %v4149, 1.0
    %v4156 = vadd.f32 %v4151, 1.0
    %v4157 = vadd.f32 %v4153, 1.0
    %v4158 = vrcp.pop %v4154
    %v4159 = vmul.f32 1.0, %v4158
    %v4160 = vrcp.pop %v4155
    %v4161 = vmul.f32 1.0, %v4160
    %v4162 = vrcp.pop %v4156
    %v4163 = vmul.f32 1.0, %v4162
    %v4164 = vrcp.pop %v4157
    %v4165 = vmul.f32 1.0, %v4164
    %v4166 = vadd.f32 %v3634, %v3886
    %v4167 = vadd.f32 %v3635, %v3888
    %v4168 = vadd.f32 %v3636, %v3968
    %v4169 = vadd.f32 %v3637, %v3970
    %v4170 = vxor.u32 %v4166, 2147483648
    %v4171 = vxor.u32 %v4167, 2147483648
    %v4172 = vxor.u32 %v4168, 2147483648
    %v4173 = vxor.u32 %v4169, 2147483648
    %v4174 = vmul.f32 %v4170, 1.442695
    %v4175 = vpow.pop %v4174
    %v4176 = vmul.f32 %v4171, 1.442695
    %v4177 = vpow.pop %v4176
    %v4178 = vmul.f32 %v4172, 1.442695
    %v4179 = vpow.pop %v4178
    %v4180 = vmul.f32 %v4173, 1.442695
    %v4181 = vpow.pop %v4180
    %v4182 = vadd.f32 %v4175, 1.0
    %v4183 = vadd.f32 %v4177, 1.0
    %v4184 = vadd.f32 %v4179, 1.0
    %v4185 = vadd.f32 %v4181, 1.0
    %v4186 = vrcp.pop %v4182
    %v4187 = vmul.f32 1.0, %v4186
    %v4188 = vrcp.pop %v4183
    %v4189 = vmul.f32 1.0, %v4188
    %v4190 = vrcp.pop %v4184
    %v4191 = vmul.f32 1.0, %v4190
    %v4192 = vrcp.pop %v4185
    %v4193 = vmul.f32 1.0, %v4192
    %v4194 = vadd.f32 %v4050, %v2958
    %v4195 = vadd.f32 %v4052, %v2962
    %v4196 = vadd.f32 %v4132, %v2966
    %v4197 = vadd.f32 %v4134, %v2970
    %v4198 = vmul.f32 %v4159, %v4194
    %v4199 = vmul.f32 %v4161, %v4195
    %v4200 = vmul.f32 %v4163, %v4196
    %v4201 = vmul.f32 %v4165, %v4197
    %v4202 = vadd.f32 %v3638, %v4198
    %v4203 = vadd.f32 %v3639, %v4199
    %v4204 = vadd.f32 %v3640, %v4200
    %v4205 = vadd.f32 %v3641, %v4201
    %v4206 = vtanh.pop %v4202
    %v4207 = vtanh.pop %v4203
    %v4208 = vtanh.pop %v4204
    %v4209 = vtanh.pop %v4205
    %v4210 = vsub.f32 %v3620, %v4206
    %v4211 = vsub.f32 %v3621, %v4207
    %v4212 = vsub.f32 %v3622, %v4208
    %v4213 = vsub.f32 %v3623, %v4209
    %v4214 = vmul.f32 %v4187, %v4210
    %v4215 = vmul.f32 %v4189, %v4211
    %v4216 = vmul.f32 %v4191, %v4212
    %v4217 = vmul.f32 %v4193, %v4213
    %v4218 = vadd.f32 %v4206, %v4214
    %v4219 = vadd.f32 %v4207, %v4215
    %v4220 = vadd.f32 %v4208, %v4216
    %v4221 = vadd.f32 %v4209, %v4217
    %v4222 = vsub.f32 %v4218, %v3620
    %v4223 = vsub.f32 %v4219, %v3621
    %v4224 = vsub.f32 %v4220, %v3622
    %v4225 = vsub.f32 %v4221, %v3623
    %v4226 = vmul.f32 %v4222, 0.9
    %v4227 = vmul.f32 %v4223, 0.9
    %v4228 = vmul.f32 %v4224, 0.9
    %v4229 = vmul.f32 %v4225, 0.9
    %v4230 = vadd.f32 %v3620, %v4226
    %v4231 = vadd.f32 %v3621, %v4227
    %v4232 = vadd.f32 %v3622, %v4228
    %v4233 = vadd.f32 %v3623, %v4229
    %s4234 = scalar_lea.vmem [#allocation11], 64
    %4235 = vst [vmem:[%s4234] sm:$0xff] %v4230
    %4236 = vst [vmem:[%s4234 + $0x8] sm:$0xff] %v4231
    %4237 = vst [vmem:[%s4234 + $0x10] sm:$0xff] %v4232
    %4238 = vst [vmem:[%s4234 + $0x18] sm:$0xff] %v4233
    %s4239 = scalar_lea.vmem [#allocation3], 288
    %v4240 = vld [vmem:[%s4239] sm:$0xff]
    %v4241 = vld [vmem:[%s4239 + $0x8] sm:$0xff]
    %v4242 = vld [vmem:[%s4239 + $0x10] sm:$0xff]
    %v4243 = vld [vmem:[%s4239 + $0x18] sm:$0xff]
    %v4244 = vld [vmem:[%s4239 + $0x20] sm:$0xff]
    %v4245 = vld [vmem:[%s4239 + $0x28] sm:$0xff]
    %v4246 = vld [vmem:[%s4239 + $0x30] sm:$0xff]
    %v4247 = vld [vmem:[%s4239 + $0x38] sm:$0xff]
    %v4248 = vld [vmem:[%s4239 + $0x40] sm:$0xff]
    %v4249 = vld [vmem:[%s4239 + $0x48] sm:$0xff]
    %v4250 = vld [vmem:[%s4239 + $0x50] sm:$0xff]
    %v4251 = vld [vmem:[%s4239 + $0x58] sm:$0xff]
    %v4252 = vpack.c.bf16 %v4230, %v4230
    %v4253 = vpack.c.bf16 %v4231, %v4231
    %v4254 = vpack.c.bf16 %v4232, %v4232
    %v4255 = vpack.c.bf16 %v4233, %v4233
    %4256 = vmatprep.subr.bf16.mxu0 %v1723
    %4257 = vmatpush1.bf16.msra.mxu0 %v1722
    %4258 = vmatprep.subr.bf16.mxu0 %v1711
    %4259 = vmatpush1.bf16.msra.mxu0 %v1710
    %4260 = vmatprep.subr.bf16.mxu0 %v1699
    %4261 = vmatpush1.bf16.msra.mxu0 %v1698
    %4262 = vmatprep.subr.bf16.mxu0 %v1687
    %4263 = vmatpush1.bf16.msra.mxu0 %v1686
    %4264 = vmatprep.subr.bf16.mxu0 %v1675
    %4265 = vmatpush1.bf16.msra.mxu0 %v1674
    %4266 = vmatprep.subr.bf16.mxu0 %v1663
    %4267 = vmatpush1.bf16.msra.mxu0 %v1662
    %4268 = vmatprep.subr.bf16.mxu0 %v1651
    %4269 = vmatpush1.bf16.msra.mxu0 %v1650
    %4270 = vmatprep.subr.bf16.mxu0 %v1639
    %4271 = vmatpush1.bf16.msra.mxu0 %v1638
    %4272 = vmatprep.subr.bf16.mxu0 %v1819
    %4273 = vmatpush2.bf16.msra.mxu0 %v1818
    %4274 = vmatprep.subr.bf16.mxu0 %v1807
    %4275 = vmatpush2.bf16.msra.mxu0 %v1806
    %4276 = vmatprep.subr.bf16.mxu0 %v1795
    %4277 = vmatpush2.bf16.msra.mxu0 %v1794
    %4278 = vmatprep.subr.bf16.mxu0 %v1783
    %4279 = vmatpush2.bf16.msra.mxu0 %v1782
    %4280 = vmatprep.subr.bf16.mxu0 %v1771
    %4281 = vmatpush2.bf16.msra.mxu0 %v1770
    %4282 = vmatprep.subr.bf16.mxu0 %v1759
    %4283 = vmatpush2.bf16.msra.mxu0 %v1758
    %4284 = vmatprep.subr.bf16.mxu0 %v1747
    %4285 = vmatpush2.bf16.msra.mxu0 %v1746
    %4286 = vmatprep.subr.bf16.mxu0 %v1735
    %4287 = vmatpush2.bf16.msra.mxu0 %v1734
    %4288 = vmatprep.mubr.bf16.mxu0 %v4253
    %4289 = vmatmul.mubr.bf16.gmra.mxu0 %v4252
    %v4290 = vpop.f32.mrf.mxu0
    %v4291 = vadd.f32 0.0, %v4290
    %v4292 = vpop.f32.mrf.mxu0
    %v4293 = vadd.f32 0.0, %v4292
    %v4294 = vpop.f32.mrf.mxu0
    %v4295 = vpop.f32.mrf.mxu0
    %4296 = vdwg.mxu0
    %4297 = vmatprep.subr.bf16.mxu0 %v1915
    %4298 = vmatpush1.bf16.msra.mxu0 %v1914
    %4299 = vmatprep.subr.bf16.mxu0 %v1903
    %4300 = vmatpush1.bf16.msra.mxu0 %v1902
    %4301 = vmatprep.subr.bf16.mxu0 %v1891
    %4302 = vmatpush1.bf16.msra.mxu0 %v1890
    %4303 = vmatprep.subr.bf16.mxu0 %v1879
    %4304 = vmatpush1.bf16.msra.mxu0 %v1878
    %4305 = vmatprep.subr.bf16.mxu0 %v1867
    %4306 = vmatpush1.bf16.msra.mxu0 %v1866
    %4307 = vmatprep.subr.bf16.mxu0 %v1855
    %4308 = vmatpush1.bf16.msra.mxu0 %v1854
    %4309 = vmatprep.subr.bf16.mxu0 %v1843
    %4310 = vmatpush1.bf16.msra.mxu0 %v1842
    %4311 = vmatprep.subr.bf16.mxu0 %v1831
    %4312 = vmatpush1.bf16.msra.mxu0 %v1830
    %4313 = vmatprep.subr.bf16.mxu0 %v2011
    %4314 = vmatpush2.bf16.msra.mxu0 %v2010
    %4315 = vmatprep.subr.bf16.mxu0 %v1999
    %4316 = vmatpush2.bf16.msra.mxu0 %v1998
    %4317 = vmatprep.subr.bf16.mxu0 %v1987
    %4318 = vmatpush2.bf16.msra.mxu0 %v1986
    %4319 = vmatprep.subr.bf16.mxu0 %v1975
    %4320 = vmatpush2.bf16.msra.mxu0 %v1974
    %4321 = vmatprep.subr.bf16.mxu0 %v1963
    %4322 = vmatpush2.bf16.msra.mxu0 %v1962
    %4323 = vmatprep.subr.bf16.mxu0 %v1951
    %4324 = vmatpush2.bf16.msra.mxu0 %v1950
    %4325 = vmatprep.subr.bf16.mxu0 %v1939
    %4326 = vmatpush2.bf16.msra.mxu0 %v1938
    %4327 = vmatprep.subr.bf16.mxu0 %v1927
    %4328 = vmatpush2.bf16.msra.mxu0 %v1926
    %4329 = vmatprep.mubr.bf16.mxu0 %v4255
    %4330 = vmatmul.mubr.bf16.gmra.mxu0 %v4254
    %v4331 = vpop.f32.mrf.mxu0
    %v4332 = vadd.f32 %v4291, %v4331
    %v4333 = vpop.f32.mrf.mxu0
    %v4334 = vadd.f32 %v4293, %v4333
    %v4335 = vpop.f32.mrf.mxu0
    %v4336 = vpop.f32.mrf.mxu0
    %4337 = vdwg.mxu0
    %4338 = vmatprep.subr.bf16.mxu0 %v1725
    %4339 = vmatpush1.bf16.msra.mxu0 %v1724
    %4340 = vmatprep.subr.bf16.mxu0 %v1713
    %4341 = vmatpush1.bf16.msra.mxu0 %v1712
    %4342 = vmatprep.subr.bf16.mxu0 %v1701
    %4343 = vmatpush1.bf16.msra.mxu0 %v1700
    %4344 = vmatprep.subr.bf16.mxu0 %v1689
    %4345 = vmatpush1.bf16.msra.mxu0 %v1688
    %4346 = vmatprep.subr.bf16.mxu0 %v1677
    %4347 = vmatpush1.bf16.msra.mxu0 %v1676
    %4348 = vmatprep.subr.bf16.mxu0 %v1665
    %4349 = vmatpush1.bf16.msra.mxu0 %v1664
    %4350 = vmatprep.subr.bf16.mxu0 %v1653
    %4351 = vmatpush1.bf16.msra.mxu0 %v1652
    %4352 = vmatprep.subr.bf16.mxu0 %v1641
    %4353 = vmatpush1.bf16.msra.mxu0 %v1640
    %4354 = vmatprep.subr.bf16.mxu0 %v1821
    %4355 = vmatpush2.bf16.msra.mxu0 %v1820
    %4356 = vmatprep.subr.bf16.mxu0 %v1809
    %4357 = vmatpush2.bf16.msra.mxu0 %v1808
    %4358 = vmatprep.subr.bf16.mxu0 %v1797
    %4359 = vmatpush2.bf16.msra.mxu0 %v1796
    %4360 = vmatprep.subr.bf16.mxu0 %v1785
    %4361 = vmatpush2.bf16.msra.mxu0 %v1784
    %4362 = vmatprep.subr.bf16.mxu0 %v1773
    %4363 = vmatpush2.bf16.msra.mxu0 %v1772
    %4364 = vmatprep.subr.bf16.mxu0 %v1761
    %4365 = vmatpush2.bf16.msra.mxu0 %v1760
    %4366 = vmatprep.subr.bf16.mxu0 %v1749
    %4367 = vmatpush2.bf16.msra.mxu0 %v1748
    %4368 = vmatprep.subr.bf16.mxu0 %v1737
    %4369 = vmatpush2.bf16.msra.mxu0 %v1736
    %4370 = vmatprep.mubr.bf16.mxu0 %v4253
    %4371 = vmatmul.mubr.bf16.gmra.mxu0 %v4252
    %v4372 = vpop.f32.mrf.mxu0
    %v4373 = vadd.f32 0.0, %v4372
    %v4374 = vpop.f32.mrf.mxu0
    %v4375 = vadd.f32 0.0, %v4374
    %v4376 = vpop.f32.mrf.mxu0
    %v4377 = vpop.f32.mrf.mxu0
    %4378 = vdwg.mxu0
    %4379 = vmatprep.subr.bf16.mxu0 %v1917
    %4380 = vmatpush1.bf16.msra.mxu0 %v1916
    %4381 = vmatprep.subr.bf16.mxu0 %v1905
    %4382 = vmatpush1.bf16.msra.mxu0 %v1904
    %4383 = vmatprep.subr.bf16.mxu0 %v1893
    %4384 = vmatpush1.bf16.msra.mxu0 %v1892
    %4385 = vmatprep.subr.bf16.mxu0 %v1881
    %4386 = vmatpush1.bf16.msra.mxu0 %v1880
    %4387 = vmatprep.subr.bf16.mxu0 %v1869
    %4388 = vmatpush1.bf16.msra.mxu0 %v1868
    %4389 = vmatprep.subr.bf16.mxu0 %v1857
    %4390 = vmatpush1.bf16.msra.mxu0 %v1856
    %4391 = vmatprep.subr.bf16.mxu0 %v1845
    %4392 = vmatpush1.bf16.msra.mxu0 %v1844
    %4393 = vmatprep.subr.bf16.mxu0 %v1833
    %4394 = vmatpush1.bf16.msra.mxu0 %v1832
    %4395 = vmatprep.subr.bf16.mxu0 %v2013
    %4396 = vmatpush2.bf16.msra.mxu0 %v2012
    %4397 = vmatprep.subr.bf16.mxu0 %v2001
    %4398 = vmatpush2.bf16.msra.mxu0 %v2000
    %4399 = vmatprep.subr.bf16.mxu0 %v1989
    %4400 = vmatpush2.bf16.msra.mxu0 %v1988
    %4401 = vmatprep.subr.bf16.mxu0 %v1977
    %4402 = vmatpush2.bf16.msra.mxu0 %v1976
    %4403 = vmatprep.subr.bf16.mxu0 %v1965
    %4404 = vmatpush2.bf16.msra.mxu0 %v1964
    %4405 = vmatprep.subr.bf16.mxu0 %v1953
    %4406 = vmatpush2.bf16.msra.mxu0 %v1952
    %4407 = vmatprep.subr.bf16.mxu0 %v1941
    %4408 = vmatpush2.bf16.msra.mxu0 %v1940
    %4409 = vmatprep.subr.bf16.mxu0 %v1929
    %4410 = vmatpush2.bf16.msra.mxu0 %v1928
    %4411 = vmatprep.mubr.bf16.mxu0 %v4255
    %4412 = vmatmul.mubr.bf16.gmra.mxu0 %v4254
    %v4413 = vpop.f32.mrf.mxu0
    %v4414 = vadd.f32 %v4373, %v4413
    %v4415 = vpop.f32.mrf.mxu0
    %v4416 = vadd.f32 %v4375, %v4415
    %v4417 = vpop.f32.mrf.mxu0
    %v4418 = vpop.f32.mrf.mxu0
    %4419 = vdwg.mxu0
    %4420 = vmatprep.subr.bf16.mxu0 %v1727
    %4421 = vmatpush1.bf16.msra.mxu0 %v1726
    %4422 = vmatprep.subr.bf16.mxu0 %v1715
    %4423 = vmatpush1.bf16.msra.mxu0 %v1714
    %4424 = vmatprep.subr.bf16.mxu0 %v1703
    %4425 = vmatpush1.bf16.msra.mxu0 %v1702
    %4426 = vmatprep.subr.bf16.mxu0 %v1691
    %4427 = vmatpush1.bf16.msra.mxu0 %v1690
    %4428 = vmatprep.subr.bf16.mxu0 %v1679
    %4429 = vmatpush1.bf16.msra.mxu0 %v1678
    %4430 = vmatprep.subr.bf16.mxu0 %v1667
    %4431 = vmatpush1.bf16.msra.mxu0 %v1666
    %4432 = vmatprep.subr.bf16.mxu0 %v1655
    %4433 = vmatpush1.bf16.msra.mxu0 %v1654
    %4434 = vmatprep.subr.bf16.mxu0 %v1643
    %4435 = vmatpush1.bf16.msra.mxu0 %v1642
    %4436 = vmatprep.subr.bf16.mxu0 %v1823
    %4437 = vmatpush2.bf16.msra.mxu0 %v1822
    %4438 = vmatprep.subr.bf16.mxu0 %v1811
    %4439 = vmatpush2.bf16.msra.mxu0 %v1810
    %4440 = vmatprep.subr.bf16.mxu0 %v1799
    %4441 = vmatpush2.bf16.msra.mxu0 %v1798
    %4442 = vmatprep.subr.bf16.mxu0 %v1787
    %4443 = vmatpush2.bf16.msra.mxu0 %v1786
    %4444 = vmatprep.subr.bf16.mxu0 %v1775
    %4445 = vmatpush2.bf16.msra.mxu0 %v1774
    %4446 = vmatprep.subr.bf16.mxu0 %v1763
    %4447 = vmatpush2.bf16.msra.mxu0 %v1762
    %4448 = vmatprep.subr.bf16.mxu0 %v1751
    %4449 = vmatpush2.bf16.msra.mxu0 %v1750
    %4450 = vmatprep.subr.bf16.mxu0 %v1739
    %4451 = vmatpush2.bf16.msra.mxu0 %v1738
    %4452 = vmatprep.mubr.bf16.mxu0 %v4253
    %4453 = vmatmul.mubr.bf16.gmra.mxu0 %v4252
    %v4454 = vpop.f32.mrf.mxu0
    %v4455 = vadd.f32 0.0, %v4454
    %v4456 = vpop.f32.mrf.mxu0
    %v4457 = vadd.f32 0.0, %v4456
    %v4458 = vpop.f32.mrf.mxu0
    %v4459 = vpop.f32.mrf.mxu0
    %4460 = vdwg.mxu0
    %4461 = vmatprep.subr.bf16.mxu0 %v1919
    %4462 = vmatpush1.bf16.msra.mxu0 %v1918
    %4463 = vmatprep.subr.bf16.mxu0 %v1907
    %4464 = vmatpush1.bf16.msra.mxu0 %v1906
    %4465 = vmatprep.subr.bf16.mxu0 %v1895
    %4466 = vmatpush1.bf16.msra.mxu0 %v1894
    %4467 = vmatprep.subr.bf16.mxu0 %v1883
    %4468 = vmatpush1.bf16.msra.mxu0 %v1882
    %4469 = vmatprep.subr.bf16.mxu0 %v1871
    %4470 = vmatpush1.bf16.msra.mxu0 %v1870
    %4471 = vmatprep.subr.bf16.mxu0 %v1859
    %4472 = vmatpush1.bf16.msra.mxu0 %v1858
    %4473 = vmatprep.subr.bf16.mxu0 %v1847
    %4474 = vmatpush1.bf16.msra.mxu0 %v1846
    %4475 = vmatprep.subr.bf16.mxu0 %v1835
    %4476 = vmatpush1.bf16.msra.mxu0 %v1834
    %4477 = vmatprep.subr.bf16.mxu0 %v2015
    %4478 = vmatpush2.bf16.msra.mxu0 %v2014
    %4479 = vmatprep.subr.bf16.mxu0 %v2003
    %4480 = vmatpush2.bf16.msra.mxu0 %v2002
    %4481 = vmatprep.subr.bf16.mxu0 %v1991
    %4482 = vmatpush2.bf16.msra.mxu0 %v1990
    %4483 = vmatprep.subr.bf16.mxu0 %v1979
    %4484 = vmatpush2.bf16.msra.mxu0 %v1978
    %4485 = vmatprep.subr.bf16.mxu0 %v1967
    %4486 = vmatpush2.bf16.msra.mxu0 %v1966
    %4487 = vmatprep.subr.bf16.mxu0 %v1955
    %4488 = vmatpush2.bf16.msra.mxu0 %v1954
    %4489 = vmatprep.subr.bf16.mxu0 %v1943
    %4490 = vmatpush2.bf16.msra.mxu0 %v1942
    %4491 = vmatprep.subr.bf16.mxu0 %v1931
    %4492 = vmatpush2.bf16.msra.mxu0 %v1930
    %4493 = vmatprep.mubr.bf16.mxu0 %v4255
    %4494 = vmatmul.mubr.bf16.gmra.mxu0 %v4254
    %v4495 = vpop.f32.mrf.mxu0
    %v4496 = vadd.f32 %v4455, %v4495
    %v4497 = vpop.f32.mrf.mxu0
    %v4498 = vadd.f32 %v4457, %v4497
    %v4499 = vpop.f32.mrf.mxu0
    %v4500 = vpop.f32.mrf.mxu0
    %4501 = vdwg.mxu0
    %4502 = vmatprep.subr.bf16.mxu0 %v1729
    %4503 = vmatpush1.bf16.msra.mxu0 %v1728
    %4504 = vmatprep.subr.bf16.mxu0 %v1717
    %4505 = vmatpush1.bf16.msra.mxu0 %v1716
    %4506 = vmatprep.subr.bf16.mxu0 %v1705
    %4507 = vmatpush1.bf16.msra.mxu0 %v1704
    %4508 = vmatprep.subr.bf16.mxu0 %v1693
    %4509 = vmatpush1.bf16.msra.mxu0 %v1692
    %4510 = vmatprep.subr.bf16.mxu0 %v1681
    %4511 = vmatpush1.bf16.msra.mxu0 %v1680
    %4512 = vmatprep.subr.bf16.mxu0 %v1669
    %4513 = vmatpush1.bf16.msra.mxu0 %v1668
    %4514 = vmatprep.subr.bf16.mxu0 %v1657
    %4515 = vmatpush1.bf16.msra.mxu0 %v1656
    %4516 = vmatprep.subr.bf16.mxu0 %v1645
    %4517 = vmatpush1.bf16.msra.mxu0 %v1644
    %4518 = vmatprep.subr.bf16.mxu0 %v1825
    %4519 = vmatpush2.bf16.msra.mxu0 %v1824
    %4520 = vmatprep.subr.bf16.mxu0 %v1813
    %4521 = vmatpush2.bf16.msra.mxu0 %v1812
    %4522 = vmatprep.subr.bf16.mxu0 %v1801
    %4523 = vmatpush2.bf16.msra.mxu0 %v1800
    %4524 = vmatprep.subr.bf16.mxu0 %v1789
    %4525 = vmatpush2.bf16.msra.mxu0 %v1788
    %4526 = vmatprep.subr.bf16.mxu0 %v1777
    %4527 = vmatpush2.bf16.msra.mxu0 %v1776
    %4528 = vmatprep.subr.bf16.mxu0 %v1765
    %4529 = vmatpush2.bf16.msra.mxu0 %v1764
    %4530 = vmatprep.subr.bf16.mxu0 %v1753
    %4531 = vmatpush2.bf16.msra.mxu0 %v1752
    %4532 = vmatprep.subr.bf16.mxu0 %v1741
    %4533 = vmatpush2.bf16.msra.mxu0 %v1740
    %4534 = vmatprep.mubr.bf16.mxu0 %v4253
    %4535 = vmatmul.mubr.bf16.gmra.mxu0 %v4252
    %v4536 = vpop.f32.mrf.mxu0
    %v4537 = vadd.f32 0.0, %v4536
    %v4538 = vpop.f32.mrf.mxu0
    %v4539 = vadd.f32 0.0, %v4538
    %v4540 = vpop.f32.mrf.mxu0
    %v4541 = vpop.f32.mrf.mxu0
    %4542 = vdwg.mxu0
    %4543 = vmatprep.subr.bf16.mxu0 %v1921
    %4544 = vmatpush1.bf16.msra.mxu0 %v1920
    %4545 = vmatprep.subr.bf16.mxu0 %v1909
    %4546 = vmatpush1.bf16.msra.mxu0 %v1908
    %4547 = vmatprep.subr.bf16.mxu0 %v1897
    %4548 = vmatpush1.bf16.msra.mxu0 %v1896
    %4549 = vmatprep.subr.bf16.mxu0 %v1885
    %4550 = vmatpush1.bf16.msra.mxu0 %v1884
    %4551 = vmatprep.subr.bf16.mxu0 %v1873
    %4552 = vmatpush1.bf16.msra.mxu0 %v1872
    %4553 = vmatprep.subr.bf16.mxu0 %v1861
    %4554 = vmatpush1.bf16.msra.mxu0 %v1860
    %4555 = vmatprep.subr.bf16.mxu0 %v1849
    %4556 = vmatpush1.bf16.msra.mxu0 %v1848
    %4557 = vmatprep.subr.bf16.mxu0 %v1837
    %4558 = vmatpush1.bf16.msra.mxu0 %v1836
    %4559 = vmatprep.subr.bf16.mxu0 %v2017
    %4560 = vmatpush2.bf16.msra.mxu0 %v2016
    %4561 = vmatprep.subr.bf16.mxu0 %v2005
    %4562 = vmatpush2.bf16.msra.mxu0 %v2004
    %4563 = vmatprep.subr.bf16.mxu0 %v1993
    %4564 = vmatpush2.bf16.msra.mxu0 %v1992
    %4565 = vmatprep.subr.bf16.mxu0 %v1981
    %4566 = vmatpush2.bf16.msra.mxu0 %v1980
    %4567 = vmatprep.subr.bf16.mxu0 %v1969
    %4568 = vmatpush2.bf16.msra.mxu0 %v1968
    %4569 = vmatprep.subr.bf16.mxu0 %v1957
    %4570 = vmatpush2.bf16.msra.mxu0 %v1956
    %4571 = vmatprep.subr.bf16.mxu0 %v1945
    %4572 = vmatpush2.bf16.msra.mxu0 %v1944
    %4573 = vmatprep.subr.bf16.mxu0 %v1933
    %4574 = vmatpush2.bf16.msra.mxu0 %v1932
    %4575 = vmatprep.mubr.bf16.mxu0 %v4255
    %4576 = vmatmul.mubr.bf16.gmra.mxu0 %v4254
    %v4577 = vpop.f32.mrf.mxu0
    %v4578 = vadd.f32 %v4537, %v4577
    %v4579 = vpop.f32.mrf.mxu0
    %v4580 = vadd.f32 %v4539, %v4579
    %v4581 = vpop.f32.mrf.mxu0
    %v4582 = vpop.f32.mrf.mxu0
    %4583 = vdwg.mxu0
    %4584 = vmatprep.subr.bf16.mxu0 %v1731
    %4585 = vmatpush1.bf16.msra.mxu0 %v1730
    %4586 = vmatprep.subr.bf16.mxu0 %v1719
    %4587 = vmatpush1.bf16.msra.mxu0 %v1718
    %4588 = vmatprep.subr.bf16.mxu0 %v1707
    %4589 = vmatpush1.bf16.msra.mxu0 %v1706
    %4590 = vmatprep.subr.bf16.mxu0 %v1695
    %4591 = vmatpush1.bf16.msra.mxu0 %v1694
    %4592 = vmatprep.subr.bf16.mxu0 %v1683
    %4593 = vmatpush1.bf16.msra.mxu0 %v1682
    %4594 = vmatprep.subr.bf16.mxu0 %v1671
    %4595 = vmatpush1.bf16.msra.mxu0 %v1670
    %4596 = vmatprep.subr.bf16.mxu0 %v1659
    %4597 = vmatpush1.bf16.msra.mxu0 %v1658
    %4598 = vmatprep.subr.bf16.mxu0 %v1647
    %4599 = vmatpush1.bf16.msra.mxu0 %v1646
    %4600 = vmatprep.subr.bf16.mxu0 %v1827
    %4601 = vmatpush2.bf16.msra.mxu0 %v1826
    %4602 = vmatprep.subr.bf16.mxu0 %v1815
    %4603 = vmatpush2.bf16.msra.mxu0 %v1814
    %4604 = vmatprep.subr.bf16.mxu0 %v1803
    %4605 = vmatpush2.bf16.msra.mxu0 %v1802
    %4606 = vmatprep.subr.bf16.mxu0 %v1791
    %4607 = vmatpush2.bf16.msra.mxu0 %v1790
    %4608 = vmatprep.subr.bf16.mxu0 %v1779
    %4609 = vmatpush2.bf16.msra.mxu0 %v1778
    %4610 = vmatprep.subr.bf16.mxu0 %v1767
    %4611 = vmatpush2.bf16.msra.mxu0 %v1766
    %4612 = vmatprep.subr.bf16.mxu0 %v1755
    %4613 = vmatpush2.bf16.msra.mxu0 %v1754
    %4614 = vmatprep.subr.bf16.mxu0 %v1743
    %4615 = vmatpush2.bf16.msra.mxu0 %v1742
    %4616 = vmatprep.mubr.bf16.mxu0 %v4253
    %4617 = vmatmul.mubr.bf16.gmra.mxu0 %v4252
    %v4618 = vpop.f32.mrf.mxu0
    %v4619 = vadd.f32 0.0, %v4618
    %v4620 = vpop.f32.mrf.mxu0
    %v4621 = vadd.f32 0.0, %v4620
    %v4622 = vpop.f32.mrf.mxu0
    %v4623 = vpop.f32.mrf.mxu0
    %4624 = vdwg.mxu0
    %4625 = vmatprep.subr.bf16.mxu0 %v1923
    %4626 = vmatpush1.bf16.msra.mxu0 %v1922
    %4627 = vmatprep.subr.bf16.mxu0 %v1911
    %4628 = vmatpush1.bf16.msra.mxu0 %v1910
    %4629 = vmatprep.subr.bf16.mxu0 %v1899
    %4630 = vmatpush1.bf16.msra.mxu0 %v1898
    %4631 = vmatprep.subr.bf16.mxu0 %v1887
    %4632 = vmatpush1.bf16.msra.mxu0 %v1886
    %4633 = vmatprep.subr.bf16.mxu0 %v1875
    %4634 = vmatpush1.bf16.msra.mxu0 %v1874
    %4635 = vmatprep.subr.bf16.mxu0 %v1863
    %4636 = vmatpush1.bf16.msra.mxu0 %v1862
    %4637 = vmatprep.subr.bf16.mxu0 %v1851
    %4638 = vmatpush1.bf16.msra.mxu0 %v1850
    %4639 = vmatprep.subr.bf16.mxu0 %v1839
    %4640 = vmatpush1.bf16.msra.mxu0 %v1838
    %4641 = vmatprep.subr.bf16.mxu0 %v2019
    %4642 = vmatpush2.bf16.msra.mxu0 %v2018
    %4643 = vmatprep.subr.bf16.mxu0 %v2007
    %4644 = vmatpush2.bf16.msra.mxu0 %v2006
    %4645 = vmatprep.subr.bf16.mxu0 %v1995
    %4646 = vmatpush2.bf16.msra.mxu0 %v1994
    %4647 = vmatprep.subr.bf16.mxu0 %v1983
    %4648 = vmatpush2.bf16.msra.mxu0 %v1982
    %4649 = vmatprep.subr.bf16.mxu0 %v1971
    %4650 = vmatpush2.bf16.msra.mxu0 %v1970
    %4651 = vmatprep.subr.bf16.mxu0 %v1959
    %4652 = vmatpush2.bf16.msra.mxu0 %v1958
    %4653 = vmatprep.subr.bf16.mxu0 %v1947
    %4654 = vmatpush2.bf16.msra.mxu0 %v1946
    %4655 = vmatprep.subr.bf16.mxu0 %v1935
    %4656 = vmatpush2.bf16.msra.mxu0 %v1934
    %4657 = vmatprep.mubr.bf16.mxu0 %v4255
    %4658 = vmatmul.mubr.bf16.gmra.mxu0 %v4254
    %v4659 = vpop.f32.mrf.mxu0
    %v4660 = vadd.f32 %v4619, %v4659
    %v4661 = vpop.f32.mrf.mxu0
    %v4662 = vadd.f32 %v4621, %v4661
    %v4663 = vpop.f32.mrf.mxu0
    %v4664 = vpop.f32.mrf.mxu0
    %4665 = vdwg.mxu0
    %4666 = vmatprep.subr.bf16.mxu0 %v1733
    %4667 = vmatpush1.bf16.msra.mxu0 %v1732
    %4668 = vmatprep.subr.bf16.mxu0 %v1721
    %4669 = vmatpush1.bf16.msra.mxu0 %v1720
    %4670 = vmatprep.subr.bf16.mxu0 %v1709
    %4671 = vmatpush1.bf16.msra.mxu0 %v1708
    %4672 = vmatprep.subr.bf16.mxu0 %v1697
    %4673 = vmatpush1.bf16.msra.mxu0 %v1696
    %4674 = vmatprep.subr.bf16.mxu0 %v1685
    %4675 = vmatpush1.bf16.msra.mxu0 %v1684
    %4676 = vmatprep.subr.bf16.mxu0 %v1673
    %4677 = vmatpush1.bf16.msra.mxu0 %v1672
    %4678 = vmatprep.subr.bf16.mxu0 %v1661
    %4679 = vmatpush1.bf16.msra.mxu0 %v1660
    %4680 = vmatprep.subr.bf16.mxu0 %v1649
    %4681 = vmatpush1.bf16.msra.mxu0 %v1648
    %4682 = vmatprep.subr.bf16.mxu0 %v1829
    %4683 = vmatpush2.bf16.msra.mxu0 %v1828
    %4684 = vmatprep.subr.bf16.mxu0 %v1817
    %4685 = vmatpush2.bf16.msra.mxu0 %v1816
    %4686 = vmatprep.subr.bf16.mxu0 %v1805
    %4687 = vmatpush2.bf16.msra.mxu0 %v1804
    %4688 = vmatprep.subr.bf16.mxu0 %v1793
    %4689 = vmatpush2.bf16.msra.mxu0 %v1792
    %4690 = vmatprep.subr.bf16.mxu0 %v1781
    %4691 = vmatpush2.bf16.msra.mxu0 %v1780
    %4692 = vmatprep.subr.bf16.mxu0 %v1769
    %4693 = vmatpush2.bf16.msra.mxu0 %v1768
    %4694 = vmatprep.subr.bf16.mxu0 %v1757
    %4695 = vmatpush2.bf16.msra.mxu0 %v1756
    %4696 = vmatprep.subr.bf16.mxu0 %v1745
    %4697 = vmatpush2.bf16.msra.mxu0 %v1744
    %4698 = vmatprep.mubr.bf16.mxu0 %v4253
    %4699 = vmatmul.mubr.bf16.gmra.mxu0 %v4252
    %v4700 = vpop.f32.mrf.mxu0
    %v4701 = vadd.f32 0.0, %v4700
    %v4702 = vpop.f32.mrf.mxu0
    %v4703 = vadd.f32 0.0, %v4702
    %v4704 = vpop.f32.mrf.mxu0
    %v4705 = vpop.f32.mrf.mxu0
    %4706 = vdwg.mxu0
    %4707 = vmatprep.subr.bf16.mxu0 %v1925
    %4708 = vmatpush1.bf16.msra.mxu0 %v1924
    %4709 = vmatprep.subr.bf16.mxu0 %v1913
    %4710 = vmatpush1.bf16.msra.mxu0 %v1912
    %4711 = vmatprep.subr.bf16.mxu0 %v1901
    %4712 = vmatpush1.bf16.msra.mxu0 %v1900
    %4713 = vmatprep.subr.bf16.mxu0 %v1889
    %4714 = vmatpush1.bf16.msra.mxu0 %v1888
    %4715 = vmatprep.subr.bf16.mxu0 %v1877
    %4716 = vmatpush1.bf16.msra.mxu0 %v1876
    %4717 = vmatprep.subr.bf16.mxu0 %v1865
    %4718 = vmatpush1.bf16.msra.mxu0 %v1864
    %4719 = vmatprep.subr.bf16.mxu0 %v1853
    %4720 = vmatpush1.bf16.msra.mxu0 %v1852
    %4721 = vmatprep.subr.bf16.mxu0 %v1841
    %4722 = vmatpush1.bf16.msra.mxu0 %v1840
    %4723 = vmatprep.subr.bf16.mxu0 %v2021
    %4724 = vmatpush2.bf16.msra.mxu0 %v2020
    %4725 = vmatprep.subr.bf16.mxu0 %v2009
    %4726 = vmatpush2.bf16.msra.mxu0 %v2008
    %4727 = vmatprep.subr.bf16.mxu0 %v1997
    %4728 = vmatpush2.bf16.msra.mxu0 %v1996
    %4729 = vmatprep.subr.bf16.mxu0 %v1985
    %4730 = vmatpush2.bf16.msra.mxu0 %v1984
    %4731 = vmatprep.subr.bf16.mxu0 %v1973
    %4732 = vmatpush2.bf16.msra.mxu0 %v1972
    %4733 = vmatprep.subr.bf16.mxu0 %v1961
    %4734 = vmatpush2.bf16.msra.mxu0 %v1960
    %4735 = vmatprep.subr.bf16.mxu0 %v1949
    %4736 = vmatpush2.bf16.msra.mxu0 %v1948
    %4737 = vmatprep.subr.bf16.mxu0 %v1937
    %4738 = vmatpush2.bf16.msra.mxu0 %v1936
    %4739 = vmatprep.mubr.bf16.mxu0 %v4255
    %4740 = vmatmul.mubr.bf16.gmra.mxu0 %v4254
    %v4741 = vpop.f32.mrf.mxu0
    %v4742 = vadd.f32 %v4701, %v4741
    %v4743 = vpop.f32.mrf.mxu0
    %v4744 = vadd.f32 %v4703, %v4743
    %v4745 = vpop.f32.mrf.mxu0
    %v4746 = vpop.f32.mrf.mxu0
    %4747 = vdwg.mxu0
    %v4748 = vadd.f32 %v4240, %v4332
    %v4749 = vadd.f32 %v4241, %v4334
    %v4750 = vadd.f32 %v4242, %v4414
    %v4751 = vadd.f32 %v4243, %v4416
    %v4752 = vxor.u32 %v4748, 2147483648
    %v4753 = vxor.u32 %v4749, 2147483648
    %v4754 = vxor.u32 %v4750, 2147483648
    %v4755 = vxor.u32 %v4751, 2147483648
    %v4756 = vmul.f32 %v4752, 1.442695
    %v4757 = vpow.pop %v4756
    %v4758 = vmul.f32 %v4753, 1.442695
    %v4759 = vpow.pop %v4758
    %v4760 = vmul.f32 %v4754, 1.442695
    %v4761 = vpow.pop %v4760
    %v4762 = vmul.f32 %v4755, 1.442695
    %v4763 = vpow.pop %v4762
    %v4764 = vadd.f32 %v4757, 1.0
    %v4765 = vadd.f32 %v4759, 1.0
    %v4766 = vadd.f32 %v4761, 1.0
    %v4767 = vadd.f32 %v4763, 1.0
    %v4768 = vrcp.pop %v4764
    %v4769 = vmul.f32 1.0, %v4768
    %v4770 = vrcp.pop %v4765
    %v4771 = vmul.f32 1.0, %v4770
    %v4772 = vrcp.pop %v4766
    %v4773 = vmul.f32 1.0, %v4772
    %v4774 = vrcp.pop %v4767
    %v4775 = vmul.f32 1.0, %v4774
    %v4776 = vadd.f32 %v4244, %v4496
    %v4777 = vadd.f32 %v4245, %v4498
    %v4778 = vadd.f32 %v4246, %v4578
    %v4779 = vadd.f32 %v4247, %v4580
    %v4780 = vxor.u32 %v4776, 2147483648
    %v4781 = vxor.u32 %v4777, 2147483648
    %v4782 = vxor.u32 %v4778, 2147483648
    %v4783 = vxor.u32 %v4779, 2147483648
    %v4784 = vmul.f32 %v4780, 1.442695
    %v4785 = vpow.pop %v4784
    %v4786 = vmul.f32 %v4781, 1.442695
    %v4787 = vpow.pop %v4786
    %v4788 = vmul.f32 %v4782, 1.442695
    %v4789 = vpow.pop %v4788
    %v4790 = vmul.f32 %v4783, 1.442695
    %v4791 = vpow.pop %v4790
    %v4792 = vadd.f32 %v4785, 1.0
    %v4793 = vadd.f32 %v4787, 1.0
    %v4794 = vadd.f32 %v4789, 1.0
    %v4795 = vadd.f32 %v4791, 1.0
    %v4796 = vrcp.pop %v4792
    %v4797 = vmul.f32 1.0, %v4796
    %v4798 = vrcp.pop %v4793
    %v4799 = vmul.f32 1.0, %v4798
    %v4800 = vrcp.pop %v4794
    %v4801 = vmul.f32 1.0, %v4800
    %v4802 = vrcp.pop %v4795
    %v4803 = vmul.f32 1.0, %v4802
    %v4804 = vadd.f32 %v4660, %v2958
    %v4805 = vadd.f32 %v4662, %v2962
    %v4806 = vadd.f32 %v4742, %v2966
    %v4807 = vadd.f32 %v4744, %v2970
    %v4808 = vmul.f32 %v4769, %v4804
    %v4809 = vmul.f32 %v4771, %v4805
    %v4810 = vmul.f32 %v4773, %v4806
    %v4811 = vmul.f32 %v4775, %v4807
    %v4812 = vadd.f32 %v4248, %v4808
    %v4813 = vadd.f32 %v4249, %v4809
    %v4814 = vadd.f32 %v4250, %v4810
    %v4815 = vadd.f32 %v4251, %v4811
    %v4816 = vtanh.pop %v4812
    %v4817 = vtanh.pop %v4813
    %v4818 = vtanh.pop %v4814
    %v4819 = vtanh.pop %v4815
    %v4820 = vsub.f32 %v4230, %v4816
    %v4821 = vsub.f32 %v4231, %v4817
    %v4822 = vsub.f32 %v4232, %v4818
    %v4823 = vsub.f32 %v4233, %v4819
    %v4824 = vmul.f32 %v4797, %v4820
    %v4825 = vmul.f32 %v4799, %v4821
    %v4826 = vmul.f32 %v4801, %v4822
    %v4827 = vmul.f32 %v4803, %v4823
    %v4828 = vadd.f32 %v4816, %v4824
    %v4829 = vadd.f32 %v4817, %v4825
    %v4830 = vadd.f32 %v4818, %v4826
    %v4831 = vadd.f32 %v4819, %v4827
    %v4832 = vsub.f32 %v4828, %v4230
    %v4833 = vsub.f32 %v4829, %v4231
    %v4834 = vsub.f32 %v4830, %v4232
    %v4835 = vsub.f32 %v4831, %v4233
    %v4836 = vmul.f32 %v4832, 0.9
    %v4837 = vmul.f32 %v4833, 0.9
    %v4838 = vmul.f32 %v4834, 0.9
    %v4839 = vmul.f32 %v4835, 0.9
    %v4840 = vadd.f32 %v4230, %v4836
    %v4841 = vadd.f32 %v4231, %v4837
    %v4842 = vadd.f32 %v4232, %v4838
    %v4843 = vadd.f32 %v4233, %v4839
    %s4844 = scalar_lea.vmem [#allocation11], 96
    %4845 = vst [vmem:[%s4844] sm:$0xff] %v4840
    %4846 = vst [vmem:[%s4844 + $0x8] sm:$0xff] %v4841
    %4847 = vst [vmem:[%s4844 + $0x10] sm:$0xff] %v4842
    %4848 = vst [vmem:[%s4844 + $0x18] sm:$0xff] %v4843
    %s4849 = scalar_lea.vmem [#allocation3], 384
    %v4850 = vld [vmem:[%s4849] sm:$0xff]
    %v4851 = vld [vmem:[%s4849 + $0x8] sm:$0xff]
    %v4852 = vld [vmem:[%s4849 + $0x10] sm:$0xff]
    %v4853 = vld [vmem:[%s4849 + $0x18] sm:$0xff]
    %v4854 = vld [vmem:[%s4849 + $0x20] sm:$0xff]
    %v4855 = vld [vmem:[%s4849 + $0x28] sm:$0xff]
    %v4856 = vld [vmem:[%s4849 + $0x30] sm:$0xff]
    %v4857 = vld [vmem:[%s4849 + $0x38] sm:$0xff]
    %v4858 = vld [vmem:[%s4849 + $0x40] sm:$0xff]
    %v4859 = vld [vmem:[%s4849 + $0x48] sm:$0xff]
    %v4860 = vld [vmem:[%s4849 + $0x50] sm:$0xff]
    %v4861 = vld [vmem:[%s4849 + $0x58] sm:$0xff]
    %v4862 = vpack.c.bf16 %v4840, %v4840
    %v4863 = vpack.c.bf16 %v4841, %v4841
    %v4864 = vpack.c.bf16 %v4842, %v4842
    %v4865 = vpack.c.bf16 %v4843, %v4843
    %4866 = vmatprep.subr.bf16.mxu0 %v1723
    %4867 = vmatpush1.bf16.msra.mxu0 %v1722
    %4868 = vmatprep.subr.bf16.mxu0 %v1711
    %4869 = vmatpush1.bf16.msra.mxu0 %v1710
    %4870 = vmatprep.subr.bf16.mxu0 %v1699
    %4871 = vmatpush1.bf16.msra.mxu0 %v1698
    %4872 = vmatprep.subr.bf16.mxu0 %v1687
    %4873 = vmatpush1.bf16.msra.mxu0 %v1686
    %4874 = vmatprep.subr.bf16.mxu0 %v1675
    %4875 = vmatpush1.bf16.msra.mxu0 %v1674
    %4876 = vmatprep.subr.bf16.mxu0 %v1663
    %4877 = vmatpush1.bf16.msra.mxu0 %v1662
    %4878 = vmatprep.subr.bf16.mxu0 %v1651
    %4879 = vmatpush1.bf16.msra.mxu0 %v1650
    %4880 = vmatprep.subr.bf16.mxu0 %v1639
    %4881 = vmatpush1.bf16.msra.mxu0 %v1638
    %4882 = vmatprep.subr.bf16.mxu0 %v1819
    %4883 = vmatpush2.bf16.msra.mxu0 %v1818
    %4884 = vmatprep.subr.bf16.mxu0 %v1807
    %4885 = vmatpush2.bf16.msra.mxu0 %v1806
    %4886 = vmatprep.subr.bf16.mxu0 %v1795
    %4887 = vmatpush2.bf16.msra.mxu0 %v1794
    %4888 = vmatprep.subr.bf16.mxu0 %v1783
    %4889 = vmatpush2.bf16.msra.mxu0 %v1782
    %4890 = vmatprep.subr.bf16.mxu0 %v1771
    %4891 = vmatpush2.bf16.msra.mxu0 %v1770
    %4892 = vmatprep.subr.bf16.mxu0 %v1759
    %4893 = vmatpush2.bf16.msra.mxu0 %v1758
    %4894 = vmatprep.subr.bf16.mxu0 %v1747
    %4895 = vmatpush2.bf16.msra.mxu0 %v1746
    %4896 = vmatprep.subr.bf16.mxu0 %v1735
    %4897 = vmatpush2.bf16.msra.mxu0 %v1734
    %4898 = vmatprep.mubr.bf16.mxu0 %v4863
    %4899 = vmatmul.mubr.bf16.gmra.mxu0 %v4862
    %v4900 = vpop.f32.mrf.mxu0
    %v4901 = vadd.f32 0.0, %v4900
    %v4902 = vpop.f32.mrf.mxu0
    %v4903 = vadd.f32 0.0, %v4902
    %v4904 = vpop.f32.mrf.mxu0
    %v4905 = vpop.f32.mrf.mxu0
    %4906 = vdwg.mxu0
    %4907 = vmatprep.subr.bf16.mxu0 %v1915
    %4908 = vmatpush1.bf16.msra.mxu0 %v1914
    %4909 = vmatprep.subr.bf16.mxu0 %v1903
    %4910 = vmatpush1.bf16.msra.mxu0 %v1902
    %4911 = vmatprep.subr.bf16.mxu0 %v1891
    %4912 = vmatpush1.bf16.msra.mxu0 %v1890
    %4913 = vmatprep.subr.bf16.mxu0 %v1879
    %4914 = vmatpush1.bf16.msra.mxu0 %v1878
    %4915 = vmatprep.subr.bf16.mxu0 %v1867
    %4916 = vmatpush1.bf16.msra.mxu0 %v1866
    %4917 = vmatprep.subr.bf16.mxu0 %v1855
    %4918 = vmatpush1.bf16.msra.mxu0 %v1854
    %4919 = vmatprep.subr.bf16.mxu0 %v1843
    %4920 = vmatpush1.bf16.msra.mxu0 %v1842
    %4921 = vmatprep.subr.bf16.mxu0 %v1831
    %4922 = vmatpush1.bf16.msra.mxu0 %v1830
    %4923 = vmatprep.subr.bf16.mxu0 %v2011
    %4924 = vmatpush2.bf16.msra.mxu0 %v2010
    %4925 = vmatprep.subr.bf16.mxu0 %v1999
    %4926 = vmatpush2.bf16.msra.mxu0 %v1998
    %4927 = vmatprep.subr.bf16.mxu0 %v1987
    %4928 = vmatpush2.bf16.msra.mxu0 %v1986
    %4929 = vmatprep.subr.bf16.mxu0 %v1975
    %4930 = vmatpush2.bf16.msra.mxu0 %v1974
    %4931 = vmatprep.subr.bf16.mxu0 %v1963
    %4932 = vmatpush2.bf16.msra.mxu0 %v1962
    %4933 = vmatprep.subr.bf16.mxu0 %v1951
    %4934 = vmatpush2.bf16.msra.mxu0 %v1950
    %4935 = vmatprep.subr.bf16.mxu0 %v1939
    %4936 = vmatpush2.bf16.msra.mxu0 %v1938
    %4937 = vmatprep.subr.bf16.mxu0 %v1927
    %4938 = vmatpush2.bf16.msra.mxu0 %v1926
    %4939 = vmatprep.mubr.bf16.mxu0 %v4865
    %4940 = vmatmul.mubr.bf16.gmra.mxu0 %v4864
    %v4941 = vpop.f32.mrf.mxu0
    %v4942 = vadd.f32 %v4901, %v4941
    %v4943 = vpop.f32.mrf.mxu0
    %v4944 = vadd.f32 %v4903, %v4943
    %v4945 = vpop.f32.mrf.mxu0
    %v4946 = vpop.f32.mrf.mxu0
    %4947 = vdwg.mxu0
    %4948 = vmatprep.subr.bf16.mxu0 %v1725
    %4949 = vmatpush1.bf16.msra.mxu0 %v1724
    %4950 = vmatprep.subr.bf16.mxu0 %v1713
    %4951 = vmatpush1.bf16.msra.mxu0 %v1712
    %4952 = vmatprep.subr.bf16.mxu0 %v1701
    %4953 = vmatpush1.bf16.msra.mxu0 %v1700
    %4954 = vmatprep.subr.bf16.mxu0 %v1689
    %4955 = vmatpush1.bf16.msra.mxu0 %v1688
    %4956 = vmatprep.subr.bf16.mxu0 %v1677
    %4957 = vmatpush1.bf16.msra.mxu0 %v1676
    %4958 = vmatprep.subr.bf16.mxu0 %v1665
    %4959 = vmatpush1.bf16.msra.mxu0 %v1664
    %4960 = vmatprep.subr.bf16.mxu0 %v1653
    %4961 = vmatpush1.bf16.msra.mxu0 %v1652
    %4962 = vmatprep.subr.bf16.mxu0 %v1641
    %4963 = vmatpush1.bf16.msra.mxu0 %v1640
    %4964 = vmatprep.subr.bf16.mxu0 %v1821
    %4965 = vmatpush2.bf16.msra.mxu0 %v1820
    %4966 = vmatprep.subr.bf16.mxu0 %v1809
    %4967 = vmatpush2.bf16.msra.mxu0 %v1808
    %4968 = vmatprep.subr.bf16.mxu0 %v1797
    %4969 = vmatpush2.bf16.msra.mxu0 %v1796
    %4970 = vmatprep.subr.bf16.mxu0 %v1785
    %4971 = vmatpush2.bf16.msra.mxu0 %v1784
    %4972 = vmatprep.subr.bf16.mxu0 %v1773
    %4973 = vmatpush2.bf16.msra.mxu0 %v1772
    %4974 = vmatprep.subr.bf16.mxu0 %v1761
    %4975 = vmatpush2.bf16.msra.mxu0 %v1760
    %4976 = vmatprep.subr.bf16.mxu0 %v1749
    %4977 = vmatpush2.bf16.msra.mxu0 %v1748
    %4978 = vmatprep.subr.bf16.mxu0 %v1737
    %4979 = vmatpush2.bf16.msra.mxu0 %v1736
    %4980 = vmatprep.mubr.bf16.mxu0 %v4863
    %4981 = vmatmul.mubr.bf16.gmra.mxu0 %v4862
    %v4982 = vpop.f32.mrf.mxu0
    %v4983 = vadd.f32 0.0, %v4982
    %v4984 = vpop.f32.mrf.mxu0
    %v4985 = vadd.f32 0.0, %v4984
    %v4986 = vpop.f32.mrf.mxu0
    %v4987 = vpop.f32.mrf.mxu0
    %4988 = vdwg.mxu0
    %4989 = vmatprep.subr.bf16.mxu0 %v1917
    %4990 = vmatpush1.bf16.msra.mxu0 %v1916
    %4991 = vmatprep.subr.bf16.mxu0 %v1905
    %4992 = vmatpush1.bf16.msra.mxu0 %v1904
    %4993 = vmatprep.subr.bf16.mxu0 %v1893
    %4994 = vmatpush1.bf16.msra.mxu0 %v1892
    %4995 = vmatprep.subr.bf16.mxu0 %v1881
    %4996 = vmatpush1.bf16.msra.mxu0 %v1880
    %4997 = vmatprep.subr.bf16.mxu0 %v1869
    %4998 = vmatpush1.bf16.msra.mxu0 %v1868
    %4999 = vmatprep.subr.bf16.mxu0 %v1857
    %5000 = vmatpush1.bf16.msra.mxu0 %v1856
    %5001 = vmatprep.subr.bf16.mxu0 %v1845
    %5002 = vmatpush1.bf16.msra.mxu0 %v1844
    %5003 = vmatprep.subr.bf16.mxu0 %v1833
    %5004 = vmatpush1.bf16.msra.mxu0 %v1832
    %5005 = vmatprep.subr.bf16.mxu0 %v2013
    %5006 = vmatpush2.bf16.msra.mxu0 %v2012
    %5007 = vmatprep.subr.bf16.mxu0 %v2001
    %5008 = vmatpush2.bf16.msra.mxu0 %v2000
    %5009 = vmatprep.subr.bf16.mxu0 %v1989
    %5010 = vmatpush2.bf16.msra.mxu0 %v1988
    %5011 = vmatprep.subr.bf16.mxu0 %v1977
    %5012 = vmatpush2.bf16.msra.mxu0 %v1976
    %5013 = vmatprep.subr.bf16.mxu0 %v1965
    %5014 = vmatpush2.bf16.msra.mxu0 %v1964
    %5015 = vmatprep.subr.bf16.mxu0 %v1953
    %5016 = vmatpush2.bf16.msra.mxu0 %v1952
    %5017 = vmatprep.subr.bf16.mxu0 %v1941
    %5018 = vmatpush2.bf16.msra.mxu0 %v1940
    %5019 = vmatprep.subr.bf16.mxu0 %v1929
    %5020 = vmatpush2.bf16.msra.mxu0 %v1928
    %5021 = vmatprep.mubr.bf16.mxu0 %v4865
    %5022 = vmatmul.mubr.bf16.gmra.mxu0 %v4864
    %v5023 = vpop.f32.mrf.mxu0
    %v5024 = vadd.f32 %v4983, %v5023
    %v5025 = vpop.f32.mrf.mxu0
    %v5026 = vadd.f32 %v4985, %v5025
    %v5027 = vpop.f32.mrf.mxu0
    %v5028 = vpop.f32.mrf.mxu0
    %5029 = vdwg.mxu0
    %5030 = vmatprep.subr.bf16.mxu0 %v1727
    %5031 = vmatpush1.bf16.msra.mxu0 %v1726
    %5032 = vmatprep.subr.bf16.mxu0 %v1715
    %5033 = vmatpush1.bf16.msra.mxu0 %v1714
    %5034 = vmatprep.subr.bf16.mxu0 %v1703
    %5035 = vmatpush1.bf16.msra.mxu0 %v1702
    %5036 = vmatprep.subr.bf16.mxu0 %v1691
    %5037 = vmatpush1.bf16.msra.mxu0 %v1690
    %5038 = vmatprep.subr.bf16.mxu0 %v1679
    %5039 = vmatpush1.bf16.msra.mxu0 %v1678
    %5040 = vmatprep.subr.bf16.mxu0 %v1667
    %5041 = vmatpush1.bf16.msra.mxu0 %v1666
    %5042 = vmatprep.subr.bf16.mxu0 %v1655
    %5043 = vmatpush1.bf16.msra.mxu0 %v1654
    %5044 = vmatprep.subr.bf16.mxu0 %v1643
    %5045 = vmatpush1.bf16.msra.mxu0 %v1642
    %5046 = vmatprep.subr.bf16.mxu0 %v1823
    %5047 = vmatpush2.bf16.msra.mxu0 %v1822
    %5048 = vmatprep.subr.bf16.mxu0 %v1811
    %5049 = vmatpush2.bf16.msra.mxu0 %v1810
    %5050 = vmatprep.subr.bf16.mxu0 %v1799
    %5051 = vmatpush2.bf16.msra.mxu0 %v1798
    %5052 = vmatprep.subr.bf16.mxu0 %v1787
    %5053 = vmatpush2.bf16.msra.mxu0 %v1786
    %5054 = vmatprep.subr.bf16.mxu0 %v1775
    %5055 = vmatpush2.bf16.msra.mxu0 %v1774
    %5056 = vmatprep.subr.bf16.mxu0 %v1763
    %5057 = vmatpush2.bf16.msra.mxu0 %v1762
    %5058 = vmatprep.subr.bf16.mxu0 %v1751
    %5059 = vmatpush2.bf16.msra.mxu0 %v1750
    %5060 = vmatprep.subr.bf16.mxu0 %v1739
    %5061 = vmatpush2.bf16.msra.mxu0 %v1738
    %5062 = vmatprep.mubr.bf16.mxu0 %v4863
    %5063 = vmatmul.mubr.bf16.gmra.mxu0 %v4862
    %v5064 = vpop.f32.mrf.mxu0
    %v5065 = vadd.f32 0.0, %v5064
    %v5066 = vpop.f32.mrf.mxu0
    %v5067 = vadd.f32 0.0, %v5066
    %v5068 = vpop.f32.mrf.mxu0
    %v5069 = vpop.f32.mrf.mxu0
    %5070 = vdwg.mxu0
    %5071 = vmatprep.subr.bf16.mxu0 %v1919
    %5072 = vmatpush1.bf16.msra.mxu0 %v1918
    %5073 = vmatprep.subr.bf16.mxu0 %v1907
    %5074 = vmatpush1.bf16.msra.mxu0 %v1906
    %5075 = vmatprep.subr.bf16.mxu0 %v1895
    %5076 = vmatpush1.bf16.msra.mxu0 %v1894
    %5077 = vmatprep.subr.bf16.mxu0 %v1883
    %5078 = vmatpush1.bf16.msra.mxu0 %v1882
    %5079 = vmatprep.subr.bf16.mxu0 %v1871
    %5080 = vmatpush1.bf16.msra.mxu0 %v1870
    %5081 = vmatprep.subr.bf16.mxu0 %v1859
    %5082 = vmatpush1.bf16.msra.mxu0 %v1858
    %5083 = vmatprep.subr.bf16.mxu0 %v1847
    %5084 = vmatpush1.bf16.msra.mxu0 %v1846
    %5085 = vmatprep.subr.bf16.mxu0 %v1835
    %5086 = vmatpush1.bf16.msra.mxu0 %v1834
    %5087 = vmatprep.subr.bf16.mxu0 %v2015
    %5088 = vmatpush2.bf16.msra.mxu0 %v2014
    %5089 = vmatprep.subr.bf16.mxu0 %v2003
    %5090 = vmatpush2.bf16.msra.mxu0 %v2002
    %5091 = vmatprep.subr.bf16.mxu0 %v1991
    %5092 = vmatpush2.bf16.msra.mxu0 %v1990
    %5093 = vmatprep.subr.bf16.mxu0 %v1979
    %5094 = vmatpush2.bf16.msra.mxu0 %v1978
    %5095 = vmatprep.subr.bf16.mxu0 %v1967
    %5096 = vmatpush2.bf16.msra.mxu0 %v1966
    %5097 = vmatprep.subr.bf16.mxu0 %v1955
    %5098 = vmatpush2.bf16.msra.mxu0 %v1954
    %5099 = vmatprep.subr.bf16.mxu0 %v1943
    %5100 = vmatpush2.bf16.msra.mxu0 %v1942
    %5101 = vmatprep.subr.bf16.mxu0 %v1931
    %5102 = vmatpush2.bf16.msra.mxu0 %v1930
    %5103 = vmatprep.mubr.bf16.mxu0 %v4865
    %5104 = vmatmul.mubr.bf16.gmra.mxu0 %v4864
    %v5105 = vpop.f32.mrf.mxu0
    %v5106 = vadd.f32 %v5065, %v5105
    %v5107 = vpop.f32.mrf.mxu0
    %v5108 = vadd.f32 %v5067, %v5107
    %v5109 = vpop.f32.mrf.mxu0
    %v5110 = vpop.f32.mrf.mxu0
    %5111 = vdwg.mxu0
    %5112 = vmatprep.subr.bf16.mxu0 %v1729
    %5113 = vmatpush1.bf16.msra.mxu0 %v1728
    %5114 = vmatprep.subr.bf16.mxu0 %v1717
    %5115 = vmatpush1.bf16.msra.mxu0 %v1716
    %5116 = vmatprep.subr.bf16.mxu0 %v1705
    %5117 = vmatpush1.bf16.msra.mxu0 %v1704
    %5118 = vmatprep.subr.bf16.mxu0 %v1693
    %5119 = vmatpush1.bf16.msra.mxu0 %v1692
    %5120 = vmatprep.subr.bf16.mxu0 %v1681
    %5121 = vmatpush1.bf16.msra.mxu0 %v1680
    %5122 = vmatprep.subr.bf16.mxu0 %v1669
    %5123 = vmatpush1.bf16.msra.mxu0 %v1668
    %5124 = vmatprep.subr.bf16.mxu0 %v1657
    %5125 = vmatpush1.bf16.msra.mxu0 %v1656
    %5126 = vmatprep.subr.bf16.mxu0 %v1645
    %5127 = vmatpush1.bf16.msra.mxu0 %v1644
    %5128 = vmatprep.subr.bf16.mxu0 %v1825
    %5129 = vmatpush2.bf16.msra.mxu0 %v1824
    %5130 = vmatprep.subr.bf16.mxu0 %v1813
    %5131 = vmatpush2.bf16.msra.mxu0 %v1812
    %5132 = vmatprep.subr.bf16.mxu0 %v1801
    %5133 = vmatpush2.bf16.msra.mxu0 %v1800
    %5134 = vmatprep.subr.bf16.mxu0 %v1789
    %5135 = vmatpush2.bf16.msra.mxu0 %v1788
    %5136 = vmatprep.subr.bf16.mxu0 %v1777
    %5137 = vmatpush2.bf16.msra.mxu0 %v1776
    %5138 = vmatprep.subr.bf16.mxu0 %v1765
    %5139 = vmatpush2.bf16.msra.mxu0 %v1764
    %5140 = vmatprep.subr.bf16.mxu0 %v1753
    %5141 = vmatpush2.bf16.msra.mxu0 %v1752
    %5142 = vmatprep.subr.bf16.mxu0 %v1741
    %5143 = vmatpush2.bf16.msra.mxu0 %v1740
    %5144 = vmatprep.mubr.bf16.mxu0 %v4863
    %5145 = vmatmul.mubr.bf16.gmra.mxu0 %v4862
    %v5146 = vpop.f32.mrf.mxu0
    %v5147 = vadd.f32 0.0, %v5146
    %v5148 = vpop.f32.mrf.mxu0
    %v5149 = vadd.f32 0.0, %v5148
    %v5150 = vpop.f32.mrf.mxu0
    %v5151 = vpop.f32.mrf.mxu0
    %5152 = vdwg.mxu0
    %5153 = vmatprep.subr.bf16.mxu0 %v1921
    %5154 = vmatpush1.bf16.msra.mxu0 %v1920
    %5155 = vmatprep.subr.bf16.mxu0 %v1909
    %5156 = vmatpush1.bf16.msra.mxu0 %v1908
    %5157 = vmatprep.subr.bf16.mxu0 %v1897
    %5158 = vmatpush1.bf16.msra.mxu0 %v1896
    %5159 = vmatprep.subr.bf16.mxu0 %v1885
    %5160 = vmatpush1.bf16.msra.mxu0 %v1884
    %5161 = vmatprep.subr.bf16.mxu0 %v1873
    %5162 = vmatpush1.bf16.msra.mxu0 %v1872
    %5163 = vmatprep.subr.bf16.mxu0 %v1861
    %5164 = vmatpush1.bf16.msra.mxu0 %v1860
    %5165 = vmatprep.subr.bf16.mxu0 %v1849
    %5166 = vmatpush1.bf16.msra.mxu0 %v1848
    %5167 = vmatprep.subr.bf16.mxu0 %v1837
    %5168 = vmatpush1.bf16.msra.mxu0 %v1836
    %5169 = vmatprep.subr.bf16.mxu0 %v2017
    %5170 = vmatpush2.bf16.msra.mxu0 %v2016
    %5171 = vmatprep.subr.bf16.mxu0 %v2005
    %5172 = vmatpush2.bf16.msra.mxu0 %v2004
    %5173 = vmatprep.subr.bf16.mxu0 %v1993
    %5174 = vmatpush2.bf16.msra.mxu0 %v1992
    %5175 = vmatprep.subr.bf16.mxu0 %v1981
    %5176 = vmatpush2.bf16.msra.mxu0 %v1980
    %5177 = vmatprep.subr.bf16.mxu0 %v1969
    %5178 = vmatpush2.bf16.msra.mxu0 %v1968
    %5179 = vmatprep.subr.bf16.mxu0 %v1957
    %5180 = vmatpush2.bf16.msra.mxu0 %v1956
    %5181 = vmatprep.subr.bf16.mxu0 %v1945
    %5182 = vmatpush2.bf16.msra.mxu0 %v1944
    %5183 = vmatprep.subr.bf16.mxu0 %v1933
    %5184 = vmatpush2.bf16.msra.mxu0 %v1932
    %5185 = vmatprep.mubr.bf16.mxu0 %v4865
    %5186 = vmatmul.mubr.bf16.gmra.mxu0 %v4864
    %v5187 = vpop.f32.mrf.mxu0
    %v5188 = vadd.f32 %v5147, %v5187
    %v5189 = vpop.f32.mrf.mxu0
    %v5190 = vadd.f32 %v5149, %v5189
    %v5191 = vpop.f32.mrf.mxu0
    %v5192 = vpop.f32.mrf.mxu0
    %5193 = vdwg.mxu0
    %5194 = vmatprep.subr.bf16.mxu0 %v1731
    %5195 = vmatpush1.bf16.msra.mxu0 %v1730
    %5196 = vmatprep.subr.bf16.mxu0 %v1719
    %5197 = vmatpush1.bf16.msra.mxu0 %v1718
    %5198 = vmatprep.subr.bf16.mxu0 %v1707
    %5199 = vmatpush1.bf16.msra.mxu0 %v1706
    %5200 = vmatprep.subr.bf16.mxu0 %v1695
    %5201 = vmatpush1.bf16.msra.mxu0 %v1694
    %5202 = vmatprep.subr.bf16.mxu0 %v1683
    %5203 = vmatpush1.bf16.msra.mxu0 %v1682
    %5204 = vmatprep.subr.bf16.mxu0 %v1671
    %5205 = vmatpush1.bf16.msra.mxu0 %v1670
    %5206 = vmatprep.subr.bf16.mxu0 %v1659
    %5207 = vmatpush1.bf16.msra.mxu0 %v1658
    %5208 = vmatprep.subr.bf16.mxu0 %v1647
    %5209 = vmatpush1.bf16.msra.mxu0 %v1646
    %5210 = vmatprep.subr.bf16.mxu0 %v1827
    %5211 = vmatpush2.bf16.msra.mxu0 %v1826
    %5212 = vmatprep.subr.bf16.mxu0 %v1815
    %5213 = vmatpush2.bf16.msra.mxu0 %v1814
    %5214 = vmatprep.subr.bf16.mxu0 %v1803
    %5215 = vmatpush2.bf16.msra.mxu0 %v1802
    %5216 = vmatprep.subr.bf16.mxu0 %v1791
    %5217 = vmatpush2.bf16.msra.mxu0 %v1790
    %5218 = vmatprep.subr.bf16.mxu0 %v1779
    %5219 = vmatpush2.bf16.msra.mxu0 %v1778
    %5220 = vmatprep.subr.bf16.mxu0 %v1767
    %5221 = vmatpush2.bf16.msra.mxu0 %v1766
    %5222 = vmatprep.subr.bf16.mxu0 %v1755
    %5223 = vmatpush2.bf16.msra.mxu0 %v1754
    %5224 = vmatprep.subr.bf16.mxu0 %v1743
    %5225 = vmatpush2.bf16.msra.mxu0 %v1742
    %5226 = vmatprep.mubr.bf16.mxu0 %v4863
    %5227 = vmatmul.mubr.bf16.gmra.mxu0 %v4862
    %v5228 = vpop.f32.mrf.mxu0
    %v5229 = vadd.f32 0.0, %v5228
    %v5230 = vpop.f32.mrf.mxu0
    %v5231 = vadd.f32 0.0, %v5230
    %v5232 = vpop.f32.mrf.mxu0
    %v5233 = vpop.f32.mrf.mxu0
    %5234 = vdwg.mxu0
    %5235 = vmatprep.subr.bf16.mxu0 %v1923
    %5236 = vmatpush1.bf16.msra.mxu0 %v1922
    %5237 = vmatprep.subr.bf16.mxu0 %v1911
    %5238 = vmatpush1.bf16.msra.mxu0 %v1910
    %5239 = vmatprep.subr.bf16.mxu0 %v1899
    %5240 = vmatpush1.bf16.msra.mxu0 %v1898
    %5241 = vmatprep.subr.bf16.mxu0 %v1887
    %5242 = vmatpush1.bf16.msra.mxu0 %v1886
    %5243 = vmatprep.subr.bf16.mxu0 %v1875
    %5244 = vmatpush1.bf16.msra.mxu0 %v1874
    %5245 = vmatprep.subr.bf16.mxu0 %v1863
    %5246 = vmatpush1.bf16.msra.mxu0 %v1862
    %5247 = vmatprep.subr.bf16.mxu0 %v1851
    %5248 = vmatpush1.bf16.msra.mxu0 %v1850
    %5249 = vmatprep.subr.bf16.mxu0 %v1839
    %5250 = vmatpush1.bf16.msra.mxu0 %v1838
    %5251 = vmatprep.subr.bf16.mxu0 %v2019
    %5252 = vmatpush2.bf16.msra.mxu0 %v2018
    %5253 = vmatprep.subr.bf16.mxu0 %v2007
    %5254 = vmatpush2.bf16.msra.mxu0 %v2006
    %5255 = vmatprep.subr.bf16.mxu0 %v1995
    %5256 = vmatpush2.bf16.msra.mxu0 %v1994
    %5257 = vmatprep.subr.bf16.mxu0 %v1983
    %5258 = vmatpush2.bf16.msra.mxu0 %v1982
    %5259 = vmatprep.subr.bf16.mxu0 %v1971
    %5260 = vmatpush2.bf16.msra.mxu0 %v1970
    %5261 = vmatprep.subr.bf16.mxu0 %v1959
    %5262 = vmatpush2.bf16.msra.mxu0 %v1958
    %5263 = vmatprep.subr.bf16.mxu0 %v1947
    %5264 = vmatpush2.bf16.msra.mxu0 %v1946
    %5265 = vmatprep.subr.bf16.mxu0 %v1935
    %5266 = vmatpush2.bf16.msra.mxu0 %v1934
    %5267 = vmatprep.mubr.bf16.mxu0 %v4865
    %5268 = vmatmul.mubr.bf16.gmra.mxu0 %v4864
    %v5269 = vpop.f32.mrf.mxu0
    %v5270 = vadd.f32 %v5229, %v5269
    %v5271 = vpop.f32.mrf.mxu0
    %v5272 = vadd.f32 %v5231, %v5271
    %v5273 = vpop.f32.mrf.mxu0
    %v5274 = vpop.f32.mrf.mxu0
    %5275 = vdwg.mxu0
    %5276 = vmatprep.subr.bf16.mxu0 %v1733
    %5277 = vmatpush1.bf16.msra.mxu0 %v1732
    %5278 = vmatprep.subr.bf16.mxu0 %v1721
    %5279 = vmatpush1.bf16.msra.mxu0 %v1720
    %5280 = vmatprep.subr.bf16.mxu0 %v1709
    %5281 = vmatpush1.bf16.msra.mxu0 %v1708
    %5282 = vmatprep.subr.bf16.mxu0 %v1697
    %5283 = vmatpush1.bf16.msra.mxu0 %v1696
    %5284 = vmatprep.subr.bf16.mxu0 %v1685
    %5285 = vmatpush1.bf16.msra.mxu0 %v1684
    %5286 = vmatprep.subr.bf16.mxu0 %v1673
    %5287 = vmatpush1.bf16.msra.mxu0 %v1672
    %5288 = vmatprep.subr.bf16.mxu0 %v1661
    %5289 = vmatpush1.bf16.msra.mxu0 %v1660
    %5290 = vmatprep.subr.bf16.mxu0 %v1649
    %5291 = vmatpush1.bf16.msra.mxu0 %v1648
    %5292 = vmatprep.subr.bf16.mxu0 %v1829
    %5293 = vmatpush2.bf16.msra.mxu0 %v1828
    %5294 = vmatprep.subr.bf16.mxu0 %v1817
    %5295 = vmatpush2.bf16.msra.mxu0 %v1816
    %5296 = vmatprep.subr.bf16.mxu0 %v1805
    %5297 = vmatpush2.bf16.msra.mxu0 %v1804
    %5298 = vmatprep.subr.bf16.mxu0 %v1793
    %5299 = vmatpush2.bf16.msra.mxu0 %v1792
    %5300 = vmatprep.subr.bf16.mxu0 %v1781
    %5301 = vmatpush2.bf16.msra.mxu0 %v1780
    %5302 = vmatprep.subr.bf16.mxu0 %v1769
    %5303 = vmatpush2.bf16.msra.mxu0 %v1768
    %5304 = vmatprep.subr.bf16.mxu0 %v1757
    %5305 = vmatpush2.bf16.msra.mxu0 %v1756
    %5306 = vmatprep.subr.bf16.mxu0 %v1745
    %5307 = vmatpush2.bf16.msra.mxu0 %v1744
    %5308 = vmatprep.mubr.bf16.mxu0 %v4863
    %5309 = vmatmul.mubr.bf16.gmra.mxu0 %v4862
    %v5310 = vpop.f32.mrf.mxu0
    %v5311 = vadd.f32 0.0, %v5310
    %v5312 = vpop.f32.mrf.mxu0
    %v5313 = vadd.f32 0.0, %v5312
    %v5314 = vpop.f32.mrf.mxu0
    %v5315 = vpop.f32.mrf.mxu0
    %5316 = vdwg.mxu0
    %5317 = vmatprep.subr.bf16.mxu0 %v1925
    %5318 = vmatpush1.bf16.msra.mxu0 %v1924
    %5319 = vmatprep.subr.bf16.mxu0 %v1913
    %5320 = vmatpush1.bf16.msra.mxu0 %v1912
    %5321 = vmatprep.subr.bf16.mxu0 %v1901
    %5322 = vmatpush1.bf16.msra.mxu0 %v1900
    %5323 = vmatprep.subr.bf16.mxu0 %v1889
    %5324 = vmatpush1.bf16.msra.mxu0 %v1888
    %5325 = vmatprep.subr.bf16.mxu0 %v1877
    %5326 = vmatpush1.bf16.msra.mxu0 %v1876
    %5327 = vmatprep.subr.bf16.mxu0 %v1865
    %5328 = vmatpush1.bf16.msra.mxu0 %v1864
    %5329 = vmatprep.subr.bf16.mxu0 %v1853
    %5330 = vmatpush1.bf16.msra.mxu0 %v1852
    %5331 = vmatprep.subr.bf16.mxu0 %v1841
    %5332 = vmatpush1.bf16.msra.mxu0 %v1840
    %5333 = vmatprep.subr.bf16.mxu0 %v2021
    %5334 = vmatpush2.bf16.msra.mxu0 %v2020
    %5335 = vmatprep.subr.bf16.mxu0 %v2009
    %5336 = vmatpush2.bf16.msra.mxu0 %v2008
    %5337 = vmatprep.subr.bf16.mxu0 %v1997
    %5338 = vmatpush2.bf16.msra.mxu0 %v1996
    %5339 = vmatprep.subr.bf16.mxu0 %v1985
    %5340 = vmatpush2.bf16.msra.mxu0 %v1984
    %5341 = vmatprep.subr.bf16.mxu0 %v1973
    %5342 = vmatpush2.bf16.msra.mxu0 %v1972
    %5343 = vmatprep.subr.bf16.mxu0 %v1961
    %5344 = vmatpush2.bf16.msra.mxu0 %v1960
    %5345 = vmatprep.subr.bf16.mxu0 %v1949
    %5346 = vmatpush2.bf16.msra.mxu0 %v1948
    %5347 = vmatprep.subr.bf16.mxu0 %v1937
    %5348 = vmatpush2.bf16.msra.mxu0 %v1936
    %5349 = vmatprep.mubr.bf16.mxu0 %v4865
    %5350 = vmatmul.mubr.bf16.gmra.mxu0 %v4864
    %v5351 = vpop.f32.mrf.mxu0
    %v5352 = vadd.f32 %v5311, %v5351
    %v5353 = vpop.f32.mrf.mxu0
    %v5354 = vadd.f32 %v5313, %v5353
    %v5355 = vpop.f32.mrf.mxu0
    %v5356 = vpop.f32.mrf.mxu0
    %5357 = vdwg.mxu0
    %v5358 = vadd.f32 %v4850, %v4942
    %v5359 = vadd.f32 %v4851, %v4944
    %v5360 = vadd.f32 %v4852, %v5024
    %v5361 = vadd.f32 %v4853, %v5026
    %v5362 = vxor.u32 %v5358, 2147483648
    %v5363 = vxor.u32 %v5359, 2147483648
    %v5364 = vxor.u32 %v5360, 2147483648
    %v5365 = vxor.u32 %v5361, 2147483648
    %v5366 = vmul.f32 %v5362, 1.442695
    %v5367 = vpow.pop %v5366
    %v5368 = vmul.f32 %v5363, 1.442695
    %v5369 = vpow.pop %v5368
    %v5370 = vmul.f32 %v5364, 1.442695
    %v5371 = vpow.pop %v5370
    %v5372 = vmul.f32 %v5365, 1.442695
    %v5373 = vpow.pop %v5372
    %v5374 = vadd.f32 %v5367, 1.0
    %v5375 = vadd.f32 %v5369, 1.0
    %v5376 = vadd.f32 %v5371, 1.0
    %v5377 = vadd.f32 %v5373, 1.0
    %v5378 = vrcp.pop %v5374
    %v5379 = vmul.f32 1.0, %v5378
    %v5380 = vrcp.pop %v5375
    %v5381 = vmul.f32 1.0, %v5380
    %v5382 = vrcp.pop %v5376
    %v5383 = vmul.f32 1.0, %v5382
    %v5384 = vrcp.pop %v5377
    %v5385 = vmul.f32 1.0, %v5384
    %v5386 = vadd.f32 %v4854, %v5106
    %v5387 = vadd.f32 %v4855, %v5108
    %v5388 = vadd.f32 %v4856, %v5188
    %v5389 = vadd.f32 %v4857, %v5190
    %v5390 = vxor.u32 %v5386, 2147483648
    %v5391 = vxor.u32 %v5387, 2147483648
    %v5392 = vxor.u32 %v5388, 2147483648
    %v5393 = vxor.u32 %v5389, 2147483648
    %v5394 = vmul.f32 %v5390, 1.442695
    %v5395 = vpow.pop %v5394
    %v5396 = vmul.f32 %v5391, 1.442695
    %v5397 = vpow.pop %v5396
    %v5398 = vmul.f32 %v5392, 1.442695
    %v5399 = vpow.pop %v5398
    %v5400 = vmul.f32 %v5393, 1.442695
    %v5401 = vpow.pop %v5400
    %v5402 = vadd.f32 %v5395, 1.0
    %v5403 = vadd.f32 %v5397, 1.0
    %v5404 = vadd.f32 %v5399, 1.0
    %v5405 = vadd.f32 %v5401, 1.0
    %v5406 = vrcp.pop %v5402
    %v5407 = vmul.f32 1.0, %v5406
    %v5408 = vrcp.pop %v5403
    %v5409 = vmul.f32 1.0, %v5408
    %v5410 = vrcp.pop %v5404
    %v5411 = vmul.f32 1.0, %v5410
    %v5412 = vrcp.pop %v5405
    %v5413 = vmul.f32 1.0, %v5412
    %v5414 = vadd.f32 %v5270, %v2958
    %v5415 = vadd.f32 %v5272, %v2962
    %v5416 = vadd.f32 %v5352, %v2966
    %v5417 = vadd.f32 %v5354, %v2970
    %v5418 = vmul.f32 %v5379, %v5414
    %v5419 = vmul.f32 %v5381, %v5415
    %v5420 = vmul.f32 %v5383, %v5416
    %v5421 = vmul.f32 %v5385, %v5417
    %v5422 = vadd.f32 %v4858, %v5418
    %v5423 = vadd.f32 %v4859, %v5419
    %v5424 = vadd.f32 %v4860, %v5420
    %v5425 = vadd.f32 %v4861, %v5421
    %v5426 = vtanh.pop %v5422
    %v5427 = vtanh.pop %v5423
    %v5428 = vtanh.pop %v5424
    %v5429 = vtanh.pop %v5425
    %v5430 = vsub.f32 %v4840, %v5426
    %v5431 = vsub.f32 %v4841, %v5427
    %v5432 = vsub.f32 %v4842, %v5428
    %v5433 = vsub.f32 %v4843, %v5429
    %v5434 = vmul.f32 %v5407, %v5430
    %v5435 = vmul.f32 %v5409, %v5431
    %v5436 = vmul.f32 %v5411, %v5432
    %v5437 = vmul.f32 %v5413, %v5433
    %v5438 = vadd.f32 %v5426, %v5434
    %v5439 = vadd.f32 %v5427, %v5435
    %v5440 = vadd.f32 %v5428, %v5436
    %v5441 = vadd.f32 %v5429, %v5437
    %v5442 = vsub.f32 %v5438, %v4840
    %v5443 = vsub.f32 %v5439, %v4841
    %v5444 = vsub.f32 %v5440, %v4842
    %v5445 = vsub.f32 %v5441, %v4843
    %v5446 = vmul.f32 %v5442, 0.9
    %v5447 = vmul.f32 %v5443, 0.9
    %v5448 = vmul.f32 %v5444, 0.9
    %v5449 = vmul.f32 %v5445, 0.9
    %v5450 = vadd.f32 %v4840, %v5446
    %v5451 = vadd.f32 %v4841, %v5447
    %v5452 = vadd.f32 %v4842, %v5448
    %v5453 = vadd.f32 %v4843, %v5449
    %s5454 = scalar_lea.vmem [#allocation11], 128
    %5455 = vst [vmem:[%s5454] sm:$0xff] %v5450
    %5456 = vst [vmem:[%s5454 + $0x8] sm:$0xff] %v5451
    %5457 = vst [vmem:[%s5454 + $0x10] sm:$0xff] %v5452
    %5458 = vst [vmem:[%s5454 + $0x18] sm:$0xff] %v5453
    %s5459 = scalar_lea.vmem [#allocation3], 480
    %v5460 = vld [vmem:[%s5459] sm:$0xff]
    %v5461 = vld [vmem:[%s5459 + $0x8] sm:$0xff]
    %v5462 = vld [vmem:[%s5459 + $0x10] sm:$0xff]
    %v5463 = vld [vmem:[%s5459 + $0x18] sm:$0xff]
    %v5464 = vld [vmem:[%s5459 + $0x20] sm:$0xff]
    %v5465 = vld [vmem:[%s5459 + $0x28] sm:$0xff]
    %v5466 = vld [vmem:[%s5459 + $0x30] sm:$0xff]
    %v5467 = vld [vmem:[%s5459 + $0x38] sm:$0xff]
    %v5468 = vld [vmem:[%s5459 + $0x40] sm:$0xff]
    %v5469 = vld [vmem:[%s5459 + $0x48] sm:$0xff]
    %v5470 = vld [vmem:[%s5459 + $0x50] sm:$0xff]
    %v5471 = vld [vmem:[%s5459 + $0x58] sm:$0xff]
    %v5472 = vpack.c.bf16 %v5450, %v5450
    %v5473 = vpack.c.bf16 %v5451, %v5451
    %v5474 = vpack.c.bf16 %v5452, %v5452
    %v5475 = vpack.c.bf16 %v5453, %v5453
    %5476 = vmatprep.subr.bf16.mxu0 %v1723
    %5477 = vmatpush1.bf16.msra.mxu0 %v1722
    %5478 = vmatprep.subr.bf16.mxu0 %v1711
    %5479 = vmatpush1.bf16.msra.mxu0 %v1710
    %5480 = vmatprep.subr.bf16.mxu0 %v1699
    %5481 = vmatpush1.bf16.msra.mxu0 %v1698
    %5482 = vmatprep.subr.bf16.mxu0 %v1687
    %5483 = vmatpush1.bf16.msra.mxu0 %v1686
    %5484 = vmatprep.subr.bf16.mxu0 %v1675
    %5485 = vmatpush1.bf16.msra.mxu0 %v1674
    %5486 = vmatprep.subr.bf16.mxu0 %v1663
    %5487 = vmatpush1.bf16.msra.mxu0 %v1662
    %5488 = vmatprep.subr.bf16.mxu0 %v1651
    %5489 = vmatpush1.bf16.msra.mxu0 %v1650
    %5490 = vmatprep.subr.bf16.mxu0 %v1639
    %5491 = vmatpush1.bf16.msra.mxu0 %v1638
    %5492 = vmatprep.subr.bf16.mxu0 %v1819
    %5493 = vmatpush2.bf16.msra.mxu0 %v1818
    %5494 = vmatprep.subr.bf16.mxu0 %v1807
    %5495 = vmatpush2.bf16.msra.mxu0 %v1806
    %5496 = vmatprep.subr.bf16.mxu0 %v1795
    %5497 = vmatpush2.bf16.msra.mxu0 %v1794
    %5498 = vmatprep.subr.bf16.mxu0 %v1783
    %5499 = vmatpush2.bf16.msra.mxu0 %v1782
    %5500 = vmatprep.subr.bf16.mxu0 %v1771
    %5501 = vmatpush2.bf16.msra.mxu0 %v1770
    %5502 = vmatprep.subr.bf16.mxu0 %v1759
    %5503 = vmatpush2.bf16.msra.mxu0 %v1758
    %5504 = vmatprep.subr.bf16.mxu0 %v1747
    %5505 = vmatpush2.bf16.msra.mxu0 %v1746
    %5506 = vmatprep.subr.bf16.mxu0 %v1735
    %5507 = vmatpush2.bf16.msra.mxu0 %v1734
    %5508 = vmatprep.mubr.bf16.mxu0 %v5473
    %5509 = vmatmul.mubr.bf16.gmra.mxu0 %v5472
    %v5510 = vpop.f32.mrf.mxu0
    %v5511 = vadd.f32 0.0, %v5510
    %v5512 = vpop.f32.mrf.mxu0
    %v5513 = vadd.f32 0.0, %v5512
    %v5514 = vpop.f32.mrf.mxu0
    %v5515 = vpop.f32.mrf.mxu0
    %5516 = vdwg.mxu0
    %5517 = vmatprep.subr.bf16.mxu0 %v1915
    %5518 = vmatpush1.bf16.msra.mxu0 %v1914
    %5519 = vmatprep.subr.bf16.mxu0 %v1903
    %5520 = vmatpush1.bf16.msra.mxu0 %v1902
    %5521 = vmatprep.subr.bf16.mxu0 %v1891
    %5522 = vmatpush1.bf16.msra.mxu0 %v1890
    %5523 = vmatprep.subr.bf16.mxu0 %v1879
    %5524 = vmatpush1.bf16.msra.mxu0 %v1878
    %5525 = vmatprep.subr.bf16.mxu0 %v1867
    %5526 = vmatpush1.bf16.msra.mxu0 %v1866
    %5527 = vmatprep.subr.bf16.mxu0 %v1855
    %5528 = vmatpush1.bf16.msra.mxu0 %v1854
    %5529 = vmatprep.subr.bf16.mxu0 %v1843
    %5530 = vmatpush1.bf16.msra.mxu0 %v1842
    %5531 = vmatprep.subr.bf16.mxu0 %v1831
    %5532 = vmatpush1.bf16.msra.mxu0 %v1830
    %5533 = vmatprep.subr.bf16.mxu0 %v2011
    %5534 = vmatpush2.bf16.msra.mxu0 %v2010
    %5535 = vmatprep.subr.bf16.mxu0 %v1999
    %5536 = vmatpush2.bf16.msra.mxu0 %v1998
    %5537 = vmatprep.subr.bf16.mxu0 %v1987
    %5538 = vmatpush2.bf16.msra.mxu0 %v1986
    %5539 = vmatprep.subr.bf16.mxu0 %v1975
    %5540 = vmatpush2.bf16.msra.mxu0 %v1974
    %5541 = vmatprep.subr.bf16.mxu0 %v1963
    %5542 = vmatpush2.bf16.msra.mxu0 %v1962
    %5543 = vmatprep.subr.bf16.mxu0 %v1951
    %5544 = vmatpush2.bf16.msra.mxu0 %v1950
    %5545 = vmatprep.subr.bf16.mxu0 %v1939
    %5546 = vmatpush2.bf16.msra.mxu0 %v1938
    %5547 = vmatprep.subr.bf16.mxu0 %v1927
    %5548 = vmatpush2.bf16.msra.mxu0 %v1926
    %5549 = vmatprep.mubr.bf16.mxu0 %v5475
    %5550 = vmatmul.mubr.bf16.gmra.mxu0 %v5474
    %v5551 = vpop.f32.mrf.mxu0
    %v5552 = vadd.f32 %v5511, %v5551
    %v5553 = vpop.f32.mrf.mxu0
    %v5554 = vadd.f32 %v5513, %v5553
    %v5555 = vpop.f32.mrf.mxu0
    %v5556 = vpop.f32.mrf.mxu0
    %5557 = vdwg.mxu0
    %5558 = vmatprep.subr.bf16.mxu0 %v1725
    %5559 = vmatpush1.bf16.msra.mxu0 %v1724
    %5560 = vmatprep.subr.bf16.mxu0 %v1713
    %5561 = vmatpush1.bf16.msra.mxu0 %v1712
    %5562 = vmatprep.subr.bf16.mxu0 %v1701
    %5563 = vmatpush1.bf16.msra.mxu0 %v1700
    %5564 = vmatprep.subr.bf16.mxu0 %v1689
    %5565 = vmatpush1.bf16.msra.mxu0 %v1688
    %5566 = vmatprep.subr.bf16.mxu0 %v1677
    %5567 = vmatpush1.bf16.msra.mxu0 %v1676
    %5568 = vmatprep.subr.bf16.mxu0 %v1665
    %5569 = vmatpush1.bf16.msra.mxu0 %v1664
    %5570 = vmatprep.subr.bf16.mxu0 %v1653
    %5571 = vmatpush1.bf16.msra.mxu0 %v1652
    %5572 = vmatprep.subr.bf16.mxu0 %v1641
    %5573 = vmatpush1.bf16.msra.mxu0 %v1640
    %5574 = vmatprep.subr.bf16.mxu0 %v1821
    %5575 = vmatpush2.bf16.msra.mxu0 %v1820
    %5576 = vmatprep.subr.bf16.mxu0 %v1809
    %5577 = vmatpush2.bf16.msra.mxu0 %v1808
    %5578 = vmatprep.subr.bf16.mxu0 %v1797
    %5579 = vmatpush2.bf16.msra.mxu0 %v1796
    %5580 = vmatprep.subr.bf16.mxu0 %v1785
    %5581 = vmatpush2.bf16.msra.mxu0 %v1784
    %5582 = vmatprep.subr.bf16.mxu0 %v1773
    %5583 = vmatpush2.bf16.msra.mxu0 %v1772
    %5584 = vmatprep.subr.bf16.mxu0 %v1761
    %5585 = vmatpush2.bf16.msra.mxu0 %v1760
    %5586 = vmatprep.subr.bf16.mxu0 %v1749
    %5587 = vmatpush2.bf16.msra.mxu0 %v1748
    %5588 = vmatprep.subr.bf16.mxu0 %v1737
    %5589 = vmatpush2.bf16.msra.mxu0 %v1736
    %5590 = vmatprep.mubr.bf16.mxu0 %v5473
    %5591 = vmatmul.mubr.bf16.gmra.mxu0 %v5472
    %v5592 = vpop.f32.mrf.mxu0
    %v5593 = vadd.f32 0.0, %v5592
    %v5594 = vpop.f32.mrf.mxu0
    %v5595 = vadd.f32 0.0, %v5594
    %v5596 = vpop.f32.mrf.mxu0
    %v5597 = vpop.f32.mrf.mxu0
    %5598 = vdwg.mxu0
    %5599 = vmatprep.subr.bf16.mxu0 %v1917
    %5600 = vmatpush1.bf16.msra.mxu0 %v1916
    %5601 = vmatprep.subr.bf16.mxu0 %v1905
    %5602 = vmatpush1.bf16.msra.mxu0 %v1904
    %5603 = vmatprep.subr.bf16.mxu0 %v1893
    %5604 = vmatpush1.bf16.msra.mxu0 %v1892
    %5605 = vmatprep.subr.bf16.mxu0 %v1881
    %5606 = vmatpush1.bf16.msra.mxu0 %v1880
    %5607 = vmatprep.subr.bf16.mxu0 %v1869
    %5608 = vmatpush1.bf16.msra.mxu0 %v1868
    %5609 = vmatprep.subr.bf16.mxu0 %v1857
    %5610 = vmatpush1.bf16.msra.mxu0 %v1856
    %5611 = vmatprep.subr.bf16.mxu0 %v1845
    %5612 = vmatpush1.bf16.msra.mxu0 %v1844
    %5613 = vmatprep.subr.bf16.mxu0 %v1833
    %5614 = vmatpush1.bf16.msra.mxu0 %v1832
    %5615 = vmatprep.subr.bf16.mxu0 %v2013
    %5616 = vmatpush2.bf16.msra.mxu0 %v2012
    %5617 = vmatprep.subr.bf16.mxu0 %v2001
    %5618 = vmatpush2.bf16.msra.mxu0 %v2000
    %5619 = vmatprep.subr.bf16.mxu0 %v1989
    %5620 = vmatpush2.bf16.msra.mxu0 %v1988
    %5621 = vmatprep.subr.bf16.mxu0 %v1977
    %5622 = vmatpush2.bf16.msra.mxu0 %v1976
    %5623 = vmatprep.subr.bf16.mxu0 %v1965
    %5624 = vmatpush2.bf16.msra.mxu0 %v1964
    %5625 = vmatprep.subr.bf16.mxu0 %v1953
    %5626 = vmatpush2.bf16.msra.mxu0 %v1952
    %5627 = vmatprep.subr.bf16.mxu0 %v1941
    %5628 = vmatpush2.bf16.msra.mxu0 %v1940
    %5629 = vmatprep.subr.bf16.mxu0 %v1929
    %5630 = vmatpush2.bf16.msra.mxu0 %v1928
    %5631 = vmatprep.mubr.bf16.mxu0 %v5475
    %5632 = vmatmul.mubr.bf16.gmra.mxu0 %v5474
    %v5633 = vpop.f32.mrf.mxu0
    %v5634 = vadd.f32 %v5593, %v5633
    %v5635 = vpop.f32.mrf.mxu0
    %v5636 = vadd.f32 %v5595, %v5635
    %v5637 = vpop.f32.mrf.mxu0
    %v5638 = vpop.f32.mrf.mxu0
    %5639 = vdwg.mxu0
    %5640 = vmatprep.subr.bf16.mxu0 %v1727
    %5641 = vmatpush1.bf16.msra.mxu0 %v1726
    %5642 = vmatprep.subr.bf16.mxu0 %v1715
    %5643 = vmatpush1.bf16.msra.mxu0 %v1714
    %5644 = vmatprep.subr.bf16.mxu0 %v1703
    %5645 = vmatpush1.bf16.msra.mxu0 %v1702
    %5646 = vmatprep.subr.bf16.mxu0 %v1691
    %5647 = vmatpush1.bf16.msra.mxu0 %v1690
    %5648 = vmatprep.subr.bf16.mxu0 %v1679
    %5649 = vmatpush1.bf16.msra.mxu0 %v1678
    %5650 = vmatprep.subr.bf16.mxu0 %v1667
    %5651 = vmatpush1.bf16.msra.mxu0 %v1666
    %5652 = vmatprep.subr.bf16.mxu0 %v1655
    %5653 = vmatpush1.bf16.msra.mxu0 %v1654
    %5654 = vmatprep.subr.bf16.mxu0 %v1643
    %5655 = vmatpush1.bf16.msra.mxu0 %v1642
    %5656 = vmatprep.subr.bf16.mxu0 %v1823
    %5657 = vmatpush2.bf16.msra.mxu0 %v1822
    %5658 = vmatprep.subr.bf16.mxu0 %v1811
    %5659 = vmatpush2.bf16.msra.mxu0 %v1810
    %5660 = vmatprep.subr.bf16.mxu0 %v1799
    %5661 = vmatpush2.bf16.msra.mxu0 %v1798
    %5662 = vmatprep.subr.bf16.mxu0 %v1787
    %5663 = vmatpush2.bf16.msra.mxu0 %v1786
    %5664 = vmatprep.subr.bf16.mxu0 %v1775
    %5665 = vmatpush2.bf16.msra.mxu0 %v1774
    %5666 = vmatprep.subr.bf16.mxu0 %v1763
    %5667 = vmatpush2.bf16.msra.mxu0 %v1762
    %5668 = vmatprep.subr.bf16.mxu0 %v1751
    %5669 = vmatpush2.bf16.msra.mxu0 %v1750
    %5670 = vmatprep.subr.bf16.mxu0 %v1739
    %5671 = vmatpush2.bf16.msra.mxu0 %v1738
    %5672 = vmatprep.mubr.bf16.mxu0 %v5473
    %5673 = vmatmul.mubr.bf16.gmra.mxu0 %v5472
    %v5674 = vpop.f32.mrf.mxu0
    %v5675 = vadd.f32 0.0, %v5674
    %v5676 = vpop.f32.mrf.mxu0
    %v5677 = vadd.f32 0.0, %v5676
    %v5678 = vpop.f32.mrf.mxu0
    %v5679 = vpop.f32.mrf.mxu0
    %5680 = vdwg.mxu0
    %5681 = vmatprep.subr.bf16.mxu0 %v1919
    %5682 = vmatpush1.bf16.msra.mxu0 %v1918
    %5683 = vmatprep.subr.bf16.mxu0 %v1907
    %5684 = vmatpush1.bf16.msra.mxu0 %v1906
    %5685 = vmatprep.subr.bf16.mxu0 %v1895
    %5686 = vmatpush1.bf16.msra.mxu0 %v1894
    %5687 = vmatprep.subr.bf16.mxu0 %v1883
    %5688 = vmatpush1.bf16.msra.mxu0 %v1882
    %5689 = vmatprep.subr.bf16.mxu0 %v1871
    %5690 = vmatpush1.bf16.msra.mxu0 %v1870
    %5691 = vmatprep.subr.bf16.mxu0 %v1859
    %5692 = vmatpush1.bf16.msra.mxu0 %v1858
    %5693 = vmatprep.subr.bf16.mxu0 %v1847
    %5694 = vmatpush1.bf16.msra.mxu0 %v1846
    %5695 = vmatprep.subr.bf16.mxu0 %v1835
    %5696 = vmatpush1.bf16.msra.mxu0 %v1834
    %5697 = vmatprep.subr.bf16.mxu0 %v2015
    %5698 = vmatpush2.bf16.msra.mxu0 %v2014
    %5699 = vmatprep.subr.bf16.mxu0 %v2003
    %5700 = vmatpush2.bf16.msra.mxu0 %v2002
    %5701 = vmatprep.subr.bf16.mxu0 %v1991
    %5702 = vmatpush2.bf16.msra.mxu0 %v1990
    %5703 = vmatprep.subr.bf16.mxu0 %v1979
    %5704 = vmatpush2.bf16.msra.mxu0 %v1978
    %5705 = vmatprep.subr.bf16.mxu0 %v1967
    %5706 = vmatpush2.bf16.msra.mxu0 %v1966
    %5707 = vmatprep.subr.bf16.mxu0 %v1955
    %5708 = vmatpush2.bf16.msra.mxu0 %v1954
    %5709 = vmatprep.subr.bf16.mxu0 %v1943
    %5710 = vmatpush2.bf16.msra.mxu0 %v1942
    %5711 = vmatprep.subr.bf16.mxu0 %v1931
    %5712 = vmatpush2.bf16.msra.mxu0 %v1930
    %5713 = vmatprep.mubr.bf16.mxu0 %v5475
    %5714 = vmatmul.mubr.bf16.gmra.mxu0 %v5474
    %v5715 = vpop.f32.mrf.mxu0
    %v5716 = vadd.f32 %v5675, %v5715
    %v5717 = vpop.f32.mrf.mxu0
    %v5718 = vadd.f32 %v5677, %v5717
    %v5719 = vpop.f32.mrf.mxu0
    %v5720 = vpop.f32.mrf.mxu0
    %5721 = vdwg.mxu0
    %5722 = vmatprep.subr.bf16.mxu0 %v1729
    %5723 = vmatpush1.bf16.msra.mxu0 %v1728
    %5724 = vmatprep.subr.bf16.mxu0 %v1717
    %5725 = vmatpush1.bf16.msra.mxu0 %v1716
    %5726 = vmatprep.subr.bf16.mxu0 %v1705
    %5727 = vmatpush1.bf16.msra.mxu0 %v1704
    %5728 = vmatprep.subr.bf16.mxu0 %v1693
    %5729 = vmatpush1.bf16.msra.mxu0 %v1692
    %5730 = vmatprep.subr.bf16.mxu0 %v1681
    %5731 = vmatpush1.bf16.msra.mxu0 %v1680
    %5732 = vmatprep.subr.bf16.mxu0 %v1669
    %5733 = vmatpush1.bf16.msra.mxu0 %v1668
    %5734 = vmatprep.subr.bf16.mxu0 %v1657
    %5735 = vmatpush1.bf16.msra.mxu0 %v1656
    %5736 = vmatprep.subr.bf16.mxu0 %v1645
    %5737 = vmatpush1.bf16.msra.mxu0 %v1644
    %5738 = vmatprep.subr.bf16.mxu0 %v1825
    %5739 = vmatpush2.bf16.msra.mxu0 %v1824
    %5740 = vmatprep.subr.bf16.mxu0 %v1813
    %5741 = vmatpush2.bf16.msra.mxu0 %v1812
    %5742 = vmatprep.subr.bf16.mxu0 %v1801
    %5743 = vmatpush2.bf16.msra.mxu0 %v1800
    %5744 = vmatprep.subr.bf16.mxu0 %v1789
    %5745 = vmatpush2.bf16.msra.mxu0 %v1788
    %5746 = vmatprep.subr.bf16.mxu0 %v1777
    %5747 = vmatpush2.bf16.msra.mxu0 %v1776
    %5748 = vmatprep.subr.bf16.mxu0 %v1765
    %5749 = vmatpush2.bf16.msra.mxu0 %v1764
    %5750 = vmatprep.subr.bf16.mxu0 %v1753
    %5751 = vmatpush2.bf16.msra.mxu0 %v1752
    %5752 = vmatprep.subr.bf16.mxu0 %v1741
    %5753 = vmatpush2.bf16.msra.mxu0 %v1740
    %5754 = vmatprep.mubr.bf16.mxu0 %v5473
    %5755 = vmatmul.mubr.bf16.gmra.mxu0 %v5472
    %v5756 = vpop.f32.mrf.mxu0
    %v5757 = vadd.f32 0.0, %v5756
    %v5758 = vpop.f32.mrf.mxu0
    %v5759 = vadd.f32 0.0, %v5758
    %v5760 = vpop.f32.mrf.mxu0
    %v5761 = vpop.f32.mrf.mxu0
    %5762 = vdwg.mxu0
    %5763 = vmatprep.subr.bf16.mxu0 %v1921
    %5764 = vmatpush1.bf16.msra.mxu0 %v1920
    %5765 = vmatprep.subr.bf16.mxu0 %v1909
    %5766 = vmatpush1.bf16.msra.mxu0 %v1908
    %5767 = vmatprep.subr.bf16.mxu0 %v1897
    %5768 = vmatpush1.bf16.msra.mxu0 %v1896
    %5769 = vmatprep.subr.bf16.mxu0 %v1885
    %5770 = vmatpush1.bf16.msra.mxu0 %v1884
    %5771 = vmatprep.subr.bf16.mxu0 %v1873
    %5772 = vmatpush1.bf16.msra.mxu0 %v1872
    %5773 = vmatprep.subr.bf16.mxu0 %v1861
    %5774 = vmatpush1.bf16.msra.mxu0 %v1860
    %5775 = vmatprep.subr.bf16.mxu0 %v1849
    %5776 = vmatpush1.bf16.msra.mxu0 %v1848
    %5777 = vmatprep.subr.bf16.mxu0 %v1837
    %5778 = vmatpush1.bf16.msra.mxu0 %v1836
    %5779 = vmatprep.subr.bf16.mxu0 %v2017
    %5780 = vmatpush2.bf16.msra.mxu0 %v2016
    %5781 = vmatprep.subr.bf16.mxu0 %v2005
    %5782 = vmatpush2.bf16.msra.mxu0 %v2004
    %5783 = vmatprep.subr.bf16.mxu0 %v1993
    %5784 = vmatpush2.bf16.msra.mxu0 %v1992
    %5785 = vmatprep.subr.bf16.mxu0 %v1981
    %5786 = vmatpush2.bf16.msra.mxu0 %v1980
    %5787 = vmatprep.subr.bf16.mxu0 %v1969
    %5788 = vmatpush2.bf16.msra.mxu0 %v1968
    %5789 = vmatprep.subr.bf16.mxu0 %v1957
    %5790 = vmatpush2.bf16.msra.mxu0 %v1956
    %5791 = vmatprep.subr.bf16.mxu0 %v1945
    %5792 = vmatpush2.bf16.msra.mxu0 %v1944
    %5793 = vmatprep.subr.bf16.mxu0 %v1933
    %5794 = vmatpush2.bf16.msra.mxu0 %v1932
    %5795 = vmatprep.mubr.bf16.mxu0 %v5475
    %5796 = vmatmul.mubr.bf16.gmra.mxu0 %v5474
    %v5797 = vpop.f32.mrf.mxu0
    %v5798 = vadd.f32 %v5757, %v5797
    %v5799 = vpop.f32.mrf.mxu0
    %v5800 = vadd.f32 %v5759, %v5799
    %v5801 = vpop.f32.mrf.mxu0
    %v5802 = vpop.f32.mrf.mxu0
    %5803 = vdwg.mxu0
    %5804 = vmatprep.subr.bf16.mxu0 %v1731
    %5805 = vmatpush1.bf16.msra.mxu0 %v1730
    %5806 = vmatprep.subr.bf16.mxu0 %v1719
    %5807 = vmatpush1.bf16.msra.mxu0 %v1718
    %5808 = vmatprep.subr.bf16.mxu0 %v1707
    %5809 = vmatpush1.bf16.msra.mxu0 %v1706
    %5810 = vmatprep.subr.bf16.mxu0 %v1695
    %5811 = vmatpush1.bf16.msra.mxu0 %v1694
    %5812 = vmatprep.subr.bf16.mxu0 %v1683
    %5813 = vmatpush1.bf16.msra.mxu0 %v1682
    %5814 = vmatprep.subr.bf16.mxu0 %v1671
    %5815 = vmatpush1.bf16.msra.mxu0 %v1670
    %5816 = vmatprep.subr.bf16.mxu0 %v1659
    %5817 = vmatpush1.bf16.msra.mxu0 %v1658
    %5818 = vmatprep.subr.bf16.mxu0 %v1647
    %5819 = vmatpush1.bf16.msra.mxu0 %v1646
    %5820 = vmatprep.subr.bf16.mxu0 %v1827
    %5821 = vmatpush2.bf16.msra.mxu0 %v1826
    %5822 = vmatprep.subr.bf16.mxu0 %v1815
    %5823 = vmatpush2.bf16.msra.mxu0 %v1814
    %5824 = vmatprep.subr.bf16.mxu0 %v1803
    %5825 = vmatpush2.bf16.msra.mxu0 %v1802
    %5826 = vmatprep.subr.bf16.mxu0 %v1791
    %5827 = vmatpush2.bf16.msra.mxu0 %v1790
    %5828 = vmatprep.subr.bf16.mxu0 %v1779
    %5829 = vmatpush2.bf16.msra.mxu0 %v1778
    %5830 = vmatprep.subr.bf16.mxu0 %v1767
    %5831 = vmatpush2.bf16.msra.mxu0 %v1766
    %5832 = vmatprep.subr.bf16.mxu0 %v1755
    %5833 = vmatpush2.bf16.msra.mxu0 %v1754
    %5834 = vmatprep.subr.bf16.mxu0 %v1743
    %5835 = vmatpush2.bf16.msra.mxu0 %v1742
    %5836 = vmatprep.mubr.bf16.mxu0 %v5473
    %5837 = vmatmul.mubr.bf16.gmra.mxu0 %v5472
    %v5838 = vpop.f32.mrf.mxu0
    %v5839 = vadd.f32 0.0, %v5838
    %v5840 = vpop.f32.mrf.mxu0
    %v5841 = vadd.f32 0.0, %v5840
    %v5842 = vpop.f32.mrf.mxu0
    %v5843 = vpop.f32.mrf.mxu0
    %5844 = vdwg.mxu0
    %5845 = vmatprep.subr.bf16.mxu0 %v1923
    %5846 = vmatpush1.bf16.msra.mxu0 %v1922
    %5847 = vmatprep.subr.bf16.mxu0 %v1911
    %5848 = vmatpush1.bf16.msra.mxu0 %v1910
    %5849 = vmatprep.subr.bf16.mxu0 %v1899
    %5850 = vmatpush1.bf16.msra.mxu0 %v1898
    %5851 = vmatprep.subr.bf16.mxu0 %v1887
    %5852 = vmatpush1.bf16.msra.mxu0 %v1886
    %5853 = vmatprep.subr.bf16.mxu0 %v1875
    %5854 = vmatpush1.bf16.msra.mxu0 %v1874
    %5855 = vmatprep.subr.bf16.mxu0 %v1863
    %5856 = vmatpush1.bf16.msra.mxu0 %v1862
    %5857 = vmatprep.subr.bf16.mxu0 %v1851
    %5858 = vmatpush1.bf16.msra.mxu0 %v1850
    %5859 = vmatprep.subr.bf16.mxu0 %v1839
    %5860 = vmatpush1.bf16.msra.mxu0 %v1838
    %5861 = vmatprep.subr.bf16.mxu0 %v2019
    %5862 = vmatpush2.bf16.msra.mxu0 %v2018
    %5863 = vmatprep.subr.bf16.mxu0 %v2007
    %5864 = vmatpush2.bf16.msra.mxu0 %v2006
    %5865 = vmatprep.subr.bf16.mxu0 %v1995
    %5866 = vmatpush2.bf16.msra.mxu0 %v1994
    %5867 = vmatprep.subr.bf16.mxu0 %v1983
    %5868 = vmatpush2.bf16.msra.mxu0 %v1982
    %5869 = vmatprep.subr.bf16.mxu0 %v1971
    %5870 = vmatpush2.bf16.msra.mxu0 %v1970
    %5871 = vmatprep.subr.bf16.mxu0 %v1959
    %5872 = vmatpush2.bf16.msra.mxu0 %v1958
    %5873 = vmatprep.subr.bf16.mxu0 %v1947
    %5874 = vmatpush2.bf16.msra.mxu0 %v1946
    %5875 = vmatprep.subr.bf16.mxu0 %v1935
    %5876 = vmatpush2.bf16.msra.mxu0 %v1934
    %5877 = vmatprep.mubr.bf16.mxu0 %v5475
    %5878 = vmatmul.mubr.bf16.gmra.mxu0 %v5474
    %v5879 = vpop.f32.mrf.mxu0
    %v5880 = vadd.f32 %v5839, %v5879
    %v5881 = vpop.f32.mrf.mxu0
    %v5882 = vadd.f32 %v5841, %v5881
    %v5883 = vpop.f32.mrf.mxu0
    %v5884 = vpop.f32.mrf.mxu0
    %5885 = vdwg.mxu0
    %5886 = vmatprep.subr.bf16.mxu0 %v1733
    %5887 = vmatpush1.bf16.msra.mxu0 %v1732
    %5888 = vmatprep.subr.bf16.mxu0 %v1721
    %5889 = vmatpush1.bf16.msra.mxu0 %v1720
    %5890 = vmatprep.subr.bf16.mxu0 %v1709
    %5891 = vmatpush1.bf16.msra.mxu0 %v1708
    %5892 = vmatprep.subr.bf16.mxu0 %v1697
    %5893 = vmatpush1.bf16.msra.mxu0 %v1696
    %5894 = vmatprep.subr.bf16.mxu0 %v1685
    %5895 = vmatpush1.bf16.msra.mxu0 %v1684
    %5896 = vmatprep.subr.bf16.mxu0 %v1673
    %5897 = vmatpush1.bf16.msra.mxu0 %v1672
    %5898 = vmatprep.subr.bf16.mxu0 %v1661
    %5899 = vmatpush1.bf16.msra.mxu0 %v1660
    %5900 = vmatprep.subr.bf16.mxu0 %v1649
    %5901 = vmatpush1.bf16.msra.mxu0 %v1648
    %5902 = vmatprep.subr.bf16.mxu0 %v1829
    %5903 = vmatpush2.bf16.msra.mxu0 %v1828
    %5904 = vmatprep.subr.bf16.mxu0 %v1817
    %5905 = vmatpush2.bf16.msra.mxu0 %v1816
    %5906 = vmatprep.subr.bf16.mxu0 %v1805
    %5907 = vmatpush2.bf16.msra.mxu0 %v1804
    %5908 = vmatprep.subr.bf16.mxu0 %v1793
    %5909 = vmatpush2.bf16.msra.mxu0 %v1792
    %5910 = vmatprep.subr.bf16.mxu0 %v1781
    %5911 = vmatpush2.bf16.msra.mxu0 %v1780
    %5912 = vmatprep.subr.bf16.mxu0 %v1769
    %5913 = vmatpush2.bf16.msra.mxu0 %v1768
    %5914 = vmatprep.subr.bf16.mxu0 %v1757
    %5915 = vmatpush2.bf16.msra.mxu0 %v1756
    %5916 = vmatprep.subr.bf16.mxu0 %v1745
    %5917 = vmatpush2.bf16.msra.mxu0 %v1744
    %5918 = vmatprep.mubr.bf16.mxu0 %v5473
    %5919 = vmatmul.mubr.bf16.gmra.mxu0 %v5472
    %v5920 = vpop.f32.mrf.mxu0
    %v5921 = vadd.f32 0.0, %v5920
    %v5922 = vpop.f32.mrf.mxu0
    %v5923 = vadd.f32 0.0, %v5922
    %v5924 = vpop.f32.mrf.mxu0
    %v5925 = vpop.f32.mrf.mxu0
    %5926 = vdwg.mxu0
    %5927 = vmatprep.subr.bf16.mxu0 %v1925
    %5928 = vmatpush1.bf16.msra.mxu0 %v1924
    %5929 = vmatprep.subr.bf16.mxu0 %v1913
    %5930 = vmatpush1.bf16.msra.mxu0 %v1912
    %5931 = vmatprep.subr.bf16.mxu0 %v1901
    %5932 = vmatpush1.bf16.msra.mxu0 %v1900
    %5933 = vmatprep.subr.bf16.mxu0 %v1889
    %5934 = vmatpush1.bf16.msra.mxu0 %v1888
    %5935 = vmatprep.subr.bf16.mxu0 %v1877
    %5936 = vmatpush1.bf16.msra.mxu0 %v1876
    %5937 = vmatprep.subr.bf16.mxu0 %v1865
    %5938 = vmatpush1.bf16.msra.mxu0 %v1864
    %5939 = vmatprep.subr.bf16.mxu0 %v1853
    %5940 = vmatpush1.bf16.msra.mxu0 %v1852
    %5941 = vmatprep.subr.bf16.mxu0 %v1841
    %5942 = vmatpush1.bf16.msra.mxu0 %v1840
    %5943 = vmatprep.subr.bf16.mxu0 %v2021
    %5944 = vmatpush2.bf16.msra.mxu0 %v2020
    %5945 = vmatprep.subr.bf16.mxu0 %v2009
    %5946 = vmatpush2.bf16.msra.mxu0 %v2008
    %5947 = vmatprep.subr.bf16.mxu0 %v1997
    %5948 = vmatpush2.bf16.msra.mxu0 %v1996
    %5949 = vmatprep.subr.bf16.mxu0 %v1985
    %5950 = vmatpush2.bf16.msra.mxu0 %v1984
    %5951 = vmatprep.subr.bf16.mxu0 %v1973
    %5952 = vmatpush2.bf16.msra.mxu0 %v1972
    %5953 = vmatprep.subr.bf16.mxu0 %v1961
    %5954 = vmatpush2.bf16.msra.mxu0 %v1960
    %5955 = vmatprep.subr.bf16.mxu0 %v1949
    %5956 = vmatpush2.bf16.msra.mxu0 %v1948
    %5957 = vmatprep.subr.bf16.mxu0 %v1937
    %5958 = vmatpush2.bf16.msra.mxu0 %v1936
    %5959 = vmatprep.mubr.bf16.mxu0 %v5475
    %5960 = vmatmul.mubr.bf16.gmra.mxu0 %v5474
    %v5961 = vpop.f32.mrf.mxu0
    %v5962 = vadd.f32 %v5921, %v5961
    %v5963 = vpop.f32.mrf.mxu0
    %v5964 = vadd.f32 %v5923, %v5963
    %v5965 = vpop.f32.mrf.mxu0
    %v5966 = vpop.f32.mrf.mxu0
    %5967 = vdwg.mxu0
    %v5968 = vadd.f32 %v5460, %v5552
    %v5969 = vadd.f32 %v5461, %v5554
    %v5970 = vadd.f32 %v5462, %v5634
    %v5971 = vadd.f32 %v5463, %v5636
    %v5972 = vxor.u32 %v5968, 2147483648
    %v5973 = vxor.u32 %v5969, 2147483648
    %v5974 = vxor.u32 %v5970, 2147483648
    %v5975 = vxor.u32 %v5971, 2147483648
    %v5976 = vmul.f32 %v5972, 1.442695
    %v5977 = vpow.pop %v5976
    %v5978 = vmul.f32 %v5973, 1.442695
    %v5979 = vpow.pop %v5978
    %v5980 = vmul.f32 %v5974, 1.442695
    %v5981 = vpow.pop %v5980
    %v5982 = vmul.f32 %v5975, 1.442695
    %v5983 = vpow.pop %v5982
    %v5984 = vadd.f32 %v5977, 1.0
    %v5985 = vadd.f32 %v5979, 1.0
    %v5986 = vadd.f32 %v5981, 1.0
    %v5987 = vadd.f32 %v5983, 1.0
    %v5988 = vrcp.pop %v5984
    %v5989 = vmul.f32 1.0, %v5988
    %v5990 = vrcp.pop %v5985
    %v5991 = vmul.f32 1.0, %v5990
    %v5992 = vrcp.pop %v5986
    %v5993 = vmul.f32 1.0, %v5992
    %v5994 = vrcp.pop %v5987
    %v5995 = vmul.f32 1.0, %v5994
    %v5996 = vadd.f32 %v5464, %v5716
    %v5997 = vadd.f32 %v5465, %v5718
    %v5998 = vadd.f32 %v5466, %v5798
    %v5999 = vadd.f32 %v5467, %v5800
    %v6000 = vxor.u32 %v5996, 2147483648
    %v6001 = vxor.u32 %v5997, 2147483648
    %v6002 = vxor.u32 %v5998, 2147483648
    %v6003 = vxor.u32 %v5999, 2147483648
    %v6004 = vmul.f32 %v6000, 1.442695
    %v6005 = vpow.pop %v6004
    %v6006 = vmul.f32 %v6001, 1.442695
    %v6007 = vpow.pop %v6006
    %v6008 = vmul.f32 %v6002, 1.442695
    %v6009 = vpow.pop %v6008
    %v6010 = vmul.f32 %v6003, 1.442695
    %v6011 = vpow.pop %v6010
    %v6012 = vadd.f32 %v6005, 1.0
    %v6013 = vadd.f32 %v6007, 1.0
    %v6014 = vadd.f32 %v6009, 1.0
    %v6015 = vadd.f32 %v6011, 1.0
    %v6016 = vrcp.pop %v6012
    %v6017 = vmul.f32 1.0, %v6016
    %v6018 = vrcp.pop %v6013
    %v6019 = vmul.f32 1.0, %v6018
    %v6020 = vrcp.pop %v6014
    %v6021 = vmul.f32 1.0, %v6020
    %v6022 = vrcp.pop %v6015
    %v6023 = vmul.f32 1.0, %v6022
    %v6024 = vadd.f32 %v5880, %v2958
    %v6025 = vadd.f32 %v5882, %v2962
    %v6026 = vadd.f32 %v5962, %v2966
    %v6027 = vadd.f32 %v5964, %v2970
    %v6028 = vmul.f32 %v5989, %v6024
    %v6029 = vmul.f32 %v5991, %v6025
    %v6030 = vmul.f32 %v5993, %v6026
    %v6031 = vmul.f32 %v5995, %v6027
    %v6032 = vadd.f32 %v5468, %v6028
    %v6033 = vadd.f32 %v5469, %v6029
    %v6034 = vadd.f32 %v5470, %v6030
    %v6035 = vadd.f32 %v5471, %v6031
    %v6036 = vtanh.pop %v6032
    %v6037 = vtanh.pop %v6033
    %v6038 = vtanh.pop %v6034
    %v6039 = vtanh.pop %v6035
    %v6040 = vsub.f32 %v5450, %v6036
    %v6041 = vsub.f32 %v5451, %v6037
    %v6042 = vsub.f32 %v5452, %v6038
    %v6043 = vsub.f32 %v5453, %v6039
    %v6044 = vmul.f32 %v6017, %v6040
    %v6045 = vmul.f32 %v6019, %v6041
    %v6046 = vmul.f32 %v6021, %v6042
    %v6047 = vmul.f32 %v6023, %v6043
    %v6048 = vadd.f32 %v6036, %v6044
    %v6049 = vadd.f32 %v6037, %v6045
    %v6050 = vadd.f32 %v6038, %v6046
    %v6051 = vadd.f32 %v6039, %v6047
    %v6052 = vsub.f32 %v6048, %v5450
    %v6053 = vsub.f32 %v6049, %v5451
    %v6054 = vsub.f32 %v6050, %v5452
    %v6055 = vsub.f32 %v6051, %v5453
    %v6056 = vmul.f32 %v6052, 0.9
    %v6057 = vmul.f32 %v6053, 0.9
    %v6058 = vmul.f32 %v6054, 0.9
    %v6059 = vmul.f32 %v6055, 0.9
    %v6060 = vadd.f32 %v5450, %v6056
    %v6061 = vadd.f32 %v5451, %v6057
    %v6062 = vadd.f32 %v5452, %v6058
    %v6063 = vadd.f32 %v5453, %v6059
    %s6064 = scalar_lea.vmem [#allocation11], 160
    %6065 = vst [vmem:[%s6064] sm:$0xff] %v6060
    %6066 = vst [vmem:[%s6064 + $0x8] sm:$0xff] %v6061
    %6067 = vst [vmem:[%s6064 + $0x10] sm:$0xff] %v6062
    %6068 = vst [vmem:[%s6064 + $0x18] sm:$0xff] %v6063
    %s6069 = scalar_lea.vmem [#allocation3], 576
    %v6070 = vld [vmem:[%s6069] sm:$0xff]
    %v6071 = vld [vmem:[%s6069 + $0x8] sm:$0xff]
    %v6072 = vld [vmem:[%s6069 + $0x10] sm:$0xff]
    %v6073 = vld [vmem:[%s6069 + $0x18] sm:$0xff]
    %v6074 = vld [vmem:[%s6069 + $0x20] sm:$0xff]
    %v6075 = vld [vmem:[%s6069 + $0x28] sm:$0xff]
    %v6076 = vld [vmem:[%s6069 + $0x30] sm:$0xff]
    %v6077 = vld [vmem:[%s6069 + $0x38] sm:$0xff]
    %v6078 = vld [vmem:[%s6069 + $0x40] sm:$0xff]
    %v6079 = vld [vmem:[%s6069 + $0x48] sm:$0xff]
    %v6080 = vld [vmem:[%s6069 + $0x50] sm:$0xff]
    %v6081 = vld [vmem:[%s6069 + $0x58] sm:$0xff]
    %v6082 = vpack.c.bf16 %v6060, %v6060
    %v6083 = vpack.c.bf16 %v6061, %v6061
    %v6084 = vpack.c.bf16 %v6062, %v6062
    %v6085 = vpack.c.bf16 %v6063, %v6063
    %6086 = vmatprep.subr.bf16.mxu0 %v1723
    %6087 = vmatpush1.bf16.msra.mxu0 %v1722
    %6088 = vmatprep.subr.bf16.mxu0 %v1711
    %6089 = vmatpush1.bf16.msra.mxu0 %v1710
    %6090 = vmatprep.subr.bf16.mxu0 %v1699
    %6091 = vmatpush1.bf16.msra.mxu0 %v1698
    %6092 = vmatprep.subr.bf16.mxu0 %v1687
    %6093 = vmatpush1.bf16.msra.mxu0 %v1686
    %6094 = vmatprep.subr.bf16.mxu0 %v1675
    %6095 = vmatpush1.bf16.msra.mxu0 %v1674
    %6096 = vmatprep.subr.bf16.mxu0 %v1663
    %6097 = vmatpush1.bf16.msra.mxu0 %v1662
    %6098 = vmatprep.subr.bf16.mxu0 %v1651
    %6099 = vmatpush1.bf16.msra.mxu0 %v1650
    %6100 = vmatprep.subr.bf16.mxu0 %v1639
    %6101 = vmatpush1.bf16.msra.mxu0 %v1638
    %6102 = vmatprep.subr.bf16.mxu0 %v1819
    %6103 = vmatpush2.bf16.msra.mxu0 %v1818
    %6104 = vmatprep.subr.bf16.mxu0 %v1807
    %6105 = vmatpush2.bf16.msra.mxu0 %v1806
    %6106 = vmatprep.subr.bf16.mxu0 %v1795
    %6107 = vmatpush2.bf16.msra.mxu0 %v1794
    %6108 = vmatprep.subr.bf16.mxu0 %v1783
    %6109 = vmatpush2.bf16.msra.mxu0 %v1782
    %6110 = vmatprep.subr.bf16.mxu0 %v1771
    %6111 = vmatpush2.bf16.msra.mxu0 %v1770
    %6112 = vmatprep.subr.bf16.mxu0 %v1759
    %6113 = vmatpush2.bf16.msra.mxu0 %v1758
    %6114 = vmatprep.subr.bf16.mxu0 %v1747
    %6115 = vmatpush2.bf16.msra.mxu0 %v1746
    %6116 = vmatprep.subr.bf16.mxu0 %v1735
    %6117 = vmatpush2.bf16.msra.mxu0 %v1734
    %6118 = vmatprep.mubr.bf16.mxu0 %v6083
    %6119 = vmatmul.mubr.bf16.gmra.mxu0 %v6082
    %v6120 = vpop.f32.mrf.mxu0
    %v6121 = vadd.f32 0.0, %v6120
    %v6122 = vpop.f32.mrf.mxu0
    %v6123 = vadd.f32 0.0, %v6122
    %v6124 = vpop.f32.mrf.mxu0
    %v6125 = vpop.f32.mrf.mxu0
    %6126 = vdwg.mxu0
    %6127 = vmatprep.subr.bf16.mxu0 %v1915
    %6128 = vmatpush1.bf16.msra.mxu0 %v1914
    %6129 = vmatprep.subr.bf16.mxu0 %v1903
    %6130 = vmatpush1.bf16.msra.mxu0 %v1902
    %6131 = vmatprep.subr.bf16.mxu0 %v1891
    %6132 = vmatpush1.bf16.msra.mxu0 %v1890
    %6133 = vmatprep.subr.bf16.mxu0 %v1879
    %6134 = vmatpush1.bf16.msra.mxu0 %v1878
    %6135 = vmatprep.subr.bf16.mxu0 %v1867
    %6136 = vmatpush1.bf16.msra.mxu0 %v1866
    %6137 = vmatprep.subr.bf16.mxu0 %v1855
    %6138 = vmatpush1.bf16.msra.mxu0 %v1854
    %6139 = vmatprep.subr.bf16.mxu0 %v1843
    %6140 = vmatpush1.bf16.msra.mxu0 %v1842
    %6141 = vmatprep.subr.bf16.mxu0 %v1831
    %6142 = vmatpush1.bf16.msra.mxu0 %v1830
    %6143 = vmatprep.subr.bf16.mxu0 %v2011
    %6144 = vmatpush2.bf16.msra.mxu0 %v2010
    %6145 = vmatprep.subr.bf16.mxu0 %v1999
    %6146 = vmatpush2.bf16.msra.mxu0 %v1998
    %6147 = vmatprep.subr.bf16.mxu0 %v1987
    %6148 = vmatpush2.bf16.msra.mxu0 %v1986
    %6149 = vmatprep.subr.bf16.mxu0 %v1975
    %6150 = vmatpush2.bf16.msra.mxu0 %v1974
    %6151 = vmatprep.subr.bf16.mxu0 %v1963
    %6152 = vmatpush2.bf16.msra.mxu0 %v1962
    %6153 = vmatprep.subr.bf16.mxu0 %v1951
    %6154 = vmatpush2.bf16.msra.mxu0 %v1950
    %6155 = vmatprep.subr.bf16.mxu0 %v1939
    %6156 = vmatpush2.bf16.msra.mxu0 %v1938
    %6157 = vmatprep.subr.bf16.mxu0 %v1927
    %6158 = vmatpush2.bf16.msra.mxu0 %v1926
    %6159 = vmatprep.mubr.bf16.mxu0 %v6085
    %6160 = vmatmul.mubr.bf16.gmra.mxu0 %v6084
    %v6161 = vpop.f32.mrf.mxu0
    %v6162 = vadd.f32 %v6121, %v6161
    %v6163 = vpop.f32.mrf.mxu0
    %v6164 = vadd.f32 %v6123, %v6163
    %v6165 = vpop.f32.mrf.mxu0
    %v6166 = vpop.f32.mrf.mxu0
    %6167 = vdwg.mxu0
    %6168 = vmatprep.subr.bf16.mxu0 %v1725
    %6169 = vmatpush1.bf16.msra.mxu0 %v1724
    %6170 = vmatprep.subr.bf16.mxu0 %v1713
    %6171 = vmatpush1.bf16.msra.mxu0 %v1712
    %6172 = vmatprep.subr.bf16.mxu0 %v1701
    %6173 = vmatpush1.bf16.msra.mxu0 %v1700
    %6174 = vmatprep.subr.bf16.mxu0 %v1689
    %6175 = vmatpush1.bf16.msra.mxu0 %v1688
    %6176 = vmatprep.subr.bf16.mxu0 %v1677
    %6177 = vmatpush1.bf16.msra.mxu0 %v1676
    %6178 = vmatprep.subr.bf16.mxu0 %v1665
    %6179 = vmatpush1.bf16.msra.mxu0 %v1664
    %6180 = vmatprep.subr.bf16.mxu0 %v1653
    %6181 = vmatpush1.bf16.msra.mxu0 %v1652
    %6182 = vmatprep.subr.bf16.mxu0 %v1641
    %6183 = vmatpush1.bf16.msra.mxu0 %v1640
    %6184 = vmatprep.subr.bf16.mxu0 %v1821
    %6185 = vmatpush2.bf16.msra.mxu0 %v1820
    %6186 = vmatprep.subr.bf16.mxu0 %v1809
    %6187 = vmatpush2.bf16.msra.mxu0 %v1808
    %6188 = vmatprep.subr.bf16.mxu0 %v1797
    %6189 = vmatpush2.bf16.msra.mxu0 %v1796
    %6190 = vmatprep.subr.bf16.mxu0 %v1785
    %6191 = vmatpush2.bf16.msra.mxu0 %v1784
    %6192 = vmatprep.subr.bf16.mxu0 %v1773
    %6193 = vmatpush2.bf16.msra.mxu0 %v1772
    %6194 = vmatprep.subr.bf16.mxu0 %v1761
    %6195 = vmatpush2.bf16.msra.mxu0 %v1760
    %6196 = vmatprep.subr.bf16.mxu0 %v1749
    %6197 = vmatpush2.bf16.msra.mxu0 %v1748
    %6198 = vmatprep.subr.bf16.mxu0 %v1737
    %6199 = vmatpush2.bf16.msra.mxu0 %v1736
    %6200 = vmatprep.mubr.bf16.mxu0 %v6083
    %6201 = vmatmul.mubr.bf16.gmra.mxu0 %v6082
    %v6202 = vpop.f32.mrf.mxu0
    %v6203 = vadd.f32 0.0, %v6202
    %v6204 = vpop.f32.mrf.mxu0
    %v6205 = vadd.f32 0.0, %v6204
    %v6206 = vpop.f32.mrf.mxu0
    %v6207 = vpop.f32.mrf.mxu0
    %6208 = vdwg.mxu0
    %6209 = vmatprep.subr.bf16.mxu0 %v1917
    %6210 = vmatpush1.bf16.msra.mxu0 %v1916
    %6211 = vmatprep.subr.bf16.mxu0 %v1905
    %6212 = vmatpush1.bf16.msra.mxu0 %v1904
    %6213 = vmatprep.subr.bf16.mxu0 %v1893
    %6214 = vmatpush1.bf16.msra.mxu0 %v1892
    %6215 = vmatprep.subr.bf16.mxu0 %v1881
    %6216 = vmatpush1.bf16.msra.mxu0 %v1880
    %6217 = vmatprep.subr.bf16.mxu0 %v1869
    %6218 = vmatpush1.bf16.msra.mxu0 %v1868
    %6219 = vmatprep.subr.bf16.mxu0 %v1857
    %6220 = vmatpush1.bf16.msra.mxu0 %v1856
    %6221 = vmatprep.subr.bf16.mxu0 %v1845
    %6222 = vmatpush1.bf16.msra.mxu0 %v1844
    %6223 = vmatprep.subr.bf16.mxu0 %v1833
    %6224 = vmatpush1.bf16.msra.mxu0 %v1832
    %6225 = vmatprep.subr.bf16.mxu0 %v2013
    %6226 = vmatpush2.bf16.msra.mxu0 %v2012
    %6227 = vmatprep.subr.bf16.mxu0 %v2001
    %6228 = vmatpush2.bf16.msra.mxu0 %v2000
    %6229 = vmatprep.subr.bf16.mxu0 %v1989
    %6230 = vmatpush2.bf16.msra.mxu0 %v1988
    %6231 = vmatprep.subr.bf16.mxu0 %v1977
    %6232 = vmatpush2.bf16.msra.mxu0 %v1976
    %6233 = vmatprep.subr.bf16.mxu0 %v1965
    %6234 = vmatpush2.bf16.msra.mxu0 %v1964
    %6235 = vmatprep.subr.bf16.mxu0 %v1953
    %6236 = vmatpush2.bf16.msra.mxu0 %v1952
    %6237 = vmatprep.subr.bf16.mxu0 %v1941
    %6238 = vmatpush2.bf16.msra.mxu0 %v1940
    %6239 = vmatprep.subr.bf16.mxu0 %v1929
    %6240 = vmatpush2.bf16.msra.mxu0 %v1928
    %6241 = vmatprep.mubr.bf16.mxu0 %v6085
    %6242 = vmatmul.mubr.bf16.gmra.mxu0 %v6084
    %v6243 = vpop.f32.mrf.mxu0
    %v6244 = vadd.f32 %v6203, %v6243
    %v6245 = vpop.f32.mrf.mxu0
    %v6246 = vadd.f32 %v6205, %v6245
    %v6247 = vpop.f32.mrf.mxu0
    %v6248 = vpop.f32.mrf.mxu0
    %6249 = vdwg.mxu0
    %6250 = vmatprep.subr.bf16.mxu0 %v1727
    %6251 = vmatpush1.bf16.msra.mxu0 %v1726
    %6252 = vmatprep.subr.bf16.mxu0 %v1715
    %6253 = vmatpush1.bf16.msra.mxu0 %v1714
    %6254 = vmatprep.subr.bf16.mxu0 %v1703
    %6255 = vmatpush1.bf16.msra.mxu0 %v1702
    %6256 = vmatprep.subr.bf16.mxu0 %v1691
    %6257 = vmatpush1.bf16.msra.mxu0 %v1690
    %6258 = vmatprep.subr.bf16.mxu0 %v1679
    %6259 = vmatpush1.bf16.msra.mxu0 %v1678
    %6260 = vmatprep.subr.bf16.mxu0 %v1667
    %6261 = vmatpush1.bf16.msra.mxu0 %v1666
    %6262 = vmatprep.subr.bf16.mxu0 %v1655
    %6263 = vmatpush1.bf16.msra.mxu0 %v1654
    %6264 = vmatprep.subr.bf16.mxu0 %v1643
    %6265 = vmatpush1.bf16.msra.mxu0 %v1642
    %6266 = vmatprep.subr.bf16.mxu0 %v1823
    %6267 = vmatpush2.bf16.msra.mxu0 %v1822
    %6268 = vmatprep.subr.bf16.mxu0 %v1811
    %6269 = vmatpush2.bf16.msra.mxu0 %v1810
    %6270 = vmatprep.subr.bf16.mxu0 %v1799
    %6271 = vmatpush2.bf16.msra.mxu0 %v1798
    %6272 = vmatprep.subr.bf16.mxu0 %v1787
    %6273 = vmatpush2.bf16.msra.mxu0 %v1786
    %6274 = vmatprep.subr.bf16.mxu0 %v1775
    %6275 = vmatpush2.bf16.msra.mxu0 %v1774
    %6276 = vmatprep.subr.bf16.mxu0 %v1763
    %6277 = vmatpush2.bf16.msra.mxu0 %v1762
    %6278 = vmatprep.subr.bf16.mxu0 %v1751
    %6279 = vmatpush2.bf16.msra.mxu0 %v1750
    %6280 = vmatprep.subr.bf16.mxu0 %v1739
    %6281 = vmatpush2.bf16.msra.mxu0 %v1738
    %6282 = vmatprep.mubr.bf16.mxu0 %v6083
    %6283 = vmatmul.mubr.bf16.gmra.mxu0 %v6082
    %v6284 = vpop.f32.mrf.mxu0
    %v6285 = vadd.f32 0.0, %v6284
    %v6286 = vpop.f32.mrf.mxu0
    %v6287 = vadd.f32 0.0, %v6286
    %v6288 = vpop.f32.mrf.mxu0
    %v6289 = vpop.f32.mrf.mxu0
    %6290 = vdwg.mxu0
    %6291 = vmatprep.subr.bf16.mxu0 %v1919
    %6292 = vmatpush1.bf16.msra.mxu0 %v1918
    %6293 = vmatprep.subr.bf16.mxu0 %v1907
    %6294 = vmatpush1.bf16.msra.mxu0 %v1906
    %6295 = vmatprep.subr.bf16.mxu0 %v1895
    %6296 = vmatpush1.bf16.msra.mxu0 %v1894
    %6297 = vmatprep.subr.bf16.mxu0 %v1883
    %6298 = vmatpush1.bf16.msra.mxu0 %v1882
    %6299 = vmatprep.subr.bf16.mxu0 %v1871
    %6300 = vmatpush1.bf16.msra.mxu0 %v1870
    %6301 = vmatprep.subr.bf16.mxu0 %v1859
    %6302 = vmatpush1.bf16.msra.mxu0 %v1858
    %6303 = vmatprep.subr.bf16.mxu0 %v1847
    %6304 = vmatpush1.bf16.msra.mxu0 %v1846
    %6305 = vmatprep.subr.bf16.mxu0 %v1835
    %6306 = vmatpush1.bf16.msra.mxu0 %v1834
    %6307 = vmatprep.subr.bf16.mxu0 %v2015
    %6308 = vmatpush2.bf16.msra.mxu0 %v2014
    %6309 = vmatprep.subr.bf16.mxu0 %v2003
    %6310 = vmatpush2.bf16.msra.mxu0 %v2002
    %6311 = vmatprep.subr.bf16.mxu0 %v1991
    %6312 = vmatpush2.bf16.msra.mxu0 %v1990
    %6313 = vmatprep.subr.bf16.mxu0 %v1979
    %6314 = vmatpush2.bf16.msra.mxu0 %v1978
    %6315 = vmatprep.subr.bf16.mxu0 %v1967
    %6316 = vmatpush2.bf16.msra.mxu0 %v1966
    %6317 = vmatprep.subr.bf16.mxu0 %v1955
    %6318 = vmatpush2.bf16.msra.mxu0 %v1954
    %6319 = vmatprep.subr.bf16.mxu0 %v1943
    %6320 = vmatpush2.bf16.msra.mxu0 %v1942
    %6321 = vmatprep.subr.bf16.mxu0 %v1931
    %6322 = vmatpush2.bf16.msra.mxu0 %v1930
    %6323 = vmatprep.mubr.bf16.mxu0 %v6085
    %6324 = vmatmul.mubr.bf16.gmra.mxu0 %v6084
    %v6325 = vpop.f32.mrf.mxu0
    %v6326 = vadd.f32 %v6285, %v6325
    %v6327 = vpop.f32.mrf.mxu0
    %v6328 = vadd.f32 %v6287, %v6327
    %v6329 = vpop.f32.mrf.mxu0
    %v6330 = vpop.f32.mrf.mxu0
    %6331 = vdwg.mxu0
    %6332 = vmatprep.subr.bf16.mxu0 %v1729
    %6333 = vmatpush1.bf16.msra.mxu0 %v1728
    %6334 = vmatprep.subr.bf16.mxu0 %v1717
    %6335 = vmatpush1.bf16.msra.mxu0 %v1716
    %6336 = vmatprep.subr.bf16.mxu0 %v1705
    %6337 = vmatpush1.bf16.msra.mxu0 %v1704
    %6338 = vmatprep.subr.bf16.mxu0 %v1693
    %6339 = vmatpush1.bf16.msra.mxu0 %v1692
    %6340 = vmatprep.subr.bf16.mxu0 %v1681
    %6341 = vmatpush1.bf16.msra.mxu0 %v1680
    %6342 = vmatprep.subr.bf16.mxu0 %v1669
    %6343 = vmatpush1.bf16.msra.mxu0 %v1668
    %6344 = vmatprep.subr.bf16.mxu0 %v1657
    %6345 = vmatpush1.bf16.msra.mxu0 %v1656
    %6346 = vmatprep.subr.bf16.mxu0 %v1645
    %6347 = vmatpush1.bf16.msra.mxu0 %v1644
    %6348 = vmatprep.subr.bf16.mxu0 %v1825
    %6349 = vmatpush2.bf16.msra.mxu0 %v1824
    %6350 = vmatprep.subr.bf16.mxu0 %v1813
    %6351 = vmatpush2.bf16.msra.mxu0 %v1812
    %6352 = vmatprep.subr.bf16.mxu0 %v1801
    %6353 = vmatpush2.bf16.msra.mxu0 %v1800
    %6354 = vmatprep.subr.bf16.mxu0 %v1789
    %6355 = vmatpush2.bf16.msra.mxu0 %v1788
    %6356 = vmatprep.subr.bf16.mxu0 %v1777
    %6357 = vmatpush2.bf16.msra.mxu0 %v1776
    %6358 = vmatprep.subr.bf16.mxu0 %v1765
    %6359 = vmatpush2.bf16.msra.mxu0 %v1764
    %6360 = vmatprep.subr.bf16.mxu0 %v1753
    %6361 = vmatpush2.bf16.msra.mxu0 %v1752
    %6362 = vmatprep.subr.bf16.mxu0 %v1741
    %6363 = vmatpush2.bf16.msra.mxu0 %v1740
    %6364 = vmatprep.mubr.bf16.mxu0 %v6083
    %6365 = vmatmul.mubr.bf16.gmra.mxu0 %v6082
    %v6366 = vpop.f32.mrf.mxu0
    %v6367 = vadd.f32 0.0, %v6366
    %v6368 = vpop.f32.mrf.mxu0
    %v6369 = vadd.f32 0.0, %v6368
    %v6370 = vpop.f32.mrf.mxu0
    %v6371 = vpop.f32.mrf.mxu0
    %6372 = vdwg.mxu0
    %6373 = vmatprep.subr.bf16.mxu0 %v1921
    %6374 = vmatpush1.bf16.msra.mxu0 %v1920
    %6375 = vmatprep.subr.bf16.mxu0 %v1909
    %6376 = vmatpush1.bf16.msra.mxu0 %v1908
    %6377 = vmatprep.subr.bf16.mxu0 %v1897
    %6378 = vmatpush1.bf16.msra.mxu0 %v1896
    %6379 = vmatprep.subr.bf16.mxu0 %v1885
    %6380 = vmatpush1.bf16.msra.mxu0 %v1884
    %6381 = vmatprep.subr.bf16.mxu0 %v1873
    %6382 = vmatpush1.bf16.msra.mxu0 %v1872
    %6383 = vmatprep.subr.bf16.mxu0 %v1861
    %6384 = vmatpush1.bf16.msra.mxu0 %v1860
    %6385 = vmatprep.subr.bf16.mxu0 %v1849
    %6386 = vmatpush1.bf16.msra.mxu0 %v1848
    %6387 = vmatprep.subr.bf16.mxu0 %v1837
    %6388 = vmatpush1.bf16.msra.mxu0 %v1836
    %6389 = vmatprep.subr.bf16.mxu0 %v2017
    %6390 = vmatpush2.bf16.msra.mxu0 %v2016
    %6391 = vmatprep.subr.bf16.mxu0 %v2005
    %6392 = vmatpush2.bf16.msra.mxu0 %v2004
    %6393 = vmatprep.subr.bf16.mxu0 %v1993
    %6394 = vmatpush2.bf16.msra.mxu0 %v1992
    %6395 = vmatprep.subr.bf16.mxu0 %v1981
    %6396 = vmatpush2.bf16.msra.mxu0 %v1980
    %6397 = vmatprep.subr.bf16.mxu0 %v1969
    %6398 = vmatpush2.bf16.msra.mxu0 %v1968
    %6399 = vmatprep.subr.bf16.mxu0 %v1957
    %6400 = vmatpush2.bf16.msra.mxu0 %v1956
    %6401 = vmatprep.subr.bf16.mxu0 %v1945
    %6402 = vmatpush2.bf16.msra.mxu0 %v1944
    %6403 = vmatprep.subr.bf16.mxu0 %v1933
    %6404 = vmatpush2.bf16.msra.mxu0 %v1932
    %6405 = vmatprep.mubr.bf16.mxu0 %v6085
    %6406 = vmatmul.mubr.bf16.gmra.mxu0 %v6084
    %v6407 = vpop.f32.mrf.mxu0
    %v6408 = vadd.f32 %v6367, %v6407
    %v6409 = vpop.f32.mrf.mxu0
    %v6410 = vadd.f32 %v6369, %v6409
    %v6411 = vpop.f32.mrf.mxu0
    %v6412 = vpop.f32.mrf.mxu0
    %6413 = vdwg.mxu0
    %6414 = vmatprep.subr.bf16.mxu0 %v1731
    %6415 = vmatpush1.bf16.msra.mxu0 %v1730
    %6416 = vmatprep.subr.bf16.mxu0 %v1719
    %6417 = vmatpush1.bf16.msra.mxu0 %v1718
    %6418 = vmatprep.subr.bf16.mxu0 %v1707
    %6419 = vmatpush1.bf16.msra.mxu0 %v1706
    %6420 = vmatprep.subr.bf16.mxu0 %v1695
    %6421 = vmatpush1.bf16.msra.mxu0 %v1694
    %6422 = vmatprep.subr.bf16.mxu0 %v1683
    %6423 = vmatpush1.bf16.msra.mxu0 %v1682
    %6424 = vmatprep.subr.bf16.mxu0 %v1671
    %6425 = vmatpush1.bf16.msra.mxu0 %v1670
    %6426 = vmatprep.subr.bf16.mxu0 %v1659
    %6427 = vmatpush1.bf16.msra.mxu0 %v1658
    %6428 = vmatprep.subr.bf16.mxu0 %v1647
    %6429 = vmatpush1.bf16.msra.mxu0 %v1646
    %6430 = vmatprep.subr.bf16.mxu0 %v1827
    %6431 = vmatpush2.bf16.msra.mxu0 %v1826
    %6432 = vmatprep.subr.bf16.mxu0 %v1815
    %6433 = vmatpush2.bf16.msra.mxu0 %v1814
    %6434 = vmatprep.subr.bf16.mxu0 %v1803
    %6435 = vmatpush2.bf16.msra.mxu0 %v1802
    %6436 = vmatprep.subr.bf16.mxu0 %v1791
    %6437 = vmatpush2.bf16.msra.mxu0 %v1790
    %6438 = vmatprep.subr.bf16.mxu0 %v1779
    %6439 = vmatpush2.bf16.msra.mxu0 %v1778
    %6440 = vmatprep.subr.bf16.mxu0 %v1767
    %6441 = vmatpush2.bf16.msra.mxu0 %v1766
    %6442 = vmatprep.subr.bf16.mxu0 %v1755
    %6443 = vmatpush2.bf16.msra.mxu0 %v1754
    %6444 = vmatprep.subr.bf16.mxu0 %v1743
    %6445 = vmatpush2.bf16.msra.mxu0 %v1742
    %6446 = vmatprep.mubr.bf16.mxu0 %v6083
    %6447 = vmatmul.mubr.bf16.gmra.mxu0 %v6082
    %v6448 = vpop.f32.mrf.mxu0
    %v6449 = vadd.f32 0.0, %v6448
    %v6450 = vpop.f32.mrf.mxu0
    %v6451 = vadd.f32 0.0, %v6450
    %v6452 = vpop.f32.mrf.mxu0
    %v6453 = vpop.f32.mrf.mxu0
    %6454 = vdwg.mxu0
    %6455 = vmatprep.subr.bf16.mxu0 %v1923
    %6456 = vmatpush1.bf16.msra.mxu0 %v1922
    %6457 = vmatprep.subr.bf16.mxu0 %v1911
    %6458 = vmatpush1.bf16.msra.mxu0 %v1910
    %6459 = vmatprep.subr.bf16.mxu0 %v1899
    %6460 = vmatpush1.bf16.msra.mxu0 %v1898
    %6461 = vmatprep.subr.bf16.mxu0 %v1887
    %6462 = vmatpush1.bf16.msra.mxu0 %v1886
    %6463 = vmatprep.subr.bf16.mxu0 %v1875
    %6464 = vmatpush1.bf16.msra.mxu0 %v1874
    %6465 = vmatprep.subr.bf16.mxu0 %v1863
    %6466 = vmatpush1.bf16.msra.mxu0 %v1862
    %6467 = vmatprep.subr.bf16.mxu0 %v1851
    %6468 = vmatpush1.bf16.msra.mxu0 %v1850
    %6469 = vmatprep.subr.bf16.mxu0 %v1839
    %6470 = vmatpush1.bf16.msra.mxu0 %v1838
    %6471 = vmatprep.subr.bf16.mxu0 %v2019
    %6472 = vmatpush2.bf16.msra.mxu0 %v2018
    %6473 = vmatprep.subr.bf16.mxu0 %v2007
    %6474 = vmatpush2.bf16.msra.mxu0 %v2006
    %6475 = vmatprep.subr.bf16.mxu0 %v1995
    %6476 = vmatpush2.bf16.msra.mxu0 %v1994
    %6477 = vmatprep.subr.bf16.mxu0 %v1983
    %6478 = vmatpush2.bf16.msra.mxu0 %v1982
    %6479 = vmatprep.subr.bf16.mxu0 %v1971
    %6480 = vmatpush2.bf16.msra.mxu0 %v1970
    %6481 = vmatprep.subr.bf16.mxu0 %v1959
    %6482 = vmatpush2.bf16.msra.mxu0 %v1958
    %6483 = vmatprep.subr.bf16.mxu0 %v1947
    %6484 = vmatpush2.bf16.msra.mxu0 %v1946
    %6485 = vmatprep.subr.bf16.mxu0 %v1935
    %6486 = vmatpush2.bf16.msra.mxu0 %v1934
    %6487 = vmatprep.mubr.bf16.mxu0 %v6085
    %6488 = vmatmul.mubr.bf16.gmra.mxu0 %v6084
    %v6489 = vpop.f32.mrf.mxu0
    %v6490 = vadd.f32 %v6449, %v6489
    %v6491 = vpop.f32.mrf.mxu0
    %v6492 = vadd.f32 %v6451, %v6491
    %v6493 = vpop.f32.mrf.mxu0
    %v6494 = vpop.f32.mrf.mxu0
    %6495 = vdwg.mxu0
    %6496 = vmatprep.subr.bf16.mxu0 %v1733
    %6497 = vmatpush1.bf16.msra.mxu0 %v1732
    %6498 = vmatprep.subr.bf16.mxu0 %v1721
    %6499 = vmatpush1.bf16.msra.mxu0 %v1720
    %6500 = vmatprep.subr.bf16.mxu0 %v1709
    %6501 = vmatpush1.bf16.msra.mxu0 %v1708
    %6502 = vmatprep.subr.bf16.mxu0 %v1697
    %6503 = vmatpush1.bf16.msra.mxu0 %v1696
    %6504 = vmatprep.subr.bf16.mxu0 %v1685
    %6505 = vmatpush1.bf16.msra.mxu0 %v1684
    %6506 = vmatprep.subr.bf16.mxu0 %v1673
    %6507 = vmatpush1.bf16.msra.mxu0 %v1672
    %6508 = vmatprep.subr.bf16.mxu0 %v1661
    %6509 = vmatpush1.bf16.msra.mxu0 %v1660
    %6510 = vmatprep.subr.bf16.mxu0 %v1649
    %6511 = vmatpush1.bf16.msra.mxu0 %v1648
    %6512 = vmatprep.subr.bf16.mxu0 %v1829
    %6513 = vmatpush2.bf16.msra.mxu0 %v1828
    %6514 = vmatprep.subr.bf16.mxu0 %v1817
    %6515 = vmatpush2.bf16.msra.mxu0 %v1816
    %6516 = vmatprep.subr.bf16.mxu0 %v1805
    %6517 = vmatpush2.bf16.msra.mxu0 %v1804
    %6518 = vmatprep.subr.bf16.mxu0 %v1793
    %6519 = vmatpush2.bf16.msra.mxu0 %v1792
    %6520 = vmatprep.subr.bf16.mxu0 %v1781
    %6521 = vmatpush2.bf16.msra.mxu0 %v1780
    %6522 = vmatprep.subr.bf16.mxu0 %v1769
    %6523 = vmatpush2.bf16.msra.mxu0 %v1768
    %6524 = vmatprep.subr.bf16.mxu0 %v1757
    %6525 = vmatpush2.bf16.msra.mxu0 %v1756
    %6526 = vmatprep.subr.bf16.mxu0 %v1745
    %6527 = vmatpush2.bf16.msra.mxu0 %v1744
    %6528 = vmatprep.mubr.bf16.mxu0 %v6083
    %6529 = vmatmul.mubr.bf16.gmra.mxu0 %v6082
    %v6530 = vpop.f32.mrf.mxu0
    %v6531 = vadd.f32 0.0, %v6530
    %v6532 = vpop.f32.mrf.mxu0
    %v6533 = vadd.f32 0.0, %v6532
    %v6534 = vpop.f32.mrf.mxu0
    %v6535 = vpop.f32.mrf.mxu0
    %6536 = vdwg.mxu0
    %6537 = vmatprep.subr.bf16.mxu0 %v1925
    %6538 = vmatpush1.bf16.msra.mxu0 %v1924
    %6539 = vmatprep.subr.bf16.mxu0 %v1913
    %6540 = vmatpush1.bf16.msra.mxu0 %v1912
    %6541 = vmatprep.subr.bf16.mxu0 %v1901
    %6542 = vmatpush1.bf16.msra.mxu0 %v1900
    %6543 = vmatprep.subr.bf16.mxu0 %v1889
    %6544 = vmatpush1.bf16.msra.mxu0 %v1888
    %6545 = vmatprep.subr.bf16.mxu0 %v1877
    %6546 = vmatpush1.bf16.msra.mxu0 %v1876
    %6547 = vmatprep.subr.bf16.mxu0 %v1865
    %6548 = vmatpush1.bf16.msra.mxu0 %v1864
    %6549 = vmatprep.subr.bf16.mxu0 %v1853
    %6550 = vmatpush1.bf16.msra.mxu0 %v1852
    %6551 = vmatprep.subr.bf16.mxu0 %v1841
    %6552 = vmatpush1.bf16.msra.mxu0 %v1840
    %6553 = vmatprep.subr.bf16.mxu0 %v2021
    %6554 = vmatpush2.bf16.msra.mxu0 %v2020
    %6555 = vmatprep.subr.bf16.mxu0 %v2009
    %6556 = vmatpush2.bf16.msra.mxu0 %v2008
    %6557 = vmatprep.subr.bf16.mxu0 %v1997
    %6558 = vmatpush2.bf16.msra.mxu0 %v1996
    %6559 = vmatprep.subr.bf16.mxu0 %v1985
    %6560 = vmatpush2.bf16.msra.mxu0 %v1984
    %6561 = vmatprep.subr.bf16.mxu0 %v1973
    %6562 = vmatpush2.bf16.msra.mxu0 %v1972
    %6563 = vmatprep.subr.bf16.mxu0 %v1961
    %6564 = vmatpush2.bf16.msra.mxu0 %v1960
    %6565 = vmatprep.subr.bf16.mxu0 %v1949
    %6566 = vmatpush2.bf16.msra.mxu0 %v1948
    %6567 = vmatprep.subr.bf16.mxu0 %v1937
    %6568 = vmatpush2.bf16.msra.mxu0 %v1936
    %6569 = vmatprep.mubr.bf16.mxu0 %v6085
    %6570 = vmatmul.mubr.bf16.gmra.mxu0 %v6084
    %v6571 = vpop.f32.mrf.mxu0
    %v6572 = vadd.f32 %v6531, %v6571
    %v6573 = vpop.f32.mrf.mxu0
    %v6574 = vadd.f32 %v6533, %v6573
    %v6575 = vpop.f32.mrf.mxu0
    %v6576 = vpop.f32.mrf.mxu0
    %6577 = vdwg.mxu0
    %v6578 = vadd.f32 %v6070, %v6162
    %v6579 = vadd.f32 %v6071, %v6164
    %v6580 = vadd.f32 %v6072, %v6244
    %v6581 = vadd.f32 %v6073, %v6246
    %v6582 = vxor.u32 %v6578, 2147483648
    %v6583 = vxor.u32 %v6579, 2147483648
    %v6584 = vxor.u32 %v6580, 2147483648
    %v6585 = vxor.u32 %v6581, 2147483648
    %v6586 = vmul.f32 %v6582, 1.442695
    %v6587 = vpow.pop %v6586
    %v6588 = vmul.f32 %v6583, 1.442695
    %v6589 = vpow.pop %v6588
    %v6590 = vmul.f32 %v6584, 1.442695
    %v6591 = vpow.pop %v6590
    %v6592 = vmul.f32 %v6585, 1.442695
    %v6593 = vpow.pop %v6592
    %v6594 = vadd.f32 %v6587, 1.0
    %v6595 = vadd.f32 %v6589, 1.0
    %v6596 = vadd.f32 %v6591, 1.0
    %v6597 = vadd.f32 %v6593, 1.0
    %v6598 = vrcp.pop %v6594
    %v6599 = vmul.f32 1.0, %v6598
    %v6600 = vrcp.pop %v6595
    %v6601 = vmul.f32 1.0, %v6600
    %v6602 = vrcp.pop %v6596
    %v6603 = vmul.f32 1.0, %v6602
    %v6604 = vrcp.pop %v6597
    %v6605 = vmul.f32 1.0, %v6604
    %v6606 = vadd.f32 %v6074, %v6326
    %v6607 = vadd.f32 %v6075, %v6328
    %v6608 = vadd.f32 %v6076, %v6408
    %v6609 = vadd.f32 %v6077, %v6410
    %v6610 = vxor.u32 %v6606, 2147483648
    %v6611 = vxor.u32 %v6607, 2147483648
    %v6612 = vxor.u32 %v6608, 2147483648
    %v6613 = vxor.u32 %v6609, 2147483648
    %v6614 = vmul.f32 %v6610, 1.442695
    %v6615 = vpow.pop %v6614
    %v6616 = vmul.f32 %v6611, 1.442695
    %v6617 = vpow.pop %v6616
    %v6618 = vmul.f32 %v6612, 1.442695
    %v6619 = vpow.pop %v6618
    %v6620 = vmul.f32 %v6613, 1.442695
    %v6621 = vpow.pop %v6620
    %v6622 = vadd.f32 %v6615, 1.0
    %v6623 = vadd.f32 %v6617, 1.0
    %v6624 = vadd.f32 %v6619, 1.0
    %v6625 = vadd.f32 %v6621, 1.0
    %v6626 = vrcp.pop %v6622
    %v6627 = vmul.f32 1.0, %v6626
    %v6628 = vrcp.pop %v6623
    %v6629 = vmul.f32 1.0, %v6628
    %v6630 = vrcp.pop %v6624
    %v6631 = vmul.f32 1.0, %v6630
    %v6632 = vrcp.pop %v6625
    %v6633 = vmul.f32 1.0, %v6632
    %v6634 = vadd.f32 %v6490, %v2958
    %v6635 = vadd.f32 %v6492, %v2962
    %v6636 = vadd.f32 %v6572, %v2966
    %v6637 = vadd.f32 %v6574, %v2970
    %v6638 = vmul.f32 %v6599, %v6634
    %v6639 = vmul.f32 %v6601, %v6635
    %v6640 = vmul.f32 %v6603, %v6636
    %v6641 = vmul.f32 %v6605, %v6637
    %v6642 = vadd.f32 %v6078, %v6638
    %v6643 = vadd.f32 %v6079, %v6639
    %v6644 = vadd.f32 %v6080, %v6640
    %v6645 = vadd.f32 %v6081, %v6641
    %v6646 = vtanh.pop %v6642
    %v6647 = vtanh.pop %v6643
    %v6648 = vtanh.pop %v6644
    %v6649 = vtanh.pop %v6645
    %v6650 = vsub.f32 %v6060, %v6646
    %v6651 = vsub.f32 %v6061, %v6647
    %v6652 = vsub.f32 %v6062, %v6648
    %v6653 = vsub.f32 %v6063, %v6649
    %v6654 = vmul.f32 %v6627, %v6650
    %v6655 = vmul.f32 %v6629, %v6651
    %v6656 = vmul.f32 %v6631, %v6652
    %v6657 = vmul.f32 %v6633, %v6653
    %v6658 = vadd.f32 %v6646, %v6654
    %v6659 = vadd.f32 %v6647, %v6655
    %v6660 = vadd.f32 %v6648, %v6656
    %v6661 = vadd.f32 %v6649, %v6657
    %v6662 = vsub.f32 %v6658, %v6060
    %v6663 = vsub.f32 %v6659, %v6061
    %v6664 = vsub.f32 %v6660, %v6062
    %v6665 = vsub.f32 %v6661, %v6063
    %v6666 = vmul.f32 %v6662, 0.9
    %v6667 = vmul.f32 %v6663, 0.9
    %v6668 = vmul.f32 %v6664, 0.9
    %v6669 = vmul.f32 %v6665, 0.9
    %v6670 = vadd.f32 %v6060, %v6666
    %v6671 = vadd.f32 %v6061, %v6667
    %v6672 = vadd.f32 %v6062, %v6668
    %v6673 = vadd.f32 %v6063, %v6669
    %s6674 = scalar_lea.vmem [#allocation11], 192
    %6675 = vst [vmem:[%s6674] sm:$0xff] %v6670
    %6676 = vst [vmem:[%s6674 + $0x8] sm:$0xff] %v6671
    %6677 = vst [vmem:[%s6674 + $0x10] sm:$0xff] %v6672
    %6678 = vst [vmem:[%s6674 + $0x18] sm:$0xff] %v6673
    %s6679 = scalar_lea.vmem [#allocation3], 672
    %v6680 = vld [vmem:[%s6679] sm:$0xff]
    %v6681 = vld [vmem:[%s6679 + $0x8] sm:$0xff]
    %v6682 = vld [vmem:[%s6679 + $0x10] sm:$0xff]
    %v6683 = vld [vmem:[%s6679 + $0x18] sm:$0xff]
    %v6684 = vld [vmem:[%s6679 + $0x20] sm:$0xff]
    %v6685 = vld [vmem:[%s6679 + $0x28] sm:$0xff]
    %v6686 = vld [vmem:[%s6679 + $0x30] sm:$0xff]
    %v6687 = vld [vmem:[%s6679 + $0x38] sm:$0xff]
    %v6688 = vld [vmem:[%s6679 + $0x40] sm:$0xff]
    %v6689 = vld [vmem:[%s6679 + $0x48] sm:$0xff]
    %v6690 = vld [vmem:[%s6679 + $0x50] sm:$0xff]
    %v6691 = vld [vmem:[%s6679 + $0x58] sm:$0xff]
    %v6692 = vpack.c.bf16 %v6670, %v6670
    %v6693 = vpack.c.bf16 %v6671, %v6671
    %v6694 = vpack.c.bf16 %v6672, %v6672
    %v6695 = vpack.c.bf16 %v6673, %v6673
    %6696 = vmatprep.subr.bf16.mxu0 %v1723
    %6697 = vmatpush1.bf16.msra.mxu0 %v1722
    %6698 = vmatprep.subr.bf16.mxu0 %v1711
    %6699 = vmatpush1.bf16.msra.mxu0 %v1710
    %6700 = vmatprep.subr.bf16.mxu0 %v1699
    %6701 = vmatpush1.bf16.msra.mxu0 %v1698
    %6702 = vmatprep.subr.bf16.mxu0 %v1687
    %6703 = vmatpush1.bf16.msra.mxu0 %v1686
    %6704 = vmatprep.subr.bf16.mxu0 %v1675
    %6705 = vmatpush1.bf16.msra.mxu0 %v1674
    %6706 = vmatprep.subr.bf16.mxu0 %v1663
    %6707 = vmatpush1.bf16.msra.mxu0 %v1662
    %6708 = vmatprep.subr.bf16.mxu0 %v1651
    %6709 = vmatpush1.bf16.msra.mxu0 %v1650
    %6710 = vmatprep.subr.bf16.mxu0 %v1639
    %6711 = vmatpush1.bf16.msra.mxu0 %v1638
    %6712 = vmatprep.subr.bf16.mxu0 %v1819
    %6713 = vmatpush2.bf16.msra.mxu0 %v1818
    %6714 = vmatprep.subr.bf16.mxu0 %v1807
    %6715 = vmatpush2.bf16.msra.mxu0 %v1806
    %6716 = vmatprep.subr.bf16.mxu0 %v1795
    %6717 = vmatpush2.bf16.msra.mxu0 %v1794
    %6718 = vmatprep.subr.bf16.mxu0 %v1783
    %6719 = vmatpush2.bf16.msra.mxu0 %v1782
    %6720 = vmatprep.subr.bf16.mxu0 %v1771
    %6721 = vmatpush2.bf16.msra.mxu0 %v1770
    %6722 = vmatprep.subr.bf16.mxu0 %v1759
    %6723 = vmatpush2.bf16.msra.mxu0 %v1758
    %6724 = vmatprep.subr.bf16.mxu0 %v1747
    %6725 = vmatpush2.bf16.msra.mxu0 %v1746
    %6726 = vmatprep.subr.bf16.mxu0 %v1735
    %6727 = vmatpush2.bf16.msra.mxu0 %v1734
    %6728 = vmatprep.mubr.bf16.mxu0 %v6693
    %6729 = vmatmul.mubr.bf16.gmra.mxu0 %v6692
    %v6730 = vpop.f32.mrf.mxu0
    %v6731 = vadd.f32 0.0, %v6730
    %v6732 = vpop.f32.mrf.mxu0
    %v6733 = vadd.f32 0.0, %v6732
    %v6734 = vpop.f32.mrf.mxu0
    %v6735 = vpop.f32.mrf.mxu0
    %6736 = vdwg.mxu0
    %6737 = vmatprep.subr.bf16.mxu0 %v1915
    %6738 = vmatpush1.bf16.msra.mxu0 %v1914
    %6739 = vmatprep.subr.bf16.mxu0 %v1903
    %6740 = vmatpush1.bf16.msra.mxu0 %v1902
    %6741 = vmatprep.subr.bf16.mxu0 %v1891
    %6742 = vmatpush1.bf16.msra.mxu0 %v1890
    %6743 = vmatprep.subr.bf16.mxu0 %v1879
    %6744 = vmatpush1.bf16.msra.mxu0 %v1878
    %6745 = vmatprep.subr.bf16.mxu0 %v1867
    %6746 = vmatpush1.bf16.msra.mxu0 %v1866
    %6747 = vmatprep.subr.bf16.mxu0 %v1855
    %6748 = vmatpush1.bf16.msra.mxu0 %v1854
    %6749 = vmatprep.subr.bf16.mxu0 %v1843
    %6750 = vmatpush1.bf16.msra.mxu0 %v1842
    %6751 = vmatprep.subr.bf16.mxu0 %v1831
    %6752 = vmatpush1.bf16.msra.mxu0 %v1830
    %6753 = vmatprep.subr.bf16.mxu0 %v2011
    %6754 = vmatpush2.bf16.msra.mxu0 %v2010
    %6755 = vmatprep.subr.bf16.mxu0 %v1999
    %6756 = vmatpush2.bf16.msra.mxu0 %v1998
    %6757 = vmatprep.subr.bf16.mxu0 %v1987
    %6758 = vmatpush2.bf16.msra.mxu0 %v1986
    %6759 = vmatprep.subr.bf16.mxu0 %v1975
    %6760 = vmatpush2.bf16.msra.mxu0 %v1974
    %6761 = vmatprep.subr.bf16.mxu0 %v1963
    %6762 = vmatpush2.bf16.msra.mxu0 %v1962
    %6763 = vmatprep.subr.bf16.mxu0 %v1951
    %6764 = vmatpush2.bf16.msra.mxu0 %v1950
    %6765 = vmatprep.subr.bf16.mxu0 %v1939
    %6766 = vmatpush2.bf16.msra.mxu0 %v1938
    %6767 = vmatprep.subr.bf16.mxu0 %v1927
    %6768 = vmatpush2.bf16.msra.mxu0 %v1926
    %6769 = vmatprep.mubr.bf16.mxu0 %v6695
    %6770 = vmatmul.mubr.bf16.gmra.mxu0 %v6694
    %v6771 = vpop.f32.mrf.mxu0
    %v6772 = vadd.f32 %v6731, %v6771
    %v6773 = vpop.f32.mrf.mxu0
    %v6774 = vadd.f32 %v6733, %v6773
    %v6775 = vpop.f32.mrf.mxu0
    %v6776 = vpop.f32.mrf.mxu0
    %6777 = vdwg.mxu0
    %6778 = vmatprep.subr.bf16.mxu0 %v1725
    %6779 = vmatpush1.bf16.msra.mxu0 %v1724
    %6780 = vmatprep.subr.bf16.mxu0 %v1713
    %6781 = vmatpush1.bf16.msra.mxu0 %v1712
    %6782 = vmatprep.subr.bf16.mxu0 %v1701
    %6783 = vmatpush1.bf16.msra.mxu0 %v1700
    %6784 = vmatprep.subr.bf16.mxu0 %v1689
    %6785 = vmatpush1.bf16.msra.mxu0 %v1688
    %6786 = vmatprep.subr.bf16.mxu0 %v1677
    %6787 = vmatpush1.bf16.msra.mxu0 %v1676
    %6788 = vmatprep.subr.bf16.mxu0 %v1665
    %6789 = vmatpush1.bf16.msra.mxu0 %v1664
    %6790 = vmatprep.subr.bf16.mxu0 %v1653
    %6791 = vmatpush1.bf16.msra.mxu0 %v1652
    %6792 = vmatprep.subr.bf16.mxu0 %v1641
    %6793 = vmatpush1.bf16.msra.mxu0 %v1640
    %6794 = vmatprep.subr.bf16.mxu0 %v1821
    %6795 = vmatpush2.bf16.msra.mxu0 %v1820
    %6796 = vmatprep.subr.bf16.mxu0 %v1809
    %6797 = vmatpush2.bf16.msra.mxu0 %v1808
    %6798 = vmatprep.subr.bf16.mxu0 %v1797
    %6799 = vmatpush2.bf16.msra.mxu0 %v1796
    %6800 = vmatprep.subr.bf16.mxu0 %v1785
    %6801 = vmatpush2.bf16.msra.mxu0 %v1784
    %6802 = vmatprep.subr.bf16.mxu0 %v1773
    %6803 = vmatpush2.bf16.msra.mxu0 %v1772
    %6804 = vmatprep.subr.bf16.mxu0 %v1761
    %6805 = vmatpush2.bf16.msra.mxu0 %v1760
    %6806 = vmatprep.subr.bf16.mxu0 %v1749
    %6807 = vmatpush2.bf16.msra.mxu0 %v1748
    %6808 = vmatprep.subr.bf16.mxu0 %v1737
    %6809 = vmatpush2.bf16.msra.mxu0 %v1736
    %6810 = vmatprep.mubr.bf16.mxu0 %v6693
    %6811 = vmatmul.mubr.bf16.gmra.mxu0 %v6692
    %v6812 = vpop.f32.mrf.mxu0
    %v6813 = vadd.f32 0.0, %v6812
    %v6814 = vpop.f32.mrf.mxu0
    %v6815 = vadd.f32 0.0, %v6814
    %v6816 = vpop.f32.mrf.mxu0
    %v6817 = vpop.f32.mrf.mxu0
    %6818 = vdwg.mxu0
    %6819 = vmatprep.subr.bf16.mxu0 %v1917
    %6820 = vmatpush1.bf16.msra.mxu0 %v1916
    %6821 = vmatprep.subr.bf16.mxu0 %v1905
    %6822 = vmatpush1.bf16.msra.mxu0 %v1904
    %6823 = vmatprep.subr.bf16.mxu0 %v1893
    %6824 = vmatpush1.bf16.msra.mxu0 %v1892
    %6825 = vmatprep.subr.bf16.mxu0 %v1881
    %6826 = vmatpush1.bf16.msra.mxu0 %v1880
    %6827 = vmatprep.subr.bf16.mxu0 %v1869
    %6828 = vmatpush1.bf16.msra.mxu0 %v1868
    %6829 = vmatprep.subr.bf16.mxu0 %v1857
    %6830 = vmatpush1.bf16.msra.mxu0 %v1856
    %6831 = vmatprep.subr.bf16.mxu0 %v1845
    %6832 = vmatpush1.bf16.msra.mxu0 %v1844
    %6833 = vmatprep.subr.bf16.mxu0 %v1833
    %6834 = vmatpush1.bf16.msra.mxu0 %v1832
    %6835 = vmatprep.subr.bf16.mxu0 %v2013
    %6836 = vmatpush2.bf16.msra.mxu0 %v2012
    %6837 = vmatprep.subr.bf16.mxu0 %v2001
    %6838 = vmatpush2.bf16.msra.mxu0 %v2000
    %6839 = vmatprep.subr.bf16.mxu0 %v1989
    %6840 = vmatpush2.bf16.msra.mxu0 %v1988
    %6841 = vmatprep.subr.bf16.mxu0 %v1977
    %6842 = vmatpush2.bf16.msra.mxu0 %v1976
    %6843 = vmatprep.subr.bf16.mxu0 %v1965
    %6844 = vmatpush2.bf16.msra.mxu0 %v1964
    %6845 = vmatprep.subr.bf16.mxu0 %v1953
    %6846 = vmatpush2.bf16.msra.mxu0 %v1952
    %6847 = vmatprep.subr.bf16.mxu0 %v1941
    %6848 = vmatpush2.bf16.msra.mxu0 %v1940
    %6849 = vmatprep.subr.bf16.mxu0 %v1929
    %6850 = vmatpush2.bf16.msra.mxu0 %v1928
    %6851 = vmatprep.mubr.bf16.mxu0 %v6695
    %6852 = vmatmul.mubr.bf16.gmra.mxu0 %v6694
    %v6853 = vpop.f32.mrf.mxu0
    %v6854 = vadd.f32 %v6813, %v6853
    %v6855 = vpop.f32.mrf.mxu0
    %v6856 = vadd.f32 %v6815, %v6855
    %v6857 = vpop.f32.mrf.mxu0
    %v6858 = vpop.f32.mrf.mxu0
    %6859 = vdwg.mxu0
    %6860 = vmatprep.subr.bf16.mxu0 %v1727
    %6861 = vmatpush1.bf16.msra.mxu0 %v1726
    %6862 = vmatprep.subr.bf16.mxu0 %v1715
    %6863 = vmatpush1.bf16.msra.mxu0 %v1714
    %6864 = vmatprep.subr.bf16.mxu0 %v1703
    %6865 = vmatpush1.bf16.msra.mxu0 %v1702
    %6866 = vmatprep.subr.bf16.mxu0 %v1691
    %6867 = vmatpush1.bf16.msra.mxu0 %v1690
    %6868 = vmatprep.subr.bf16.mxu0 %v1679
    %6869 = vmatpush1.bf16.msra.mxu0 %v1678
    %6870 = vmatprep.subr.bf16.mxu0 %v1667
    %6871 = vmatpush1.bf16.msra.mxu0 %v1666
    %6872 = vmatprep.subr.bf16.mxu0 %v1655
    %6873 = vmatpush1.bf16.msra.mxu0 %v1654
    %6874 = vmatprep.subr.bf16.mxu0 %v1643
    %6875 = vmatpush1.bf16.msra.mxu0 %v1642
    %6876 = vmatprep.subr.bf16.mxu0 %v1823
    %6877 = vmatpush2.bf16.msra.mxu0 %v1822
    %6878 = vmatprep.subr.bf16.mxu0 %v1811
    %6879 = vmatpush2.bf16.msra.mxu0 %v1810
    %6880 = vmatprep.subr.bf16.mxu0 %v1799
    %6881 = vmatpush2.bf16.msra.mxu0 %v1798
    %6882 = vmatprep.subr.bf16.mxu0 %v1787
    %6883 = vmatpush2.bf16.msra.mxu0 %v1786
    %6884 = vmatprep.subr.bf16.mxu0 %v1775
    %6885 = vmatpush2.bf16.msra.mxu0 %v1774
    %6886 = vmatprep.subr.bf16.mxu0 %v1763
    %6887 = vmatpush2.bf16.msra.mxu0 %v1762
    %6888 = vmatprep.subr.bf16.mxu0 %v1751
    %6889 = vmatpush2.bf16.msra.mxu0 %v1750
    %6890 = vmatprep.subr.bf16.mxu0 %v1739
    %6891 = vmatpush2.bf16.msra.mxu0 %v1738
    %6892 = vmatprep.mubr.bf16.mxu0 %v6693
    %6893 = vmatmul.mubr.bf16.gmra.mxu0 %v6692
    %v6894 = vpop.f32.mrf.mxu0
    %v6895 = vadd.f32 0.0, %v6894
    %v6896 = vpop.f32.mrf.mxu0
    %v6897 = vadd.f32 0.0, %v6896
    %v6898 = vpop.f32.mrf.mxu0
    %v6899 = vpop.f32.mrf.mxu0
    %6900 = vdwg.mxu0
    %6901 = vmatprep.subr.bf16.mxu0 %v1919
    %6902 = vmatpush1.bf16.msra.mxu0 %v1918
    %6903 = vmatprep.subr.bf16.mxu0 %v1907
    %6904 = vmatpush1.bf16.msra.mxu0 %v1906
    %6905 = vmatprep.subr.bf16.mxu0 %v1895
    %6906 = vmatpush1.bf16.msra.mxu0 %v1894
    %6907 = vmatprep.subr.bf16.mxu0 %v1883
    %6908 = vmatpush1.bf16.msra.mxu0 %v1882
    %6909 = vmatprep.subr.bf16.mxu0 %v1871
    %6910 = vmatpush1.bf16.msra.mxu0 %v1870
    %6911 = vmatprep.subr.bf16.mxu0 %v1859
    %6912 = vmatpush1.bf16.msra.mxu0 %v1858
    %6913 = vmatprep.subr.bf16.mxu0 %v1847
    %6914 = vmatpush1.bf16.msra.mxu0 %v1846
    %6915 = vmatprep.subr.bf16.mxu0 %v1835
    %6916 = vmatpush1.bf16.msra.mxu0 %v1834
    %6917 = vmatprep.subr.bf16.mxu0 %v2015
    %6918 = vmatpush2.bf16.msra.mxu0 %v2014
    %6919 = vmatprep.subr.bf16.mxu0 %v2003
    %6920 = vmatpush2.bf16.msra.mxu0 %v2002
    %6921 = vmatprep.subr.bf16.mxu0 %v1991
    %6922 = vmatpush2.bf16.msra.mxu0 %v1990
    %6923 = vmatprep.subr.bf16.mxu0 %v1979
    %6924 = vmatpush2.bf16.msra.mxu0 %v1978
    %6925 = vmatprep.subr.bf16.mxu0 %v1967
    %6926 = vmatpush2.bf16.msra.mxu0 %v1966
    %6927 = vmatprep.subr.bf16.mxu0 %v1955
    %6928 = vmatpush2.bf16.msra.mxu0 %v1954
    %6929 = vmatprep.subr.bf16.mxu0 %v1943
    %6930 = vmatpush2.bf16.msra.mxu0 %v1942
    %6931 = vmatprep.subr.bf16.mxu0 %v1931
    %6932 = vmatpush2.bf16.msra.mxu0 %v1930
    %6933 = vmatprep.mubr.bf16.mxu0 %v6695
    %6934 = vmatmul.mubr.bf16.gmra.mxu0 %v6694
    %v6935 = vpop.f32.mrf.mxu0
    %v6936 = vadd.f32 %v6895, %v6935
    %v6937 = vpop.f32.mrf.mxu0
    %v6938 = vadd.f32 %v6897, %v6937
    %v6939 = vpop.f32.mrf.mxu0
    %v6940 = vpop.f32.mrf.mxu0
    %6941 = vdwg.mxu0
    %6942 = vmatprep.subr.bf16.mxu0 %v1729
    %6943 = vmatpush1.bf16.msra.mxu0 %v1728
    %6944 = vmatprep.subr.bf16.mxu0 %v1717
    %6945 = vmatpush1.bf16.msra.mxu0 %v1716
    %6946 = vmatprep.subr.bf16.mxu0 %v1705
    %6947 = vmatpush1.bf16.msra.mxu0 %v1704
    %6948 = vmatprep.subr.bf16.mxu0 %v1693
    %6949 = vmatpush1.bf16.msra.mxu0 %v1692
    %6950 = vmatprep.subr.bf16.mxu0 %v1681
    %6951 = vmatpush1.bf16.msra.mxu0 %v1680
    %6952 = vmatprep.subr.bf16.mxu0 %v1669
    %6953 = vmatpush1.bf16.msra.mxu0 %v1668
    %6954 = vmatprep.subr.bf16.mxu0 %v1657
    %6955 = vmatpush1.bf16.msra.mxu0 %v1656
    %6956 = vmatprep.subr.bf16.mxu0 %v1645
    %6957 = vmatpush1.bf16.msra.mxu0 %v1644
    %6958 = vmatprep.subr.bf16.mxu0 %v1825
    %6959 = vmatpush2.bf16.msra.mxu0 %v1824
    %6960 = vmatprep.subr.bf16.mxu0 %v1813
    %6961 = vmatpush2.bf16.msra.mxu0 %v1812
    %6962 = vmatprep.subr.bf16.mxu0 %v1801
    %6963 = vmatpush2.bf16.msra.mxu0 %v1800
    %6964 = vmatprep.subr.bf16.mxu0 %v1789
    %6965 = vmatpush2.bf16.msra.mxu0 %v1788
    %6966 = vmatprep.subr.bf16.mxu0 %v1777
    %6967 = vmatpush2.bf16.msra.mxu0 %v1776
    %6968 = vmatprep.subr.bf16.mxu0 %v1765
    %6969 = vmatpush2.bf16.msra.mxu0 %v1764
    %6970 = vmatprep.subr.bf16.mxu0 %v1753
    %6971 = vmatpush2.bf16.msra.mxu0 %v1752
    %6972 = vmatprep.subr.bf16.mxu0 %v1741
    %6973 = vmatpush2.bf16.msra.mxu0 %v1740
    %6974 = vmatprep.mubr.bf16.mxu0 %v6693
    %6975 = vmatmul.mubr.bf16.gmra.mxu0 %v6692
    %v6976 = vpop.f32.mrf.mxu0
    %v6977 = vadd.f32 0.0, %v6976
    %v6978 = vpop.f32.mrf.mxu0
    %v6979 = vadd.f32 0.0, %v6978
    %v6980 = vpop.f32.mrf.mxu0
    %v6981 = vpop.f32.mrf.mxu0
    %6982 = vdwg.mxu0
    %6983 = vmatprep.subr.bf16.mxu0 %v1921
    %6984 = vmatpush1.bf16.msra.mxu0 %v1920
    %6985 = vmatprep.subr.bf16.mxu0 %v1909
    %6986 = vmatpush1.bf16.msra.mxu0 %v1908
    %6987 = vmatprep.subr.bf16.mxu0 %v1897
    %6988 = vmatpush1.bf16.msra.mxu0 %v1896
    %6989 = vmatprep.subr.bf16.mxu0 %v1885
    %6990 = vmatpush1.bf16.msra.mxu0 %v1884
    %6991 = vmatprep.subr.bf16.mxu0 %v1873
    %6992 = vmatpush1.bf16.msra.mxu0 %v1872
    %6993 = vmatprep.subr.bf16.mxu0 %v1861
    %6994 = vmatpush1.bf16.msra.mxu0 %v1860
    %6995 = vmatprep.subr.bf16.mxu0 %v1849
    %6996 = vmatpush1.bf16.msra.mxu0 %v1848
    %6997 = vmatprep.subr.bf16.mxu0 %v1837
    %6998 = vmatpush1.bf16.msra.mxu0 %v1836
    %6999 = vmatprep.subr.bf16.mxu0 %v2017
    %7000 = vmatpush2.bf16.msra.mxu0 %v2016
    %7001 = vmatprep.subr.bf16.mxu0 %v2005
    %7002 = vmatpush2.bf16.msra.mxu0 %v2004
    %7003 = vmatprep.subr.bf16.mxu0 %v1993
    %7004 = vmatpush2.bf16.msra.mxu0 %v1992
    %7005 = vmatprep.subr.bf16.mxu0 %v1981
    %7006 = vmatpush2.bf16.msra.mxu0 %v1980
    %7007 = vmatprep.subr.bf16.mxu0 %v1969
    %7008 = vmatpush2.bf16.msra.mxu0 %v1968
    %7009 = vmatprep.subr.bf16.mxu0 %v1957
    %7010 = vmatpush2.bf16.msra.mxu0 %v1956
    %7011 = vmatprep.subr.bf16.mxu0 %v1945
    %7012 = vmatpush2.bf16.msra.mxu0 %v1944
    %7013 = vmatprep.subr.bf16.mxu0 %v1933
    %7014 = vmatpush2.bf16.msra.mxu0 %v1932
    %7015 = vmatprep.mubr.bf16.mxu0 %v6695
    %7016 = vmatmul.mubr.bf16.gmra.mxu0 %v6694
    %v7017 = vpop.f32.mrf.mxu0
    %v7018 = vadd.f32 %v6977, %v7017
    %v7019 = vpop.f32.mrf.mxu0
    %v7020 = vadd.f32 %v6979, %v7019
    %v7021 = vpop.f32.mrf.mxu0
    %v7022 = vpop.f32.mrf.mxu0
    %7023 = vdwg.mxu0
    %7024 = vmatprep.subr.bf16.mxu0 %v1731
    %7025 = vmatpush1.bf16.msra.mxu0 %v1730
    %7026 = vmatprep.subr.bf16.mxu0 %v1719
    %7027 = vmatpush1.bf16.msra.mxu0 %v1718
    %7028 = vmatprep.subr.bf16.mxu0 %v1707
    %7029 = vmatpush1.bf16.msra.mxu0 %v1706
    %7030 = vmatprep.subr.bf16.mxu0 %v1695
    %7031 = vmatpush1.bf16.msra.mxu0 %v1694
    %7032 = vmatprep.subr.bf16.mxu0 %v1683
    %7033 = vmatpush1.bf16.msra.mxu0 %v1682
    %7034 = vmatprep.subr.bf16.mxu0 %v1671
    %7035 = vmatpush1.bf16.msra.mxu0 %v1670
    %7036 = vmatprep.subr.bf16.mxu0 %v1659
    %7037 = vmatpush1.bf16.msra.mxu0 %v1658
    %7038 = vmatprep.subr.bf16.mxu0 %v1647
    %7039 = vmatpush1.bf16.msra.mxu0 %v1646
    %7040 = vmatprep.subr.bf16.mxu0 %v1827
    %7041 = vmatpush2.bf16.msra.mxu0 %v1826
    %7042 = vmatprep.subr.bf16.mxu0 %v1815
    %7043 = vmatpush2.bf16.msra.mxu0 %v1814
    %7044 = vmatprep.subr.bf16.mxu0 %v1803
    %7045 = vmatpush2.bf16.msra.mxu0 %v1802
    %7046 = vmatprep.subr.bf16.mxu0 %v1791
    %7047 = vmatpush2.bf16.msra.mxu0 %v1790
    %7048 = vmatprep.subr.bf16.mxu0 %v1779
    %7049 = vmatpush2.bf16.msra.mxu0 %v1778
    %7050 = vmatprep.subr.bf16.mxu0 %v1767
    %7051 = vmatpush2.bf16.msra.mxu0 %v1766
    %7052 = vmatprep.subr.bf16.mxu0 %v1755
    %7053 = vmatpush2.bf16.msra.mxu0 %v1754
    %7054 = vmatprep.subr.bf16.mxu0 %v1743
    %7055 = vmatpush2.bf16.msra.mxu0 %v1742
    %7056 = vmatprep.mubr.bf16.mxu0 %v6693
    %7057 = vmatmul.mubr.bf16.gmra.mxu0 %v6692
    %v7058 = vpop.f32.mrf.mxu0
    %v7059 = vadd.f32 0.0, %v7058
    %v7060 = vpop.f32.mrf.mxu0
    %v7061 = vadd.f32 0.0, %v7060
    %v7062 = vpop.f32.mrf.mxu0
    %v7063 = vpop.f32.mrf.mxu0
    %7064 = vdwg.mxu0
    %7065 = vmatprep.subr.bf16.mxu0 %v1923
    %7066 = vmatpush1.bf16.msra.mxu0 %v1922
    %7067 = vmatprep.subr.bf16.mxu0 %v1911
    %7068 = vmatpush1.bf16.msra.mxu0 %v1910
    %7069 = vmatprep.subr.bf16.mxu0 %v1899
    %7070 = vmatpush1.bf16.msra.mxu0 %v1898
    %7071 = vmatprep.subr.bf16.mxu0 %v1887
    %7072 = vmatpush1.bf16.msra.mxu0 %v1886
    %7073 = vmatprep.subr.bf16.mxu0 %v1875
    %7074 = vmatpush1.bf16.msra.mxu0 %v1874
    %7075 = vmatprep.subr.bf16.mxu0 %v1863
    %7076 = vmatpush1.bf16.msra.mxu0 %v1862
    %7077 = vmatprep.subr.bf16.mxu0 %v1851
    %7078 = vmatpush1.bf16.msra.mxu0 %v1850
    %7079 = vmatprep.subr.bf16.mxu0 %v1839
    %7080 = vmatpush1.bf16.msra.mxu0 %v1838
    %7081 = vmatprep.subr.bf16.mxu0 %v2019
    %7082 = vmatpush2.bf16.msra.mxu0 %v2018
    %7083 = vmatprep.subr.bf16.mxu0 %v2007
    %7084 = vmatpush2.bf16.msra.mxu0 %v2006
    %7085 = vmatprep.subr.bf16.mxu0 %v1995
    %7086 = vmatpush2.bf16.msra.mxu0 %v1994
    %7087 = vmatprep.subr.bf16.mxu0 %v1983
    %7088 = vmatpush2.bf16.msra.mxu0 %v1982
    %7089 = vmatprep.subr.bf16.mxu0 %v1971
    %7090 = vmatpush2.bf16.msra.mxu0 %v1970
    %7091 = vmatprep.subr.bf16.mxu0 %v1959
    %7092 = vmatpush2.bf16.msra.mxu0 %v1958
    %7093 = vmatprep.subr.bf16.mxu0 %v1947
    %7094 = vmatpush2.bf16.msra.mxu0 %v1946
    %7095 = vmatprep.subr.bf16.mxu0 %v1935
    %7096 = vmatpush2.bf16.msra.mxu0 %v1934
    %7097 = vmatprep.mubr.bf16.mxu0 %v6695
    %7098 = vmatmul.mubr.bf16.gmra.mxu0 %v6694
    %v7099 = vpop.f32.mrf.mxu0
    %v7100 = vadd.f32 %v7059, %v7099
    %v7101 = vpop.f32.mrf.mxu0
    %v7102 = vadd.f32 %v7061, %v7101
    %v7103 = vpop.f32.mrf.mxu0
    %v7104 = vpop.f32.mrf.mxu0
    %7105 = vdwg.mxu0
    %7106 = vmatprep.subr.bf16.mxu0 %v1733
    %7107 = vmatpush1.bf16.msra.mxu0 %v1732
    %7108 = vmatprep.subr.bf16.mxu0 %v1721
    %7109 = vmatpush1.bf16.msra.mxu0 %v1720
    %7110 = vmatprep.subr.bf16.mxu0 %v1709
    %7111 = vmatpush1.bf16.msra.mxu0 %v1708
    %7112 = vmatprep.subr.bf16.mxu0 %v1697
    %7113 = vmatpush1.bf16.msra.mxu0 %v1696
    %7114 = vmatprep.subr.bf16.mxu0 %v1685
    %7115 = vmatpush1.bf16.msra.mxu0 %v1684
    %7116 = vmatprep.subr.bf16.mxu0 %v1673
    %7117 = vmatpush1.bf16.msra.mxu0 %v1672
    %7118 = vmatprep.subr.bf16.mxu0 %v1661
    %7119 = vmatpush1.bf16.msra.mxu0 %v1660
    %7120 = vmatprep.subr.bf16.mxu0 %v1649
    %7121 = vmatpush1.bf16.msra.mxu0 %v1648
    %7122 = vmatprep.subr.bf16.mxu0 %v1829
    %7123 = vmatpush2.bf16.msra.mxu0 %v1828
    %7124 = vmatprep.subr.bf16.mxu0 %v1817
    %7125 = vmatpush2.bf16.msra.mxu0 %v1816
    %7126 = vmatprep.subr.bf16.mxu0 %v1805
    %7127 = vmatpush2.bf16.msra.mxu0 %v1804
    %7128 = vmatprep.subr.bf16.mxu0 %v1793
    %7129 = vmatpush2.bf16.msra.mxu0 %v1792
    %7130 = vmatprep.subr.bf16.mxu0 %v1781
    %7131 = vmatpush2.bf16.msra.mxu0 %v1780
    %7132 = vmatprep.subr.bf16.mxu0 %v1769
    %7133 = vmatpush2.bf16.msra.mxu0 %v1768
    %7134 = vmatprep.subr.bf16.mxu0 %v1757
    %7135 = vmatpush2.bf16.msra.mxu0 %v1756
    %7136 = vmatprep.subr.bf16.mxu0 %v1745
    %7137 = vmatpush2.bf16.msra.mxu0 %v1744
    %7138 = vmatprep.mubr.bf16.mxu0 %v6693
    %7139 = vmatmul.mubr.bf16.gmra.mxu0 %v6692
    %v7140 = vpop.f32.mrf.mxu0
    %v7141 = vadd.f32 0.0, %v7140
    %v7142 = vpop.f32.mrf.mxu0
    %v7143 = vadd.f32 0.0, %v7142
    %v7144 = vpop.f32.mrf.mxu0
    %v7145 = vpop.f32.mrf.mxu0
    %7146 = vdwg.mxu0
    %7147 = vmatprep.subr.bf16.mxu0 %v1925
    %7148 = vmatpush1.bf16.msra.mxu0 %v1924
    %7149 = vmatprep.subr.bf16.mxu0 %v1913
    %7150 = vmatpush1.bf16.msra.mxu0 %v1912
    %7151 = vmatprep.subr.bf16.mxu0 %v1901
    %7152 = vmatpush1.bf16.msra.mxu0 %v1900
    %7153 = vmatprep.subr.bf16.mxu0 %v1889
    %7154 = vmatpush1.bf16.msra.mxu0 %v1888
    %7155 = vmatprep.subr.bf16.mxu0 %v1877
    %7156 = vmatpush1.bf16.msra.mxu0 %v1876
    %7157 = vmatprep.subr.bf16.mxu0 %v1865
    %7158 = vmatpush1.bf16.msra.mxu0 %v1864
    %7159 = vmatprep.subr.bf16.mxu0 %v1853
    %7160 = vmatpush1.bf16.msra.mxu0 %v1852
    %7161 = vmatprep.subr.bf16.mxu0 %v1841
    %7162 = vmatpush1.bf16.msra.mxu0 %v1840
    %7163 = vmatprep.subr.bf16.mxu0 %v2021
    %7164 = vmatpush2.bf16.msra.mxu0 %v2020
    %7165 = vmatprep.subr.bf16.mxu0 %v2009
    %7166 = vmatpush2.bf16.msra.mxu0 %v2008
    %7167 = vmatprep.subr.bf16.mxu0 %v1997
    %7168 = vmatpush2.bf16.msra.mxu0 %v1996
    %7169 = vmatprep.subr.bf16.mxu0 %v1985
    %7170 = vmatpush2.bf16.msra.mxu0 %v1984
    %7171 = vmatprep.subr.bf16.mxu0 %v1973
    %7172 = vmatpush2.bf16.msra.mxu0 %v1972
    %7173 = vmatprep.subr.bf16.mxu0 %v1961
    %7174 = vmatpush2.bf16.msra.mxu0 %v1960
    %7175 = vmatprep.subr.bf16.mxu0 %v1949
    %7176 = vmatpush2.bf16.msra.mxu0 %v1948
    %7177 = vmatprep.subr.bf16.mxu0 %v1937
    %7178 = vmatpush2.bf16.msra.mxu0 %v1936
    %7179 = vmatprep.mubr.bf16.mxu0 %v6695
    %7180 = vmatmul.mubr.bf16.gmra.mxu0 %v6694
    %v7181 = vpop.f32.mrf.mxu0
    %v7182 = vadd.f32 %v7141, %v7181
    %v7183 = vpop.f32.mrf.mxu0
    %v7184 = vadd.f32 %v7143, %v7183
    %v7185 = vpop.f32.mrf.mxu0
    %v7186 = vpop.f32.mrf.mxu0
    %7187 = vdwg.mxu0
    %v7188 = vadd.f32 %v6680, %v6772
    %v7189 = vadd.f32 %v6681, %v6774
    %v7190 = vadd.f32 %v6682, %v6854
    %v7191 = vadd.f32 %v6683, %v6856
    %v7192 = vxor.u32 %v7188, 2147483648
    %v7193 = vxor.u32 %v7189, 2147483648
    %v7194 = vxor.u32 %v7190, 2147483648
    %v7195 = vxor.u32 %v7191, 2147483648
    %v7196 = vmul.f32 %v7192, 1.442695
    %v7197 = vpow.pop %v7196
    %v7198 = vmul.f32 %v7193, 1.442695
    %v7199 = vpow.pop %v7198
    %v7200 = vmul.f32 %v7194, 1.442695
    %v7201 = vpow.pop %v7200
    %v7202 = vmul.f32 %v7195, 1.442695
    %v7203 = vpow.pop %v7202
    %v7204 = vadd.f32 %v7197, 1.0
    %v7205 = vadd.f32 %v7199, 1.0
    %v7206 = vadd.f32 %v7201, 1.0
    %v7207 = vadd.f32 %v7203, 1.0
    %v7208 = vrcp.pop %v7204
    %v7209 = vmul.f32 1.0, %v7208
    %v7210 = vrcp.pop %v7205
    %v7211 = vmul.f32 1.0, %v7210
    %v7212 = vrcp.pop %v7206
    %v7213 = vmul.f32 1.0, %v7212
    %v7214 = vrcp.pop %v7207
    %v7215 = vmul.f32 1.0, %v7214
    %v7216 = vadd.f32 %v6684, %v6936
    %v7217 = vadd.f32 %v6685, %v6938
    %v7218 = vadd.f32 %v6686, %v7018
    %v7219 = vadd.f32 %v6687, %v7020
    %v7220 = vxor.u32 %v7216, 2147483648
    %v7221 = vxor.u32 %v7217, 2147483648
    %v7222 = vxor.u32 %v7218, 2147483648
    %v7223 = vxor.u32 %v7219, 2147483648
    %v7224 = vmul.f32 %v7220, 1.442695
    %v7225 = vpow.pop %v7224
    %v7226 = vmul.f32 %v7221, 1.442695
    %v7227 = vpow.pop %v7226
    %v7228 = vmul.f32 %v7222, 1.442695
    %v7229 = vpow.pop %v7228
    %v7230 = vmul.f32 %v7223, 1.442695
    %v7231 = vpow.pop %v7230
    %v7232 = vadd.f32 %v7225, 1.0
    %v7233 = vadd.f32 %v7227, 1.0
    %v7234 = vadd.f32 %v7229, 1.0
    %v7235 = vadd.f32 %v7231, 1.0
    %v7236 = vrcp.pop %v7232
    %v7237 = vmul.f32 1.0, %v7236
    %v7238 = vrcp.pop %v7233
    %v7239 = vmul.f32 1.0, %v7238
    %v7240 = vrcp.pop %v7234
    %v7241 = vmul.f32 1.0, %v7240
    %v7242 = vrcp.pop %v7235
    %v7243 = vmul.f32 1.0, %v7242
    %v7244 = vadd.f32 %v7100, %v2958
    %v7245 = vadd.f32 %v7102, %v2962
    %v7246 = vadd.f32 %v7182, %v2966
    %v7247 = vadd.f32 %v7184, %v2970
    %v7248 = vmul.f32 %v7209, %v7244
    %v7249 = vmul.f32 %v7211, %v7245
    %v7250 = vmul.f32 %v7213, %v7246
    %v7251 = vmul.f32 %v7215, %v7247
    %v7252 = vadd.f32 %v6688, %v7248
    %v7253 = vadd.f32 %v6689, %v7249
    %v7254 = vadd.f32 %v6690, %v7250
    %v7255 = vadd.f32 %v6691, %v7251
    %v7256 = vtanh.pop %v7252
    %v7257 = vtanh.pop %v7253
    %v7258 = vtanh.pop %v7254
    %v7259 = vtanh.pop %v7255
    %v7260 = vsub.f32 %v6670, %v7256
    %v7261 = vsub.f32 %v6671, %v7257
    %v7262 = vsub.f32 %v6672, %v7258
    %v7263 = vsub.f32 %v6673, %v7259
    %v7264 = vmul.f32 %v7237, %v7260
    %v7265 = vmul.f32 %v7239, %v7261
    %v7266 = vmul.f32 %v7241, %v7262
    %v7267 = vmul.f32 %v7243, %v7263
    %v7268 = vadd.f32 %v7256, %v7264
    %v7269 = vadd.f32 %v7257, %v7265
    %v7270 = vadd.f32 %v7258, %v7266
    %v7271 = vadd.f32 %v7259, %v7267
    %v7272 = vsub.f32 %v7268, %v6670
    %v7273 = vsub.f32 %v7269, %v6671
    %v7274 = vsub.f32 %v7270, %v6672
    %v7275 = vsub.f32 %v7271, %v6673
    %v7276 = vmul.f32 %v7272, 0.9
    %v7277 = vmul.f32 %v7273, 0.9
    %v7278 = vmul.f32 %v7274, 0.9
    %v7279 = vmul.f32 %v7275, 0.9
    %v7280 = vadd.f32 %v6670, %v7276
    %v7281 = vadd.f32 %v6671, %v7277
    %v7282 = vadd.f32 %v6672, %v7278
    %v7283 = vadd.f32 %v6673, %v7279
    %s7284 = scalar_lea.vmem [#allocation11], 224
    %7285 = vst [vmem:[%s7284] sm:$0xff] %v7280
    %7286 = vst [vmem:[%s7284 + $0x8] sm:$0xff] %v7281
    %7287 = vst [vmem:[%s7284 + $0x10] sm:$0xff] %v7282
    %7288 = vst [vmem:[%s7284 + $0x18] sm:$0xff] %v7283
    %7289 = vst [vmem:[#allocation2] sm:$0xff] %v7280
    %7290 = vst [vmem:[#allocation2 + $0x8] sm:$0xff] %v7281
    %7291 = vst [vmem:[#allocation2 + $0x10] sm:$0xff] %v7282
    %7292 = vst [vmem:[#allocation2 + $0x18] sm:$0xff] %v7283
    // Predicated region
    $region38: #{tpu_custom_call.1} parent=1 // pred_check
      _
    $region39: #{tpu_custom_call.1} parent=1 // pred_check_branch
      %7294 = sbr.rel (0) target = $region41
    $region40: #{tpu_custom_call.1} parent=1 // pred_region
      %s7296 = ssub.s32 4096, 4096
      %7297 = vsyncadd [#allocation5], %s7296
      %s7298 = sshll.u32 [#allocation11], 4
      %s7299 = int_to_ptr.vmem [resolvable:$true] %s7298
      %7304 = dma.vmem_to_hbm [thread:$0]  %s7299, 4096, %s4, [#allocation5], 512, 512, 32
    $region41: #{tpu_custom_call.1} parent=1 // pred_fallthru
      _
    // Predicated region
    $region42: #{tpu_custom_call.1} parent=1 // pred_check
      _
    $region43: #{tpu_custom_call.1} parent=1 // pred_check_branch
      %7306 = sbr.rel (0) target = $region45
    $region44: #{tpu_custom_call.1} parent=1 // pred_region
      %7307 = dma.done [#allocation5], 4096
    $region45: #{tpu_custom_call.1} parent=1 // pred_fallthru
      _
    %7308 = vsyncpa [#allocation4], 1
    %7309 = vsyncpa [#allocation7], 1
    %7310 = vsyncpa [#allocation10], 1
    %7311 = vsyncpa [#allocation5], 1

</llo_original>
